<compile_context>
chip_gen: v6e
topology: v6e:2x2x1
jax: 0.10.0
libtpu: 0.0.40
codegen_flags: <defaults>
</compile_context>

<pallas_src>
import functools

import jax
import jax.numpy as jnp
from jax.experimental import pallas as pl
from jax.experimental.pallas import tpu as pltpu

VMEM_SPEC = pl.BlockSpec(memory_space=pltpu.MemorySpace.VMEM)

# (cin, cout, kernel, dilation); padding = dilation*(k-1)//2 ("same"), all static ints.
CONV_CFG = (
    (6, 64, 5, 1), (64, 64, 7, 1), (64, 64, 5, 2), (64, 64, 5, 4),
    (64, 64, 5, 8), (64, 64, 5, 16), (64, 16, 1, 1),
)
LSTM_HIDDEN = 16
FC = 64


# --------------------------------------------------------------------------- #
# Static tap bookkeeping (all plain Python ints -> no tracing issues)
# --------------------------------------------------------------------------- #
def _tap_offsets(K, dil):
    pad = dil * (K - 1) // 2
    return [k * dil - pad for k in range(K)]


def _kept_taps(L):
    """Per conv layer: list of (k, d) taps whose offset |d| < L (others only ever
    read zero padding for this sequence length and are skipped statically)."""
    kept = []
    for (_, _, K, dil) in CONV_CFG:
        kept.append([(k, d) for k, d in enumerate(_tap_offsets(K, dil)) if abs(d) < L])
    return kept


def _margin(L):
    m = 0
    for taps in _kept_taps(L):
        for _, d in taps:
            m = max(m, abs(d))
    return -(-m // 8) * 8          # round up to a multiple of 8 -> aligned halo concat


# --------------------------------------------------------------------------- #
# Fused kernel: conv stack + BiLSTM + MLP head, all activations VMEM/vreg resident
# --------------------------------------------------------------------------- #
def _fused_kernel(B, L, H, *refs):
    n_conv = len(CONV_CFG)
    idx = 0
    x_ref = refs[idx]; idx += 1
    conv_refs = refs[idx: idx + 2 * n_conv]; idx += 2 * n_conv
    wif_ref, wib_ref, bi_ref, wh_ref = refs[idx: idx + 4]; idx += 4
    lin_refs = refs[idx: idx + 8]; idx += 8
    wfin_ref, bfin_ref = refs[idx: idx + 2]; idx += 2
    fin_ref, out_ref = refs[idx: idx + 2]; idx += 2
    rh_ref = refs[idx]                                 # (B, 2*H*L) f32 scratch

    kept = _kept_taps(L)
    margin = _margin(L)
    R = B * L

    # per-row time index (compile-time pattern) for batch-boundary masking of taps
    t_row = jax.lax.broadcasted_iota(jnp.int32, (R, 1), 0) % L

    # ---------------- conv stack: per-tap accumulation, everything stays 2-D --------
    a = x_ref[...]                                     # (B*L, Cin) f32, channels-last
    for li, (cin, cout, K, dil) in enumerate(CONV_CFG):
        w_ref = conv_refs[2 * li]                      # (K, cin, cout) bf16
        b = conv_refs[2 * li + 1][...]                 # (1, cout)      f32

        need_shift = any(d != 0 for _, d in kept[li])
        if need_shift and margin > 0:                  # aligned (multiple-of-8) halo
            zpad = jnp.zeros((margin, cin), a.dtype)
            apad = jnp.concatenate([zpad, a, zpad], axis=0)

        acc = jnp.zeros((R, cout), jnp.float32)
        for (k, d) in kept[li]:
            if d == 0:
                tap = a
            else:
                tap = apad[margin + d: margin + d + R, :]      # static sublane slice
                if B > 1:                                      # kill cross-batch rows
                    valid = (t_row + d >= 0) & (t_row + d < L)
                    tap = jnp.where(valid, tap, 0)
            acc = acc + jnp.dot(tap.astype(jnp.bfloat16), w_ref[k],
                                preferred_element_type=jnp.float32)
        a = jnp.maximum(acc + b, 0.0)                  # conv + folded BN + ReLU

    # ---------------- BiLSTM: hoisted input projection, fused fwd/bwd step ----------
    H2, H8 = 2 * H, 8 * H
    # fwd / bwd projections live in disjoint interleaved gate columns; combined bias
    # (both directions) is added exactly once via xpf.
    xpf = (jnp.dot(a, wif_ref[...], preferred_element_type=jnp.float32)
           + bi_ref[...]).reshape(B, L, H8)
    xpb = jnp.dot(a, wib_ref[...], preferred_element_type=jnp.float32).reshape(B, L, H8)
    wh = wh_ref[...]                                   # (2H, 8H) interleaved block-diag

    h_cat = jnp.zeros((B, H2), jnp.float32)            # [h_fwd | h_bwd]
    c_cat = jnp.zeros((B, H2), jnp.float32)

    # L = 16 static unroll: after slimming the step body to 1 matmul + a few (B, 2H)
    # vector ops, live values stay far below the 64-vreg budget and static slices
    # avoid dynamic sublane indexing.  TODO(synk): switch to lax.fori_loop for large L.
    for s in range(L):
        tb = L - 1 - s                                 # backward-direction time index
        z = xpf[:, s, :] + xpb[:, tb, :] + jnp.dot(h_cat, wh,
                                                   preferred_element_type=jnp.float32)
        i_g = jax.nn.sigmoid(z[:, 0:H2])               # contiguous 32-lane gate blocks
        f_g = jax.nn.sigmoid(z[:, H2:2 * H2])
        g_g = jnp.tanh(z[:, 2 * H2:3 * H2])
        o_g = jax.nn.sigmoid(z[:, 3 * H2:4 * H2])
        c_cat = f_g * c_cat + i_g * g_g
        h_cat = o_g * jnp.tanh(c_cat)

        # relu(LSTM output) stored in PyTorch flatten layout (t*2H + dir*H + j)
        r = jnp.maximum(h_cat, 0.0)
        rh_ref[:, s * H2: s * H2 + H] = r[:, 0:H]          # fwd half  -> time s
        rh_ref[:, tb * H2 + H: tb * H2 + H2] = r[:, H:H2]  # bwd half  -> time tb

    # ---------------- MLP head (single 512-deep Linear-1, bf16 operands) ------------
    h = rh_ref[...]                                    # (B, 2*H*L) f32, already relu'd
    for li in range(4):
        w = lin_refs[2 * li][...]                      # bf16
        bb = lin_refs[2 * li + 1][...]                 # (1, FC) f32 (BN folded)
        h = jnp.maximum(jnp.dot(h.astype(jnp.bfloat16), w,
                                preferred_element_type=jnp.float32) + bb, 0.0)

    out_ref[...] = h
    fin_ref[...] = (jnp.dot(h.astype(jnp.bfloat16), wfin_ref[...],
                            preferred_element_type=jnp.float32) + bfin_ref[...])


# --------------------------------------------------------------------------- #
# Wrapper
# --------------------------------------------------------------------------- #
def feature_extractor(x_ncw, params):
    # x is PyTorch NCW (B, C, L); convert once (outside the kernel) to flat (B*L, C).
    B, Cin, L = x_ncw.shape
    x2 = jnp.transpose(x_ncw, (0, 2, 1)).reshape(B * L, Cin).astype(jnp.float32)

    H = params["wh_cat"].shape[0] // 2
    fc = params["lin_ws"][0].shape[1]
    class_num = params["wfin"].shape[1]

    args = [x2]
    for (w, b) in params["conv"]:
        args += [w, b]
    args += [params["wi_f"], params["wi_b"], params["bi"], params["wh_cat"]]
    for w, b in zip(params["lin_ws"], params["lin_bs"]):
        args += [w, b]
    args += [params["wfin"], params["bfin"]]

    kernel = functools.partial(_fused_kernel, B, L, H)
    fin, out = pl.pallas_call(
        kernel,
        out_shape=(jax.ShapeDtypeStruct((B, class_num), jnp.float32),
                   jax.ShapeDtypeStruct((B, fc), jnp.float32)),
        in_specs=[VMEM_SPEC] * len(args),
        out_specs=(VMEM_SPEC, VMEM_SPEC),
        scratch_shapes=[pltpu.VMEM((B, 2 * H * L), jnp.float32)],
    )(*args)
    return fin, out


# --------------------------------------------------------------------------- #
# Parameter construction (deterministic, synthetic) + BN folding (eval mode)
# --------------------------------------------------------------------------- #
def _fold_bn(w, b, gamma, beta, mean, var, eps=1e-5):
    s = gamma / jnp.sqrt(var + eps)
    return w * s, (b - mean) * s + beta


def _interleave_gates(m, dir_idx, H):
    """Map a (..., 4H) [i|f|g|o] per-direction matrix into the fused interleaved
    (..., 8H) layout [i_f i_b | f_f f_b | g_f g_b | o_f o_b] at direction dir_idx."""
    out = jnp.zeros(m.shape[:-1] + (8 * H,), m.dtype)
    for g in range(4):
        out = out.at[..., g * 2 * H + dir_idx * H: g * 2 * H + (dir_idx + 1) * H].set(
            m[..., g * H:(g + 1) * H])
    return out


def init_params(key, class_num=5, feat_len=16, lstm_hidden=LSTM_HIDDEN, fc=FC):
    keys = iter(jax.random.split(key, 128))

    def u(shape, scale):
        return jax.random.uniform(next(keys), shape, jnp.float32, -scale, scale)

    params = {}

    # conv stack (BN folded), per-tap weight layout (K, Cin, Cout), bf16 operands
    conv = []
    for (cin, cout, k, dil) in CONV_CFG:
        scale = (cin * k) ** -0.5
        w = u((k, cin, cout), scale)
        b = u((cout,), scale)
        gamma = 1.0 + u((cout,), 0.2)
        beta = u((cout,), 0.1)
        mean = u((cout,), 0.1)
        var = 1.0 + u((cout,), 0.5)
        wf_, bf_ = _fold_bn(w, b, gamma, beta, mean, var)
        conv.append((wf_.astype(jnp.bfloat16), bf_.reshape(1, cout)))
    params["conv"] = conv

    # bidirectional LSTM (input D = last conv cout, hidden H); gate order i,f,g,o.
    D, H = CONV_CFG[-1][1], lstm_hidden
    s = H ** -0.5
    wif = u((D, 4 * H), s); whf = u((H, 4 * H), s)
    bfw = u((4 * H,), s) + u((4 * H,), s)              # b_ih + b_hh (forward)
    wib = u((D, 4 * H), s); whb = u((H, 4 * H), s)
    bbw = u((4 * H,), s) + u((4 * H,), s)              # b_ih + b_hh (backward)

    params["wi_f"] = _interleave_gates(wif, 0, H)                      # (D, 8H)
    params["wi_b"] = _interleave_gates(wib, 1, H)                      # (D, 8H)
    params["bi"] = (_interleave_gates(bfw.reshape(1, 4 * H), 0, H)
                    + _interleave_gates(bbw.reshape(1, 4 * H), 1, H))  # (1, 8H)
    wh_cat = jnp.zeros((2 * H, 8 * H), jnp.float32)                    # block-diag-ish
    wh_cat = wh_cat.at[0:H].set(_interleave_gates(whf, 0, H))
    wh_cat = wh_cat.at[H:].set(_interleave_gates(whb, 1, H))
    params["wh_cat"] = wh_cat

    # linear stack (BN folded), bf16 operands; row order of W1 matches flatten layout
    fin = 2 * H * feat_len
    lin_ws, lin_bs = [], []
    for li in range(4):
        f_in = fin if li == 0 else fc
        scale = f_in ** -0.5
        w = u((f_in, fc), scale)
        b = u((fc,), scale)
        gamma = 1.0 + u((fc,), 0.2)
        beta = u((fc,), 0.1)
        mean = u((fc,), 0.1)
        var = 1.0 + u((fc,), 0.5)
        wf_, bf_ = _fold_bn(w, b, gamma, beta, mean, var)
        lin_ws.append(wf_.astype(jnp.bfloat16))
        lin_bs.append(bf_.reshape(1, fc))
    params["lin_ws"], params["lin_bs"] = lin_ws, lin_bs

    scale = fc ** -0.5
    params["wfin"] = u((fc, class_num), scale).astype(jnp.bfloat16)
    params["bfin"] = u((class_num,), scale).reshape(1, class_num)
    return params


if __name__ == "__main__":
    B, in_chan, feat_len, class_num = 2, 6, 16, 5
    key = jax.random.PRNGKey(0)
    k_x, k_p = jax.random.split(key)
    x = jax.random.normal(k_x, (B, in_chan, feat_len), jnp.float32)
    params = init_params(k_p, class_num=class_num, feat_len=feat_len)

    fwd = jax.jit(feature_extractor)
    final_out, out = fwd(x, params)
    jax.block_until_ready((final_out, out))

    assert final_out.shape == (B, class_num)
    assert out.shape == (B, FC)
    assert bool(jnp.all(jnp.isfinite(final_out))) and bool(jnp.all(jnp.isfinite(out)))
    print("KERNEL_OK")
</pallas_src>

<mosaic_0001>
module attributes {stable_mosaic.version = 11 : i64} {
  func.func @_fused_kernel(%arg0: memref<32x6xf32, #tpu.memory_space<vmem>>, %arg1: memref<5x6x64xbf16, #tpu.memory_space<vmem>>, %arg2: memref<1x64xf32, #tpu.memory_space<vmem>>, %arg3: memref<7x64x64xbf16, #tpu.memory_space<vmem>>, %arg4: memref<1x64xf32, #tpu.memory_space<vmem>>, %arg5: memref<5x64x64xbf16, #tpu.memory_space<vmem>>, %arg6: memref<1x64xf32, #tpu.memory_space<vmem>>, %arg7: memref<5x64x64xbf16, #tpu.memory_space<vmem>>, %arg8: memref<1x64xf32, #tpu.memory_space<vmem>>, %arg9: memref<5x64x64xbf16, #tpu.memory_space<vmem>>, %arg10: memref<1x64xf32, #tpu.memory_space<vmem>>, %arg11: memref<5x64x64xbf16, #tpu.memory_space<vmem>>, %arg12: memref<1x64xf32, #tpu.memory_space<vmem>>, %arg13: memref<1x64x16xbf16, #tpu.memory_space<vmem>>, %arg14: memref<1x16xf32, #tpu.memory_space<vmem>>, %arg15: memref<16x128xf32, #tpu.memory_space<vmem>>, %arg16: memref<16x128xf32, #tpu.memory_space<vmem>>, %arg17: memref<1x128xf32, #tpu.memory_space<vmem>>, %arg18: memref<32x128xf32, #tpu.memory_space<vmem>>, %arg19: memref<512x64xbf16, #tpu.memory_space<vmem>>, %arg20: memref<1x64xf32, #tpu.memory_space<vmem>>, %arg21: memref<64x64xbf16, #tpu.memory_space<vmem>>, %arg22: memref<1x64xf32, #tpu.memory_space<vmem>>, %arg23: memref<64x64xbf16, #tpu.memory_space<vmem>>, %arg24: memref<1x64xf32, #tpu.memory_space<vmem>>, %arg25: memref<64x64xbf16, #tpu.memory_space<vmem>>, %arg26: memref<1x64xf32, #tpu.memory_space<vmem>>, %arg27: memref<64x5xbf16, #tpu.memory_space<vmem>>, %arg28: memref<1x5xf32, #tpu.memory_space<vmem>>, %arg29: memref<2x5xf32, #tpu.memory_space<vmem>>, %arg30: memref<2x64xf32, #tpu.memory_space<vmem>>, %arg31: memref<2x512xf32, #tpu.memory_space<vmem>>) attributes {dimension_semantics = [], scalar_prefetch = 0 : i64, scratch_operands = 1 : i64, tpu.core_type = #tpu.core_type<tc>} {
    %0 = tpu.iota {dimensions = array<i32: 0>} : vector<32x1xi32>
    %c16_i32 = arith.constant 16 : i32
    %c0_i32 = arith.constant 0 : i32
    %1 = arith.cmpi eq, %c16_i32, %c0_i32 : i32
    %c1_i32 = arith.constant 1 : i32
    %2 = arith.select %1, %c1_i32, %c16_i32 : i32
    %3 = vector.broadcast %2 : i32 to vector<32x1xi32>
    %4 = arith.remsi %0, %3 : vector<32x1xi32>
    %c0_i32_0 = arith.constant 0 : i32
    %5 = vector.broadcast %c0_i32_0 : i32 to vector<32x1xi32>
    %6 = arith.cmpi ne, %4, %5 : vector<32x1xi32>
    %c0_i32_1 = arith.constant 0 : i32
    %7 = vector.broadcast %c0_i32_1 : i32 to vector<32x1xi32>
    %8 = arith.cmpi slt, %4, %7 : vector<32x1xi32>
    %c0_i32_2 = arith.constant 0 : i32
    %9 = arith.cmpi slt, %2, %c0_i32_2 : i32
    %10 = vector.broadcast %9 : i1 to vector<32x1xi1>
    %11 = vector.broadcast %10 : vector<32x1xi1> to vector<32x1xi1>
    %12 = arith.xori %8, %11 : vector<32x1xi1>
    %13 = arith.andi %12, %6 : vector<32x1xi1>
    %14 = vector.broadcast %2 : i32 to vector<32x1xi32>
    %15 = arith.addi %4, %14 : vector<32x1xi32>
    %16 = arith.select %13, %15, %4 : vector<32x1xi1>, vector<32x1xi32>
    %c0 = arith.constant 0 : index
    %c0_3 = arith.constant 0 : index
    %17 = vector.load %arg0[%c0, %c0_3] : memref<32x6xf32, #tpu.memory_space<vmem>>, vector<32x6xf32>
    %c0_4 = arith.constant 0 : index
    %c0_5 = arith.constant 0 : index
    %18 = vector.load %arg2[%c0_4, %c0_5] : memref<1x64xf32, #tpu.memory_space<vmem>>, vector<1x64xf32>
    %cst = arith.constant 0.000000e+00 : f32
    %19 = vector.broadcast %cst : f32 to vector<8x6xf32>
    %20 = tpu.concatenate %19, %17, %19 in 0 : vector<8x6xf32>, vector<32x6xf32>, vector<8x6xf32> -> vector<48x6xf32>
    %cst_6 = arith.constant 0.000000e+00 : f32
    %21 = vector.broadcast %cst_6 : f32 to vector<32x64xf32>
    %22 = vector.extract_strided_slice %20 {offsets = [6, 0], sizes = [32, 6], strides = [1, 1]} : vector<48x6xf32> to vector<32x6xf32>
    %c-2_i32 = arith.constant -2 : i32
    %23 = vector.broadcast %c-2_i32 : i32 to vector<32x1xi32>
    %24 = arith.addi %16, %23 : vector<32x1xi32>
    %c0_i32_7 = arith.constant 0 : i32
    %25 = vector.broadcast %c0_i32_7 : i32 to vector<32x1xi32>
    %26 = arith.cmpi sge, %24, %25 : vector<32x1xi32>
    %c-2_i32_8 = arith.constant -2 : i32
    %27 = vector.broadcast %c-2_i32_8 : i32 to vector<32x1xi32>
    %28 = arith.addi %16, %27 : vector<32x1xi32>
    %c16_i32_9 = arith.constant 16 : i32
    %29 = vector.broadcast %c16_i32_9 : i32 to vector<32x1xi32>
    %30 = arith.cmpi slt, %28, %29 : vector<32x1xi32>
    %31 = arith.andi %26, %30 : vector<32x1xi1>
    %c0_i32_10 = arith.constant 0 : i32
    %32 = arith.sitofp %c0_i32_10 : i32 to f32
    %33 = vector.shape_cast %31 : vector<32x1xi1> to vector<32x1xi1>
    %34 = vector.broadcast %33 : vector<32x1xi1> to vector<32x6xi1>
    %35 = vector.broadcast %32 : f32 to vector<32x6xf32>
    %36 = arith.select %34, %22, %35 : vector<32x6xi1>, vector<32x6xf32>
    %37 = arith.truncf %36 : vector<32x6xf32> to vector<32x6xbf16>
    %c0_11 = arith.constant 0 : index
    %c0_12 = arith.constant 0 : index
    %c0_13 = arith.constant 0 : index
    %38 = vector.load %arg1[%c0_11, %c0_12, %c0_13] : memref<5x6x64xbf16, #tpu.memory_space<vmem>>, vector<1x6x64xbf16>
    %39 = vector.shape_cast %38 : vector<1x6x64xbf16> to vector<6x64xbf16>
    %cst_14 = arith.constant dense<0.000000e+00> : vector<32x64xf32>
    %40 = tpu.matmul %37, %39, %cst_14 {dimension_numbers = #tpu.dot_dimension_numbers<[1], [0], [0], [1], [0, 0, 1, 1], [], []>} : vector<32x6xbf16>, vector<6x64xbf16>, vector<32x64xf32> -> vector<32x64xf32>
    %41 = arith.addf %21, %40 : vector<32x64xf32>
    %42 = vector.extract_strided_slice %20 {offsets = [7, 0], sizes = [32, 6], strides = [1, 1]} : vector<48x6xf32> to vector<32x6xf32>
    %c-1_i32 = arith.constant -1 : i32
    %43 = vector.broadcast %c-1_i32 : i32 to vector<32x1xi32>
    %44 = arith.addi %16, %43 : vector<32x1xi32>
    %c0_i32_15 = arith.constant 0 : i32
    %45 = vector.broadcast %c0_i32_15 : i32 to vector<32x1xi32>
    %46 = arith.cmpi sge, %44, %45 : vector<32x1xi32>
    %c-1_i32_16 = arith.constant -1 : i32
    %47 = vector.broadcast %c-1_i32_16 : i32 to vector<32x1xi32>
    %48 = arith.addi %16, %47 : vector<32x1xi32>
    %c16_i32_17 = arith.constant 16 : i32
    %49 = vector.broadcast %c16_i32_17 : i32 to vector<32x1xi32>
    %50 = arith.cmpi slt, %48, %49 : vector<32x1xi32>
    %51 = arith.andi %46, %50 : vector<32x1xi1>
    %c0_i32_18 = arith.constant 0 : i32
    %52 = arith.sitofp %c0_i32_18 : i32 to f32
    %53 = vector.shape_cast %51 : vector<32x1xi1> to vector<32x1xi1>
    %54 = vector.broadcast %53 : vector<32x1xi1> to vector<32x6xi1>
    %55 = vector.broadcast %52 : f32 to vector<32x6xf32>
    %56 = arith.select %54, %42, %55 : vector<32x6xi1>, vector<32x6xf32>
    %57 = arith.truncf %56 : vector<32x6xf32> to vector<32x6xbf16>
    %c1 = arith.constant 1 : index
    %c0_19 = arith.constant 0 : index
    %c0_20 = arith.constant 0 : index
    %58 = vector.load %arg1[%c1, %c0_19, %c0_20] : memref<5x6x64xbf16, #tpu.memory_space<vmem>>, vector<1x6x64xbf16>
    %59 = vector.shape_cast %58 : vector<1x6x64xbf16> to vector<6x64xbf16>
    %cst_21 = arith.constant dense<0.000000e+00> : vector<32x64xf32>
    %60 = tpu.matmul %57, %59, %cst_21 {dimension_numbers = #tpu.dot_dimension_numbers<[1], [0], [0], [1], [0, 0, 1, 1], [], []>} : vector<32x6xbf16>, vector<6x64xbf16>, vector<32x64xf32> -> vector<32x64xf32>
    %61 = arith.addf %41, %60 : vector<32x64xf32>
    %62 = arith.truncf %17 : vector<32x6xf32> to vector<32x6xbf16>
    %c2 = arith.constant 2 : index
    %c0_22 = arith.constant 0 : index
    %c0_23 = arith.constant 0 : index
    %63 = vector.load %arg1[%c2, %c0_22, %c0_23] : memref<5x6x64xbf16, #tpu.memory_space<vmem>>, vector<1x6x64xbf16>
    %64 = vector.shape_cast %63 : vector<1x6x64xbf16> to vector<6x64xbf16>
    %cst_24 = arith.constant dense<0.000000e+00> : vector<32x64xf32>
    %65 = tpu.matmul %62, %64, %cst_24 {dimension_numbers = #tpu.dot_dimension_numbers<[1], [0], [0], [1], [0, 0, 1, 1], [], []>} : vector<32x6xbf16>, vector<6x64xbf16>, vector<32x64xf32> -> vector<32x64xf32>
    %66 = arith.addf %61, %65 : vector<32x64xf32>
    %67 = vector.extract_strided_slice %20 {offsets = [9, 0], sizes = [32, 6], strides = [1, 1]} : vector<48x6xf32> to vector<32x6xf32>
    %c1_i32_25 = arith.constant 1 : i32
    %68 = vector.broadcast %c1_i32_25 : i32 to vector<32x1xi32>
    %69 = arith.addi %16, %68 : vector<32x1xi32>
    %c0_i32_26 = arith.constant 0 : i32
    %70 = vector.broadcast %c0_i32_26 : i32 to vector<32x1xi32>
    %71 = arith.cmpi sge, %69, %70 : vector<32x1xi32>
    %c1_i32_27 = arith.constant 1 : i32
    %72 = vector.broadcast %c1_i32_27 : i32 to vector<32x1xi32>
    %73 = arith.addi %16, %72 : vector<32x1xi32>
    %c16_i32_28 = arith.constant 16 : i32
    %74 = vector.broadcast %c16_i32_28 : i32 to vector<32x1xi32>
    %75 = arith.cmpi slt, %73, %74 : vector<32x1xi32>
    %76 = arith.andi %71, %75 : vector<32x1xi1>
    %c0_i32_29 = arith.constant 0 : i32
    %77 = arith.sitofp %c0_i32_29 : i32 to f32
    %78 = vector.shape_cast %76 : vector<32x1xi1> to vector<32x1xi1>
    %79 = vector.broadcast %78 : vector<32x1xi1> to vector<32x6xi1>
    %80 = vector.broadcast %77 : f32 to vector<32x6xf32>
    %81 = arith.select %79, %67, %80 : vector<32x6xi1>, vector<32x6xf32>
    %82 = arith.truncf %81 : vector<32x6xf32> to vector<32x6xbf16>
    %c3 = arith.constant 3 : index
    %c0_30 = arith.constant 0 : index
    %c0_31 = arith.constant 0 : index
    %83 = vector.load %arg1[%c3, %c0_30, %c0_31] : memref<5x6x64xbf16, #tpu.memory_space<vmem>>, vector<1x6x64xbf16>
    %84 = vector.shape_cast %83 : vector<1x6x64xbf16> to vector<6x64xbf16>
    %cst_32 = arith.constant dense<0.000000e+00> : vector<32x64xf32>
    %85 = tpu.matmul %82, %84, %cst_32 {dimension_numbers = #tpu.dot_dimension_numbers<[1], [0], [0], [1], [0, 0, 1, 1], [], []>} : vector<32x6xbf16>, vector<6x64xbf16>, vector<32x64xf32> -> vector<32x64xf32>
    %86 = arith.addf %66, %85 : vector<32x64xf32>
    %87 = vector.extract_strided_slice %20 {offsets = [10, 0], sizes = [32, 6], strides = [1, 1]} : vector<48x6xf32> to vector<32x6xf32>
    %c2_i32 = arith.constant 2 : i32
    %88 = vector.broadcast %c2_i32 : i32 to vector<32x1xi32>
    %89 = arith.addi %16, %88 : vector<32x1xi32>
    %c0_i32_33 = arith.constant 0 : i32
    %90 = vector.broadcast %c0_i32_33 : i32 to vector<32x1xi32>
    %91 = arith.cmpi sge, %89, %90 : vector<32x1xi32>
    %c2_i32_34 = arith.constant 2 : i32
    %92 = vector.broadcast %c2_i32_34 : i32 to vector<32x1xi32>
    %93 = arith.addi %16, %92 : vector<32x1xi32>
    %c16_i32_35 = arith.constant 16 : i32
    %94 = vector.broadcast %c16_i32_35 : i32 to vector<32x1xi32>
    %95 = arith.cmpi slt, %93, %94 : vector<32x1xi32>
    %96 = arith.andi %91, %95 : vector<32x1xi1>
    %c0_i32_36 = arith.constant 0 : i32
    %97 = arith.sitofp %c0_i32_36 : i32 to f32
    %98 = vector.shape_cast %96 : vector<32x1xi1> to vector<32x1xi1>
    %99 = vector.broadcast %98 : vector<32x1xi1> to vector<32x6xi1>
    %100 = vector.broadcast %97 : f32 to vector<32x6xf32>
    %101 = arith.select %99, %87, %100 : vector<32x6xi1>, vector<32x6xf32>
    %102 = arith.truncf %101 : vector<32x6xf32> to vector<32x6xbf16>
    %c4 = arith.constant 4 : index
    %c0_37 = arith.constant 0 : index
    %c0_38 = arith.constant 0 : index
    %103 = vector.load %arg1[%c4, %c0_37, %c0_38] : memref<5x6x64xbf16, #tpu.memory_space<vmem>>, vector<1x6x64xbf16>
    %104 = vector.shape_cast %103 : vector<1x6x64xbf16> to vector<6x64xbf16>
    %cst_39 = arith.constant dense<0.000000e+00> : vector<32x64xf32>
    %105 = tpu.matmul %102, %104, %cst_39 {dimension_numbers = #tpu.dot_dimension_numbers<[1], [0], [0], [1], [0, 0, 1, 1], [], []>} : vector<32x6xbf16>, vector<6x64xbf16>, vector<32x64xf32> -> vector<32x64xf32>
    %106 = arith.addf %86, %105 : vector<32x64xf32>
    %107 = vector.broadcast %18 : vector<1x64xf32> to vector<32x64xf32>
    %108 = arith.addf %106, %107 : vector<32x64xf32>
    %cst_40 = arith.constant 0.000000e+00 : f32
    %109 = vector.broadcast %cst_40 : f32 to vector<32x64xf32>
    %110 = arith.maximumf %108, %109 : vector<32x64xf32>
    %c0_41 = arith.constant 0 : index
    %c0_42 = arith.constant 0 : index
    %111 = vector.load %arg4[%c0_41, %c0_42] : memref<1x64xf32, #tpu.memory_space<vmem>>, vector<1x64xf32>
    %cst_43 = arith.constant 0.000000e+00 : f32
    %112 = vector.broadcast %cst_43 : f32 to vector<8x64xf32>
    %113 = tpu.concatenate %112, %110, %112 in 0 : vector<8x64xf32>, vector<32x64xf32>, vector<8x64xf32> -> vector<48x64xf32>
    %cst_44 = arith.constant 0.000000e+00 : f32
    %114 = vector.broadcast %cst_44 : f32 to vector<32x64xf32>
    %115 = vector.extract_strided_slice %113 {offsets = [5, 0], sizes = [32, 64], strides = [1, 1]} : vector<48x64xf32> to vector<32x64xf32>
    %c-3_i32 = arith.constant -3 : i32
    %116 = vector.broadcast %c-3_i32 : i32 to vector<32x1xi32>
    %117 = arith.addi %16, %116 : vector<32x1xi32>
    %c0_i32_45 = arith.constant 0 : i32
    %118 = vector.broadcast %c0_i32_45 : i32 to vector<32x1xi32>
    %119 = arith.cmpi sge, %117, %118 : vector<32x1xi32>
    %c-3_i32_46 = arith.constant -3 : i32
    %120 = vector.broadcast %c-3_i32_46 : i32 to vector<32x1xi32>
    %121 = arith.addi %16, %120 : vector<32x1xi32>
    %c16_i32_47 = arith.constant 16 : i32
    %122 = vector.broadcast %c16_i32_47 : i32 to vector<32x1xi32>
    %123 = arith.cmpi slt, %121, %122 : vector<32x1xi32>
    %124 = arith.andi %119, %123 : vector<32x1xi1>
    %c0_i32_48 = arith.constant 0 : i32
    %125 = arith.sitofp %c0_i32_48 : i32 to f32
    %126 = vector.shape_cast %124 : vector<32x1xi1> to vector<32x1xi1>
    %127 = vector.broadcast %126 : vector<32x1xi1> to vector<32x64xi1>
    %128 = vector.broadcast %125 : f32 to vector<32x64xf32>
    %129 = arith.select %127, %115, %128 : vector<32x64xi1>, vector<32x64xf32>
    %130 = arith.truncf %129 : vector<32x64xf32> to vector<32x64xbf16>
    %c0_49 = arith.constant 0 : index
    %c0_50 = arith.constant 0 : index
    %c0_51 = arith.constant 0 : index
    %131 = vector.load %arg3[%c0_49, %c0_50, %c0_51] : memref<7x64x64xbf16, #tpu.memory_space<vmem>>, vector<1x64x64xbf16>
    %132 = vector.shape_cast %131 : vector<1x64x64xbf16> to vector<64x64xbf16>
    %cst_52 = arith.constant dense<0.000000e+00> : vector<32x64xf32>
    %133 = tpu.matmul %130, %132, %cst_52 {dimension_numbers = #tpu.dot_dimension_numbers<[1], [0], [0], [1], [0, 0, 1, 1], [], []>} : vector<32x64xbf16>, vector<64x64xbf16>, vector<32x64xf32> -> vector<32x64xf32>
    %134 = arith.addf %114, %133 : vector<32x64xf32>
    %135 = vector.extract_strided_slice %113 {offsets = [6, 0], sizes = [32, 64], strides = [1, 1]} : vector<48x64xf32> to vector<32x64xf32>
    %c-2_i32_53 = arith.constant -2 : i32
    %136 = vector.broadcast %c-2_i32_53 : i32 to vector<32x1xi32>
    %137 = arith.addi %16, %136 : vector<32x1xi32>
    %c0_i32_54 = arith.constant 0 : i32
    %138 = vector.broadcast %c0_i32_54 : i32 to vector<32x1xi32>
    %139 = arith.cmpi sge, %137, %138 : vector<32x1xi32>
    %c-2_i32_55 = arith.constant -2 : i32
    %140 = vector.broadcast %c-2_i32_55 : i32 to vector<32x1xi32>
    %141 = arith.addi %16, %140 : vector<32x1xi32>
    %c16_i32_56 = arith.constant 16 : i32
    %142 = vector.broadcast %c16_i32_56 : i32 to vector<32x1xi32>
    %143 = arith.cmpi slt, %141, %142 : vector<32x1xi32>
    %144 = arith.andi %139, %143 : vector<32x1xi1>
    %c0_i32_57 = arith.constant 0 : i32
    %145 = arith.sitofp %c0_i32_57 : i32 to f32
    %146 = vector.shape_cast %144 : vector<32x1xi1> to vector<32x1xi1>
    %147 = vector.broadcast %146 : vector<32x1xi1> to vector<32x64xi1>
    %148 = vector.broadcast %145 : f32 to vector<32x64xf32>
    %149 = arith.select %147, %135, %148 : vector<32x64xi1>, vector<32x64xf32>
    %150 = arith.truncf %149 : vector<32x64xf32> to vector<32x64xbf16>
    %c1_58 = arith.constant 1 : index
    %c0_59 = arith.constant 0 : index
    %c0_60 = arith.constant 0 : index
    %151 = vector.load %arg3[%c1_58, %c0_59, %c0_60] : memref<7x64x64xbf16, #tpu.memory_space<vmem>>, vector<1x64x64xbf16>
    %152 = vector.shape_cast %151 : vector<1x64x64xbf16> to vector<64x64xbf16>
    %cst_61 = arith.constant dense<0.000000e+00> : vector<32x64xf32>
    %153 = tpu.matmul %150, %152, %cst_61 {dimension_numbers = #tpu.dot_dimension_numbers<[1], [0], [0], [1], [0, 0, 1, 1], [], []>} : vector<32x64xbf16>, vector<64x64xbf16>, vector<32x64xf32> -> vector<32x64xf32>
    %154 = arith.addf %134, %153 : vector<32x64xf32>
    %155 = vector.extract_strided_slice %113 {offsets = [7, 0], sizes = [32, 64], strides = [1, 1]} : vector<48x64xf32> to vector<32x64xf32>
    %c-1_i32_62 = arith.constant -1 : i32
    %156 = vector.broadcast %c-1_i32_62 : i32 to vector<32x1xi32>
    %157 = arith.addi %16, %156 : vector<32x1xi32>
    %c0_i32_63 = arith.constant 0 : i32
    %158 = vector.broadcast %c0_i32_63 : i32 to vector<32x1xi32>
    %159 = arith.cmpi sge, %157, %158 : vector<32x1xi32>
    %c-1_i32_64 = arith.constant -1 : i32
    %160 = vector.broadcast %c-1_i32_64 : i32 to vector<32x1xi32>
    %161 = arith.addi %16, %160 : vector<32x1xi32>
    %c16_i32_65 = arith.constant 16 : i32
    %162 = vector.broadcast %c16_i32_65 : i32 to vector<32x1xi32>
    %163 = arith.cmpi slt, %161, %162 : vector<32x1xi32>
    %164 = arith.andi %159, %163 : vector<32x1xi1>
    %c0_i32_66 = arith.constant 0 : i32
    %165 = arith.sitofp %c0_i32_66 : i32 to f32
    %166 = vector.shape_cast %164 : vector<32x1xi1> to vector<32x1xi1>
    %167 = vector.broadcast %166 : vector<32x1xi1> to vector<32x64xi1>
    %168 = vector.broadcast %165 : f32 to vector<32x64xf32>
    %169 = arith.select %167, %155, %168 : vector<32x64xi1>, vector<32x64xf32>
    %170 = arith.truncf %169 : vector<32x64xf32> to vector<32x64xbf16>
    %c2_67 = arith.constant 2 : index
    %c0_68 = arith.constant 0 : index
    %c0_69 = arith.constant 0 : index
    %171 = vector.load %arg3[%c2_67, %c0_68, %c0_69] : memref<7x64x64xbf16, #tpu.memory_space<vmem>>, vector<1x64x64xbf16>
    %172 = vector.shape_cast %171 : vector<1x64x64xbf16> to vector<64x64xbf16>
    %cst_70 = arith.constant dense<0.000000e+00> : vector<32x64xf32>
    %173 = tpu.matmul %170, %172, %cst_70 {dimension_numbers = #tpu.dot_dimension_numbers<[1], [0], [0], [1], [0, 0, 1, 1], [], []>} : vector<32x64xbf16>, vector<64x64xbf16>, vector<32x64xf32> -> vector<32x64xf32>
    %174 = arith.addf %154, %173 : vector<32x64xf32>
    %175 = arith.truncf %110 : vector<32x64xf32> to vector<32x64xbf16>
    %c3_71 = arith.constant 3 : index
    %c0_72 = arith.constant 0 : index
    %c0_73 = arith.constant 0 : index
    %176 = vector.load %arg3[%c3_71, %c0_72, %c0_73] : memref<7x64x64xbf16, #tpu.memory_space<vmem>>, vector<1x64x64xbf16>
    %177 = vector.shape_cast %176 : vector<1x64x64xbf16> to vector<64x64xbf16>
    %cst_74 = arith.constant dense<0.000000e+00> : vector<32x64xf32>
    %178 = tpu.matmul %175, %177, %cst_74 {dimension_numbers = #tpu.dot_dimension_numbers<[1], [0], [0], [1], [0, 0, 1, 1], [], []>} : vector<32x64xbf16>, vector<64x64xbf16>, vector<32x64xf32> -> vector<32x64xf32>
    %179 = arith.addf %174, %178 : vector<32x64xf32>
    %180 = vector.extract_strided_slice %113 {offsets = [9, 0], sizes = [32, 64], strides = [1, 1]} : vector<48x64xf32> to vector<32x64xf32>
    %c1_i32_75 = arith.constant 1 : i32
    %181 = vector.broadcast %c1_i32_75 : i32 to vector<32x1xi32>
    %182 = arith.addi %16, %181 : vector<32x1xi32>
    %c0_i32_76 = arith.constant 0 : i32
    %183 = vector.broadcast %c0_i32_76 : i32 to vector<32x1xi32>
    %184 = arith.cmpi sge, %182, %183 : vector<32x1xi32>
    %c1_i32_77 = arith.constant 1 : i32
    %185 = vector.broadcast %c1_i32_77 : i32 to vector<32x1xi32>
    %186 = arith.addi %16, %185 : vector<32x1xi32>
    %c16_i32_78 = arith.constant 16 : i32
    %187 = vector.broadcast %c16_i32_78 : i32 to vector<32x1xi32>
    %188 = arith.cmpi slt, %186, %187 : vector<32x1xi32>
    %189 = arith.andi %184, %188 : vector<32x1xi1>
    %c0_i32_79 = arith.constant 0 : i32
    %190 = arith.sitofp %c0_i32_79 : i32 to f32
    %191 = vector.shape_cast %189 : vector<32x1xi1> to vector<32x1xi1>
    %192 = vector.broadcast %191 : vector<32x1xi1> to vector<32x64xi1>
    %193 = vector.broadcast %190 : f32 to vector<32x64xf32>
    %194 = arith.select %192, %180, %193 : vector<32x64xi1>, vector<32x64xf32>
    %195 = arith.truncf %194 : vector<32x64xf32> to vector<32x64xbf16>
    %c4_80 = arith.constant 4 : index
    %c0_81 = arith.constant 0 : index
    %c0_82 = arith.constant 0 : index
    %196 = vector.load %arg3[%c4_80, %c0_81, %c0_82] : memref<7x64x64xbf16, #tpu.memory_space<vmem>>, vector<1x64x64xbf16>
    %197 = vector.shape_cast %196 : vector<1x64x64xbf16> to vector<64x64xbf16>
    %cst_83 = arith.constant dense<0.000000e+00> : vector<32x64xf32>
    %198 = tpu.matmul %195, %197, %cst_83 {dimension_numbers = #tpu.dot_dimension_numbers<[1], [0], [0], [1], [0, 0, 1, 1], [], []>} : vector<32x64xbf16>, vector<64x64xbf16>, vector<32x64xf32> -> vector<32x64xf32>
    %199 = arith.addf %179, %198 : vector<32x64xf32>
    %200 = vector.extract_strided_slice %113 {offsets = [10, 0], sizes = [32, 64], strides = [1, 1]} : vector<48x64xf32> to vector<32x64xf32>
    %c2_i32_84 = arith.constant 2 : i32
    %201 = vector.broadcast %c2_i32_84 : i32 to vector<32x1xi32>
    %202 = arith.addi %16, %201 : vector<32x1xi32>
    %c0_i32_85 = arith.constant 0 : i32
    %203 = vector.broadcast %c0_i32_85 : i32 to vector<32x1xi32>
    %204 = arith.cmpi sge, %202, %203 : vector<32x1xi32>
    %c2_i32_86 = arith.constant 2 : i32
    %205 = vector.broadcast %c2_i32_86 : i32 to vector<32x1xi32>
    %206 = arith.addi %16, %205 : vector<32x1xi32>
    %c16_i32_87 = arith.constant 16 : i32
    %207 = vector.broadcast %c16_i32_87 : i32 to vector<32x1xi32>
    %208 = arith.cmpi slt, %206, %207 : vector<32x1xi32>
    %209 = arith.andi %204, %208 : vector<32x1xi1>
    %c0_i32_88 = arith.constant 0 : i32
    %210 = arith.sitofp %c0_i32_88 : i32 to f32
    %211 = vector.shape_cast %209 : vector<32x1xi1> to vector<32x1xi1>
    %212 = vector.broadcast %211 : vector<32x1xi1> to vector<32x64xi1>
    %213 = vector.broadcast %210 : f32 to vector<32x64xf32>
    %214 = arith.select %212, %200, %213 : vector<32x64xi1>, vector<32x64xf32>
    %215 = arith.truncf %214 : vector<32x64xf32> to vector<32x64xbf16>
    %c5 = arith.constant 5 : index
    %c0_89 = arith.constant 0 : index
    %c0_90 = arith.constant 0 : index
    %216 = vector.load %arg3[%c5, %c0_89, %c0_90] : memref<7x64x64xbf16, #tpu.memory_space<vmem>>, vector<1x64x64xbf16>
    %217 = vector.shape_cast %216 : vector<1x64x64xbf16> to vector<64x64xbf16>
    %cst_91 = arith.constant dense<0.000000e+00> : vector<32x64xf32>
    %218 = tpu.matmul %215, %217, %cst_91 {dimension_numbers = #tpu.dot_dimension_numbers<[1], [0], [0], [1], [0, 0, 1, 1], [], []>} : vector<32x64xbf16>, vector<64x64xbf16>, vector<32x64xf32> -> vector<32x64xf32>
    %219 = arith.addf %199, %218 : vector<32x64xf32>
    %220 = vector.extract_strided_slice %113 {offsets = [11, 0], sizes = [32, 64], strides = [1, 1]} : vector<48x64xf32> to vector<32x64xf32>
    %c3_i32 = arith.constant 3 : i32
    %221 = vector.broadcast %c3_i32 : i32 to vector<32x1xi32>
    %222 = arith.addi %16, %221 : vector<32x1xi32>
    %c0_i32_92 = arith.constant 0 : i32
    %223 = vector.broadcast %c0_i32_92 : i32 to vector<32x1xi32>
    %224 = arith.cmpi sge, %222, %223 : vector<32x1xi32>
    %c3_i32_93 = arith.constant 3 : i32
    %225 = vector.broadcast %c3_i32_93 : i32 to vector<32x1xi32>
    %226 = arith.addi %16, %225 : vector<32x1xi32>
    %c16_i32_94 = arith.constant 16 : i32
    %227 = vector.broadcast %c16_i32_94 : i32 to vector<32x1xi32>
    %228 = arith.cmpi slt, %226, %227 : vector<32x1xi32>
    %229 = arith.andi %224, %228 : vector<32x1xi1>
    %c0_i32_95 = arith.constant 0 : i32
    %230 = arith.sitofp %c0_i32_95 : i32 to f32
    %231 = vector.shape_cast %229 : vector<32x1xi1> to vector<32x1xi1>
    %232 = vector.broadcast %231 : vector<32x1xi1> to vector<32x64xi1>
    %233 = vector.broadcast %230 : f32 to vector<32x64xf32>
    %234 = arith.select %232, %220, %233 : vector<32x64xi1>, vector<32x64xf32>
    %235 = arith.truncf %234 : vector<32x64xf32> to vector<32x64xbf16>
    %c6 = arith.constant 6 : index
    %c0_96 = arith.constant 0 : index
    %c0_97 = arith.constant 0 : index
    %236 = vector.load %arg3[%c6, %c0_96, %c0_97] : memref<7x64x64xbf16, #tpu.memory_space<vmem>>, vector<1x64x64xbf16>
    %237 = vector.shape_cast %236 : vector<1x64x64xbf16> to vector<64x64xbf16>
    %cst_98 = arith.constant dense<0.000000e+00> : vector<32x64xf32>
    %238 = tpu.matmul %235, %237, %cst_98 {dimension_numbers = #tpu.dot_dimension_numbers<[1], [0], [0], [1], [0, 0, 1, 1], [], []>} : vector<32x64xbf16>, vector<64x64xbf16>, vector<32x64xf32> -> vector<32x64xf32>
    %239 = arith.addf %219, %238 : vector<32x64xf32>
    %240 = vector.broadcast %111 : vector<1x64xf32> to vector<32x64xf32>
    %241 = arith.addf %239, %240 : vector<32x64xf32>
    %cst_99 = arith.constant 0.000000e+00 : f32
    %242 = vector.broadcast %cst_99 : f32 to vector<32x64xf32>
    %243 = arith.maximumf %241, %242 : vector<32x64xf32>
    %c0_100 = arith.constant 0 : index
    %c0_101 = arith.constant 0 : index
    %244 = vector.load %arg6[%c0_100, %c0_101] : memref<1x64xf32, #tpu.memory_space<vmem>>, vector<1x64xf32>
    %cst_102 = arith.constant 0.000000e+00 : f32
    %245 = vector.broadcast %cst_102 : f32 to vector<8x64xf32>
    %246 = tpu.concatenate %245, %243, %245 in 0 : vector<8x64xf32>, vector<32x64xf32>, vector<8x64xf32> -> vector<48x64xf32>
    %cst_103 = arith.constant 0.000000e+00 : f32
    %247 = vector.broadcast %cst_103 : f32 to vector<32x64xf32>
    %248 = vector.extract_strided_slice %246 {offsets = [4, 0], sizes = [32, 64], strides = [1, 1]} : vector<48x64xf32> to vector<32x64xf32>
    %c-4_i32 = arith.constant -4 : i32
    %249 = vector.broadcast %c-4_i32 : i32 to vector<32x1xi32>
    %250 = arith.addi %16, %249 : vector<32x1xi32>
    %c0_i32_104 = arith.constant 0 : i32
    %251 = vector.broadcast %c0_i32_104 : i32 to vector<32x1xi32>
    %252 = arith.cmpi sge, %250, %251 : vector<32x1xi32>
    %c-4_i32_105 = arith.constant -4 : i32
    %253 = vector.broadcast %c-4_i32_105 : i32 to vector<32x1xi32>
    %254 = arith.addi %16, %253 : vector<32x1xi32>
    %c16_i32_106 = arith.constant 16 : i32
    %255 = vector.broadcast %c16_i32_106 : i32 to vector<32x1xi32>
    %256 = arith.cmpi slt, %254, %255 : vector<32x1xi32>
    %257 = arith.andi %252, %256 : vector<32x1xi1>
    %c0_i32_107 = arith.constant 0 : i32
    %258 = arith.sitofp %c0_i32_107 : i32 to f32
    %259 = vector.shape_cast %257 : vector<32x1xi1> to vector<32x1xi1>
    %260 = vector.broadcast %259 : vector<32x1xi1> to vector<32x64xi1>
    %261 = vector.broadcast %258 : f32 to vector<32x64xf32>
    %262 = arith.select %260, %248, %261 : vector<32x64xi1>, vector<32x64xf32>
    %263 = arith.truncf %262 : vector<32x64xf32> to vector<32x64xbf16>
    %c0_108 = arith.constant 0 : index
    %c0_109 = arith.constant 0 : index
    %c0_110 = arith.constant 0 : index
    %264 = vector.load %arg5[%c0_108, %c0_109, %c0_110] : memref<5x64x64xbf16, #tpu.memory_space<vmem>>, vector<1x64x64xbf16>
    %265 = vector.shape_cast %264 : vector<1x64x64xbf16> to vector<64x64xbf16>
    %cst_111 = arith.constant dense<0.000000e+00> : vector<32x64xf32>
    %266 = tpu.matmul %263, %265, %cst_111 {dimension_numbers = #tpu.dot_dimension_numbers<[1], [0], [0], [1], [0, 0, 1, 1], [], []>} : vector<32x64xbf16>, vector<64x64xbf16>, vector<32x64xf32> -> vector<32x64xf32>
    %267 = arith.addf %247, %266 : vector<32x64xf32>
    %268 = vector.extract_strided_slice %246 {offsets = [6, 0], sizes = [32, 64], strides = [1, 1]} : vector<48x64xf32> to vector<32x64xf32>
    %c-2_i32_112 = arith.constant -2 : i32
    %269 = vector.broadcast %c-2_i32_112 : i32 to vector<32x1xi32>
    %270 = arith.addi %16, %269 : vector<32x1xi32>
    %c0_i32_113 = arith.constant 0 : i32
    %271 = vector.broadcast %c0_i32_113 : i32 to vector<32x1xi32>
    %272 = arith.cmpi sge, %270, %271 : vector<32x1xi32>
    %c-2_i32_114 = arith.constant -2 : i32
    %273 = vector.broadcast %c-2_i32_114 : i32 to vector<32x1xi32>
    %274 = arith.addi %16, %273 : vector<32x1xi32>
    %c16_i32_115 = arith.constant 16 : i32
    %275 = vector.broadcast %c16_i32_115 : i32 to vector<32x1xi32>
    %276 = arith.cmpi slt, %274, %275 : vector<32x1xi32>
    %277 = arith.andi %272, %276 : vector<32x1xi1>
    %c0_i32_116 = arith.constant 0 : i32
    %278 = arith.sitofp %c0_i32_116 : i32 to f32
    %279 = vector.shape_cast %277 : vector<32x1xi1> to vector<32x1xi1>
    %280 = vector.broadcast %279 : vector<32x1xi1> to vector<32x64xi1>
    %281 = vector.broadcast %278 : f32 to vector<32x64xf32>
    %282 = arith.select %280, %268, %281 : vector<32x64xi1>, vector<32x64xf32>
    %283 = arith.truncf %282 : vector<32x64xf32> to vector<32x64xbf16>
    %c1_117 = arith.constant 1 : index
    %c0_118 = arith.constant 0 : index
    %c0_119 = arith.constant 0 : index
    %284 = vector.load %arg5[%c1_117, %c0_118, %c0_119] : memref<5x64x64xbf16, #tpu.memory_space<vmem>>, vector<1x64x64xbf16>
    %285 = vector.shape_cast %284 : vector<1x64x64xbf16> to vector<64x64xbf16>
    %cst_120 = arith.constant dense<0.000000e+00> : vector<32x64xf32>
    %286 = tpu.matmul %283, %285, %cst_120 {dimension_numbers = #tpu.dot_dimension_numbers<[1], [0], [0], [1], [0, 0, 1, 1], [], []>} : vector<32x64xbf16>, vector<64x64xbf16>, vector<32x64xf32> -> vector<32x64xf32>
    %287 = arith.addf %267, %286 : vector<32x64xf32>
    %288 = arith.truncf %243 : vector<32x64xf32> to vector<32x64xbf16>
    %c2_121 = arith.constant 2 : index
    %c0_122 = arith.constant 0 : index
    %c0_123 = arith.constant 0 : index
    %289 = vector.load %arg5[%c2_121, %c0_122, %c0_123] : memref<5x64x64xbf16, #tpu.memory_space<vmem>>, vector<1x64x64xbf16>
    %290 = vector.shape_cast %289 : vector<1x64x64xbf16> to vector<64x64xbf16>
    %cst_124 = arith.constant dense<0.000000e+00> : vector<32x64xf32>
    %291 = tpu.matmul %288, %290, %cst_124 {dimension_numbers = #tpu.dot_dimension_numbers<[1], [0], [0], [1], [0, 0, 1, 1], [], []>} : vector<32x64xbf16>, vector<64x64xbf16>, vector<32x64xf32> -> vector<32x64xf32>
    %292 = arith.addf %287, %291 : vector<32x64xf32>
    %293 = vector.extract_strided_slice %246 {offsets = [10, 0], sizes = [32, 64], strides = [1, 1]} : vector<48x64xf32> to vector<32x64xf32>
    %c2_i32_125 = arith.constant 2 : i32
    %294 = vector.broadcast %c2_i32_125 : i32 to vector<32x1xi32>
    %295 = arith.addi %16, %294 : vector<32x1xi32>
    %c0_i32_126 = arith.constant 0 : i32
    %296 = vector.broadcast %c0_i32_126 : i32 to vector<32x1xi32>
    %297 = arith.cmpi sge, %295, %296 : vector<32x1xi32>
    %c2_i32_127 = arith.constant 2 : i32
    %298 = vector.broadcast %c2_i32_127 : i32 to vector<32x1xi32>
    %299 = arith.addi %16, %298 : vector<32x1xi32>
    %c16_i32_128 = arith.constant 16 : i32
    %300 = vector.broadcast %c16_i32_128 : i32 to vector<32x1xi32>
    %301 = arith.cmpi slt, %299, %300 : vector<32x1xi32>
    %302 = arith.andi %297, %301 : vector<32x1xi1>
    %c0_i32_129 = arith.constant 0 : i32
    %303 = arith.sitofp %c0_i32_129 : i32 to f32
    %304 = vector.shape_cast %302 : vector<32x1xi1> to vector<32x1xi1>
    %305 = vector.broadcast %304 : vector<32x1xi1> to vector<32x64xi1>
    %306 = vector.broadcast %303 : f32 to vector<32x64xf32>
    %307 = arith.select %305, %293, %306 : vector<32x64xi1>, vector<32x64xf32>
    %308 = arith.truncf %307 : vector<32x64xf32> to vector<32x64xbf16>
    %c3_130 = arith.constant 3 : index
    %c0_131 = arith.constant 0 : index
    %c0_132 = arith.constant 0 : index
    %309 = vector.load %arg5[%c3_130, %c0_131, %c0_132] : memref<5x64x64xbf16, #tpu.memory_space<vmem>>, vector<1x64x64xbf16>
    %310 = vector.shape_cast %309 : vector<1x64x64xbf16> to vector<64x64xbf16>
    %cst_133 = arith.constant dense<0.000000e+00> : vector<32x64xf32>
    %311 = tpu.matmul %308, %310, %cst_133 {dimension_numbers = #tpu.dot_dimension_numbers<[1], [0], [0], [1], [0, 0, 1, 1], [], []>} : vector<32x64xbf16>, vector<64x64xbf16>, vector<32x64xf32> -> vector<32x64xf32>
    %312 = arith.addf %292, %311 : vector<32x64xf32>
    %313 = vector.extract_strided_slice %246 {offsets = [12, 0], sizes = [32, 64], strides = [1, 1]} : vector<48x64xf32> to vector<32x64xf32>
    %c4_i32 = arith.constant 4 : i32
    %314 = vector.broadcast %c4_i32 : i32 to vector<32x1xi32>
    %315 = arith.addi %16, %314 : vector<32x1xi32>
    %c0_i32_134 = arith.constant 0 : i32
    %316 = vector.broadcast %c0_i32_134 : i32 to vector<32x1xi32>
    %317 = arith.cmpi sge, %315, %316 : vector<32x1xi32>
    %c4_i32_135 = arith.constant 4 : i32
    %318 = vector.broadcast %c4_i32_135 : i32 to vector<32x1xi32>
    %319 = arith.addi %16, %318 : vector<32x1xi32>
    %c16_i32_136 = arith.constant 16 : i32
    %320 = vector.broadcast %c16_i32_136 : i32 to vector<32x1xi32>
    %321 = arith.cmpi slt, %319, %320 : vector<32x1xi32>
    %322 = arith.andi %317, %321 : vector<32x1xi1>
    %c0_i32_137 = arith.constant 0 : i32
    %323 = arith.sitofp %c0_i32_137 : i32 to f32
    %324 = vector.shape_cast %322 : vector<32x1xi1> to vector<32x1xi1>
    %325 = vector.broadcast %324 : vector<32x1xi1> to vector<32x64xi1>
    %326 = vector.broadcast %323 : f32 to vector<32x64xf32>
    %327 = arith.select %325, %313, %326 : vector<32x64xi1>, vector<32x64xf32>
    %328 = arith.truncf %327 : vector<32x64xf32> to vector<32x64xbf16>
    %c4_138 = arith.constant 4 : index
    %c0_139 = arith.constant 0 : index
    %c0_140 = arith.constant 0 : index
    %329 = vector.load %arg5[%c4_138, %c0_139, %c0_140] : memref<5x64x64xbf16, #tpu.memory_space<vmem>>, vector<1x64x64xbf16>
    %330 = vector.shape_cast %329 : vector<1x64x64xbf16> to vector<64x64xbf16>
    %cst_141 = arith.constant dense<0.000000e+00> : vector<32x64xf32>
    %331 = tpu.matmul %328, %330, %cst_141 {dimension_numbers = #tpu.dot_dimension_numbers<[1], [0], [0], [1], [0, 0, 1, 1], [], []>} : vector<32x64xbf16>, vector<64x64xbf16>, vector<32x64xf32> -> vector<32x64xf32>
    %332 = arith.addf %312, %331 : vector<32x64xf32>
    %333 = vector.broadcast %244 : vector<1x64xf32> to vector<32x64xf32>
    %334 = arith.addf %332, %333 : vector<32x64xf32>
    %cst_142 = arith.constant 0.000000e+00 : f32
    %335 = vector.broadcast %cst_142 : f32 to vector<32x64xf32>
    %336 = arith.maximumf %334, %335 : vector<32x64xf32>
    %c0_143 = arith.constant 0 : index
    %c0_144 = arith.constant 0 : index
    %337 = vector.load %arg8[%c0_143, %c0_144] : memref<1x64xf32, #tpu.memory_space<vmem>>, vector<1x64xf32>
    %cst_145 = arith.constant 0.000000e+00 : f32
    %338 = vector.broadcast %cst_145 : f32 to vector<8x64xf32>
    %339 = tpu.concatenate %338, %336, %338 in 0 : vector<8x64xf32>, vector<32x64xf32>, vector<8x64xf32> -> vector<48x64xf32>
    %cst_146 = arith.constant 0.000000e+00 : f32
    %340 = vector.broadcast %cst_146 : f32 to vector<32x64xf32>
    %341 = vector.extract_strided_slice %339 {offsets = [0, 0], sizes = [32, 64], strides = [1, 1]} : vector<48x64xf32> to vector<32x64xf32>
    %c-8_i32 = arith.constant -8 : i32
    %342 = vector.broadcast %c-8_i32 : i32 to vector<32x1xi32>
    %343 = arith.addi %16, %342 : vector<32x1xi32>
    %c0_i32_147 = arith.constant 0 : i32
    %344 = vector.broadcast %c0_i32_147 : i32 to vector<32x1xi32>
    %345 = arith.cmpi sge, %343, %344 : vector<32x1xi32>
    %c-8_i32_148 = arith.constant -8 : i32
    %346 = vector.broadcast %c-8_i32_148 : i32 to vector<32x1xi32>
    %347 = arith.addi %16, %346 : vector<32x1xi32>
    %c16_i32_149 = arith.constant 16 : i32
    %348 = vector.broadcast %c16_i32_149 : i32 to vector<32x1xi32>
    %349 = arith.cmpi slt, %347, %348 : vector<32x1xi32>
    %350 = arith.andi %345, %349 : vector<32x1xi1>
    %c0_i32_150 = arith.constant 0 : i32
    %351 = arith.sitofp %c0_i32_150 : i32 to f32
    %352 = vector.shape_cast %350 : vector<32x1xi1> to vector<32x1xi1>
    %353 = vector.broadcast %352 : vector<32x1xi1> to vector<32x64xi1>
    %354 = vector.broadcast %351 : f32 to vector<32x64xf32>
    %355 = arith.select %353, %341, %354 : vector<32x64xi1>, vector<32x64xf32>
    %356 = arith.truncf %355 : vector<32x64xf32> to vector<32x64xbf16>
    %c0_151 = arith.constant 0 : index
    %c0_152 = arith.constant 0 : index
    %c0_153 = arith.constant 0 : index
    %357 = vector.load %arg7[%c0_151, %c0_152, %c0_153] : memref<5x64x64xbf16, #tpu.memory_space<vmem>>, vector<1x64x64xbf16>
    %358 = vector.shape_cast %357 : vector<1x64x64xbf16> to vector<64x64xbf16>
    %cst_154 = arith.constant dense<0.000000e+00> : vector<32x64xf32>
    %359 = tpu.matmul %356, %358, %cst_154 {dimension_numbers = #tpu.dot_dimension_numbers<[1], [0], [0], [1], [0, 0, 1, 1], [], []>} : vector<32x64xbf16>, vector<64x64xbf16>, vector<32x64xf32> -> vector<32x64xf32>
    %360 = arith.addf %340, %359 : vector<32x64xf32>
    %361 = vector.extract_strided_slice %339 {offsets = [4, 0], sizes = [32, 64], strides = [1, 1]} : vector<48x64xf32> to vector<32x64xf32>
    %c-4_i32_155 = arith.constant -4 : i32
    %362 = vector.broadcast %c-4_i32_155 : i32 to vector<32x1xi32>
    %363 = arith.addi %16, %362 : vector<32x1xi32>
    %c0_i32_156 = arith.constant 0 : i32
    %364 = vector.broadcast %c0_i32_156 : i32 to vector<32x1xi32>
    %365 = arith.cmpi sge, %363, %364 : vector<32x1xi32>
    %c-4_i32_157 = arith.constant -4 : i32
    %366 = vector.broadcast %c-4_i32_157 : i32 to vector<32x1xi32>
    %367 = arith.addi %16, %366 : vector<32x1xi32>
    %c16_i32_158 = arith.constant 16 : i32
    %368 = vector.broadcast %c16_i32_158 : i32 to vector<32x1xi32>
    %369 = arith.cmpi slt, %367, %368 : vector<32x1xi32>
    %370 = arith.andi %365, %369 : vector<32x1xi1>
    %c0_i32_159 = arith.constant 0 : i32
    %371 = arith.sitofp %c0_i32_159 : i32 to f32
    %372 = vector.shape_cast %370 : vector<32x1xi1> to vector<32x1xi1>
    %373 = vector.broadcast %372 : vector<32x1xi1> to vector<32x64xi1>
    %374 = vector.broadcast %371 : f32 to vector<32x64xf32>
    %375 = arith.select %373, %361, %374 : vector<32x64xi1>, vector<32x64xf32>
    %376 = arith.truncf %375 : vector<32x64xf32> to vector<32x64xbf16>
    %c1_160 = arith.constant 1 : index
    %c0_161 = arith.constant 0 : index
    %c0_162 = arith.constant 0 : index
    %377 = vector.load %arg7[%c1_160, %c0_161, %c0_162] : memref<5x64x64xbf16, #tpu.memory_space<vmem>>, vector<1x64x64xbf16>
    %378 = vector.shape_cast %377 : vector<1x64x64xbf16> to vector<64x64xbf16>
    %cst_163 = arith.constant dense<0.000000e+00> : vector<32x64xf32>
    %379 = tpu.matmul %376, %378, %cst_163 {dimension_numbers = #tpu.dot_dimension_numbers<[1], [0], [0], [1], [0, 0, 1, 1], [], []>} : vector<32x64xbf16>, vector<64x64xbf16>, vector<32x64xf32> -> vector<32x64xf32>
    %380 = arith.addf %360, %379 : vector<32x64xf32>
    %381 = arith.truncf %336 : vector<32x64xf32> to vector<32x64xbf16>
    %c2_164 = arith.constant 2 : index
    %c0_165 = arith.constant 0 : index
    %c0_166 = arith.constant 0 : index
    %382 = vector.load %arg7[%c2_164, %c0_165, %c0_166] : memref<5x64x64xbf16, #tpu.memory_space<vmem>>, vector<1x64x64xbf16>
    %383 = vector.shape_cast %382 : vector<1x64x64xbf16> to vector<64x64xbf16>
    %cst_167 = arith.constant dense<0.000000e+00> : vector<32x64xf32>
    %384 = tpu.matmul %381, %383, %cst_167 {dimension_numbers = #tpu.dot_dimension_numbers<[1], [0], [0], [1], [0, 0, 1, 1], [], []>} : vector<32x64xbf16>, vector<64x64xbf16>, vector<32x64xf32> -> vector<32x64xf32>
    %385 = arith.addf %380, %384 : vector<32x64xf32>
    %386 = vector.extract_strided_slice %339 {offsets = [12, 0], sizes = [32, 64], strides = [1, 1]} : vector<48x64xf32> to vector<32x64xf32>
    %c4_i32_168 = arith.constant 4 : i32
    %387 = vector.broadcast %c4_i32_168 : i32 to vector<32x1xi32>
    %388 = arith.addi %16, %387 : vector<32x1xi32>
    %c0_i32_169 = arith.constant 0 : i32
    %389 = vector.broadcast %c0_i32_169 : i32 to vector<32x1xi32>
    %390 = arith.cmpi sge, %388, %389 : vector<32x1xi32>
    %c4_i32_170 = arith.constant 4 : i32
    %391 = vector.broadcast %c4_i32_170 : i32 to vector<32x1xi32>
    %392 = arith.addi %16, %391 : vector<32x1xi32>
    %c16_i32_171 = arith.constant 16 : i32
    %393 = vector.broadcast %c16_i32_171 : i32 to vector<32x1xi32>
    %394 = arith.cmpi slt, %392, %393 : vector<32x1xi32>
    %395 = arith.andi %390, %394 : vector<32x1xi1>
    %c0_i32_172 = arith.constant 0 : i32
    %396 = arith.sitofp %c0_i32_172 : i32 to f32
    %397 = vector.shape_cast %395 : vector<32x1xi1> to vector<32x1xi1>
    %398 = vector.broadcast %397 : vector<32x1xi1> to vector<32x64xi1>
    %399 = vector.broadcast %396 : f32 to vector<32x64xf32>
    %400 = arith.select %398, %386, %399 : vector<32x64xi1>, vector<32x64xf32>
    %401 = arith.truncf %400 : vector<32x64xf32> to vector<32x64xbf16>
    %c3_173 = arith.constant 3 : index
    %c0_174 = arith.constant 0 : index
    %c0_175 = arith.constant 0 : index
    %402 = vector.load %arg7[%c3_173, %c0_174, %c0_175] : memref<5x64x64xbf16, #tpu.memory_space<vmem>>, vector<1x64x64xbf16>
    %403 = vector.shape_cast %402 : vector<1x64x64xbf16> to vector<64x64xbf16>
    %cst_176 = arith.constant dense<0.000000e+00> : vector<32x64xf32>
    %404 = tpu.matmul %401, %403, %cst_176 {dimension_numbers = #tpu.dot_dimension_numbers<[1], [0], [0], [1], [0, 0, 1, 1], [], []>} : vector<32x64xbf16>, vector<64x64xbf16>, vector<32x64xf32> -> vector<32x64xf32>
    %405 = arith.addf %385, %404 : vector<32x64xf32>
    %406 = vector.extract_strided_slice %339 {offsets = [16, 0], sizes = [32, 64], strides = [1, 1]} : vector<48x64xf32> to vector<32x64xf32>
    %c8_i32 = arith.constant 8 : i32
    %407 = vector.broadcast %c8_i32 : i32 to vector<32x1xi32>
    %408 = arith.addi %16, %407 : vector<32x1xi32>
    %c0_i32_177 = arith.constant 0 : i32
    %409 = vector.broadcast %c0_i32_177 : i32 to vector<32x1xi32>
    %410 = arith.cmpi sge, %408, %409 : vector<32x1xi32>
    %c8_i32_178 = arith.constant 8 : i32
    %411 = vector.broadcast %c8_i32_178 : i32 to vector<32x1xi32>
    %412 = arith.addi %16, %411 : vector<32x1xi32>
    %c16_i32_179 = arith.constant 16 : i32
    %413 = vector.broadcast %c16_i32_179 : i32 to vector<32x1xi32>
    %414 = arith.cmpi slt, %412, %413 : vector<32x1xi32>
    %415 = arith.andi %410, %414 : vector<32x1xi1>
    %c0_i32_180 = arith.constant 0 : i32
    %416 = arith.sitofp %c0_i32_180 : i32 to f32
    %417 = vector.shape_cast %415 : vector<32x1xi1> to vector<32x1xi1>
    %418 = vector.broadcast %417 : vector<32x1xi1> to vector<32x64xi1>
    %419 = vector.broadcast %416 : f32 to vector<32x64xf32>
    %420 = arith.select %418, %406, %419 : vector<32x64xi1>, vector<32x64xf32>
    %421 = arith.truncf %420 : vector<32x64xf32> to vector<32x64xbf16>
    %c4_181 = arith.constant 4 : index
    %c0_182 = arith.constant 0 : index
    %c0_183 = arith.constant 0 : index
    %422 = vector.load %arg7[%c4_181, %c0_182, %c0_183] : memref<5x64x64xbf16, #tpu.memory_space<vmem>>, vector<1x64x64xbf16>
    %423 = vector.shape_cast %422 : vector<1x64x64xbf16> to vector<64x64xbf16>
    %cst_184 = arith.constant dense<0.000000e+00> : vector<32x64xf32>
    %424 = tpu.matmul %421, %423, %cst_184 {dimension_numbers = #tpu.dot_dimension_numbers<[1], [0], [0], [1], [0, 0, 1, 1], [], []>} : vector<32x64xbf16>, vector<64x64xbf16>, vector<32x64xf32> -> vector<32x64xf32>
    %425 = arith.addf %405, %424 : vector<32x64xf32>
    %426 = vector.broadcast %337 : vector<1x64xf32> to vector<32x64xf32>
    %427 = arith.addf %425, %426 : vector<32x64xf32>
    %cst_185 = arith.constant 0.000000e+00 : f32
    %428 = vector.broadcast %cst_185 : f32 to vector<32x64xf32>
    %429 = arith.maximumf %427, %428 : vector<32x64xf32>
    %c0_186 = arith.constant 0 : index
    %c0_187 = arith.constant 0 : index
    %430 = vector.load %arg10[%c0_186, %c0_187] : memref<1x64xf32, #tpu.memory_space<vmem>>, vector<1x64xf32>
    %cst_188 = arith.constant 0.000000e+00 : f32
    %431 = vector.broadcast %cst_188 : f32 to vector<8x64xf32>
    %432 = tpu.concatenate %431, %429, %431 in 0 : vector<8x64xf32>, vector<32x64xf32>, vector<8x64xf32> -> vector<48x64xf32>
    %cst_189 = arith.constant 0.000000e+00 : f32
    %433 = vector.broadcast %cst_189 : f32 to vector<32x64xf32>
    %434 = vector.extract_strided_slice %432 {offsets = [0, 0], sizes = [32, 64], strides = [1, 1]} : vector<48x64xf32> to vector<32x64xf32>
    %c-8_i32_190 = arith.constant -8 : i32
    %435 = vector.broadcast %c-8_i32_190 : i32 to vector<32x1xi32>
    %436 = arith.addi %16, %435 : vector<32x1xi32>
    %c0_i32_191 = arith.constant 0 : i32
    %437 = vector.broadcast %c0_i32_191 : i32 to vector<32x1xi32>
    %438 = arith.cmpi sge, %436, %437 : vector<32x1xi32>
    %c-8_i32_192 = arith.constant -8 : i32
    %439 = vector.broadcast %c-8_i32_192 : i32 to vector<32x1xi32>
    %440 = arith.addi %16, %439 : vector<32x1xi32>
    %c16_i32_193 = arith.constant 16 : i32
    %441 = vector.broadcast %c16_i32_193 : i32 to vector<32x1xi32>
    %442 = arith.cmpi slt, %440, %441 : vector<32x1xi32>
    %443 = arith.andi %438, %442 : vector<32x1xi1>
    %c0_i32_194 = arith.constant 0 : i32
    %444 = arith.sitofp %c0_i32_194 : i32 to f32
    %445 = vector.shape_cast %443 : vector<32x1xi1> to vector<32x1xi1>
    %446 = vector.broadcast %445 : vector<32x1xi1> to vector<32x64xi1>
    %447 = vector.broadcast %444 : f32 to vector<32x64xf32>
    %448 = arith.select %446, %434, %447 : vector<32x64xi1>, vector<32x64xf32>
    %449 = arith.truncf %448 : vector<32x64xf32> to vector<32x64xbf16>
    %c1_195 = arith.constant 1 : index
    %c0_196 = arith.constant 0 : index
    %c0_197 = arith.constant 0 : index
    %450 = vector.load %arg9[%c1_195, %c0_196, %c0_197] : memref<5x64x64xbf16, #tpu.memory_space<vmem>>, vector<1x64x64xbf16>
    %451 = vector.shape_cast %450 : vector<1x64x64xbf16> to vector<64x64xbf16>
    %cst_198 = arith.constant dense<0.000000e+00> : vector<32x64xf32>
    %452 = tpu.matmul %449, %451, %cst_198 {dimension_numbers = #tpu.dot_dimension_numbers<[1], [0], [0], [1], [0, 0, 1, 1], [], []>} : vector<32x64xbf16>, vector<64x64xbf16>, vector<32x64xf32> -> vector<32x64xf32>
    %453 = arith.addf %433, %452 : vector<32x64xf32>
    %454 = arith.truncf %429 : vector<32x64xf32> to vector<32x64xbf16>
    %c2_199 = arith.constant 2 : index
    %c0_200 = arith.constant 0 : index
    %c0_201 = arith.constant 0 : index
    %455 = vector.load %arg9[%c2_199, %c0_200, %c0_201] : memref<5x64x64xbf16, #tpu.memory_space<vmem>>, vector<1x64x64xbf16>
    %456 = vector.shape_cast %455 : vector<1x64x64xbf16> to vector<64x64xbf16>
    %cst_202 = arith.constant dense<0.000000e+00> : vector<32x64xf32>
    %457 = tpu.matmul %454, %456, %cst_202 {dimension_numbers = #tpu.dot_dimension_numbers<[1], [0], [0], [1], [0, 0, 1, 1], [], []>} : vector<32x64xbf16>, vector<64x64xbf16>, vector<32x64xf32> -> vector<32x64xf32>
    %458 = arith.addf %453, %457 : vector<32x64xf32>
    %459 = vector.extract_strided_slice %432 {offsets = [16, 0], sizes = [32, 64], strides = [1, 1]} : vector<48x64xf32> to vector<32x64xf32>
    %c8_i32_203 = arith.constant 8 : i32
    %460 = vector.broadcast %c8_i32_203 : i32 to vector<32x1xi32>
    %461 = arith.addi %16, %460 : vector<32x1xi32>
    %c0_i32_204 = arith.constant 0 : i32
    %462 = vector.broadcast %c0_i32_204 : i32 to vector<32x1xi32>
    %463 = arith.cmpi sge, %461, %462 : vector<32x1xi32>
    %c8_i32_205 = arith.constant 8 : i32
    %464 = vector.broadcast %c8_i32_205 : i32 to vector<32x1xi32>
    %465 = arith.addi %16, %464 : vector<32x1xi32>
    %c16_i32_206 = arith.constant 16 : i32
    %466 = vector.broadcast %c16_i32_206 : i32 to vector<32x1xi32>
    %467 = arith.cmpi slt, %465, %466 : vector<32x1xi32>
    %468 = arith.andi %463, %467 : vector<32x1xi1>
    %c0_i32_207 = arith.constant 0 : i32
    %469 = arith.sitofp %c0_i32_207 : i32 to f32
    %470 = vector.shape_cast %468 : vector<32x1xi1> to vector<32x1xi1>
    %471 = vector.broadcast %470 : vector<32x1xi1> to vector<32x64xi1>
    %472 = vector.broadcast %469 : f32 to vector<32x64xf32>
    %473 = arith.select %471, %459, %472 : vector<32x64xi1>, vector<32x64xf32>
    %474 = arith.truncf %473 : vector<32x64xf32> to vector<32x64xbf16>
    %c3_208 = arith.constant 3 : index
    %c0_209 = arith.constant 0 : index
    %c0_210 = arith.constant 0 : index
    %475 = vector.load %arg9[%c3_208, %c0_209, %c0_210] : memref<5x64x64xbf16, #tpu.memory_space<vmem>>, vector<1x64x64xbf16>
    %476 = vector.shape_cast %475 : vector<1x64x64xbf16> to vector<64x64xbf16>
    %cst_211 = arith.constant dense<0.000000e+00> : vector<32x64xf32>
    %477 = tpu.matmul %474, %476, %cst_211 {dimension_numbers = #tpu.dot_dimension_numbers<[1], [0], [0], [1], [0, 0, 1, 1], [], []>} : vector<32x64xbf16>, vector<64x64xbf16>, vector<32x64xf32> -> vector<32x64xf32>
    %478 = arith.addf %458, %477 : vector<32x64xf32>
    %479 = vector.broadcast %430 : vector<1x64xf32> to vector<32x64xf32>
    %480 = arith.addf %478, %479 : vector<32x64xf32>
    %cst_212 = arith.constant 0.000000e+00 : f32
    %481 = vector.broadcast %cst_212 : f32 to vector<32x64xf32>
    %482 = arith.maximumf %480, %481 : vector<32x64xf32>
    %c0_213 = arith.constant 0 : index
    %c0_214 = arith.constant 0 : index
    %483 = vector.load %arg12[%c0_213, %c0_214] : memref<1x64xf32, #tpu.memory_space<vmem>>, vector<1x64xf32>
    %cst_215 = arith.constant 0.000000e+00 : f32
    %484 = vector.broadcast %cst_215 : f32 to vector<32x64xf32>
    %485 = arith.truncf %482 : vector<32x64xf32> to vector<32x64xbf16>
    %c2_216 = arith.constant 2 : index
    %c0_217 = arith.constant 0 : index
    %c0_218 = arith.constant 0 : index
    %486 = vector.load %arg11[%c2_216, %c0_217, %c0_218] : memref<5x64x64xbf16, #tpu.memory_space<vmem>>, vector<1x64x64xbf16>
    %487 = vector.shape_cast %486 : vector<1x64x64xbf16> to vector<64x64xbf16>
    %cst_219 = arith.constant dense<0.000000e+00> : vector<32x64xf32>
    %488 = tpu.matmul %485, %487, %cst_219 {dimension_numbers = #tpu.dot_dimension_numbers<[1], [0], [0], [1], [0, 0, 1, 1], [], []>} : vector<32x64xbf16>, vector<64x64xbf16>, vector<32x64xf32> -> vector<32x64xf32>
    %489 = arith.addf %484, %488 : vector<32x64xf32>
    %490 = vector.broadcast %483 : vector<1x64xf32> to vector<32x64xf32>
    %491 = arith.addf %489, %490 : vector<32x64xf32>
    %cst_220 = arith.constant 0.000000e+00 : f32
    %492 = vector.broadcast %cst_220 : f32 to vector<32x64xf32>
    %493 = arith.maximumf %491, %492 : vector<32x64xf32>
    %c0_221 = arith.constant 0 : index
    %c0_222 = arith.constant 0 : index
    %494 = vector.load %arg14[%c0_221, %c0_222] : memref<1x16xf32, #tpu.memory_space<vmem>>, vector<1x16xf32>
    %cst_223 = arith.constant 0.000000e+00 : f32
    %495 = vector.broadcast %cst_223 : f32 to vector<32x16xf32>
    %496 = arith.truncf %493 : vector<32x64xf32> to vector<32x64xbf16>
    %c0_224 = arith.constant 0 : index
    %c0_225 = arith.constant 0 : index
    %c0_226 = arith.constant 0 : index
    %497 = vector.load %arg13[%c0_224, %c0_225, %c0_226] : memref<1x64x16xbf16, #tpu.memory_space<vmem>>, vector<1x64x16xbf16>
    %498 = vector.shape_cast %497 : vector<1x64x16xbf16> to vector<64x16xbf16>
    %cst_227 = arith.constant dense<0.000000e+00> : vector<32x16xf32>
    %499 = tpu.matmul %496, %498, %cst_227 {dimension_numbers = #tpu.dot_dimension_numbers<[1], [0], [0], [1], [0, 0, 1, 1], [], []>} : vector<32x64xbf16>, vector<64x16xbf16>, vector<32x16xf32> -> vector<32x16xf32>
    %500 = arith.addf %495, %499 : vector<32x16xf32>
    %501 = vector.broadcast %494 : vector<1x16xf32> to vector<32x16xf32>
    %502 = arith.addf %500, %501 : vector<32x16xf32>
    %cst_228 = arith.constant 0.000000e+00 : f32
    %503 = vector.broadcast %cst_228 : f32 to vector<32x16xf32>
    %504 = arith.maximumf %502, %503 : vector<32x16xf32>
    %c0_229 = arith.constant 0 : index
    %c0_230 = arith.constant 0 : index
    %505 = vector.load %arg15[%c0_229, %c0_230] : memref<16x128xf32, #tpu.memory_space<vmem>>, vector<16x128xf32>
    %cst_231 = arith.constant dense<0.000000e+00> : vector<32x128xf32>
    %506 = tpu.matmul %504, %505, %cst_231 {dimension_numbers = #tpu.dot_dimension_numbers<[1], [0], [0], [1], [0, 0, 1, 1], [], []>} : vector<32x16xf32>, vector<16x128xf32>, vector<32x128xf32> -> vector<32x128xf32>
    %c0_232 = arith.constant 0 : index
    %c0_233 = arith.constant 0 : index
    %507 = vector.load %arg17[%c0_232, %c0_233] : memref<1x128xf32, #tpu.memory_space<vmem>>, vector<1x128xf32>
    %508 = vector.broadcast %507 : vector<1x128xf32> to vector<32x128xf32>
    %509 = arith.addf %506, %508 : vector<32x128xf32>
    %510 = vector.shape_cast %509 : vector<32x128xf32> to vector<2x16x128xf32>
    %c0_234 = arith.constant 0 : index
    %c0_235 = arith.constant 0 : index
    %511 = vector.load %arg16[%c0_234, %c0_235] : memref<16x128xf32, #tpu.memory_space<vmem>>, vector<16x128xf32>
    %cst_236 = arith.constant dense<0.000000e+00> : vector<32x128xf32>
    %512 = tpu.matmul %504, %511, %cst_236 {dimension_numbers = #tpu.dot_dimension_numbers<[1], [0], [0], [1], [0, 0, 1, 1], [], []>} : vector<32x16xf32>, vector<16x128xf32>, vector<32x128xf32> -> vector<32x128xf32>
    %513 = vector.shape_cast %512 : vector<32x128xf32> to vector<2x16x128xf32>
    %c0_237 = arith.constant 0 : index
    %c0_238 = arith.constant 0 : index
    %514 = vector.load %arg18[%c0_237, %c0_238] : memref<32x128xf32, #tpu.memory_space<vmem>>, vector<32x128xf32>
    %cst_239 = arith.constant 0.000000e+00 : f32
    %515 = vector.broadcast %cst_239 : f32 to vector<2x32xf32>
    %cst_240 = arith.constant 0.000000e+00 : f32
    %516 = vector.broadcast %cst_240 : f32 to vector<2x32xf32>
    %517 = vector.extract_strided_slice %510 {offsets = [0, 0, 0], sizes = [2, 1, 128], strides = [1, 1, 1]} : vector<2x16x128xf32> to vector<2x1x128xf32>
    %518 = vector.shape_cast %517 : vector<2x1x128xf32> to vector<2x128xf32>
    %519 = vector.extract_strided_slice %513 {offsets = [0, 15, 0], sizes = [2, 1, 128], strides = [1, 1, 1]} : vector<2x16x128xf32> to vector<2x1x128xf32>
    %520 = vector.shape_cast %519 : vector<2x1x128xf32> to vector<2x128xf32>
    %521 = arith.addf %518, %520 : vector<2x128xf32>
    %cst_241 = arith.constant dense<0.000000e+00> : vector<2x128xf32>
    %522 = tpu.matmul %515, %514, %cst_241 {dimension_numbers = #tpu.dot_dimension_numbers<[1], [0], [0], [1], [0, 0, 1, 1], [], []>} : vector<2x32xf32>, vector<32x128xf32>, vector<2x128xf32> -> vector<2x128xf32>
    %523 = arith.addf %521, %522 : vector<2x128xf32>
    %524 = vector.extract_strided_slice %523 {offsets = [0, 0], sizes = [2, 32], strides = [1, 1]} : vector<2x128xf32> to vector<2x32xf32>
    %525 = arith.negf %524 : vector<2x32xf32>
    %526 = math.exp %525 : vector<2x32xf32>
    %cst_242 = arith.constant 1.000000e+00 : f32
    %527 = vector.broadcast %cst_242 : f32 to vector<2x32xf32>
    %528 = arith.addf %527, %526 : vector<2x32xf32>
    %529 = arith.divf %527, %528 : vector<2x32xf32>
    %530 = vector.extract_strided_slice %523 {offsets = [0, 32], sizes = [2, 32], strides = [1, 1]} : vector<2x128xf32> to vector<2x32xf32>
    %531 = arith.negf %530 : vector<2x32xf32>
    %532 = math.exp %531 : vector<2x32xf32>
    %cst_243 = arith.constant 1.000000e+00 : f32
    %533 = vector.broadcast %cst_243 : f32 to vector<2x32xf32>
    %534 = arith.addf %533, %532 : vector<2x32xf32>
    %535 = arith.divf %533, %534 : vector<2x32xf32>
    %536 = vector.extract_strided_slice %523 {offsets = [0, 64], sizes = [2, 32], strides = [1, 1]} : vector<2x128xf32> to vector<2x32xf32>
    %537 = math.tanh %536 : vector<2x32xf32>
    %538 = vector.extract_strided_slice %523 {offsets = [0, 96], sizes = [2, 32], strides = [1, 1]} : vector<2x128xf32> to vector<2x32xf32>
    %539 = arith.negf %538 : vector<2x32xf32>
    %540 = math.exp %539 : vector<2x32xf32>
    %cst_244 = arith.constant 1.000000e+00 : f32
    %541 = vector.broadcast %cst_244 : f32 to vector<2x32xf32>
    %542 = arith.addf %541, %540 : vector<2x32xf32>
    %543 = arith.divf %541, %542 : vector<2x32xf32>
    %544 = arith.mulf %535, %516 : vector<2x32xf32>
    %545 = arith.mulf %529, %537 : vector<2x32xf32>
    %546 = arith.addf %544, %545 : vector<2x32xf32>
    %547 = math.tanh %546 : vector<2x32xf32>
    %548 = arith.mulf %543, %547 : vector<2x32xf32>
    %cst_245 = arith.constant 0.000000e+00 : f32
    %549 = vector.broadcast %cst_245 : f32 to vector<2x32xf32>
    %550 = arith.maximumf %548, %549 : vector<2x32xf32>
    %551 = vector.extract_strided_slice %550 {offsets = [0, 0], sizes = [2, 16], strides = [1, 1]} : vector<2x32xf32> to vector<2x16xf32>
    %c0_246 = arith.constant 0 : index
    %c0_247 = arith.constant 0 : index
    %552 = vector.load %arg31[%c0_246, %c0_247] : memref<2x512xf32, #tpu.memory_space<vmem>>, vector<2x16xf32>
    tpu.vector_store %arg31[%c0_246, %c0_247], %551 {strides = array<i32>} : memref<2x512xf32, #tpu.memory_space<vmem>>, vector<2x16xf32>,
    %553 = vector.extract_strided_slice %550 {offsets = [0, 16], sizes = [2, 16], strides = [1, 1]} : vector<2x32xf32> to vector<2x16xf32>
    %c0_248 = arith.constant 0 : index
    %c496 = arith.constant 496 : index
    %554 = vector.load %arg31[%c0_248, %c496] : memref<2x512xf32, #tpu.memory_space<vmem>>, vector<2x16xf32>
    tpu.vector_store %arg31[%c0_248, %c496], %553 {strides = array<i32>} : memref<2x512xf32, #tpu.memory_space<vmem>>, vector<2x16xf32>,
    %555 = vector.extract_strided_slice %510 {offsets = [0, 1, 0], sizes = [2, 1, 128], strides = [1, 1, 1]} : vector<2x16x128xf32> to vector<2x1x128xf32>
    %556 = vector.shape_cast %555 : vector<2x1x128xf32> to vector<2x128xf32>
    %557 = vector.extract_strided_slice %513 {offsets = [0, 14, 0], sizes = [2, 1, 128], strides = [1, 1, 1]} : vector<2x16x128xf32> to vector<2x1x128xf32>
    %558 = vector.shape_cast %557 : vector<2x1x128xf32> to vector<2x128xf32>
    %559 = arith.addf %556, %558 : vector<2x128xf32>
    %cst_249 = arith.constant dense<0.000000e+00> : vector<2x128xf32>
    %560 = tpu.matmul %548, %514, %cst_249 {dimension_numbers = #tpu.dot_dimension_numbers<[1], [0], [0], [1], [0, 0, 1, 1], [], []>} : vector<2x32xf32>, vector<32x128xf32>, vector<2x128xf32> -> vector<2x128xf32>
    %561 = arith.addf %559, %560 : vector<2x128xf32>
    %562 = vector.extract_strided_slice %561 {offsets = [0, 0], sizes = [2, 32], strides = [1, 1]} : vector<2x128xf32> to vector<2x32xf32>
    %563 = arith.negf %562 : vector<2x32xf32>
    %564 = math.exp %563 : vector<2x32xf32>
    %cst_250 = arith.constant 1.000000e+00 : f32
    %565 = vector.broadcast %cst_250 : f32 to vector<2x32xf32>
    %566 = arith.addf %565, %564 : vector<2x32xf32>
    %567 = arith.divf %565, %566 : vector<2x32xf32>
    %568 = vector.extract_strided_slice %561 {offsets = [0, 32], sizes = [2, 32], strides = [1, 1]} : vector<2x128xf32> to vector<2x32xf32>
    %569 = arith.negf %568 : vector<2x32xf32>
    %570 = math.exp %569 : vector<2x32xf32>
    %cst_251 = arith.constant 1.000000e+00 : f32
    %571 = vector.broadcast %cst_251 : f32 to vector<2x32xf32>
    %572 = arith.addf %571, %570 : vector<2x32xf32>
    %573 = arith.divf %571, %572 : vector<2x32xf32>
    %574 = vector.extract_strided_slice %561 {offsets = [0, 64], sizes = [2, 32], strides = [1, 1]} : vector<2x128xf32> to vector<2x32xf32>
    %575 = math.tanh %574 : vector<2x32xf32>
    %576 = vector.extract_strided_slice %561 {offsets = [0, 96], sizes = [2, 32], strides = [1, 1]} : vector<2x128xf32> to vector<2x32xf32>
    %577 = arith.negf %576 : vector<2x32xf32>
    %578 = math.exp %577 : vector<2x32xf32>
    %cst_252 = arith.constant 1.000000e+00 : f32
    %579 = vector.broadcast %cst_252 : f32 to vector<2x32xf32>
    %580 = arith.addf %579, %578 : vector<2x32xf32>
    %581 = arith.divf %579, %580 : vector<2x32xf32>
    %582 = arith.mulf %573, %546 : vector<2x32xf32>
    %583 = arith.mulf %567, %575 : vector<2x32xf32>
    %584 = arith.addf %582, %583 : vector<2x32xf32>
    %585 = math.tanh %584 : vector<2x32xf32>
    %586 = arith.mulf %581, %585 : vector<2x32xf32>
    %cst_253 = arith.constant 0.000000e+00 : f32
    %587 = vector.broadcast %cst_253 : f32 to vector<2x32xf32>
    %588 = arith.maximumf %586, %587 : vector<2x32xf32>
    %589 = vector.extract_strided_slice %588 {offsets = [0, 0], sizes = [2, 16], strides = [1, 1]} : vector<2x32xf32> to vector<2x16xf32>
    %c0_254 = arith.constant 0 : index
    %c32 = arith.constant 32 : index
    %590 = vector.load %arg31[%c0_254, %c32] : memref<2x512xf32, #tpu.memory_space<vmem>>, vector<2x16xf32>
    tpu.vector_store %arg31[%c0_254, %c32], %589 {strides = array<i32>} : memref<2x512xf32, #tpu.memory_space<vmem>>, vector<2x16xf32>,
    %591 = vector.extract_strided_slice %588 {offsets = [0, 16], sizes = [2, 16], strides = [1, 1]} : vector<2x32xf32> to vector<2x16xf32>
    %c0_255 = arith.constant 0 : index
    %c464 = arith.constant 464 : index
    %592 = vector.load %arg31[%c0_255, %c464] : memref<2x512xf32, #tpu.memory_space<vmem>>, vector<2x16xf32>
    tpu.vector_store %arg31[%c0_255, %c464], %591 {strides = array<i32>} : memref<2x512xf32, #tpu.memory_space<vmem>>, vector<2x16xf32>,
    %593 = vector.extract_strided_slice %510 {offsets = [0, 2, 0], sizes = [2, 1, 128], strides = [1, 1, 1]} : vector<2x16x128xf32> to vector<2x1x128xf32>
    %594 = vector.shape_cast %593 : vector<2x1x128xf32> to vector<2x128xf32>
    %595 = vector.extract_strided_slice %513 {offsets = [0, 13, 0], sizes = [2, 1, 128], strides = [1, 1, 1]} : vector<2x16x128xf32> to vector<2x1x128xf32>
    %596 = vector.shape_cast %595 : vector<2x1x128xf32> to vector<2x128xf32>
    %597 = arith.addf %594, %596 : vector<2x128xf32>
    %cst_256 = arith.constant dense<0.000000e+00> : vector<2x128xf32>
    %598 = tpu.matmul %586, %514, %cst_256 {dimension_numbers = #tpu.dot_dimension_numbers<[1], [0], [0], [1], [0, 0, 1, 1], [], []>} : vector<2x32xf32>, vector<32x128xf32>, vector<2x128xf32> -> vector<2x128xf32>
    %599 = arith.addf %597, %598 : vector<2x128xf32>
    %600 = vector.extract_strided_slice %599 {offsets = [0, 0], sizes = [2, 32], strides = [1, 1]} : vector<2x128xf32> to vector<2x32xf32>
    %601 = arith.negf %600 : vector<2x32xf32>
    %602 = math.exp %601 : vector<2x32xf32>
    %cst_257 = arith.constant 1.000000e+00 : f32
    %603 = vector.broadcast %cst_257 : f32 to vector<2x32xf32>
    %604 = arith.addf %603, %602 : vector<2x32xf32>
    %605 = arith.divf %603, %604 : vector<2x32xf32>
    %606 = vector.extract_strided_slice %599 {offsets = [0, 32], sizes = [2, 32], strides = [1, 1]} : vector<2x128xf32> to vector<2x32xf32>
    %607 = arith.negf %606 : vector<2x32xf32>
    %608 = math.exp %607 : vector<2x32xf32>
    %cst_258 = arith.constant 1.000000e+00 : f32
    %609 = vector.broadcast %cst_258 : f32 to vector<2x32xf32>
    %610 = arith.addf %609, %608 : vector<2x32xf32>
    %611 = arith.divf %609, %610 : vector<2x32xf32>
    %612 = vector.extract_strided_slice %599 {offsets = [0, 64], sizes = [2, 32], strides = [1, 1]} : vector<2x128xf32> to vector<2x32xf32>
    %613 = math.tanh %612 : vector<2x32xf32>
    %614 = vector.extract_strided_slice %599 {offsets = [0, 96], sizes = [2, 32], strides = [1, 1]} : vector<2x128xf32> to vector<2x32xf32>
    %615 = arith.negf %614 : vector<2x32xf32>
    %616 = math.exp %615 : vector<2x32xf32>
    %cst_259 = arith.constant 1.000000e+00 : f32
    %617 = vector.broadcast %cst_259 : f32 to vector<2x32xf32>
    %618 = arith.addf %617, %616 : vector<2x32xf32>
    %619 = arith.divf %617, %618 : vector<2x32xf32>
    %620 = arith.mulf %611, %584 : vector<2x32xf32>
    %621 = arith.mulf %605, %613 : vector<2x32xf32>
    %622 = arith.addf %620, %621 : vector<2x32xf32>
    %623 = math.tanh %622 : vector<2x32xf32>
    %624 = arith.mulf %619, %623 : vector<2x32xf32>
    %cst_260 = arith.constant 0.000000e+00 : f32
    %625 = vector.broadcast %cst_260 : f32 to vector<2x32xf32>
    %626 = arith.maximumf %624, %625 : vector<2x32xf32>
    %627 = vector.extract_strided_slice %626 {offsets = [0, 0], sizes = [2, 16], strides = [1, 1]} : vector<2x32xf32> to vector<2x16xf32>
    %c0_261 = arith.constant 0 : index
    %c64 = arith.constant 64 : index
    %628 = vector.load %arg31[%c0_261, %c64] : memref<2x512xf32, #tpu.memory_space<vmem>>, vector<2x16xf32>
    tpu.vector_store %arg31[%c0_261, %c64], %627 {strides = array<i32>} : memref<2x512xf32, #tpu.memory_space<vmem>>, vector<2x16xf32>,
    %629 = vector.extract_strided_slice %626 {offsets = [0, 16], sizes = [2, 16], strides = [1, 1]} : vector<2x32xf32> to vector<2x16xf32>
    %c0_262 = arith.constant 0 : index
    %c432 = arith.constant 432 : index
    %630 = vector.load %arg31[%c0_262, %c432] : memref<2x512xf32, #tpu.memory_space<vmem>>, vector<2x16xf32>
    tpu.vector_store %arg31[%c0_262, %c432], %629 {strides = array<i32>} : memref<2x512xf32, #tpu.memory_space<vmem>>, vector<2x16xf32>,
    %631 = vector.extract_strided_slice %510 {offsets = [0, 3, 0], sizes = [2, 1, 128], strides = [1, 1, 1]} : vector<2x16x128xf32> to vector<2x1x128xf32>
    %632 = vector.shape_cast %631 : vector<2x1x128xf32> to vector<2x128xf32>
    %633 = vector.extract_strided_slice %513 {offsets = [0, 12, 0], sizes = [2, 1, 128], strides = [1, 1, 1]} : vector<2x16x128xf32> to vector<2x1x128xf32>
    %634 = vector.shape_cast %633 : vector<2x1x128xf32> to vector<2x128xf32>
    %635 = arith.addf %632, %634 : vector<2x128xf32>
    %cst_263 = arith.constant dense<0.000000e+00> : vector<2x128xf32>
    %636 = tpu.matmul %624, %514, %cst_263 {dimension_numbers = #tpu.dot_dimension_numbers<[1], [0], [0], [1], [0, 0, 1, 1], [], []>} : vector<2x32xf32>, vector<32x128xf32>, vector<2x128xf32> -> vector<2x128xf32>
    %637 = arith.addf %635, %636 : vector<2x128xf32>
    %638 = vector.extract_strided_slice %637 {offsets = [0, 0], sizes = [2, 32], strides = [1, 1]} : vector<2x128xf32> to vector<2x32xf32>
    %639 = arith.negf %638 : vector<2x32xf32>
    %640 = math.exp %639 : vector<2x32xf32>
    %cst_264 = arith.constant 1.000000e+00 : f32
    %641 = vector.broadcast %cst_264 : f32 to vector<2x32xf32>
    %642 = arith.addf %641, %640 : vector<2x32xf32>
    %643 = arith.divf %641, %642 : vector<2x32xf32>
    %644 = vector.extract_strided_slice %637 {offsets = [0, 32], sizes = [2, 32], strides = [1, 1]} : vector<2x128xf32> to vector<2x32xf32>
    %645 = arith.negf %644 : vector<2x32xf32>
    %646 = math.exp %645 : vector<2x32xf32>
    %cst_265 = arith.constant 1.000000e+00 : f32
    %647 = vector.broadcast %cst_265 : f32 to vector<2x32xf32>
    %648 = arith.addf %647, %646 : vector<2x32xf32>
    %649 = arith.divf %647, %648 : vector<2x32xf32>
    %650 = vector.extract_strided_slice %637 {offsets = [0, 64], sizes = [2, 32], strides = [1, 1]} : vector<2x128xf32> to vector<2x32xf32>
    %651 = math.tanh %650 : vector<2x32xf32>
    %652 = vector.extract_strided_slice %637 {offsets = [0, 96], sizes = [2, 32], strides = [1, 1]} : vector<2x128xf32> to vector<2x32xf32>
    %653 = arith.negf %652 : vector<2x32xf32>
    %654 = math.exp %653 : vector<2x32xf32>
    %cst_266 = arith.constant 1.000000e+00 : f32
    %655 = vector.broadcast %cst_266 : f32 to vector<2x32xf32>
    %656 = arith.addf %655, %654 : vector<2x32xf32>
    %657 = arith.divf %655, %656 : vector<2x32xf32>
    %658 = arith.mulf %649, %622 : vector<2x32xf32>
    %659 = arith.mulf %643, %651 : vector<2x32xf32>
    %660 = arith.addf %658, %659 : vector<2x32xf32>
    %661 = math.tanh %660 : vector<2x32xf32>
    %662 = arith.mulf %657, %661 : vector<2x32xf32>
    %cst_267 = arith.constant 0.000000e+00 : f32
    %663 = vector.broadcast %cst_267 : f32 to vector<2x32xf32>
    %664 = arith.maximumf %662, %663 : vector<2x32xf32>
    %665 = vector.extract_strided_slice %664 {offsets = [0, 0], sizes = [2, 16], strides = [1, 1]} : vector<2x32xf32> to vector<2x16xf32>
    %c0_268 = arith.constant 0 : index
    %c96 = arith.constant 96 : index
    %666 = vector.load %arg31[%c0_268, %c96] : memref<2x512xf32, #tpu.memory_space<vmem>>, vector<2x16xf32>
    tpu.vector_store %arg31[%c0_268, %c96], %665 {strides = array<i32>} : memref<2x512xf32, #tpu.memory_space<vmem>>, vector<2x16xf32>,
    %667 = vector.extract_strided_slice %664 {offsets = [0, 16], sizes = [2, 16], strides = [1, 1]} : vector<2x32xf32> to vector<2x16xf32>
    %c0_269 = arith.constant 0 : index
    %c400 = arith.constant 400 : index
    %668 = vector.load %arg31[%c0_269, %c400] : memref<2x512xf32, #tpu.memory_space<vmem>>, vector<2x16xf32>
    tpu.vector_store %arg31[%c0_269, %c400], %667 {strides = array<i32>} : memref<2x512xf32, #tpu.memory_space<vmem>>, vector<2x16xf32>,
    %669 = vector.extract_strided_slice %510 {offsets = [0, 4, 0], sizes = [2, 1, 128], strides = [1, 1, 1]} : vector<2x16x128xf32> to vector<2x1x128xf32>
    %670 = vector.shape_cast %669 : vector<2x1x128xf32> to vector<2x128xf32>
    %671 = vector.extract_strided_slice %513 {offsets = [0, 11, 0], sizes = [2, 1, 128], strides = [1, 1, 1]} : vector<2x16x128xf32> to vector<2x1x128xf32>
    %672 = vector.shape_cast %671 : vector<2x1x128xf32> to vector<2x128xf32>
    %673 = arith.addf %670, %672 : vector<2x128xf32>
    %cst_270 = arith.constant dense<0.000000e+00> : vector<2x128xf32>
    %674 = tpu.matmul %662, %514, %cst_270 {dimension_numbers = #tpu.dot_dimension_numbers<[1], [0], [0], [1], [0, 0, 1, 1], [], []>} : vector<2x32xf32>, vector<32x128xf32>, vector<2x128xf32> -> vector<2x128xf32>
    %675 = arith.addf %673, %674 : vector<2x128xf32>
    %676 = vector.extract_strided_slice %675 {offsets = [0, 0], sizes = [2, 32], strides = [1, 1]} : vector<2x128xf32> to vector<2x32xf32>
    %677 = arith.negf %676 : vector<2x32xf32>
    %678 = math.exp %677 : vector<2x32xf32>
    %cst_271 = arith.constant 1.000000e+00 : f32
    %679 = vector.broadcast %cst_271 : f32 to vector<2x32xf32>
    %680 = arith.addf %679, %678 : vector<2x32xf32>
    %681 = arith.divf %679, %680 : vector<2x32xf32>
    %682 = vector.extract_strided_slice %675 {offsets = [0, 32], sizes = [2, 32], strides = [1, 1]} : vector<2x128xf32> to vector<2x32xf32>
    %683 = arith.negf %682 : vector<2x32xf32>
    %684 = math.exp %683 : vector<2x32xf32>
    %cst_272 = arith.constant 1.000000e+00 : f32
    %685 = vector.broadcast %cst_272 : f32 to vector<2x32xf32>
    %686 = arith.addf %685, %684 : vector<2x32xf32>
    %687 = arith.divf %685, %686 : vector<2x32xf32>
    %688 = vector.extract_strided_slice %675 {offsets = [0, 64], sizes = [2, 32], strides = [1, 1]} : vector<2x128xf32> to vector<2x32xf32>
    %689 = math.tanh %688 : vector<2x32xf32>
    %690 = vector.extract_strided_slice %675 {offsets = [0, 96], sizes = [2, 32], strides = [1, 1]} : vector<2x128xf32> to vector<2x32xf32>
    %691 = arith.negf %690 : vector<2x32xf32>
    %692 = math.exp %691 : vector<2x32xf32>
    %cst_273 = arith.constant 1.000000e+00 : f32
    %693 = vector.broadcast %cst_273 : f32 to vector<2x32xf32>
    %694 = arith.addf %693, %692 : vector<2x32xf32>
    %695 = arith.divf %693, %694 : vector<2x32xf32>
    %696 = arith.mulf %687, %660 : vector<2x32xf32>
    %697 = arith.mulf %681, %689 : vector<2x32xf32>
    %698 = arith.addf %696, %697 : vector<2x32xf32>
    %699 = math.tanh %698 : vector<2x32xf32>
    %700 = arith.mulf %695, %699 : vector<2x32xf32>
    %cst_274 = arith.constant 0.000000e+00 : f32
    %701 = vector.broadcast %cst_274 : f32 to vector<2x32xf32>
    %702 = arith.maximumf %700, %701 : vector<2x32xf32>
    %703 = vector.extract_strided_slice %702 {offsets = [0, 0], sizes = [2, 16], strides = [1, 1]} : vector<2x32xf32> to vector<2x16xf32>
    %c0_275 = arith.constant 0 : index
    %c128 = arith.constant 128 : index
    %704 = vector.load %arg31[%c0_275, %c128] : memref<2x512xf32, #tpu.memory_space<vmem>>, vector<2x16xf32>
    tpu.vector_store %arg31[%c0_275, %c128], %703 {strides = array<i32>} : memref<2x512xf32, #tpu.memory_space<vmem>>, vector<2x16xf32>,
    %705 = vector.extract_strided_slice %702 {offsets = [0, 16], sizes = [2, 16], strides = [1, 1]} : vector<2x32xf32> to vector<2x16xf32>
    %c0_276 = arith.constant 0 : index
    %c368 = arith.constant 368 : index
    %706 = vector.load %arg31[%c0_276, %c368] : memref<2x512xf32, #tpu.memory_space<vmem>>, vector<2x16xf32>
    tpu.vector_store %arg31[%c0_276, %c368], %705 {strides = array<i32>} : memref<2x512xf32, #tpu.memory_space<vmem>>, vector<2x16xf32>,
    %707 = vector.extract_strided_slice %510 {offsets = [0, 5, 0], sizes = [2, 1, 128], strides = [1, 1, 1]} : vector<2x16x128xf32> to vector<2x1x128xf32>
    %708 = vector.shape_cast %707 : vector<2x1x128xf32> to vector<2x128xf32>
    %709 = vector.extract_strided_slice %513 {offsets = [0, 10, 0], sizes = [2, 1, 128], strides = [1, 1, 1]} : vector<2x16x128xf32> to vector<2x1x128xf32>
    %710 = vector.shape_cast %709 : vector<2x1x128xf32> to vector<2x128xf32>
    %711 = arith.addf %708, %710 : vector<2x128xf32>
    %cst_277 = arith.constant dense<0.000000e+00> : vector<2x128xf32>
    %712 = tpu.matmul %700, %514, %cst_277 {dimension_numbers = #tpu.dot_dimension_numbers<[1], [0], [0], [1], [0, 0, 1, 1], [], []>} : vector<2x32xf32>, vector<32x128xf32>, vector<2x128xf32> -> vector<2x128xf32>
    %713 = arith.addf %711, %712 : vector<2x128xf32>
    %714 = vector.extract_strided_slice %713 {offsets = [0, 0], sizes = [2, 32], strides = [1, 1]} : vector<2x128xf32> to vector<2x32xf32>
    %715 = arith.negf %714 : vector<2x32xf32>
    %716 = math.exp %715 : vector<2x32xf32>
    %cst_278 = arith.constant 1.000000e+00 : f32
    %717 = vector.broadcast %cst_278 : f32 to vector<2x32xf32>
    %718 = arith.addf %717, %716 : vector<2x32xf32>
    %719 = arith.divf %717, %718 : vector<2x32xf32>
    %720 = vector.extract_strided_slice %713 {offsets = [0, 32], sizes = [2, 32], strides = [1, 1]} : vector<2x128xf32> to vector<2x32xf32>
    %721 = arith.negf %720 : vector<2x32xf32>
    %722 = math.exp %721 : vector<2x32xf32>
    %cst_279 = arith.constant 1.000000e+00 : f32
    %723 = vector.broadcast %cst_279 : f32 to vector<2x32xf32>
    %724 = arith.addf %723, %722 : vector<2x32xf32>
    %725 = arith.divf %723, %724 : vector<2x32xf32>
    %726 = vector.extract_strided_slice %713 {offsets = [0, 64], sizes = [2, 32], strides = [1, 1]} : vector<2x128xf32> to vector<2x32xf32>
    %727 = math.tanh %726 : vector<2x32xf32>
    %728 = vector.extract_strided_slice %713 {offsets = [0, 96], sizes = [2, 32], strides = [1, 1]} : vector<2x128xf32> to vector<2x32xf32>
    %729 = arith.negf %728 : vector<2x32xf32>
    %730 = math.exp %729 : vector<2x32xf32>
    %cst_280 = arith.constant 1.000000e+00 : f32
    %731 = vector.broadcast %cst_280 : f32 to vector<2x32xf32>
    %732 = arith.addf %731, %730 : vector<2x32xf32>
    %733 = arith.divf %731, %732 : vector<2x32xf32>
    %734 = arith.mulf %725, %698 : vector<2x32xf32>
    %735 = arith.mulf %719, %727 : vector<2x32xf32>
    %736 = arith.addf %734, %735 : vector<2x32xf32>
    %737 = math.tanh %736 : vector<2x32xf32>
    %738 = arith.mulf %733, %737 : vector<2x32xf32>
    %cst_281 = arith.constant 0.000000e+00 : f32
    %739 = vector.broadcast %cst_281 : f32 to vector<2x32xf32>
    %740 = arith.maximumf %738, %739 : vector<2x32xf32>
    %741 = vector.extract_strided_slice %740 {offsets = [0, 0], sizes = [2, 16], strides = [1, 1]} : vector<2x32xf32> to vector<2x16xf32>
    %c0_282 = arith.constant 0 : index
    %c160 = arith.constant 160 : index
    %742 = vector.load %arg31[%c0_282, %c160] : memref<2x512xf32, #tpu.memory_space<vmem>>, vector<2x16xf32>
    tpu.vector_store %arg31[%c0_282, %c160], %741 {strides = array<i32>} : memref<2x512xf32, #tpu.memory_space<vmem>>, vector<2x16xf32>,
    %743 = vector.extract_strided_slice %740 {offsets = [0, 16], sizes = [2, 16], strides = [1, 1]} : vector<2x32xf32> to vector<2x16xf32>
    %c0_283 = arith.constant 0 : index
    %c336 = arith.constant 336 : index
    %744 = vector.load %arg31[%c0_283, %c336] : memref<2x512xf32, #tpu.memory_space<vmem>>, vector<2x16xf32>
    tpu.vector_store %arg31[%c0_283, %c336], %743 {strides = array<i32>} : memref<2x512xf32, #tpu.memory_space<vmem>>, vector<2x16xf32>,
    %745 = vector.extract_strided_slice %510 {offsets = [0, 6, 0], sizes = [2, 1, 128], strides = [1, 1, 1]} : vector<2x16x128xf32> to vector<2x1x128xf32>
    %746 = vector.shape_cast %745 : vector<2x1x128xf32> to vector<2x128xf32>
    %747 = vector.extract_strided_slice %513 {offsets = [0, 9, 0], sizes = [2, 1, 128], strides = [1, 1, 1]} : vector<2x16x128xf32> to vector<2x1x128xf32>
    %748 = vector.shape_cast %747 : vector<2x1x128xf32> to vector<2x128xf32>
    %749 = arith.addf %746, %748 : vector<2x128xf32>
    %cst_284 = arith.constant dense<0.000000e+00> : vector<2x128xf32>
    %750 = tpu.matmul %738, %514, %cst_284 {dimension_numbers = #tpu.dot_dimension_numbers<[1], [0], [0], [1], [0, 0, 1, 1], [], []>} : vector<2x32xf32>, vector<32x128xf32>, vector<2x128xf32> -> vector<2x128xf32>
    %751 = arith.addf %749, %750 : vector<2x128xf32>
    %752 = vector.extract_strided_slice %751 {offsets = [0, 0], sizes = [2, 32], strides = [1, 1]} : vector<2x128xf32> to vector<2x32xf32>
    %753 = arith.negf %752 : vector<2x32xf32>
    %754 = math.exp %753 : vector<2x32xf32>
    %cst_285 = arith.constant 1.000000e+00 : f32
    %755 = vector.broadcast %cst_285 : f32 to vector<2x32xf32>
    %756 = arith.addf %755, %754 : vector<2x32xf32>
    %757 = arith.divf %755, %756 : vector<2x32xf32>
    %758 = vector.extract_strided_slice %751 {offsets = [0, 32], sizes = [2, 32], strides = [1, 1]} : vector<2x128xf32> to vector<2x32xf32>
    %759 = arith.negf %758 : vector<2x32xf32>
    %760 = math.exp %759 : vector<2x32xf32>
    %cst_286 = arith.constant 1.000000e+00 : f32
    %761 = vector.broadcast %cst_286 : f32 to vector<2x32xf32>
    %762 = arith.addf %761, %760 : vector<2x32xf32>
    %763 = arith.divf %761, %762 : vector<2x32xf32>
    %764 = vector.extract_strided_slice %751 {offsets = [0, 64], sizes = [2, 32], strides = [1, 1]} : vector<2x128xf32> to vector<2x32xf32>
    %765 = math.tanh %764 : vector<2x32xf32>
    %766 = vector.extract_strided_slice %751 {offsets = [0, 96], sizes = [2, 32], strides = [1, 1]} : vector<2x128xf32> to vector<2x32xf32>
    %767 = arith.negf %766 : vector<2x32xf32>
    %768 = math.exp %767 : vector<2x32xf32>
    %cst_287 = arith.constant 1.000000e+00 : f32
    %769 = vector.broadcast %cst_287 : f32 to vector<2x32xf32>
    %770 = arith.addf %769, %768 : vector<2x32xf32>
    %771 = arith.divf %769, %770 : vector<2x32xf32>
    %772 = arith.mulf %763, %736 : vector<2x32xf32>
    %773 = arith.mulf %757, %765 : vector<2x32xf32>
    %774 = arith.addf %772, %773 : vector<2x32xf32>
    %775 = math.tanh %774 : vector<2x32xf32>
    %776 = arith.mulf %771, %775 : vector<2x32xf32>
    %cst_288 = arith.constant 0.000000e+00 : f32
    %777 = vector.broadcast %cst_288 : f32 to vector<2x32xf32>
    %778 = arith.maximumf %776, %777 : vector<2x32xf32>
    %779 = vector.extract_strided_slice %778 {offsets = [0, 0], sizes = [2, 16], strides = [1, 1]} : vector<2x32xf32> to vector<2x16xf32>
    %c0_289 = arith.constant 0 : index
    %c192 = arith.constant 192 : index
    %780 = vector.load %arg31[%c0_289, %c192] : memref<2x512xf32, #tpu.memory_space<vmem>>, vector<2x16xf32>
    tpu.vector_store %arg31[%c0_289, %c192], %779 {strides = array<i32>} : memref<2x512xf32, #tpu.memory_space<vmem>>, vector<2x16xf32>,
    %781 = vector.extract_strided_slice %778 {offsets = [0, 16], sizes = [2, 16], strides = [1, 1]} : vector<2x32xf32> to vector<2x16xf32>
    %c0_290 = arith.constant 0 : index
    %c304 = arith.constant 304 : index
    %782 = vector.load %arg31[%c0_290, %c304] : memref<2x512xf32, #tpu.memory_space<vmem>>, vector<2x16xf32>
    tpu.vector_store %arg31[%c0_290, %c304], %781 {strides = array<i32>} : memref<2x512xf32, #tpu.memory_space<vmem>>, vector<2x16xf32>,
    %783 = vector.extract_strided_slice %510 {offsets = [0, 7, 0], sizes = [2, 1, 128], strides = [1, 1, 1]} : vector<2x16x128xf32> to vector<2x1x128xf32>
    %784 = vector.shape_cast %783 : vector<2x1x128xf32> to vector<2x128xf32>
    %785 = vector.extract_strided_slice %513 {offsets = [0, 8, 0], sizes = [2, 1, 128], strides = [1, 1, 1]} : vector<2x16x128xf32> to vector<2x1x128xf32>
    %786 = vector.shape_cast %785 : vector<2x1x128xf32> to vector<2x128xf32>
    %787 = arith.addf %784, %786 : vector<2x128xf32>
    %cst_291 = arith.constant dense<0.000000e+00> : vector<2x128xf32>
    %788 = tpu.matmul %776, %514, %cst_291 {dimension_numbers = #tpu.dot_dimension_numbers<[1], [0], [0], [1], [0, 0, 1, 1], [], []>} : vector<2x32xf32>, vector<32x128xf32>, vector<2x128xf32> -> vector<2x128xf32>
    %789 = arith.addf %787, %788 : vector<2x128xf32>
    %790 = vector.extract_strided_slice %789 {offsets = [0, 0], sizes = [2, 32], strides = [1, 1]} : vector<2x128xf32> to vector<2x32xf32>
    %791 = arith.negf %790 : vector<2x32xf32>
    %792 = math.exp %791 : vector<2x32xf32>
    %cst_292 = arith.constant 1.000000e+00 : f32
    %793 = vector.broadcast %cst_292 : f32 to vector<2x32xf32>
    %794 = arith.addf %793, %792 : vector<2x32xf32>
    %795 = arith.divf %793, %794 : vector<2x32xf32>
    %796 = vector.extract_strided_slice %789 {offsets = [0, 32], sizes = [2, 32], strides = [1, 1]} : vector<2x128xf32> to vector<2x32xf32>
    %797 = arith.negf %796 : vector<2x32xf32>
    %798 = math.exp %797 : vector<2x32xf32>
    %cst_293 = arith.constant 1.000000e+00 : f32
    %799 = vector.broadcast %cst_293 : f32 to vector<2x32xf32>
    %800 = arith.addf %799, %798 : vector<2x32xf32>
    %801 = arith.divf %799, %800 : vector<2x32xf32>
    %802 = vector.extract_strided_slice %789 {offsets = [0, 64], sizes = [2, 32], strides = [1, 1]} : vector<2x128xf32> to vector<2x32xf32>
    %803 = math.tanh %802 : vector<2x32xf32>
    %804 = vector.extract_strided_slice %789 {offsets = [0, 96], sizes = [2, 32], strides = [1, 1]} : vector<2x128xf32> to vector<2x32xf32>
    %805 = arith.negf %804 : vector<2x32xf32>
    %806 = math.exp %805 : vector<2x32xf32>
    %cst_294 = arith.constant 1.000000e+00 : f32
    %807 = vector.broadcast %cst_294 : f32 to vector<2x32xf32>
    %808 = arith.addf %807, %806 : vector<2x32xf32>
    %809 = arith.divf %807, %808 : vector<2x32xf32>
    %810 = arith.mulf %801, %774 : vector<2x32xf32>
    %811 = arith.mulf %795, %803 : vector<2x32xf32>
    %812 = arith.addf %810, %811 : vector<2x32xf32>
    %813 = math.tanh %812 : vector<2x32xf32>
    %814 = arith.mulf %809, %813 : vector<2x32xf32>
    %cst_295 = arith.constant 0.000000e+00 : f32
    %815 = vector.broadcast %cst_295 : f32 to vector<2x32xf32>
    %816 = arith.maximumf %814, %815 : vector<2x32xf32>
    %817 = vector.extract_strided_slice %816 {offsets = [0, 0], sizes = [2, 16], strides = [1, 1]} : vector<2x32xf32> to vector<2x16xf32>
    %c0_296 = arith.constant 0 : index
    %c224 = arith.constant 224 : index
    %818 = vector.load %arg31[%c0_296, %c224] : memref<2x512xf32, #tpu.memory_space<vmem>>, vector<2x16xf32>
    tpu.vector_store %arg31[%c0_296, %c224], %817 {strides = array<i32>} : memref<2x512xf32, #tpu.memory_space<vmem>>, vector<2x16xf32>,
    %819 = vector.extract_strided_slice %816 {offsets = [0, 16], sizes = [2, 16], strides = [1, 1]} : vector<2x32xf32> to vector<2x16xf32>
    %c0_297 = arith.constant 0 : index
    %c272 = arith.constant 272 : index
    %820 = vector.load %arg31[%c0_297, %c272] : memref<2x512xf32, #tpu.memory_space<vmem>>, vector<2x16xf32>
    tpu.vector_store %arg31[%c0_297, %c272], %819 {strides = array<i32>} : memref<2x512xf32, #tpu.memory_space<vmem>>, vector<2x16xf32>,
    %821 = vector.extract_strided_slice %510 {offsets = [0, 8, 0], sizes = [2, 1, 128], strides = [1, 1, 1]} : vector<2x16x128xf32> to vector<2x1x128xf32>
    %822 = vector.shape_cast %821 : vector<2x1x128xf32> to vector<2x128xf32>
    %823 = vector.extract_strided_slice %513 {offsets = [0, 7, 0], sizes = [2, 1, 128], strides = [1, 1, 1]} : vector<2x16x128xf32> to vector<2x1x128xf32>
    %824 = vector.shape_cast %823 : vector<2x1x128xf32> to vector<2x128xf32>
    %825 = arith.addf %822, %824 : vector<2x128xf32>
    %cst_298 = arith.constant dense<0.000000e+00> : vector<2x128xf32>
    %826 = tpu.matmul %814, %514, %cst_298 {dimension_numbers = #tpu.dot_dimension_numbers<[1], [0], [0], [1], [0, 0, 1, 1], [], []>} : vector<2x32xf32>, vector<32x128xf32>, vector<2x128xf32> -> vector<2x128xf32>
    %827 = arith.addf %825, %826 : vector<2x128xf32>
    %828 = vector.extract_strided_slice %827 {offsets = [0, 0], sizes = [2, 32], strides = [1, 1]} : vector<2x128xf32> to vector<2x32xf32>
    %829 = arith.negf %828 : vector<2x32xf32>
    %830 = math.exp %829 : vector<2x32xf32>
    %cst_299 = arith.constant 1.000000e+00 : f32
    %831 = vector.broadcast %cst_299 : f32 to vector<2x32xf32>
    %832 = arith.addf %831, %830 : vector<2x32xf32>
    %833 = arith.divf %831, %832 : vector<2x32xf32>
    %834 = vector.extract_strided_slice %827 {offsets = [0, 32], sizes = [2, 32], strides = [1, 1]} : vector<2x128xf32> to vector<2x32xf32>
    %835 = arith.negf %834 : vector<2x32xf32>
    %836 = math.exp %835 : vector<2x32xf32>
    %cst_300 = arith.constant 1.000000e+00 : f32
    %837 = vector.broadcast %cst_300 : f32 to vector<2x32xf32>
    %838 = arith.addf %837, %836 : vector<2x32xf32>
    %839 = arith.divf %837, %838 : vector<2x32xf32>
    %840 = vector.extract_strided_slice %827 {offsets = [0, 64], sizes = [2, 32], strides = [1, 1]} : vector<2x128xf32> to vector<2x32xf32>
    %841 = math.tanh %840 : vector<2x32xf32>
    %842 = vector.extract_strided_slice %827 {offsets = [0, 96], sizes = [2, 32], strides = [1, 1]} : vector<2x128xf32> to vector<2x32xf32>
    %843 = arith.negf %842 : vector<2x32xf32>
    %844 = math.exp %843 : vector<2x32xf32>
    %cst_301 = arith.constant 1.000000e+00 : f32
    %845 = vector.broadcast %cst_301 : f32 to vector<2x32xf32>
    %846 = arith.addf %845, %844 : vector<2x32xf32>
    %847 = arith.divf %845, %846 : vector<2x32xf32>
    %848 = arith.mulf %839, %812 : vector<2x32xf32>
    %849 = arith.mulf %833, %841 : vector<2x32xf32>
    %850 = arith.addf %848, %849 : vector<2x32xf32>
    %851 = math.tanh %850 : vector<2x32xf32>
    %852 = arith.mulf %847, %851 : vector<2x32xf32>
    %cst_302 = arith.constant 0.000000e+00 : f32
    %853 = vector.broadcast %cst_302 : f32 to vector<2x32xf32>
    %854 = arith.maximumf %852, %853 : vector<2x32xf32>
    %855 = vector.extract_strided_slice %854 {offsets = [0, 0], sizes = [2, 16], strides = [1, 1]} : vector<2x32xf32> to vector<2x16xf32>
    %c0_303 = arith.constant 0 : index
    %c256 = arith.constant 256 : index
    %856 = vector.load %arg31[%c0_303, %c256] : memref<2x512xf32, #tpu.memory_space<vmem>>, vector<2x16xf32>
    tpu.vector_store %arg31[%c0_303, %c256], %855 {strides = array<i32>} : memref<2x512xf32, #tpu.memory_space<vmem>>, vector<2x16xf32>,
    %857 = vector.extract_strided_slice %854 {offsets = [0, 16], sizes = [2, 16], strides = [1, 1]} : vector<2x32xf32> to vector<2x16xf32>
    %c0_304 = arith.constant 0 : index
    %c240 = arith.constant 240 : index
    %858 = vector.load %arg31[%c0_304, %c240] : memref<2x512xf32, #tpu.memory_space<vmem>>, vector<2x16xf32>
    tpu.vector_store %arg31[%c0_304, %c240], %857 {strides = array<i32>} : memref<2x512xf32, #tpu.memory_space<vmem>>, vector<2x16xf32>,
    %859 = vector.extract_strided_slice %510 {offsets = [0, 9, 0], sizes = [2, 1, 128], strides = [1, 1, 1]} : vector<2x16x128xf32> to vector<2x1x128xf32>
    %860 = vector.shape_cast %859 : vector<2x1x128xf32> to vector<2x128xf32>
    %861 = vector.extract_strided_slice %513 {offsets = [0, 6, 0], sizes = [2, 1, 128], strides = [1, 1, 1]} : vector<2x16x128xf32> to vector<2x1x128xf32>
    %862 = vector.shape_cast %861 : vector<2x1x128xf32> to vector<2x128xf32>
    %863 = arith.addf %860, %862 : vector<2x128xf32>
    %cst_305 = arith.constant dense<0.000000e+00> : vector<2x128xf32>
    %864 = tpu.matmul %852, %514, %cst_305 {dimension_numbers = #tpu.dot_dimension_numbers<[1], [0], [0], [1], [0, 0, 1, 1], [], []>} : vector<2x32xf32>, vector<32x128xf32>, vector<2x128xf32> -> vector<2x128xf32>
    %865 = arith.addf %863, %864 : vector<2x128xf32>
    %866 = vector.extract_strided_slice %865 {offsets = [0, 0], sizes = [2, 32], strides = [1, 1]} : vector<2x128xf32> to vector<2x32xf32>
    %867 = arith.negf %866 : vector<2x32xf32>
    %868 = math.exp %867 : vector<2x32xf32>
    %cst_306 = arith.constant 1.000000e+00 : f32
    %869 = vector.broadcast %cst_306 : f32 to vector<2x32xf32>
    %870 = arith.addf %869, %868 : vector<2x32xf32>
    %871 = arith.divf %869, %870 : vector<2x32xf32>
    %872 = vector.extract_strided_slice %865 {offsets = [0, 32], sizes = [2, 32], strides = [1, 1]} : vector<2x128xf32> to vector<2x32xf32>
    %873 = arith.negf %872 : vector<2x32xf32>
    %874 = math.exp %873 : vector<2x32xf32>
    %cst_307 = arith.constant 1.000000e+00 : f32
    %875 = vector.broadcast %cst_307 : f32 to vector<2x32xf32>
    %876 = arith.addf %875, %874 : vector<2x32xf32>
    %877 = arith.divf %875, %876 : vector<2x32xf32>
    %878 = vector.extract_strided_slice %865 {offsets = [0, 64], sizes = [2, 32], strides = [1, 1]} : vector<2x128xf32> to vector<2x32xf32>
    %879 = math.tanh %878 : vector<2x32xf32>
    %880 = vector.extract_strided_slice %865 {offsets = [0, 96], sizes = [2, 32], strides = [1, 1]} : vector<2x128xf32> to vector<2x32xf32>
    %881 = arith.negf %880 : vector<2x32xf32>
    %882 = math.exp %881 : vector<2x32xf32>
    %cst_308 = arith.constant 1.000000e+00 : f32
    %883 = vector.broadcast %cst_308 : f32 to vector<2x32xf32>
    %884 = arith.addf %883, %882 : vector<2x32xf32>
    %885 = arith.divf %883, %884 : vector<2x32xf32>
    %886 = arith.mulf %877, %850 : vector<2x32xf32>
    %887 = arith.mulf %871, %879 : vector<2x32xf32>
    %888 = arith.addf %886, %887 : vector<2x32xf32>
    %889 = math.tanh %888 : vector<2x32xf32>
    %890 = arith.mulf %885, %889 : vector<2x32xf32>
    %cst_309 = arith.constant 0.000000e+00 : f32
    %891 = vector.broadcast %cst_309 : f32 to vector<2x32xf32>
    %892 = arith.maximumf %890, %891 : vector<2x32xf32>
    %893 = vector.extract_strided_slice %892 {offsets = [0, 0], sizes = [2, 16], strides = [1, 1]} : vector<2x32xf32> to vector<2x16xf32>
    %c0_310 = arith.constant 0 : index
    %c288 = arith.constant 288 : index
    %894 = vector.load %arg31[%c0_310, %c288] : memref<2x512xf32, #tpu.memory_space<vmem>>, vector<2x16xf32>
    tpu.vector_store %arg31[%c0_310, %c288], %893 {strides = array<i32>} : memref<2x512xf32, #tpu.memory_space<vmem>>, vector<2x16xf32>,
    %895 = vector.extract_strided_slice %892 {offsets = [0, 16], sizes = [2, 16], strides = [1, 1]} : vector<2x32xf32> to vector<2x16xf32>
    %c0_311 = arith.constant 0 : index
    %c208 = arith.constant 208 : index
    %896 = vector.load %arg31[%c0_311, %c208] : memref<2x512xf32, #tpu.memory_space<vmem>>, vector<2x16xf32>
    tpu.vector_store %arg31[%c0_311, %c208], %895 {strides = array<i32>} : memref<2x512xf32, #tpu.memory_space<vmem>>, vector<2x16xf32>,
    %897 = vector.extract_strided_slice %510 {offsets = [0, 10, 0], sizes = [2, 1, 128], strides = [1, 1, 1]} : vector<2x16x128xf32> to vector<2x1x128xf32>
    %898 = vector.shape_cast %897 : vector<2x1x128xf32> to vector<2x128xf32>
    %899 = vector.extract_strided_slice %513 {offsets = [0, 5, 0], sizes = [2, 1, 128], strides = [1, 1, 1]} : vector<2x16x128xf32> to vector<2x1x128xf32>
    %900 = vector.shape_cast %899 : vector<2x1x128xf32> to vector<2x128xf32>
    %901 = arith.addf %898, %900 : vector<2x128xf32>
    %cst_312 = arith.constant dense<0.000000e+00> : vector<2x128xf32>
    %902 = tpu.matmul %890, %514, %cst_312 {dimension_numbers = #tpu.dot_dimension_numbers<[1], [0], [0], [1], [0, 0, 1, 1], [], []>} : vector<2x32xf32>, vector<32x128xf32>, vector<2x128xf32> -> vector<2x128xf32>
    %903 = arith.addf %901, %902 : vector<2x128xf32>
    %904 = vector.extract_strided_slice %903 {offsets = [0, 0], sizes = [2, 32], strides = [1, 1]} : vector<2x128xf32> to vector<2x32xf32>
    %905 = arith.negf %904 : vector<2x32xf32>
    %906 = math.exp %905 : vector<2x32xf32>
    %cst_313 = arith.constant 1.000000e+00 : f32
    %907 = vector.broadcast %cst_313 : f32 to vector<2x32xf32>
    %908 = arith.addf %907, %906 : vector<2x32xf32>
    %909 = arith.divf %907, %908 : vector<2x32xf32>
    %910 = vector.extract_strided_slice %903 {offsets = [0, 32], sizes = [2, 32], strides = [1, 1]} : vector<2x128xf32> to vector<2x32xf32>
    %911 = arith.negf %910 : vector<2x32xf32>
    %912 = math.exp %911 : vector<2x32xf32>
    %cst_314 = arith.constant 1.000000e+00 : f32
    %913 = vector.broadcast %cst_314 : f32 to vector<2x32xf32>
    %914 = arith.addf %913, %912 : vector<2x32xf32>
    %915 = arith.divf %913, %914 : vector<2x32xf32>
    %916 = vector.extract_strided_slice %903 {offsets = [0, 64], sizes = [2, 32], strides = [1, 1]} : vector<2x128xf32> to vector<2x32xf32>
    %917 = math.tanh %916 : vector<2x32xf32>
    %918 = vector.extract_strided_slice %903 {offsets = [0, 96], sizes = [2, 32], strides = [1, 1]} : vector<2x128xf32> to vector<2x32xf32>
    %919 = arith.negf %918 : vector<2x32xf32>
    %920 = math.exp %919 : vector<2x32xf32>
    %cst_315 = arith.constant 1.000000e+00 : f32
    %921 = vector.broadcast %cst_315 : f32 to vector<2x32xf32>
    %922 = arith.addf %921, %920 : vector<2x32xf32>
    %923 = arith.divf %921, %922 : vector<2x32xf32>
    %924 = arith.mulf %915, %888 : vector<2x32xf32>
    %925 = arith.mulf %909, %917 : vector<2x32xf32>
    %926 = arith.addf %924, %925 : vector<2x32xf32>
    %927 = math.tanh %926 : vector<2x32xf32>
    %928 = arith.mulf %923, %927 : vector<2x32xf32>
    %cst_316 = arith.constant 0.000000e+00 : f32
    %929 = vector.broadcast %cst_316 : f32 to vector<2x32xf32>
    %930 = arith.maximumf %928, %929 : vector<2x32xf32>
    %931 = vector.extract_strided_slice %930 {offsets = [0, 0], sizes = [2, 16], strides = [1, 1]} : vector<2x32xf32> to vector<2x16xf32>
    %c0_317 = arith.constant 0 : index
    %c320 = arith.constant 320 : index
    %932 = vector.load %arg31[%c0_317, %c320] : memref<2x512xf32, #tpu.memory_space<vmem>>, vector<2x16xf32>
    tpu.vector_store %arg31[%c0_317, %c320], %931 {strides = array<i32>} : memref<2x512xf32, #tpu.memory_space<vmem>>, vector<2x16xf32>,
    %933 = vector.extract_strided_slice %930 {offsets = [0, 16], sizes = [2, 16], strides = [1, 1]} : vector<2x32xf32> to vector<2x16xf32>
    %c0_318 = arith.constant 0 : index
    %c176 = arith.constant 176 : index
    %934 = vector.load %arg31[%c0_318, %c176] : memref<2x512xf32, #tpu.memory_space<vmem>>, vector<2x16xf32>
    tpu.vector_store %arg31[%c0_318, %c176], %933 {strides = array<i32>} : memref<2x512xf32, #tpu.memory_space<vmem>>, vector<2x16xf32>,
    %935 = vector.extract_strided_slice %510 {offsets = [0, 11, 0], sizes = [2, 1, 128], strides = [1, 1, 1]} : vector<2x16x128xf32> to vector<2x1x128xf32>
    %936 = vector.shape_cast %935 : vector<2x1x128xf32> to vector<2x128xf32>
    %937 = vector.extract_strided_slice %513 {offsets = [0, 4, 0], sizes = [2, 1, 128], strides = [1, 1, 1]} : vector<2x16x128xf32> to vector<2x1x128xf32>
    %938 = vector.shape_cast %937 : vector<2x1x128xf32> to vector<2x128xf32>
    %939 = arith.addf %936, %938 : vector<2x128xf32>
    %cst_319 = arith.constant dense<0.000000e+00> : vector<2x128xf32>
    %940 = tpu.matmul %928, %514, %cst_319 {dimension_numbers = #tpu.dot_dimension_numbers<[1], [0], [0], [1], [0, 0, 1, 1], [], []>} : vector<2x32xf32>, vector<32x128xf32>, vector<2x128xf32> -> vector<2x128xf32>
    %941 = arith.addf %939, %940 : vector<2x128xf32>
    %942 = vector.extract_strided_slice %941 {offsets = [0, 0], sizes = [2, 32], strides = [1, 1]} : vector<2x128xf32> to vector<2x32xf32>
    %943 = arith.negf %942 : vector<2x32xf32>
    %944 = math.exp %943 : vector<2x32xf32>
    %cst_320 = arith.constant 1.000000e+00 : f32
    %945 = vector.broadcast %cst_320 : f32 to vector<2x32xf32>
    %946 = arith.addf %945, %944 : vector<2x32xf32>
    %947 = arith.divf %945, %946 : vector<2x32xf32>
    %948 = vector.extract_strided_slice %941 {offsets = [0, 32], sizes = [2, 32], strides = [1, 1]} : vector<2x128xf32> to vector<2x32xf32>
    %949 = arith.negf %948 : vector<2x32xf32>
    %950 = math.exp %949 : vector<2x32xf32>
    %cst_321 = arith.constant 1.000000e+00 : f32
    %951 = vector.broadcast %cst_321 : f32 to vector<2x32xf32>
    %952 = arith.addf %951, %950 : vector<2x32xf32>
    %953 = arith.divf %951, %952 : vector<2x32xf32>
    %954 = vector.extract_strided_slice %941 {offsets = [0, 64], sizes = [2, 32], strides = [1, 1]} : vector<2x128xf32> to vector<2x32xf32>
    %955 = math.tanh %954 : vector<2x32xf32>
    %956 = vector.extract_strided_slice %941 {offsets = [0, 96], sizes = [2, 32], strides = [1, 1]} : vector<2x128xf32> to vector<2x32xf32>
    %957 = arith.negf %956 : vector<2x32xf32>
    %958 = math.exp %957 : vector<2x32xf32>
    %cst_322 = arith.constant 1.000000e+00 : f32
    %959 = vector.broadcast %cst_322 : f32 to vector<2x32xf32>
    %960 = arith.addf %959, %958 : vector<2x32xf32>
    %961 = arith.divf %959, %960 : vector<2x32xf32>
    %962 = arith.mulf %953, %926 : vector<2x32xf32>
    %963 = arith.mulf %947, %955 : vector<2x32xf32>
    %964 = arith.addf %962, %963 : vector<2x32xf32>
    %965 = math.tanh %964 : vector<2x32xf32>
    %966 = arith.mulf %961, %965 : vector<2x32xf32>
    %cst_323 = arith.constant 0.000000e+00 : f32
    %967 = vector.broadcast %cst_323 : f32 to vector<2x32xf32>
    %968 = arith.maximumf %966, %967 : vector<2x32xf32>
    %969 = vector.extract_strided_slice %968 {offsets = [0, 0], sizes = [2, 16], strides = [1, 1]} : vector<2x32xf32> to vector<2x16xf32>
    %c0_324 = arith.constant 0 : index
    %c352 = arith.constant 352 : index
    %970 = vector.load %arg31[%c0_324, %c352] : memref<2x512xf32, #tpu.memory_space<vmem>>, vector<2x16xf32>
    tpu.vector_store %arg31[%c0_324, %c352], %969 {strides = array<i32>} : memref<2x512xf32, #tpu.memory_space<vmem>>, vector<2x16xf32>,
    %971 = vector.extract_strided_slice %968 {offsets = [0, 16], sizes = [2, 16], strides = [1, 1]} : vector<2x32xf32> to vector<2x16xf32>
    %c0_325 = arith.constant 0 : index
    %c144 = arith.constant 144 : index
    %972 = vector.load %arg31[%c0_325, %c144] : memref<2x512xf32, #tpu.memory_space<vmem>>, vector<2x16xf32>
    tpu.vector_store %arg31[%c0_325, %c144], %971 {strides = array<i32>} : memref<2x512xf32, #tpu.memory_space<vmem>>, vector<2x16xf32>,
    %973 = vector.extract_strided_slice %510 {offsets = [0, 12, 0], sizes = [2, 1, 128], strides = [1, 1, 1]} : vector<2x16x128xf32> to vector<2x1x128xf32>
    %974 = vector.shape_cast %973 : vector<2x1x128xf32> to vector<2x128xf32>
    %975 = vector.extract_strided_slice %513 {offsets = [0, 3, 0], sizes = [2, 1, 128], strides = [1, 1, 1]} : vector<2x16x128xf32> to vector<2x1x128xf32>
    %976 = vector.shape_cast %975 : vector<2x1x128xf32> to vector<2x128xf32>
    %977 = arith.addf %974, %976 : vector<2x128xf32>
    %cst_326 = arith.constant dense<0.000000e+00> : vector<2x128xf32>
    %978 = tpu.matmul %966, %514, %cst_326 {dimension_numbers = #tpu.dot_dimension_numbers<[1], [0], [0], [1], [0, 0, 1, 1], [], []>} : vector<2x32xf32>, vector<32x128xf32>, vector<2x128xf32> -> vector<2x128xf32>
    %979 = arith.addf %977, %978 : vector<2x128xf32>
    %980 = vector.extract_strided_slice %979 {offsets = [0, 0], sizes = [2, 32], strides = [1, 1]} : vector<2x128xf32> to vector<2x32xf32>
    %981 = arith.negf %980 : vector<2x32xf32>
    %982 = math.exp %981 : vector<2x32xf32>
    %cst_327 = arith.constant 1.000000e+00 : f32
    %983 = vector.broadcast %cst_327 : f32 to vector<2x32xf32>
    %984 = arith.addf %983, %982 : vector<2x32xf32>
    %985 = arith.divf %983, %984 : vector<2x32xf32>
    %986 = vector.extract_strided_slice %979 {offsets = [0, 32], sizes = [2, 32], strides = [1, 1]} : vector<2x128xf32> to vector<2x32xf32>
    %987 = arith.negf %986 : vector<2x32xf32>
    %988 = math.exp %987 : vector<2x32xf32>
    %cst_328 = arith.constant 1.000000e+00 : f32
    %989 = vector.broadcast %cst_328 : f32 to vector<2x32xf32>
    %990 = arith.addf %989, %988 : vector<2x32xf32>
    %991 = arith.divf %989, %990 : vector<2x32xf32>
    %992 = vector.extract_strided_slice %979 {offsets = [0, 64], sizes = [2, 32], strides = [1, 1]} : vector<2x128xf32> to vector<2x32xf32>
    %993 = math.tanh %992 : vector<2x32xf32>
    %994 = vector.extract_strided_slice %979 {offsets = [0, 96], sizes = [2, 32], strides = [1, 1]} : vector<2x128xf32> to vector<2x32xf32>
    %995 = arith.negf %994 : vector<2x32xf32>
    %996 = math.exp %995 : vector<2x32xf32>
    %cst_329 = arith.constant 1.000000e+00 : f32
    %997 = vector.broadcast %cst_329 : f32 to vector<2x32xf32>
    %998 = arith.addf %997, %996 : vector<2x32xf32>
    %999 = arith.divf %997, %998 : vector<2x32xf32>
    %1000 = arith.mulf %991, %964 : vector<2x32xf32>
    %1001 = arith.mulf %985, %993 : vector<2x32xf32>
    %1002 = arith.addf %1000, %1001 : vector<2x32xf32>
    %1003 = math.tanh %1002 : vector<2x32xf32>
    %1004 = arith.mulf %999, %1003 : vector<2x32xf32>
    %cst_330 = arith.constant 0.000000e+00 : f32
    %1005 = vector.broadcast %cst_330 : f32 to vector<2x32xf32>
    %1006 = arith.maximumf %1004, %1005 : vector<2x32xf32>
    %1007 = vector.extract_strided_slice %1006 {offsets = [0, 0], sizes = [2, 16], strides = [1, 1]} : vector<2x32xf32> to vector<2x16xf32>
    %c0_331 = arith.constant 0 : index
    %c384 = arith.constant 384 : index
    %1008 = vector.load %arg31[%c0_331, %c384] : memref<2x512xf32, #tpu.memory_space<vmem>>, vector<2x16xf32>
    tpu.vector_store %arg31[%c0_331, %c384], %1007 {strides = array<i32>} : memref<2x512xf32, #tpu.memory_space<vmem>>, vector<2x16xf32>,
    %1009 = vector.extract_strided_slice %1006 {offsets = [0, 16], sizes = [2, 16], strides = [1, 1]} : vector<2x32xf32> to vector<2x16xf32>
    %c0_332 = arith.constant 0 : index
    %c112 = arith.constant 112 : index
    %1010 = vector.load %arg31[%c0_332, %c112] : memref<2x512xf32, #tpu.memory_space<vmem>>, vector<2x16xf32>
    tpu.vector_store %arg31[%c0_332, %c112], %1009 {strides = array<i32>} : memref<2x512xf32, #tpu.memory_space<vmem>>, vector<2x16xf32>,
    %1011 = vector.extract_strided_slice %510 {offsets = [0, 13, 0], sizes = [2, 1, 128], strides = [1, 1, 1]} : vector<2x16x128xf32> to vector<2x1x128xf32>
    %1012 = vector.shape_cast %1011 : vector<2x1x128xf32> to vector<2x128xf32>
    %1013 = vector.extract_strided_slice %513 {offsets = [0, 2, 0], sizes = [2, 1, 128], strides = [1, 1, 1]} : vector<2x16x128xf32> to vector<2x1x128xf32>
    %1014 = vector.shape_cast %1013 : vector<2x1x128xf32> to vector<2x128xf32>
    %1015 = arith.addf %1012, %1014 : vector<2x128xf32>
    %cst_333 = arith.constant dense<0.000000e+00> : vector<2x128xf32>
    %1016 = tpu.matmul %1004, %514, %cst_333 {dimension_numbers = #tpu.dot_dimension_numbers<[1], [0], [0], [1], [0, 0, 1, 1], [], []>} : vector<2x32xf32>, vector<32x128xf32>, vector<2x128xf32> -> vector<2x128xf32>
    %1017 = arith.addf %1015, %1016 : vector<2x128xf32>
    %1018 = vector.extract_strided_slice %1017 {offsets = [0, 0], sizes = [2, 32], strides = [1, 1]} : vector<2x128xf32> to vector<2x32xf32>
    %1019 = arith.negf %1018 : vector<2x32xf32>
    %1020 = math.exp %1019 : vector<2x32xf32>
    %cst_334 = arith.constant 1.000000e+00 : f32
    %1021 = vector.broadcast %cst_334 : f32 to vector<2x32xf32>
    %1022 = arith.addf %1021, %1020 : vector<2x32xf32>
    %1023 = arith.divf %1021, %1022 : vector<2x32xf32>
    %1024 = vector.extract_strided_slice %1017 {offsets = [0, 32], sizes = [2, 32], strides = [1, 1]} : vector<2x128xf32> to vector<2x32xf32>
    %1025 = arith.negf %1024 : vector<2x32xf32>
    %1026 = math.exp %1025 : vector<2x32xf32>
    %cst_335 = arith.constant 1.000000e+00 : f32
    %1027 = vector.broadcast %cst_335 : f32 to vector<2x32xf32>
    %1028 = arith.addf %1027, %1026 : vector<2x32xf32>
    %1029 = arith.divf %1027, %1028 : vector<2x32xf32>
    %1030 = vector.extract_strided_slice %1017 {offsets = [0, 64], sizes = [2, 32], strides = [1, 1]} : vector<2x128xf32> to vector<2x32xf32>
    %1031 = math.tanh %1030 : vector<2x32xf32>
    %1032 = vector.extract_strided_slice %1017 {offsets = [0, 96], sizes = [2, 32], strides = [1, 1]} : vector<2x128xf32> to vector<2x32xf32>
    %1033 = arith.negf %1032 : vector<2x32xf32>
    %1034 = math.exp %1033 : vector<2x32xf32>
    %cst_336 = arith.constant 1.000000e+00 : f32
    %1035 = vector.broadcast %cst_336 : f32 to vector<2x32xf32>
    %1036 = arith.addf %1035, %1034 : vector<2x32xf32>
    %1037 = arith.divf %1035, %1036 : vector<2x32xf32>
    %1038 = arith.mulf %1029, %1002 : vector<2x32xf32>
    %1039 = arith.mulf %1023, %1031 : vector<2x32xf32>
    %1040 = arith.addf %1038, %1039 : vector<2x32xf32>
    %1041 = math.tanh %1040 : vector<2x32xf32>
    %1042 = arith.mulf %1037, %1041 : vector<2x32xf32>
    %cst_337 = arith.constant 0.000000e+00 : f32
    %1043 = vector.broadcast %cst_337 : f32 to vector<2x32xf32>
    %1044 = arith.maximumf %1042, %1043 : vector<2x32xf32>
    %1045 = vector.extract_strided_slice %1044 {offsets = [0, 0], sizes = [2, 16], strides = [1, 1]} : vector<2x32xf32> to vector<2x16xf32>
    %c0_338 = arith.constant 0 : index
    %c416 = arith.constant 416 : index
    %1046 = vector.load %arg31[%c0_338, %c416] : memref<2x512xf32, #tpu.memory_space<vmem>>, vector<2x16xf32>
    tpu.vector_store %arg31[%c0_338, %c416], %1045 {strides = array<i32>} : memref<2x512xf32, #tpu.memory_space<vmem>>, vector<2x16xf32>,
    %1047 = vector.extract_strided_slice %1044 {offsets = [0, 16], sizes = [2, 16], strides = [1, 1]} : vector<2x32xf32> to vector<2x16xf32>
    %c0_339 = arith.constant 0 : index
    %c80 = arith.constant 80 : index
    %1048 = vector.load %arg31[%c0_339, %c80] : memref<2x512xf32, #tpu.memory_space<vmem>>, vector<2x16xf32>
    tpu.vector_store %arg31[%c0_339, %c80], %1047 {strides = array<i32>} : memref<2x512xf32, #tpu.memory_space<vmem>>, vector<2x16xf32>,
    %1049 = vector.extract_strided_slice %510 {offsets = [0, 14, 0], sizes = [2, 1, 128], strides = [1, 1, 1]} : vector<2x16x128xf32> to vector<2x1x128xf32>
    %1050 = vector.shape_cast %1049 : vector<2x1x128xf32> to vector<2x128xf32>
    %1051 = vector.extract_strided_slice %513 {offsets = [0, 1, 0], sizes = [2, 1, 128], strides = [1, 1, 1]} : vector<2x16x128xf32> to vector<2x1x128xf32>
    %1052 = vector.shape_cast %1051 : vector<2x1x128xf32> to vector<2x128xf32>
    %1053 = arith.addf %1050, %1052 : vector<2x128xf32>
    %cst_340 = arith.constant dense<0.000000e+00> : vector<2x128xf32>
    %1054 = tpu.matmul %1042, %514, %cst_340 {dimension_numbers = #tpu.dot_dimension_numbers<[1], [0], [0], [1], [0, 0, 1, 1], [], []>} : vector<2x32xf32>, vector<32x128xf32>, vector<2x128xf32> -> vector<2x128xf32>
    %1055 = arith.addf %1053, %1054 : vector<2x128xf32>
    %1056 = vector.extract_strided_slice %1055 {offsets = [0, 0], sizes = [2, 32], strides = [1, 1]} : vector<2x128xf32> to vector<2x32xf32>
    %1057 = arith.negf %1056 : vector<2x32xf32>
    %1058 = math.exp %1057 : vector<2x32xf32>
    %cst_341 = arith.constant 1.000000e+00 : f32
    %1059 = vector.broadcast %cst_341 : f32 to vector<2x32xf32>
    %1060 = arith.addf %1059, %1058 : vector<2x32xf32>
    %1061 = arith.divf %1059, %1060 : vector<2x32xf32>
    %1062 = vector.extract_strided_slice %1055 {offsets = [0, 32], sizes = [2, 32], strides = [1, 1]} : vector<2x128xf32> to vector<2x32xf32>
    %1063 = arith.negf %1062 : vector<2x32xf32>
    %1064 = math.exp %1063 : vector<2x32xf32>
    %cst_342 = arith.constant 1.000000e+00 : f32
    %1065 = vector.broadcast %cst_342 : f32 to vector<2x32xf32>
    %1066 = arith.addf %1065, %1064 : vector<2x32xf32>
    %1067 = arith.divf %1065, %1066 : vector<2x32xf32>
    %1068 = vector.extract_strided_slice %1055 {offsets = [0, 64], sizes = [2, 32], strides = [1, 1]} : vector<2x128xf32> to vector<2x32xf32>
    %1069 = math.tanh %1068 : vector<2x32xf32>
    %1070 = vector.extract_strided_slice %1055 {offsets = [0, 96], sizes = [2, 32], strides = [1, 1]} : vector<2x128xf32> to vector<2x32xf32>
    %1071 = arith.negf %1070 : vector<2x32xf32>
    %1072 = math.exp %1071 : vector<2x32xf32>
    %cst_343 = arith.constant 1.000000e+00 : f32
    %1073 = vector.broadcast %cst_343 : f32 to vector<2x32xf32>
    %1074 = arith.addf %1073, %1072 : vector<2x32xf32>
    %1075 = arith.divf %1073, %1074 : vector<2x32xf32>
    %1076 = arith.mulf %1067, %1040 : vector<2x32xf32>
    %1077 = arith.mulf %1061, %1069 : vector<2x32xf32>
    %1078 = arith.addf %1076, %1077 : vector<2x32xf32>
    %1079 = math.tanh %1078 : vector<2x32xf32>
    %1080 = arith.mulf %1075, %1079 : vector<2x32xf32>
    %cst_344 = arith.constant 0.000000e+00 : f32
    %1081 = vector.broadcast %cst_344 : f32 to vector<2x32xf32>
    %1082 = arith.maximumf %1080, %1081 : vector<2x32xf32>
    %1083 = vector.extract_strided_slice %1082 {offsets = [0, 0], sizes = [2, 16], strides = [1, 1]} : vector<2x32xf32> to vector<2x16xf32>
    %c0_345 = arith.constant 0 : index
    %c448 = arith.constant 448 : index
    %1084 = vector.load %arg31[%c0_345, %c448] : memref<2x512xf32, #tpu.memory_space<vmem>>, vector<2x16xf32>
    tpu.vector_store %arg31[%c0_345, %c448], %1083 {strides = array<i32>} : memref<2x512xf32, #tpu.memory_space<vmem>>, vector<2x16xf32>,
    %1085 = vector.extract_strided_slice %1082 {offsets = [0, 16], sizes = [2, 16], strides = [1, 1]} : vector<2x32xf32> to vector<2x16xf32>
    %c0_346 = arith.constant 0 : index
    %c48 = arith.constant 48 : index
    %1086 = vector.load %arg31[%c0_346, %c48] : memref<2x512xf32, #tpu.memory_space<vmem>>, vector<2x16xf32>
    tpu.vector_store %arg31[%c0_346, %c48], %1085 {strides = array<i32>} : memref<2x512xf32, #tpu.memory_space<vmem>>, vector<2x16xf32>,
    %1087 = vector.extract_strided_slice %510 {offsets = [0, 15, 0], sizes = [2, 1, 128], strides = [1, 1, 1]} : vector<2x16x128xf32> to vector<2x1x128xf32>
    %1088 = vector.shape_cast %1087 : vector<2x1x128xf32> to vector<2x128xf32>
    %1089 = vector.extract_strided_slice %513 {offsets = [0, 0, 0], sizes = [2, 1, 128], strides = [1, 1, 1]} : vector<2x16x128xf32> to vector<2x1x128xf32>
    %1090 = vector.shape_cast %1089 : vector<2x1x128xf32> to vector<2x128xf32>
    %1091 = arith.addf %1088, %1090 : vector<2x128xf32>
    %cst_347 = arith.constant dense<0.000000e+00> : vector<2x128xf32>
    %1092 = tpu.matmul %1080, %514, %cst_347 {dimension_numbers = #tpu.dot_dimension_numbers<[1], [0], [0], [1], [0, 0, 1, 1], [], []>} : vector<2x32xf32>, vector<32x128xf32>, vector<2x128xf32> -> vector<2x128xf32>
    %1093 = arith.addf %1091, %1092 : vector<2x128xf32>
    %1094 = vector.extract_strided_slice %1093 {offsets = [0, 0], sizes = [2, 32], strides = [1, 1]} : vector<2x128xf32> to vector<2x32xf32>
    %1095 = arith.negf %1094 : vector<2x32xf32>
    %1096 = math.exp %1095 : vector<2x32xf32>
    %cst_348 = arith.constant 1.000000e+00 : f32
    %1097 = vector.broadcast %cst_348 : f32 to vector<2x32xf32>
    %1098 = arith.addf %1097, %1096 : vector<2x32xf32>
    %1099 = arith.divf %1097, %1098 : vector<2x32xf32>
    %1100 = vector.extract_strided_slice %1093 {offsets = [0, 32], sizes = [2, 32], strides = [1, 1]} : vector<2x128xf32> to vector<2x32xf32>
    %1101 = arith.negf %1100 : vector<2x32xf32>
    %1102 = math.exp %1101 : vector<2x32xf32>
    %cst_349 = arith.constant 1.000000e+00 : f32
    %1103 = vector.broadcast %cst_349 : f32 to vector<2x32xf32>
    %1104 = arith.addf %1103, %1102 : vector<2x32xf32>
    %1105 = arith.divf %1103, %1104 : vector<2x32xf32>
    %1106 = vector.extract_strided_slice %1093 {offsets = [0, 64], sizes = [2, 32], strides = [1, 1]} : vector<2x128xf32> to vector<2x32xf32>
    %1107 = math.tanh %1106 : vector<2x32xf32>
    %1108 = vector.extract_strided_slice %1093 {offsets = [0, 96], sizes = [2, 32], strides = [1, 1]} : vector<2x128xf32> to vector<2x32xf32>
    %1109 = arith.negf %1108 : vector<2x32xf32>
    %1110 = math.exp %1109 : vector<2x32xf32>
    %cst_350 = arith.constant 1.000000e+00 : f32
    %1111 = vector.broadcast %cst_350 : f32 to vector<2x32xf32>
    %1112 = arith.addf %1111, %1110 : vector<2x32xf32>
    %1113 = arith.divf %1111, %1112 : vector<2x32xf32>
    %1114 = arith.mulf %1105, %1078 : vector<2x32xf32>
    %1115 = arith.mulf %1099, %1107 : vector<2x32xf32>
    %1116 = arith.addf %1114, %1115 : vector<2x32xf32>
    %1117 = math.tanh %1116 : vector<2x32xf32>
    %1118 = arith.mulf %1113, %1117 : vector<2x32xf32>
    %cst_351 = arith.constant 0.000000e+00 : f32
    %1119 = vector.broadcast %cst_351 : f32 to vector<2x32xf32>
    %1120 = arith.maximumf %1118, %1119 : vector<2x32xf32>
    %1121 = vector.extract_strided_slice %1120 {offsets = [0, 0], sizes = [2, 16], strides = [1, 1]} : vector<2x32xf32> to vector<2x16xf32>
    %c0_352 = arith.constant 0 : index
    %c480 = arith.constant 480 : index
    %1122 = vector.load %arg31[%c0_352, %c480] : memref<2x512xf32, #tpu.memory_space<vmem>>, vector<2x16xf32>
    tpu.vector_store %arg31[%c0_352, %c480], %1121 {strides = array<i32>} : memref<2x512xf32, #tpu.memory_space<vmem>>, vector<2x16xf32>,
    %1123 = vector.extract_strided_slice %1120 {offsets = [0, 16], sizes = [2, 16], strides = [1, 1]} : vector<2x32xf32> to vector<2x16xf32>
    %c0_353 = arith.constant 0 : index
    %c16 = arith.constant 16 : index
    %1124 = vector.load %arg31[%c0_353, %c16] : memref<2x512xf32, #tpu.memory_space<vmem>>, vector<2x16xf32>
    tpu.vector_store %arg31[%c0_353, %c16], %1123 {strides = array<i32>} : memref<2x512xf32, #tpu.memory_space<vmem>>, vector<2x16xf32>,
    %c0_354 = arith.constant 0 : index
    %c0_355 = arith.constant 0 : index
    %1125 = vector.load %arg31[%c0_354, %c0_355] : memref<2x512xf32, #tpu.memory_space<vmem>>, vector<2x512xf32>
    %c0_356 = arith.constant 0 : index
    %c0_357 = arith.constant 0 : index
    %1126 = vector.load %arg19[%c0_356, %c0_357] : memref<512x64xbf16, #tpu.memory_space<vmem>>, vector<512x64xbf16>
    %c0_358 = arith.constant 0 : index
    %c0_359 = arith.constant 0 : index
    %1127 = vector.load %arg20[%c0_358, %c0_359] : memref<1x64xf32, #tpu.memory_space<vmem>>, vector<1x64xf32>
    %1128 = arith.truncf %1125 : vector<2x512xf32> to vector<2x512xbf16>
    %cst_360 = arith.constant dense<0.000000e+00> : vector<2x64xf32>
    %1129 = tpu.matmul %1128, %1126, %cst_360 {dimension_numbers = #tpu.dot_dimension_numbers<[1], [0], [0], [1], [0, 0, 1, 1], [], []>} : vector<2x512xbf16>, vector<512x64xbf16>, vector<2x64xf32> -> vector<2x64xf32>
    %1130 = vector.broadcast %1127 : vector<1x64xf32> to vector<2x64xf32>
    %1131 = arith.addf %1129, %1130 : vector<2x64xf32>
    %cst_361 = arith.constant 0.000000e+00 : f32
    %1132 = vector.broadcast %cst_361 : f32 to vector<2x64xf32>
    %1133 = arith.maximumf %1131, %1132 : vector<2x64xf32>
    %c0_362 = arith.constant 0 : index
    %c0_363 = arith.constant 0 : index
    %1134 = vector.load %arg21[%c0_362, %c0_363] : memref<64x64xbf16, #tpu.memory_space<vmem>>, vector<64x64xbf16>
    %c0_364 = arith.constant 0 : index
    %c0_365 = arith.constant 0 : index
    %1135 = vector.load %arg22[%c0_364, %c0_365] : memref<1x64xf32, #tpu.memory_space<vmem>>, vector<1x64xf32>
    %1136 = arith.truncf %1133 : vector<2x64xf32> to vector<2x64xbf16>
    %cst_366 = arith.constant dense<0.000000e+00> : vector<2x64xf32>
    %1137 = tpu.matmul %1136, %1134, %cst_366 {dimension_numbers = #tpu.dot_dimension_numbers<[1], [0], [0], [1], [0, 0, 1, 1], [], []>} : vector<2x64xbf16>, vector<64x64xbf16>, vector<2x64xf32> -> vector<2x64xf32>
    %1138 = vector.broadcast %1135 : vector<1x64xf32> to vector<2x64xf32>
    %1139 = arith.addf %1137, %1138 : vector<2x64xf32>
    %cst_367 = arith.constant 0.000000e+00 : f32
    %1140 = vector.broadcast %cst_367 : f32 to vector<2x64xf32>
    %1141 = arith.maximumf %1139, %1140 : vector<2x64xf32>
    %c0_368 = arith.constant 0 : index
    %c0_369 = arith.constant 0 : index
    %1142 = vector.load %arg23[%c0_368, %c0_369] : memref<64x64xbf16, #tpu.memory_space<vmem>>, vector<64x64xbf16>
    %c0_370 = arith.constant 0 : index
    %c0_371 = arith.constant 0 : index
    %1143 = vector.load %arg24[%c0_370, %c0_371] : memref<1x64xf32, #tpu.memory_space<vmem>>, vector<1x64xf32>
    %1144 = arith.truncf %1141 : vector<2x64xf32> to vector<2x64xbf16>
    %cst_372 = arith.constant dense<0.000000e+00> : vector<2x64xf32>
    %1145 = tpu.matmul %1144, %1142, %cst_372 {dimension_numbers = #tpu.dot_dimension_numbers<[1], [0], [0], [1], [0, 0, 1, 1], [], []>} : vector<2x64xbf16>, vector<64x64xbf16>, vector<2x64xf32> -> vector<2x64xf32>
    %1146 = vector.broadcast %1143 : vector<1x64xf32> to vector<2x64xf32>
    %1147 = arith.addf %1145, %1146 : vector<2x64xf32>
    %cst_373 = arith.constant 0.000000e+00 : f32
    %1148 = vector.broadcast %cst_373 : f32 to vector<2x64xf32>
    %1149 = arith.maximumf %1147, %1148 : vector<2x64xf32>
    %c0_374 = arith.constant 0 : index
    %c0_375 = arith.constant 0 : index
    %1150 = vector.load %arg25[%c0_374, %c0_375] : memref<64x64xbf16, #tpu.memory_space<vmem>>, vector<64x64xbf16>
    %c0_376 = arith.constant 0 : index
    %c0_377 = arith.constant 0 : index
    %1151 = vector.load %arg26[%c0_376, %c0_377] : memref<1x64xf32, #tpu.memory_space<vmem>>, vector<1x64xf32>
    %1152 = arith.truncf %1149 : vector<2x64xf32> to vector<2x64xbf16>
    %cst_378 = arith.constant dense<0.000000e+00> : vector<2x64xf32>
    %1153 = tpu.matmul %1152, %1150, %cst_378 {dimension_numbers = #tpu.dot_dimension_numbers<[1], [0], [0], [1], [0, 0, 1, 1], [], []>} : vector<2x64xbf16>, vector<64x64xbf16>, vector<2x64xf32> -> vector<2x64xf32>
    %1154 = vector.broadcast %1151 : vector<1x64xf32> to vector<2x64xf32>
    %1155 = arith.addf %1153, %1154 : vector<2x64xf32>
    %cst_379 = arith.constant 0.000000e+00 : f32
    %1156 = vector.broadcast %cst_379 : f32 to vector<2x64xf32>
    %1157 = arith.maximumf %1155, %1156 : vector<2x64xf32>
    %c0_380 = arith.constant 0 : index
    %c0_381 = arith.constant 0 : index
    %1158 = vector.load %arg30[%c0_380, %c0_381] : memref<2x64xf32, #tpu.memory_space<vmem>>, vector<2x64xf32>
    tpu.vector_store %arg30[%c0_380, %c0_381], %1157 {strides = array<i32>} : memref<2x64xf32, #tpu.memory_space<vmem>>, vector<2x64xf32>,
    %1159 = arith.truncf %1157 : vector<2x64xf32> to vector<2x64xbf16>
    %c0_382 = arith.constant 0 : index
    %c0_383 = arith.constant 0 : index
    %1160 = vector.load %arg27[%c0_382, %c0_383] : memref<64x5xbf16, #tpu.memory_space<vmem>>, vector<64x5xbf16>
    %cst_384 = arith.constant dense<0.000000e+00> : vector<2x5xf32>
    %1161 = tpu.matmul %1159, %1160, %cst_384 {dimension_numbers = #tpu.dot_dimension_numbers<[1], [0], [0], [1], [0, 0, 1, 1], [], []>} : vector<2x64xbf16>, vector<64x5xbf16>, vector<2x5xf32> -> vector<2x5xf32>
    %c0_385 = arith.constant 0 : index
    %c0_386 = arith.constant 0 : index
    %1162 = vector.load %arg28[%c0_385, %c0_386] : memref<1x5xf32, #tpu.memory_space<vmem>>, vector<1x5xf32>
    %1163 = vector.broadcast %1162 : vector<1x5xf32> to vector<2x5xf32>
    %1164 = arith.addf %1161, %1163 : vector<2x5xf32>
    %c0_387 = arith.constant 0 : index
    %c0_388 = arith.constant 0 : index
    %1165 = vector.load %arg29[%c0_387, %c0_388] : memref<2x5xf32, #tpu.memory_space<vmem>>, vector<2x5xf32>
    tpu.vector_store %arg29[%c0_387, %c0_388], %1164 {strides = array<i32>} : memref<2x5xf32, #tpu.memory_space<vmem>>, vector<2x5xf32>,
    return
  }
}

</mosaic_0001>

<llo_original>
// kernel: feature_extractor.1
$region0: #{feature_extractor.1}
  #allocation0 [shape = 'u32[]', space=smem, size = 0x4, offset = 0x4, fixed_abs, tag = 'smem constant byte address 0x4 - core index']
  #allocation1 [shape = 'u32[144,128]{1,0:T(1,128)}', space=vmem, size = 0x12000, scoped, tag = 'internal scratch']
  #allocation2 [shape = 'f32[2,512]{1,0:T(2,128)}', space=vmem, size = 0x1000, scoped, tag = 'scratch operand']
  %s0 = inlined_call_operand.smem [shape: u32[31], index: -1, kind: input, shape index: {}]
  %s1 = sld [smem:[%s0]]
  %s2 = scalar_lea.smem %s0, 1
  %s3 = sld [smem:[%s2]]
  %s4 = scalar_lea.smem %s0, 2
  %s5 = sld [smem:[%s4]]
  %s6 = scalar_lea.smem %s0, 3
  %s7 = sld [smem:[%s6]]
  %s8 = scalar_lea.smem %s0, 4
  %s9 = sld [smem:[%s8]]
  %s10 = scalar_lea.smem %s0, 5
  %s11 = sld [smem:[%s10]]
  %s12 = scalar_lea.smem %s0, 6
  %s13 = sld [smem:[%s12]]
  %s14 = scalar_lea.smem %s0, 7
  %s15 = sld [smem:[%s14]]
  %s16 = scalar_lea.smem %s0, 8
  %s17 = sld [smem:[%s16]]
  %s18 = scalar_lea.smem %s0, 9
  %s19 = sld [smem:[%s18]]
  %s20 = scalar_lea.smem %s0, 10
  %s21 = sld [smem:[%s20]]
  %s22 = scalar_lea.smem %s0, 11
  %s23 = sld [smem:[%s22]]
  %s24 = scalar_lea.smem %s0, 12
  %s25 = sld [smem:[%s24]]
  %s26 = scalar_lea.smem %s0, 13
  %s27 = sld [smem:[%s26]]
  %s28 = scalar_lea.smem %s0, 14
  %s29 = sld [smem:[%s28]]
  %s30 = scalar_lea.smem %s0, 15
  %s31 = sld [smem:[%s30]]
  %s32 = scalar_lea.smem %s0, 16
  %s33 = sld [smem:[%s32]]
  %s34 = scalar_lea.smem %s0, 17
  %s35 = sld [smem:[%s34]]
  %s36 = scalar_lea.smem %s0, 18
  %s37 = sld [smem:[%s36]]
  %s38 = scalar_lea.smem %s0, 19
  %s39 = sld [smem:[%s38]]
  %s40 = scalar_lea.smem %s0, 20
  %s41 = sld [smem:[%s40]]
  %s42 = scalar_lea.smem %s0, 21
  %s43 = sld [smem:[%s42]]
  %s44 = scalar_lea.smem %s0, 22
  %s45 = sld [smem:[%s44]]
  %s46 = scalar_lea.smem %s0, 23
  %s47 = sld [smem:[%s46]]
  %s48 = scalar_lea.smem %s0, 24
  %s49 = sld [smem:[%s48]]
  %s50 = scalar_lea.smem %s0, 25
  %s51 = sld [smem:[%s50]]
  %s52 = scalar_lea.smem %s0, 26
  %s53 = sld [smem:[%s52]]
  %s54 = scalar_lea.smem %s0, 27
  %s55 = sld [smem:[%s54]]
  %s56 = scalar_lea.smem %s0, 28
  %s57 = sld [smem:[%s56]]
  %s58 = scalar_lea.smem %s0, 29
  %s59 = sld [smem:[%s58]]
  %s60 = scalar_lea.smem %s0, 30
  %s61 = sld [smem:[%s60]]
  %62 = xla_tuple %s59, %s61
  %s63 = sld [smem:[#allocation0]]
  $region218: #{feature_extractor.1} parent=0
    _
  %s65 = ssub.s32 1, %s63
  %s66 = scalar_select 0, %s65, %s63
  $region1: #{feature_extractor.1} parent=0
    #allocation3 [shape = 'u8[10240]{0}', space=vmem, size = 0x2800, scoped, tag = 'input window, operand 1, single buffered']
    #allocation4 [shape = 's32[1]{0}', space=sflag, size = 0x4, scoped, tag = 'scoped memory for feature_extractor.1']
    #allocation5 [shape = 's32[1]{0}', space=sflag, size = 0x4, scoped, tag = 'scoped memory for feature_extractor.1']
    #allocation6 [shape = 'u8[512]{0}', space=vmem, size = 0x400, scoped, tag = 'input window, operand 4, single buffered']
    #allocation7 [shape = 's32[1]{0}', space=sflag, size = 0x4, scoped, tag = 'scoped memory for feature_extractor.1']
    #allocation8 [shape = 'u8[512]{0}', space=vmem, size = 0x400, scoped, tag = 'input window, operand 6, single buffered']
    #allocation9 [shape = 'u8[81920]{0}', space=vmem, size = 0x14000, scoped, tag = 'input window, operand 7, single buffered']
    #allocation10 [shape = 's32[1]{0}', space=sflag, size = 0x4, scoped, tag = 'scoped memory for feature_extractor.1']
    #allocation11 [shape = 'u8[512]{0}', space=vmem, size = 0x400, scoped, tag = 'input window, operand 8, single buffered']
    #allocation12 [shape = 'u8[81920]{0}', space=vmem, size = 0x14000, scoped, tag = 'input window, operand 9, single buffered']
    #allocation13 [shape = 's32[1]{0}', space=sflag, size = 0x4, scoped, tag = 'scoped memory for feature_extractor.1']
    #allocation14 [shape = 'u8[512]{0}', space=vmem, size = 0x400, scoped, tag = 'input window, operand 10, single buffered']
    #allocation15 [shape = 'u8[81920]{0}', space=vmem, size = 0x14000, scoped, tag = 'input window, operand 11, single buffered']
    #allocation16 [shape = 's32[1]{0}', space=sflag, size = 0x4, scoped, tag = 'scoped memory for feature_extractor.1']
    #allocation17 [shape = 'u8[512]{0}', space=vmem, size = 0x400, scoped, tag = 'input window, operand 12, single buffered']
    #allocation18 [shape = 'u8[512]{0}', space=vmem, size = 0x400, scoped, tag = 'input window, operand 14, single buffered']
    #allocation19 [shape = 's32[1]{0}', space=sflag, size = 0x4, scoped, tag = 'scoped memory for feature_extractor.1']
    #allocation20 [shape = 'u8[8192]{0}', space=vmem, size = 0x2000, scoped, tag = 'input window, operand 15, single buffered']
    #allocation21 [shape = 'u8[8192]{0}', space=vmem, size = 0x2000, scoped, tag = 'input window, operand 16, single buffered']
    #allocation22 [shape = 's32[1]{0}', space=sflag, size = 0x4, scoped, tag = 'scoped memory for feature_extractor.1']
    #allocation23 [shape = 'u8[512]{0}', space=vmem, size = 0x400, scoped, tag = 'input window, operand 17, single buffered']
    #allocation24 [shape = 'u8[512]{0}', space=vmem, size = 0x400, scoped, tag = 'input window, operand 20, single buffered']
    #allocation25 [shape = 's32[1]{0}', space=sflag, size = 0x4, scoped, tag = 'scoped memory for feature_extractor.1']
    #allocation26 [shape = 'u8[16384]{0}', space=vmem, size = 0x4000, scoped, tag = 'input window, operand 21, single buffered']
    #allocation27 [shape = 'u8[512]{0}', space=vmem, size = 0x400, scoped, tag = 'input window, operand 22, single buffered']
    #allocation28 [shape = 's32[1]{0}', space=sflag, size = 0x4, scoped, tag = 'scoped memory for feature_extractor.1']
    #allocation29 [shape = 'u8[16384]{0}', space=vmem, size = 0x4000, scoped, tag = 'input window, operand 23, single buffered']
    #allocation30 [shape = 'u8[512]{0}', space=vmem, size = 0x400, scoped, tag = 'input window, operand 24, single buffered']
    #allocation31 [shape = 's32[1]{0}', space=sflag, size = 0x4, scoped, tag = 'scoped memory for feature_extractor.1']
    #allocation32 [shape = 'u8[16384]{0}', space=vmem, size = 0x4000, scoped, tag = 'input window, operand 25, single buffered']
    #allocation33 [shape = 'u8[512]{0}', space=vmem, size = 0x400, scoped, tag = 'input window, operand 26, single buffered']
    #allocation34 [shape = 's32[1]{0}', space=sflag, size = 0x4, scoped, tag = 'scoped memory for feature_extractor.1']
    #allocation35 [shape = 'u8[512]{0}', space=vmem, size = 0x400, scoped, tag = 'input window, operand 28, single buffered']
    #allocation36 [shape = 'u8[1024]{0}', space=vmem, size = 0x400, scoped, tag = 'output window, operand 0, single buffered']
    #allocation37 [shape = 'u8[1024]{0}', space=vmem, size = 0x400, scoped, tag = 'output window, operand 1, single buffered']
    #allocation38 [shape = 's32[1]{0}', space=sflag, size = 0x4, scoped, tag = 'scoped memory for feature_extractor.1']
    %67 = vsyncpa [#allocation4], 0
    %68 = vsyncpa [#allocation7], 0
    %69 = vsyncpa [#allocation10], 0
    %70 = vsyncpa [#allocation13], 0
    %71 = vsyncpa [#allocation16], 0
    %72 = vsyncpa [#allocation19], 0
    %73 = vsyncpa [#allocation22], 0
    %74 = vsyncpa [#allocation25], 0
    %75 = vsyncpa [#allocation28], 0
    %76 = vsyncpa [#allocation31], 0
    %77 = vsyncpa [#allocation34], 0
    %78 = vsyncpa [#allocation5], 0
    %79 = vsyncpa [#allocation38], 0
    // Predicated region
    $region2: #{feature_extractor.1} parent=1 // pred_check
      _
    $region3: #{feature_extractor.1} parent=1 // pred_check_branch
      %81 = sbr.rel (0) target = $region5
    $region4: #{feature_extractor.1} parent=1 // pred_region
      _
    $region5: #{feature_extractor.1} parent=1 // pred_fallthru
      _
    // Predicated region
    $region6: #{feature_extractor.1} parent=1 // pred_check
      _
    $region7: #{feature_extractor.1} parent=1 // pred_check_branch
      %83 = sbr.rel (0) target = $region9
    $region8: #{feature_extractor.1} parent=1 // pred_region
      %s85 = ssub.s32 320, 320
      %86 = vsyncadd [#allocation4], %s85
      %s87 = sshll.u32 [#allocation3], 4
      %s88 = int_to_ptr.vmem [resolvable:$true] %s87
      %93 = dma.hbm_to_vmem [thread:$0]  %s3, 320, %s88, [#allocation4], 64, 64, 4
    $region9: #{feature_extractor.1} parent=1 // pred_fallthru
      _
    // Predicated region
    $region10: #{feature_extractor.1} parent=1 // pred_check
      _
    $region11: #{feature_extractor.1} parent=1 // pred_check_branch
      %95 = sbr.rel (0) target = $region13
    $region12: #{feature_extractor.1} parent=1 // pred_region
      _
    $region13: #{feature_extractor.1} parent=1 // pred_fallthru
      _
    // Predicated region
    $region14: #{feature_extractor.1} parent=1 // pred_check
      _
    $region15: #{feature_extractor.1} parent=1 // pred_check_branch
      %97 = sbr.rel (0) target = $region17
    $region16: #{feature_extractor.1} parent=1 // pred_region
      _
    $region17: #{feature_extractor.1} parent=1 // pred_fallthru
      _
    // Predicated region
    $region18: #{feature_extractor.1} parent=1 // pred_check
      _
    $region19: #{feature_extractor.1} parent=1 // pred_check_branch
      %99 = sbr.rel (0) target = $region21
    $region20: #{feature_extractor.1} parent=1 // pred_region
      %s101 = ssub.s32 16, 16
      %102 = vsyncadd [#allocation7], %s101
      %s104 = sshll.u32 [#allocation6], 4
      %s105 = int_to_ptr.vmem [resolvable:$true] %s104
      %107 = dma.hbm_to_vmem [thread:$0]  %s9, 16, %s105, [#allocation7]
    $region21: #{feature_extractor.1} parent=1 // pred_fallthru
      _
    // Predicated region
    $region22: #{feature_extractor.1} parent=1 // pred_check
      _
    $region23: #{feature_extractor.1} parent=1 // pred_check_branch
      %109 = sbr.rel (0) target = $region25
    $region24: #{feature_extractor.1} parent=1 // pred_region
      _
    $region25: #{feature_extractor.1} parent=1 // pred_fallthru
      _
    // Predicated region
    $region26: #{feature_extractor.1} parent=1 // pred_check
      _
    $region27: #{feature_extractor.1} parent=1 // pred_check_branch
      %111 = sbr.rel (0) target = $region29
    $region28: #{feature_extractor.1} parent=1 // pred_region
      %s113 = ssub.s32 16, 16
      %114 = vsyncadd [#allocation7], %s113
      %s116 = sshll.u32 [#allocation8], 4
      %s117 = int_to_ptr.vmem [resolvable:$true] %s116
      %119 = dma.hbm_to_vmem [thread:$0]  %s13, 16, %s117, [#allocation7]
    $region29: #{feature_extractor.1} parent=1 // pred_fallthru
      _
    // Predicated region
    $region30: #{feature_extractor.1} parent=1 // pred_check
      _
    $region31: #{feature_extractor.1} parent=1 // pred_check_branch
      %121 = sbr.rel (0) target = $region33
    $region32: #{feature_extractor.1} parent=1 // pred_region
      %s123 = ssub.s32 2560, 2560
      %124 = vsyncadd [#allocation10], %s123
      %s125 = sshll.u32 [#allocation9], 4
      %s126 = int_to_ptr.vmem [resolvable:$true] %s125
      %131 = dma.hbm_to_vmem [thread:$0]  %s15, 2560, %s126, [#allocation10], 64, 64, 4
    $region33: #{feature_extractor.1} parent=1 // pred_fallthru
      _
    // Predicated region
    $region34: #{feature_extractor.1} parent=1 // pred_check
      _
    $region35: #{feature_extractor.1} parent=1 // pred_check_branch
      %133 = sbr.rel (0) target = $region37
    $region36: #{feature_extractor.1} parent=1 // pred_region
      %s135 = ssub.s32 16, 16
      %136 = vsyncadd [#allocation10], %s135
      %s138 = sshll.u32 [#allocation11], 4
      %s139 = int_to_ptr.vmem [resolvable:$true] %s138
      %141 = dma.hbm_to_vmem [thread:$0]  %s17, 16, %s139, [#allocation10]
    $region37: #{feature_extractor.1} parent=1 // pred_fallthru
      _
    // Predicated region
    $region38: #{feature_extractor.1} parent=1 // pred_check
      _
    $region39: #{feature_extractor.1} parent=1 // pred_check_branch
      %143 = sbr.rel (0) target = $region41
    $region40: #{feature_extractor.1} parent=1 // pred_region
      %s145 = ssub.s32 2560, 2560
      %146 = vsyncadd [#allocation13], %s145
      %s147 = sshll.u32 [#allocation12], 4
      %s148 = int_to_ptr.vmem [resolvable:$true] %s147
      %153 = dma.hbm_to_vmem [thread:$0]  %s19, 2560, %s148, [#allocation13], 64, 64, 4
    $region41: #{feature_extractor.1} parent=1 // pred_fallthru
      _
    // Predicated region
    $region42: #{feature_extractor.1} parent=1 // pred_check
      _
    $region43: #{feature_extractor.1} parent=1 // pred_check_branch
      %155 = sbr.rel (0) target = $region45
    $region44: #{feature_extractor.1} parent=1 // pred_region
      %s157 = ssub.s32 16, 16
      %158 = vsyncadd [#allocation13], %s157
      %s160 = sshll.u32 [#allocation14], 4
      %s161 = int_to_ptr.vmem [resolvable:$true] %s160
      %163 = dma.hbm_to_vmem [thread:$0]  %s21, 16, %s161, [#allocation13]
    $region45: #{feature_extractor.1} parent=1 // pred_fallthru
      _
    // Predicated region
    $region46: #{feature_extractor.1} parent=1 // pred_check
      _
    $region47: #{feature_extractor.1} parent=1 // pred_check_branch
      %165 = sbr.rel (0) target = $region49
    $region48: #{feature_extractor.1} parent=1 // pred_region
      %s167 = ssub.s32 2560, 2560
      %168 = vsyncadd [#allocation16], %s167
      %s169 = sshll.u32 [#allocation15], 4
      %s170 = int_to_ptr.vmem [resolvable:$true] %s169
      %175 = dma.hbm_to_vmem [thread:$0]  %s23, 2560, %s170, [#allocation16], 64, 64, 4
    $region49: #{feature_extractor.1} parent=1 // pred_fallthru
      _
    // Predicated region
    $region50: #{feature_extractor.1} parent=1 // pred_check
      _
    $region51: #{feature_extractor.1} parent=1 // pred_check_branch
      %177 = sbr.rel (0) target = $region53
    $region52: #{feature_extractor.1} parent=1 // pred_region
      %s179 = ssub.s32 16, 16
      %180 = vsyncadd [#allocation16], %s179
      %s182 = sshll.u32 [#allocation17], 4
      %s183 = int_to_ptr.vmem [resolvable:$true] %s182
      %185 = dma.hbm_to_vmem [thread:$0]  %s25, 16, %s183, [#allocation16]
    $region53: #{feature_extractor.1} parent=1 // pred_fallthru
      _
    // Predicated region
    $region54: #{feature_extractor.1} parent=1 // pred_check
      _
    $region55: #{feature_extractor.1} parent=1 // pred_check_branch
      %187 = sbr.rel (0) target = $region57
    $region56: #{feature_extractor.1} parent=1 // pred_region
      _
    $region57: #{feature_extractor.1} parent=1 // pred_fallthru
      _
    // Predicated region
    $region58: #{feature_extractor.1} parent=1 // pred_check
      _
    $region59: #{feature_extractor.1} parent=1 // pred_check_branch
      %189 = sbr.rel (0) target = $region61
    $region60: #{feature_extractor.1} parent=1 // pred_region
      %s191 = ssub.s32 16, 16
      %192 = vsyncadd [#allocation19], %s191
      %s194 = sshll.u32 [#allocation18], 4
      %s195 = int_to_ptr.vmem [resolvable:$true] %s194
      %197 = dma.hbm_to_vmem [thread:$0]  %s29, 16, %s195, [#allocation19]
    $region61: #{feature_extractor.1} parent=1 // pred_fallthru
      _
    // Predicated region
    $region62: #{feature_extractor.1} parent=1 // pred_check
      _
    $region63: #{feature_extractor.1} parent=1 // pred_check_branch
      %199 = sbr.rel (0) target = $region65
    $region64: #{feature_extractor.1} parent=1 // pred_region
      %s201 = ssub.s32 256, 256
      %202 = vsyncadd [#allocation19], %s201
      %s203 = sshll.u32 [#allocation20], 4
      %s204 = int_to_ptr.vmem [resolvable:$true] %s203
      %209 = dma.hbm_to_vmem [thread:$0]  %s31, 256, %s204, [#allocation19], 128, 128, 8
    $region65: #{feature_extractor.1} parent=1 // pred_fallthru
      _
    // Predicated region
    $region66: #{feature_extractor.1} parent=1 // pred_check
      _
    $region67: #{feature_extractor.1} parent=1 // pred_check_branch
      %211 = sbr.rel (0) target = $region69
    $region68: #{feature_extractor.1} parent=1 // pred_region
      %s213 = ssub.s32 256, 256
      %214 = vsyncadd [#allocation22], %s213
      %s215 = sshll.u32 [#allocation21], 4
      %s216 = int_to_ptr.vmem [resolvable:$true] %s215
      %221 = dma.hbm_to_vmem [thread:$0]  %s33, 256, %s216, [#allocation22], 128, 128, 8
    $region69: #{feature_extractor.1} parent=1 // pred_fallthru
      _
    // Predicated region
    $region70: #{feature_extractor.1} parent=1 // pred_check
      _
    $region71: #{feature_extractor.1} parent=1 // pred_check_branch
      %223 = sbr.rel (0) target = $region73
    $region72: #{feature_extractor.1} parent=1 // pred_region
      %s225 = ssub.s32 16, 16
      %226 = vsyncadd [#allocation22], %s225
      %s228 = sshll.u32 [#allocation23], 4
      %s229 = int_to_ptr.vmem [resolvable:$true] %s228
      %231 = dma.hbm_to_vmem [thread:$0]  %s35, 16, %s229, [#allocation22]
    $region73: #{feature_extractor.1} parent=1 // pred_fallthru
      _
    // Predicated region
    $region74: #{feature_extractor.1} parent=1 // pred_check
      _
    $region75: #{feature_extractor.1} parent=1 // pred_check_branch
      %233 = sbr.rel (0) target = $region77
    $region76: #{feature_extractor.1} parent=1 // pred_region
      _
    $region77: #{feature_extractor.1} parent=1 // pred_fallthru
      _
    // Predicated region
    $region78: #{feature_extractor.1} parent=1 // pred_check
      _
    $region79: #{feature_extractor.1} parent=1 // pred_check_branch
      %235 = sbr.rel (0) target = $region81
    $region80: #{feature_extractor.1} parent=1 // pred_region
      _
    $region81: #{feature_extractor.1} parent=1 // pred_fallthru
      _
    // Predicated region
    $region82: #{feature_extractor.1} parent=1 // pred_check
      _
    $region83: #{feature_extractor.1} parent=1 // pred_check_branch
      %237 = sbr.rel (0) target = $region85
    $region84: #{feature_extractor.1} parent=1 // pred_region
      %s239 = ssub.s32 16, 16
      %240 = vsyncadd [#allocation25], %s239
      %s242 = sshll.u32 [#allocation24], 4
      %s243 = int_to_ptr.vmem [resolvable:$true] %s242
      %245 = dma.hbm_to_vmem [thread:$0]  %s41, 16, %s243, [#allocation25]
    $region85: #{feature_extractor.1} parent=1 // pred_fallthru
      _
    // Predicated region
    $region86: #{feature_extractor.1} parent=1 // pred_check
      _
    $region87: #{feature_extractor.1} parent=1 // pred_check_branch
      %247 = sbr.rel (0) target = $region89
    $region88: #{feature_extractor.1} parent=1 // pred_region
      %s249 = ssub.s32 512, 512
      %250 = vsyncadd [#allocation25], %s249
      %s251 = sshll.u32 [#allocation26], 4
      %s252 = int_to_ptr.vmem [resolvable:$true] %s251
      %257 = dma.hbm_to_vmem [thread:$0]  %s43, 512, %s252, [#allocation25], 64, 64, 4
    $region89: #{feature_extractor.1} parent=1 // pred_fallthru
      _
    // Predicated region
    $region90: #{feature_extractor.1} parent=1 // pred_check
      _
    $region91: #{feature_extractor.1} parent=1 // pred_check_branch
      %259 = sbr.rel (0) target = $region93
    $region92: #{feature_extractor.1} parent=1 // pred_region
      %s261 = ssub.s32 16, 16
      %262 = vsyncadd [#allocation28], %s261
      %s264 = sshll.u32 [#allocation27], 4
      %s265 = int_to_ptr.vmem [resolvable:$true] %s264
      %267 = dma.hbm_to_vmem [thread:$0]  %s45, 16, %s265, [#allocation28]
    $region93: #{feature_extractor.1} parent=1 // pred_fallthru
      _
    // Predicated region
    $region94: #{feature_extractor.1} parent=1 // pred_check
      _
    $region95: #{feature_extractor.1} parent=1 // pred_check_branch
      %269 = sbr.rel (0) target = $region97
    $region96: #{feature_extractor.1} parent=1 // pred_region
      %s271 = ssub.s32 512, 512
      %272 = vsyncadd [#allocation28], %s271
      %s273 = sshll.u32 [#allocation29], 4
      %s274 = int_to_ptr.vmem [resolvable:$true] %s273
      %279 = dma.hbm_to_vmem [thread:$0]  %s47, 512, %s274, [#allocation28], 64, 64, 4
    $region97: #{feature_extractor.1} parent=1 // pred_fallthru
      _
    // Predicated region
    $region98: #{feature_extractor.1} parent=1 // pred_check
      _
    $region99: #{feature_extractor.1} parent=1 // pred_check_branch
      %281 = sbr.rel (0) target = $region101
    $region100: #{feature_extractor.1} parent=1 // pred_region
      %s283 = ssub.s32 16, 16
      %284 = vsyncadd [#allocation31], %s283
      %s286 = sshll.u32 [#allocation30], 4
      %s287 = int_to_ptr.vmem [resolvable:$true] %s286
      %289 = dma.hbm_to_vmem [thread:$0]  %s49, 16, %s287, [#allocation31]
    $region101: #{feature_extractor.1} parent=1 // pred_fallthru
      _
    // Predicated region
    $region102: #{feature_extractor.1} parent=1 // pred_check
      _
    $region103: #{feature_extractor.1} parent=1 // pred_check_branch
      %291 = sbr.rel (0) target = $region105
    $region104: #{feature_extractor.1} parent=1 // pred_region
      %s293 = ssub.s32 512, 512
      %294 = vsyncadd [#allocation31], %s293
      %s295 = sshll.u32 [#allocation32], 4
      %s296 = int_to_ptr.vmem [resolvable:$true] %s295
      %301 = dma.hbm_to_vmem [thread:$0]  %s51, 512, %s296, [#allocation31], 64, 64, 4
    $region105: #{feature_extractor.1} parent=1 // pred_fallthru
      _
    // Predicated region
    $region106: #{feature_extractor.1} parent=1 // pred_check
      _
    $region107: #{feature_extractor.1} parent=1 // pred_check_branch
      %303 = sbr.rel (0) target = $region109
    $region108: #{feature_extractor.1} parent=1 // pred_region
      %s305 = ssub.s32 16, 16
      %306 = vsyncadd [#allocation34], %s305
      %s308 = sshll.u32 [#allocation33], 4
      %s309 = int_to_ptr.vmem [resolvable:$true] %s308
      %311 = dma.hbm_to_vmem [thread:$0]  %s53, 16, %s309, [#allocation34]
    $region109: #{feature_extractor.1} parent=1 // pred_fallthru
      _
    // Predicated region
    $region110: #{feature_extractor.1} parent=1 // pred_check
      _
    $region111: #{feature_extractor.1} parent=1 // pred_check_branch
      %313 = sbr.rel (0) target = $region113
    $region112: #{feature_extractor.1} parent=1 // pred_region
      _
    $region113: #{feature_extractor.1} parent=1 // pred_fallthru
      _
    // Predicated region
    $region114: #{feature_extractor.1} parent=1 // pred_check
      _
    $region115: #{feature_extractor.1} parent=1 // pred_check_branch
      %315 = sbr.rel (0) target = $region117
    $region116: #{feature_extractor.1} parent=1 // pred_region
      %s317 = ssub.s32 16, 16
      %318 = vsyncadd [#allocation34], %s317
      %s320 = sshll.u32 [#allocation35], 4
      %s321 = int_to_ptr.vmem [resolvable:$true] %s320
      %323 = dma.hbm_to_vmem [thread:$0]  %s57, 16, %s321, [#allocation34]
    $region117: #{feature_extractor.1} parent=1 // pred_fallthru
      _
    // Predicated region
    $region118: #{feature_extractor.1} parent=1 // pred_check
      _
    $region119: #{feature_extractor.1} parent=1 // pred_check_branch
      %325 = sbr.rel (0) target = $region121
    $region120: #{feature_extractor.1} parent=1 // pred_region
      %326 = dma.done [#allocation4], 320
    $region121: #{feature_extractor.1} parent=1 // pred_fallthru
      _
    // Predicated region
    $region122: #{feature_extractor.1} parent=1 // pred_check
      _
    $region123: #{feature_extractor.1} parent=1 // pred_check_branch
      %328 = sbr.rel (0) target = $region125
    $region124: #{feature_extractor.1} parent=1 // pred_region
      %329 = dma.done [#allocation7], 16
    $region125: #{feature_extractor.1} parent=1 // pred_fallthru
      _
    // Predicated region
    $region126: #{feature_extractor.1} parent=1 // pred_check
      _
    $region127: #{feature_extractor.1} parent=1 // pred_check_branch
      %331 = sbr.rel (0) target = $region129
    $region128: #{feature_extractor.1} parent=1 // pred_region
      %332 = dma.done [#allocation7], 16
    $region129: #{feature_extractor.1} parent=1 // pred_fallthru
      _
    // Predicated region
    $region130: #{feature_extractor.1} parent=1 // pred_check
      _
    $region131: #{feature_extractor.1} parent=1 // pred_check_branch
      %334 = sbr.rel (0) target = $region133
    $region132: #{feature_extractor.1} parent=1 // pred_region
      %335 = dma.done [#allocation10], 2560
    $region133: #{feature_extractor.1} parent=1 // pred_fallthru
      _
    // Predicated region
    $region134: #{feature_extractor.1} parent=1 // pred_check
      _
    $region135: #{feature_extractor.1} parent=1 // pred_check_branch
      %337 = sbr.rel (0) target = $region137
    $region136: #{feature_extractor.1} parent=1 // pred_region
      %338 = dma.done [#allocation10], 16
    $region137: #{feature_extractor.1} parent=1 // pred_fallthru
      _
    // Predicated region
    $region138: #{feature_extractor.1} parent=1 // pred_check
      _
    $region139: #{feature_extractor.1} parent=1 // pred_check_branch
      %340 = sbr.rel (0) target = $region141
    $region140: #{feature_extractor.1} parent=1 // pred_region
      %341 = dma.done [#allocation13], 2560
    $region141: #{feature_extractor.1} parent=1 // pred_fallthru
      _
    // Predicated region
    $region142: #{feature_extractor.1} parent=1 // pred_check
      _
    $region143: #{feature_extractor.1} parent=1 // pred_check_branch
      %343 = sbr.rel (0) target = $region145
    $region144: #{feature_extractor.1} parent=1 // pred_region
      %344 = dma.done [#allocation13], 16
    $region145: #{feature_extractor.1} parent=1 // pred_fallthru
      _
    // Predicated region
    $region146: #{feature_extractor.1} parent=1 // pred_check
      _
    $region147: #{feature_extractor.1} parent=1 // pred_check_branch
      %346 = sbr.rel (0) target = $region149
    $region148: #{feature_extractor.1} parent=1 // pred_region
      %347 = dma.done [#allocation16], 2560
    $region149: #{feature_extractor.1} parent=1 // pred_fallthru
      _
    // Predicated region
    $region150: #{feature_extractor.1} parent=1 // pred_check
      _
    $region151: #{feature_extractor.1} parent=1 // pred_check_branch
      %349 = sbr.rel (0) target = $region153
    $region152: #{feature_extractor.1} parent=1 // pred_region
      %350 = dma.done [#allocation16], 16
    $region153: #{feature_extractor.1} parent=1 // pred_fallthru
      _
    // Predicated region
    $region154: #{feature_extractor.1} parent=1 // pred_check
      _
    $region155: #{feature_extractor.1} parent=1 // pred_check_branch
      %352 = sbr.rel (0) target = $region157
    $region156: #{feature_extractor.1} parent=1 // pred_region
      %353 = dma.done [#allocation19], 16
    $region157: #{feature_extractor.1} parent=1 // pred_fallthru
      _
    // Predicated region
    $region158: #{feature_extractor.1} parent=1 // pred_check
      _
    $region159: #{feature_extractor.1} parent=1 // pred_check_branch
      %355 = sbr.rel (0) target = $region161
    $region160: #{feature_extractor.1} parent=1 // pred_region
      %356 = dma.done [#allocation19], 256
    $region161: #{feature_extractor.1} parent=1 // pred_fallthru
      _
    // Predicated region
    $region162: #{feature_extractor.1} parent=1 // pred_check
      _
    $region163: #{feature_extractor.1} parent=1 // pred_check_branch
      %358 = sbr.rel (0) target = $region165
    $region164: #{feature_extractor.1} parent=1 // pred_region
      %359 = dma.done [#allocation22], 256
    $region165: #{feature_extractor.1} parent=1 // pred_fallthru
      _
    // Predicated region
    $region166: #{feature_extractor.1} parent=1 // pred_check
      _
    $region167: #{feature_extractor.1} parent=1 // pred_check_branch
      %361 = sbr.rel (0) target = $region169
    $region168: #{feature_extractor.1} parent=1 // pred_region
      %362 = dma.done [#allocation22], 16
    $region169: #{feature_extractor.1} parent=1 // pred_fallthru
      _
    // Predicated region
    $region170: #{feature_extractor.1} parent=1 // pred_check
      _
    $region171: #{feature_extractor.1} parent=1 // pred_check_branch
      %364 = sbr.rel (0) target = $region173
    $region172: #{feature_extractor.1} parent=1 // pred_region
      %365 = dma.done [#allocation25], 16
    $region173: #{feature_extractor.1} parent=1 // pred_fallthru
      _
    // Predicated region
    $region174: #{feature_extractor.1} parent=1 // pred_check
      _
    $region175: #{feature_extractor.1} parent=1 // pred_check_branch
      %367 = sbr.rel (0) target = $region177
    $region176: #{feature_extractor.1} parent=1 // pred_region
      %368 = dma.done [#allocation25], 512
    $region177: #{feature_extractor.1} parent=1 // pred_fallthru
      _
    // Predicated region
    $region178: #{feature_extractor.1} parent=1 // pred_check
      _
    $region179: #{feature_extractor.1} parent=1 // pred_check_branch
      %370 = sbr.rel (0) target = $region181
    $region180: #{feature_extractor.1} parent=1 // pred_region
      %371 = dma.done [#allocation28], 16
    $region181: #{feature_extractor.1} parent=1 // pred_fallthru
      _
    // Predicated region
    $region182: #{feature_extractor.1} parent=1 // pred_check
      _
    $region183: #{feature_extractor.1} parent=1 // pred_check_branch
      %373 = sbr.rel (0) target = $region185
    $region184: #{feature_extractor.1} parent=1 // pred_region
      %374 = dma.done [#allocation28], 512
    $region185: #{feature_extractor.1} parent=1 // pred_fallthru
      _
    // Predicated region
    $region186: #{feature_extractor.1} parent=1 // pred_check
      _
    $region187: #{feature_extractor.1} parent=1 // pred_check_branch
      %376 = sbr.rel (0) target = $region189
    $region188: #{feature_extractor.1} parent=1 // pred_region
      %377 = dma.done [#allocation31], 16
    $region189: #{feature_extractor.1} parent=1 // pred_fallthru
      _
    // Predicated region
    $region190: #{feature_extractor.1} parent=1 // pred_check
      _
    $region191: #{feature_extractor.1} parent=1 // pred_check_branch
      %379 = sbr.rel (0) target = $region193
    $region192: #{feature_extractor.1} parent=1 // pred_region
      %380 = dma.done [#allocation31], 512
    $region193: #{feature_extractor.1} parent=1 // pred_fallthru
      _
    // Predicated region
    $region194: #{feature_extractor.1} parent=1 // pred_check
      _
    $region195: #{feature_extractor.1} parent=1 // pred_check_branch
      %382 = sbr.rel (0) target = $region197
    $region196: #{feature_extractor.1} parent=1 // pred_region
      %383 = dma.done [#allocation34], 16
    $region197: #{feature_extractor.1} parent=1 // pred_fallthru
      _
    // Predicated region
    $region198: #{feature_extractor.1} parent=1 // pred_check
      _
    $region199: #{feature_extractor.1} parent=1 // pred_check_branch
      %385 = sbr.rel (0) target = $region201
    $region200: #{feature_extractor.1} parent=1 // pred_region
      %386 = dma.done [#allocation34], 16
    $region201: #{feature_extractor.1} parent=1 // pred_fallthru
      _
    %v388 = vlaneseq
    %v389 = vshrl.u32 %v388, 7
    %v390 = vadd.s32 %v389, 8
    %v391 = vadd.s32 %v389, 16
    %v392 = vadd.s32 %v389, 24
    %vm393 = vcmp.lt.s32.totalorder %v389, 0
    %v394 = vsub.s32 0, %v389
    %v395 = vsel %vm393, %v394, %v389
    %v396 = vshrl.u32 %v395, 4
    %v397 = vand.u32 %v395, 15
    %v398 = vsub.s32 0, %v397
    %v399 = vsel %vm393, %v398, %v397
    %vm400 = vcmp.lt.s32.totalorder %v390, 0
    %v401 = vsub.s32 0, %v390
    %v402 = vsel %vm400, %v401, %v390
    %v403 = vshrl.u32 %v402, 4
    %v404 = vand.u32 %v402, 15
    %v405 = vsub.s32 0, %v404
    %v406 = vsel %vm400, %v405, %v404
    %vm407 = vcmp.lt.s32.totalorder %v391, 0
    %v408 = vsub.s32 0, %v391
    %v409 = vsel %vm407, %v408, %v391
    %v410 = vshrl.u32 %v409, 4
    %v411 = vand.u32 %v409, 15
    %v412 = vsub.s32 0, %v411
    %v413 = vsel %vm407, %v412, %v411
    %vm414 = vcmp.lt.s32.totalorder %v392, 0
    %v415 = vsub.s32 0, %v392
    %v416 = vsel %vm414, %v415, %v392
    %v417 = vshrl.u32 %v416, 4
    %v418 = vand.u32 %v416, 15
    %v419 = vsub.s32 0, %v418
    %v420 = vsel %vm414, %v419, %v418
    %vm421 = vcmp.ne.s32.totalorder %v399, 0
    %vm422 = vcmp.ne.s32.totalorder %v406, 0
    %vm423 = vcmp.ne.s32.totalorder %v413, 0
    %vm424 = vcmp.ne.s32.totalorder %v420, 0
    %vm425 = vcmp.lt.s32.totalorder %v399, 0
    %vm426 = vcmp.lt.s32.totalorder %v406, 0
    %vm427 = vcmp.lt.s32.totalorder %v413, 0
    %vm428 = vcmp.lt.s32.totalorder %v420, 0
    %vm429 = vmand %vm425, %vm421
    %vm430 = vmand %vm426, %vm422
    %vm431 = vmand %vm427, %vm423
    %vm432 = vmand %vm428, %vm424
    %v433 = vadd.s32 %v399, 16
    %v434 = vadd.s32 %v406, 16
    %v435 = vadd.s32 %v413, 16
    %v436 = vadd.s32 %v420, 16
    %v437 = vsel %vm429, %v433, %v399
    %v438 = vsel %vm430, %v434, %v406
    %v439 = vsel %vm431, %v435, %v413
    %v440 = vsel %vm432, %v436, %v420
    %v441 = vld [vmem:[%s1] sm:$0xff]
    %v442 = vld [vmem:[%s1 + $0x8] sm:$0xff]
    %v443 = vld [vmem:[%s1 + $0x10] sm:$0xff]
    %v444 = vld [vmem:[%s1 + $0x18] sm:$0xff]
    %v445 = vld [vmem:[%s5] sm:$0x1]
    %v446 = vadd.s32 %v437, 4294967294
    %v447 = vadd.s32 %v438, 4294967294
    %v448 = vadd.s32 %v439, 4294967294
    %v449 = vadd.s32 %v440, 4294967294
    %vm450 = vcmp.ge.s32.totalorder %v446, 0
    %vm451 = vcmp.ge.s32.totalorder %v447, 0
    %vm452 = vcmp.ge.s32.totalorder %v448, 0
    %vm453 = vcmp.ge.s32.totalorder %v449, 0
    %vm454 = vcmp.lt.s32.totalorder %v446, 16
    %vm455 = vcmp.lt.s32.totalorder %v447, 16
    %vm456 = vcmp.lt.s32.totalorder %v448, 16
    %vm457 = vcmp.lt.s32.totalorder %v449, 16
    %vm458 = vmand %vm450, %vm454
    %vm459 = vmand %vm451, %vm455
    %vm460 = vmand %vm452, %vm456
    %vm461 = vmand %vm453, %vm457
    %v462 = vsel %vm458, 1, 0
    %v463 = vsel %vm459, 1, 0
    %v464 = vsel %vm460, 1, 0
    %v465 = vsel %vm461, 1, 0
    %vm466 = vcmp.eq.s32.totalorder %v462, 1
    %vm467 = vcmp.eq.s32.totalorder %v463, 1
    %vm468 = vcmp.eq.s32.totalorder %v464, 1
    %vm469 = vcmp.eq.s32.totalorder %v465, 1
    %vm475 = vcmask 1041408
    %v476 = vrot.slane 0.0, 6
    %v477 = vrot.slane %v441, 6
    %v478 = vsel %vm475, %v476, %v477
    %v479 = vrot.slane %v442, 6
    %v480 = vsel %vm475, %v477, %v479
    %v481 = vrot.slane %v443, 6
    %v482 = vsel %vm475, %v479, %v481
    %v483 = vrot.slane %v444, 6
    %v484 = vsel %vm475, %v481, %v483
    %v489 = vsel %vm466, %v478, 0.0
    %v490 = vsel %vm467, %v480, 0.0
    %v491 = vsel %vm468, %v482, 0.0
    %v492 = vsel %vm469, %v484, 0.0
    %v493 = vpack.c.bf16 %v490, %v489
    %v494 = vpack.c.bf16 %v492, %v491
    %v495 = vld [vmem:[#allocation3] sm:$0x7]
    %v496 = vadd.s32 %v437, 4294967295
    %v497 = vadd.s32 %v438, 4294967295
    %v498 = vadd.s32 %v439, 4294967295
    %v499 = vadd.s32 %v440, 4294967295
    %vm500 = vcmp.ge.s32.totalorder %v496, 0
    %vm501 = vcmp.ge.s32.totalorder %v497, 0
    %vm502 = vcmp.ge.s32.totalorder %v498, 0
    %vm503 = vcmp.ge.s32.totalorder %v499, 0
    %vm504 = vcmp.lt.s32.totalorder %v496, 16
    %vm505 = vcmp.lt.s32.totalorder %v497, 16
    %vm506 = vcmp.lt.s32.totalorder %v498, 16
    %vm507 = vcmp.lt.s32.totalorder %v499, 16
    %vm508 = vmand %vm500, %vm504
    %vm509 = vmand %vm501, %vm505
    %vm510 = vmand %vm502, %vm506
    %vm511 = vmand %vm503, %vm507
    %v512 = vsel %vm508, 1, 0
    %v513 = vsel %vm509, 1, 0
    %v514 = vsel %vm510, 1, 0
    %v515 = vsel %vm511, 1, 0
    %vm516 = vcmp.eq.s32.totalorder %v512, 1
    %vm517 = vcmp.eq.s32.totalorder %v513, 1
    %vm518 = vcmp.eq.s32.totalorder %v514, 1
    %vm519 = vcmp.eq.s32.totalorder %v515, 1
    %vm520 = vcmask 1040384
    %v521 = vrot.slane 0.0, 7
    %v522 = vrot.slane %v441, 7
    %v523 = vsel %vm520, %v521, %v522
    %v524 = vrot.slane %v442, 7
    %v525 = vsel %vm520, %v522, %v524
    %v526 = vrot.slane %v443, 7
    %v527 = vsel %vm520, %v524, %v526
    %v528 = vrot.slane %v444, 7
    %v529 = vsel %vm520, %v526, %v528
    %v534 = vsel %vm516, %v523, 0.0
    %v535 = vsel %vm517, %v525, 0.0
    %v536 = vsel %vm518, %v527, 0.0
    %v537 = vsel %vm519, %v529, 0.0
    %v538 = vpack.c.bf16 %v535, %v534
    %v539 = vpack.c.bf16 %v537, %v536
    %s540 = scalar_lea.vmem [#allocation3], 4
    %v541 = vld [vmem:[%s540] sm:$0x7]
    %vm542 = vcmask 48128
    %v544 = vsel %vm542, %v538, 0
    %v547 = vsel %vm542, %v539, 0
    %vm549 = vcmask 1042432
    %v551 = vsel %vm549, %v541, 0
    %553 = vmatprep.subr.bf16.mxu0 0
    %554 = vmatpush1.bf16.msra.mxu0 0
    %555 = vmatprep.subr.bf16.mxu0 0
    %556 = vmatpush1.bf16.msra.mxu0 0
    %557 = vmatprep.subr.bf16.mxu0 0
    %558 = vmatpush1.bf16.msra.mxu0 0
    %559 = vmatprep.subr.bf16.mxu0 0
    %560 = vmatpush1.bf16.msra.mxu0 0
    %561 = vmatprep.subr.bf16.mxu0 0
    %562 = vmatpush1.bf16.msra.mxu0 0
    %563 = vmatprep.subr.bf16.mxu0 0
    %564 = vmatpush1.bf16.msra.mxu0 0
    %565 = vmatprep.subr.bf16.mxu0 0
    %566 = vmatpush1.bf16.msra.mxu0 0
    %567 = vmatprep.subr.bf16.mxu0 0
    %568 = vmatpush1.bf16.msra.mxu0 %v551
    %569 = vmatprep.subr.bf16.mxu0 0
    %570 = vmatpush2.bf16.msra.mxu0 0
    %571 = vmatprep.subr.bf16.mxu0 0
    %572 = vmatpush2.bf16.msra.mxu0 0
    %573 = vmatprep.subr.bf16.mxu0 0
    %574 = vmatpush2.bf16.msra.mxu0 0
    %575 = vmatprep.subr.bf16.mxu0 0
    %576 = vmatpush2.bf16.msra.mxu0 0
    %577 = vmatprep.subr.bf16.mxu0 0
    %578 = vmatpush2.bf16.msra.mxu0 0
    %579 = vmatprep.subr.bf16.mxu0 0
    %580 = vmatpush2.bf16.msra.mxu0 0
    %581 = vmatprep.subr.bf16.mxu0 0
    %582 = vmatpush2.bf16.msra.mxu0 0
    %583 = vmatprep.subr.bf16.mxu0 0
    %584 = vmatpush2.bf16.msra.mxu0 0
    %585 = vmatprep.mubr.bf16.mxu0 0
    %586 = vmatmul.mubr.bf16.gmra.mxu0 %v544
    %v587 = vpop.f32.mrf.mxu0
    %v588 = vadd.f32 0.0, %v587
    %v589 = vpop.f32.mrf.mxu0
    %v590 = vpop.f32.mrf.mxu0
    %v591 = vadd.f32 0.0, %v590
    %v592 = vpop.f32.mrf.mxu0
    %593 = vmatprep.mubr.bf16.mxu0 0
    %594 = vmatmul.mubr.bf16.gmra.mxu0 %v547
    %v595 = vpop.f32.mrf.mxu0
    %v596 = vadd.f32 0.0, %v595
    %v597 = vpop.f32.mrf.mxu0
    %v598 = vpop.f32.mrf.mxu0
    %v599 = vadd.f32 0.0, %v598
    %v600 = vpop.f32.mrf.mxu0
    %601 = vdwg.mxu0
    %v603 = vsel %vm542, %v493, 0
    %v606 = vsel %vm542, %v494, 0
    %v609 = vsel %vm549, %v495, 0
    %611 = vmatprep.subr.bf16.mxu0 0
    %612 = vmatpush1.bf16.msra.mxu0 0
    %613 = vmatprep.subr.bf16.mxu0 0
    %614 = vmatpush1.bf16.msra.mxu0 0
    %615 = vmatprep.subr.bf16.mxu0 0
    %616 = vmatpush1.bf16.msra.mxu0 0
    %617 = vmatprep.subr.bf16.mxu0 0
    %618 = vmatpush1.bf16.msra.mxu0 0
    %619 = vmatprep.subr.bf16.mxu0 0
    %620 = vmatpush1.bf16.msra.mxu0 0
    %621 = vmatprep.subr.bf16.mxu0 0
    %622 = vmatpush1.bf16.msra.mxu0 0
    %623 = vmatprep.subr.bf16.mxu0 0
    %624 = vmatpush1.bf16.msra.mxu0 0
    %625 = vmatprep.subr.bf16.mxu0 0
    %626 = vmatpush1.bf16.msra.mxu0 %v609
    %627 = vmatprep.subr.bf16.mxu0 0
    %628 = vmatpush2.bf16.msra.mxu0 0
    %629 = vmatprep.subr.bf16.mxu0 0
    %630 = vmatpush2.bf16.msra.mxu0 0
    %631 = vmatprep.subr.bf16.mxu0 0
    %632 = vmatpush2.bf16.msra.mxu0 0
    %633 = vmatprep.subr.bf16.mxu0 0
    %634 = vmatpush2.bf16.msra.mxu0 0
    %635 = vmatprep.subr.bf16.mxu0 0
    %636 = vmatpush2.bf16.msra.mxu0 0
    %637 = vmatprep.subr.bf16.mxu0 0
    %638 = vmatpush2.bf16.msra.mxu0 0
    %639 = vmatprep.subr.bf16.mxu0 0
    %640 = vmatpush2.bf16.msra.mxu0 0
    %641 = vmatprep.subr.bf16.mxu0 0
    %642 = vmatpush2.bf16.msra.mxu0 0
    %643 = vmatprep.mubr.bf16.mxu0 0
    %644 = vmatmul.mubr.bf16.gmra.mxu0 %v603
    %v645 = vpop.f32.mrf.mxu0
    %v646 = vadd.f32 %v588, %v645
    %v647 = vpop.f32.mrf.mxu0
    %v648 = vpop.f32.mrf.mxu0
    %v649 = vadd.f32 %v591, %v648
    %v650 = vpop.f32.mrf.mxu0
    %651 = vmatprep.mubr.bf16.mxu0 0
    %652 = vmatmul.mubr.bf16.gmra.mxu0 %v606
    %v653 = vpop.f32.mrf.mxu0
    %v654 = vadd.f32 %v596, %v653
    %v655 = vpop.f32.mrf.mxu0
    %v656 = vpop.f32.mrf.mxu0
    %v657 = vadd.f32 %v599, %v656
    %v658 = vpop.f32.mrf.mxu0
    %659 = vdwg.mxu0
    %v660 = vpack.c.bf16 %v442, %v441
    %v661 = vpack.c.bf16 %v444, %v443
    %s662 = scalar_lea.vmem [#allocation3], 8
    %v663 = vld [vmem:[%s662] sm:$0x7]
    %v665 = vsel %vm542, %v660, 0
    %v668 = vsel %vm542, %v661, 0
    %v671 = vsel %vm549, %v663, 0
    %673 = vmatprep.subr.bf16.mxu0 0
    %674 = vmatpush1.bf16.msra.mxu0 0
    %675 = vmatprep.subr.bf16.mxu0 0
    %676 = vmatpush1.bf16.msra.mxu0 0
    %677 = vmatprep.subr.bf16.mxu0 0
    %678 = vmatpush1.bf16.msra.mxu0 0
    %679 = vmatprep.subr.bf16.mxu0 0
    %680 = vmatpush1.bf16.msra.mxu0 0
    %681 = vmatprep.subr.bf16.mxu0 0
    %682 = vmatpush1.bf16.msra.mxu0 0
    %683 = vmatprep.subr.bf16.mxu0 0
    %684 = vmatpush1.bf16.msra.mxu0 0
    %685 = vmatprep.subr.bf16.mxu0 0
    %686 = vmatpush1.bf16.msra.mxu0 0
    %687 = vmatprep.subr.bf16.mxu0 0
    %688 = vmatpush1.bf16.msra.mxu0 %v671
    %689 = vmatprep.subr.bf16.mxu0 0
    %690 = vmatpush2.bf16.msra.mxu0 0
    %691 = vmatprep.subr.bf16.mxu0 0
    %692 = vmatpush2.bf16.msra.mxu0 0
    %693 = vmatprep.subr.bf16.mxu0 0
    %694 = vmatpush2.bf16.msra.mxu0 0
    %695 = vmatprep.subr.bf16.mxu0 0
    %696 = vmatpush2.bf16.msra.mxu0 0
    %697 = vmatprep.subr.bf16.mxu0 0
    %698 = vmatpush2.bf16.msra.mxu0 0
    %699 = vmatprep.subr.bf16.mxu0 0
    %700 = vmatpush2.bf16.msra.mxu0 0
    %701 = vmatprep.subr.bf16.mxu0 0
    %702 = vmatpush2.bf16.msra.mxu0 0
    %703 = vmatprep.subr.bf16.mxu0 0
    %704 = vmatpush2.bf16.msra.mxu0 0
    %705 = vmatprep.mubr.bf16.mxu0 0
    %706 = vmatmul.mubr.bf16.gmra.mxu0 %v665
    %v707 = vpop.f32.mrf.mxu0
    %v708 = vadd.f32 0.0, %v707
    %v709 = vpop.f32.mrf.mxu0
    %v710 = vpop.f32.mrf.mxu0
    %v711 = vadd.f32 0.0, %v710
    %v712 = vpop.f32.mrf.mxu0
    %713 = vmatprep.mubr.bf16.mxu0 0
    %714 = vmatmul.mubr.bf16.gmra.mxu0 %v668
    %v715 = vpop.f32.mrf.mxu0
    %v716 = vadd.f32 0.0, %v715
    %v717 = vpop.f32.mrf.mxu0
    %v718 = vpop.f32.mrf.mxu0
    %v719 = vadd.f32 0.0, %v718
    %v720 = vpop.f32.mrf.mxu0
    %721 = vdwg.mxu0
    %v722 = vadd.f32 %v646, %v708
    %v723 = vadd.f32 %v649, %v711
    %v724 = vadd.f32 %v654, %v716
    %v725 = vadd.f32 %v657, %v719
    %v726 = vadd.s32 %v437, 1
    %v727 = vadd.s32 %v438, 1
    %v728 = vadd.s32 %v439, 1
    %v729 = vadd.s32 %v440, 1
    %vm730 = vcmp.ge.s32.totalorder %v726, 0
    %vm731 = vcmp.ge.s32.totalorder %v727, 0
    %vm732 = vcmp.ge.s32.totalorder %v728, 0
    %vm733 = vcmp.ge.s32.totalorder %v729, 0
    %vm734 = vcmp.lt.s32.totalorder %v726, 16
    %vm735 = vcmp.lt.s32.totalorder %v727, 16
    %vm736 = vcmp.lt.s32.totalorder %v728, 16
    %vm737 = vcmp.lt.s32.totalorder %v729, 16
    %vm738 = vmand %vm730, %vm734
    %vm739 = vmand %vm731, %vm735
    %vm740 = vmand %vm732, %vm736
    %vm741 = vmand %vm733, %vm737
    %v742 = vsel %vm738, 1, 0
    %v743 = vsel %vm739, 1, 0
    %v744 = vsel %vm740, 1, 0
    %v745 = vsel %vm741, 1, 0
    %vm746 = vcmp.eq.s32.totalorder %v742, 1
    %vm747 = vcmp.eq.s32.totalorder %v743, 1
    %vm748 = vcmp.eq.s32.totalorder %v744, 1
    %vm749 = vcmp.eq.s32.totalorder %v745, 1
    %vm750 = vcmask 1046528
    %v751 = vrot.slane %v441, 1
    %v752 = vrot.slane %v442, 1
    %v753 = vsel %vm750, %v751, %v752
    %v754 = vrot.slane %v443, 1
    %v755 = vsel %vm750, %v752, %v754
    %v756 = vrot.slane %v444, 1
    %v757 = vsel %vm750, %v754, %v756
    %v758 = vrot.slane 0.0, 1
    %v759 = vsel %vm750, %v756, %v758
    %v764 = vsel %vm746, %v753, 0.0
    %v765 = vsel %vm747, %v755, 0.0
    %v766 = vsel %vm748, %v757, 0.0
    %v767 = vsel %vm749, %v759, 0.0
    %v768 = vpack.c.bf16 %v765, %v764
    %v769 = vpack.c.bf16 %v767, %v766
    %s770 = scalar_lea.vmem [#allocation3], 12
    %v771 = vld [vmem:[%s770] sm:$0x7]
    %v773 = vsel %vm542, %v768, 0
    %v776 = vsel %vm542, %v769, 0
    %v779 = vsel %vm549, %v771, 0
    %781 = vmatprep.subr.bf16.mxu0 0
    %782 = vmatpush1.bf16.msra.mxu0 0
    %783 = vmatprep.subr.bf16.mxu0 0
    %784 = vmatpush1.bf16.msra.mxu0 0
    %785 = vmatprep.subr.bf16.mxu0 0
    %786 = vmatpush1.bf16.msra.mxu0 0
    %787 = vmatprep.subr.bf16.mxu0 0
    %788 = vmatpush1.bf16.msra.mxu0 0
    %789 = vmatprep.subr.bf16.mxu0 0
    %790 = vmatpush1.bf16.msra.mxu0 0
    %791 = vmatprep.subr.bf16.mxu0 0
    %792 = vmatpush1.bf16.msra.mxu0 0
    %793 = vmatprep.subr.bf16.mxu0 0
    %794 = vmatpush1.bf16.msra.mxu0 0
    %795 = vmatprep.subr.bf16.mxu0 0
    %796 = vmatpush1.bf16.msra.mxu0 %v779
    %797 = vmatprep.subr.bf16.mxu0 0
    %798 = vmatpush2.bf16.msra.mxu0 0
    %799 = vmatprep.subr.bf16.mxu0 0
    %800 = vmatpush2.bf16.msra.mxu0 0
    %801 = vmatprep.subr.bf16.mxu0 0
    %802 = vmatpush2.bf16.msra.mxu0 0
    %803 = vmatprep.subr.bf16.mxu0 0
    %804 = vmatpush2.bf16.msra.mxu0 0
    %805 = vmatprep.subr.bf16.mxu0 0
    %806 = vmatpush2.bf16.msra.mxu0 0
    %807 = vmatprep.subr.bf16.mxu0 0
    %808 = vmatpush2.bf16.msra.mxu0 0
    %809 = vmatprep.subr.bf16.mxu0 0
    %810 = vmatpush2.bf16.msra.mxu0 0
    %811 = vmatprep.subr.bf16.mxu0 0
    %812 = vmatpush2.bf16.msra.mxu0 0
    %813 = vmatprep.mubr.bf16.mxu0 0
    %814 = vmatmul.mubr.bf16.gmra.mxu0 %v773
    %v815 = vpop.f32.mrf.mxu0
    %v816 = vadd.f32 0.0, %v815
    %v817 = vpop.f32.mrf.mxu0
    %v818 = vpop.f32.mrf.mxu0
    %v819 = vadd.f32 0.0, %v818
    %v820 = vpop.f32.mrf.mxu0
    %821 = vmatprep.mubr.bf16.mxu0 0
    %822 = vmatmul.mubr.bf16.gmra.mxu0 %v776
    %v823 = vpop.f32.mrf.mxu0
    %v824 = vadd.f32 0.0, %v823
    %v825 = vpop.f32.mrf.mxu0
    %v826 = vpop.f32.mrf.mxu0
    %v827 = vadd.f32 0.0, %v826
    %v828 = vpop.f32.mrf.mxu0
    %829 = vdwg.mxu0
    %v830 = vadd.f32 %v722, %v816
    %v831 = vadd.f32 %v723, %v819
    %v832 = vadd.f32 %v724, %v824
    %v833 = vadd.f32 %v725, %v827
    %v834 = vadd.s32 %v437, 2
    %v835 = vadd.s32 %v438, 2
    %v836 = vadd.s32 %v439, 2
    %v837 = vadd.s32 %v440, 2
    %vm838 = vcmp.ge.s32.totalorder %v834, 0
    %vm839 = vcmp.ge.s32.totalorder %v835, 0
    %vm840 = vcmp.ge.s32.totalorder %v836, 0
    %vm841 = vcmp.ge.s32.totalorder %v837, 0
    %vm842 = vcmp.lt.s32.totalorder %v834, 16
    %vm843 = vcmp.lt.s32.totalorder %v835, 16
    %vm844 = vcmp.lt.s32.totalorder %v836, 16
    %vm845 = vcmp.lt.s32.totalorder %v837, 16
    %vm846 = vmand %vm838, %vm842
    %vm847 = vmand %vm839, %vm843
    %vm848 = vmand %vm840, %vm844
    %vm849 = vmand %vm841, %vm845
    %v850 = vsel %vm846, 1, 0
    %v851 = vsel %vm847, 1, 0
    %v852 = vsel %vm848, 1, 0
    %v853 = vsel %vm849, 1, 0
    %vm854 = vcmp.eq.s32.totalorder %v850, 1
    %vm855 = vcmp.eq.s32.totalorder %v851, 1
    %vm856 = vcmp.eq.s32.totalorder %v852, 1
    %vm857 = vcmp.eq.s32.totalorder %v853, 1
    %vm858 = vcmask 1045504
    %v859 = vrot.slane %v441, 2
    %v860 = vrot.slane %v442, 2
    %v861 = vsel %vm858, %v859, %v860
    %v862 = vrot.slane %v443, 2
    %v863 = vsel %vm858, %v860, %v862
    %v864 = vrot.slane %v444, 2
    %v865 = vsel %vm858, %v862, %v864
    %v866 = vrot.slane 0.0, 2
    %v867 = vsel %vm858, %v864, %v866
    %v872 = vsel %vm854, %v861, 0.0
    %v873 = vsel %vm855, %v863, 0.0
    %v874 = vsel %vm856, %v865, 0.0
    %v875 = vsel %vm857, %v867, 0.0
    %v876 = vpack.c.bf16 %v873, %v872
    %v877 = vpack.c.bf16 %v875, %v874
    %s878 = scalar_lea.vmem [#allocation3], 16
    %v879 = vld [vmem:[%s878] sm:$0x7]
    %v881 = vsel %vm542, %v876, 0
    %v884 = vsel %vm542, %v877, 0
    %v887 = vsel %vm549, %v879, 0
    %889 = vmatprep.subr.bf16.mxu0 0
    %890 = vmatpush1.bf16.msra.mxu0 0
    %891 = vmatprep.subr.bf16.mxu0 0
    %892 = vmatpush1.bf16.msra.mxu0 0
    %893 = vmatprep.subr.bf16.mxu0 0
    %894 = vmatpush1.bf16.msra.mxu0 0
    %895 = vmatprep.subr.bf16.mxu0 0
    %896 = vmatpush1.bf16.msra.mxu0 0
    %897 = vmatprep.subr.bf16.mxu0 0
    %898 = vmatpush1.bf16.msra.mxu0 0
    %899 = vmatprep.subr.bf16.mxu0 0
    %900 = vmatpush1.bf16.msra.mxu0 0
    %901 = vmatprep.subr.bf16.mxu0 0
    %902 = vmatpush1.bf16.msra.mxu0 0
    %903 = vmatprep.subr.bf16.mxu0 0
    %904 = vmatpush1.bf16.msra.mxu0 %v887
    %905 = vmatprep.subr.bf16.mxu0 0
    %906 = vmatpush2.bf16.msra.mxu0 0
    %907 = vmatprep.subr.bf16.mxu0 0
    %908 = vmatpush2.bf16.msra.mxu0 0
    %909 = vmatprep.subr.bf16.mxu0 0
    %910 = vmatpush2.bf16.msra.mxu0 0
    %911 = vmatprep.subr.bf16.mxu0 0
    %912 = vmatpush2.bf16.msra.mxu0 0
    %913 = vmatprep.subr.bf16.mxu0 0
    %914 = vmatpush2.bf16.msra.mxu0 0
    %915 = vmatprep.subr.bf16.mxu0 0
    %916 = vmatpush2.bf16.msra.mxu0 0
    %917 = vmatprep.subr.bf16.mxu0 0
    %918 = vmatpush2.bf16.msra.mxu0 0
    %919 = vmatprep.subr.bf16.mxu0 0
    %920 = vmatpush2.bf16.msra.mxu0 0
    %921 = vmatprep.mubr.bf16.mxu0 0
    %922 = vmatmul.mubr.bf16.gmra.mxu0 %v881
    %v923 = vpop.f32.mrf.mxu0
    %v924 = vadd.f32 0.0, %v923
    %v925 = vpop.f32.mrf.mxu0
    %v926 = vpop.f32.mrf.mxu0
    %v927 = vadd.f32 0.0, %v926
    %v928 = vpop.f32.mrf.mxu0
    %929 = vmatprep.mubr.bf16.mxu0 0
    %930 = vmatmul.mubr.bf16.gmra.mxu0 %v884
    %v931 = vpop.f32.mrf.mxu0
    %v932 = vadd.f32 0.0, %v931
    %v933 = vpop.f32.mrf.mxu0
    %v934 = vpop.f32.mrf.mxu0
    %v935 = vadd.f32 0.0, %v934
    %v936 = vpop.f32.mrf.mxu0
    %937 = vdwg.mxu0
    %v938 = vadd.f32 %v830, %v924
    %v939 = vadd.f32 %v831, %v927
    %v940 = vadd.f32 %v832, %v932
    %v941 = vadd.f32 %v833, %v935
    %v943 = vlaneseq
    %v944 = vshrl.u32 %v943, 7
    %v945 = vsub.s32 0, %v944
    %v946 = vrot.slane %v445, %v945
    %v948 = vadd.f32 %v938, %v946
    %v949 = vadd.f32 %v939, %v946
    %v950 = vadd.f32 %v940, %v946
    %v951 = vadd.f32 %v941, %v946
    %v952 = vmax.f32 %v948, 0.0
    %v953 = vmax.f32 %v949, 0.0
    %v954 = vmax.f32 %v950, 0.0
    %v955 = vmax.f32 %v951, 0.0
    %v956 = vld [vmem:[#allocation6] sm:$0x1]
    %v957 = vadd.s32 %v437, 4294967293
    %v958 = vadd.s32 %v438, 4294967293
    %v959 = vadd.s32 %v439, 4294967293
    %v960 = vadd.s32 %v440, 4294967293
    %vm961 = vcmp.ge.s32.totalorder %v957, 0
    %vm962 = vcmp.ge.s32.totalorder %v958, 0
    %vm963 = vcmp.ge.s32.totalorder %v959, 0
    %vm964 = vcmp.ge.s32.totalorder %v960, 0
    %vm965 = vcmp.lt.s32.totalorder %v957, 16
    %vm966 = vcmp.lt.s32.totalorder %v958, 16
    %vm967 = vcmp.lt.s32.totalorder %v959, 16
    %vm968 = vcmp.lt.s32.totalorder %v960, 16
    %vm969 = vmand %vm961, %vm965
    %vm970 = vmand %vm962, %vm966
    %vm971 = vmand %vm963, %vm967
    %vm972 = vmand %vm964, %vm968
    %v973 = vsel %vm969, 1, 0
    %v974 = vsel %vm970, 1, 0
    %v975 = vsel %vm971, 1, 0
    %v976 = vsel %vm972, 1, 0
    %vm977 = vcmp.eq.s32.totalorder %v973, 1
    %vm978 = vcmp.eq.s32.totalorder %v974, 1
    %vm979 = vcmp.eq.s32.totalorder %v975, 1
    %vm980 = vcmp.eq.s32.totalorder %v976, 1
    %v985 = vrot.slane 0.0, 5
    %v986 = vrot.slane %v952, 5
    %v987 = vsel %vm549, %v985, %v986
    %v988 = vrot.slane %v953, 5
    %v989 = vsel %vm549, %v986, %v988
    %v990 = vrot.slane %v954, 5
    %v991 = vsel %vm549, %v988, %v990
    %v992 = vrot.slane %v955, 5
    %v993 = vsel %vm549, %v990, %v992
    %v998 = vsel %vm977, %v987, 0.0
    %v999 = vsel %vm978, %v989, 0.0
    %v1000 = vsel %vm979, %v991, 0.0
    %v1001 = vsel %vm980, %v993, 0.0
    %v1002 = vpack.c.bf16 %v999, %v998
    %v1003 = vpack.c.bf16 %v1001, %v1000
    %v1004 = vld [vmem:[%s7] sm:$0xf]
    %v1005 = vld [vmem:[%s7 + $0x4] sm:$0xf]
    %v1006 = vld [vmem:[%s7 + $0x8] sm:$0xf]
    %v1007 = vld [vmem:[%s7 + $0xc] sm:$0xf]
    %v1008 = vld [vmem:[%s7 + $0x10] sm:$0xf]
    %v1009 = vld [vmem:[%s7 + $0x14] sm:$0xf]
    %v1010 = vld [vmem:[%s7 + $0x18] sm:$0xf]
    %v1011 = vld [vmem:[%s7 + $0x1c] sm:$0xf]
    %v1012 = vrot.slane %v952, 6
    %v1013 = vsel %vm475, %v476, %v1012
    %v1014 = vrot.slane %v953, 6
    %v1015 = vsel %vm475, %v1012, %v1014
    %v1016 = vrot.slane %v954, 6
    %v1017 = vsel %vm475, %v1014, %v1016
    %v1018 = vrot.slane %v955, 6
    %v1019 = vsel %vm475, %v1016, %v1018
    %v1024 = vsel %vm466, %v1013, 0.0
    %v1025 = vsel %vm467, %v1015, 0.0
    %v1026 = vsel %vm468, %v1017, 0.0
    %v1027 = vsel %vm469, %v1019, 0.0
    %v1028 = vpack.c.bf16 %v1025, %v1024
    %v1029 = vpack.c.bf16 %v1027, %v1026
    %s1030 = scalar_lea.vmem %s7, 32
    %v1031 = vld [vmem:[%s1030] sm:$0xf]
    %v1032 = vld [vmem:[%s1030 + $0x4] sm:$0xf]
    %v1033 = vld [vmem:[%s1030 + $0x8] sm:$0xf]
    %v1034 = vld [vmem:[%s1030 + $0xc] sm:$0xf]
    %v1035 = vld [vmem:[%s1030 + $0x10] sm:$0xf]
    %v1036 = vld [vmem:[%s1030 + $0x14] sm:$0xf]
    %v1037 = vld [vmem:[%s1030 + $0x18] sm:$0xf]
    %v1038 = vld [vmem:[%s1030 + $0x1c] sm:$0xf]
    %v1047 = vunpack.c.l.b16 %v1031
    %v1048 = vunpack.c.l.b16 %v1032
    %v1049 = vunpack.c.l.b16 %v1033
    %v1050 = vunpack.c.l.b16 %v1034
    %v1051 = vunpack.c.l.b16 %v1035
    %v1052 = vunpack.c.l.b16 %v1036
    %v1053 = vunpack.c.l.b16 %v1037
    %v1054 = vunpack.c.l.b16 %v1038
    %v1055 = vpack.c.b16 %v1048, %v1047
    %v1056 = vpack.c.b16 %v1050, %v1049
    %v1057 = vpack.c.b16 %v1052, %v1051
    %v1058 = vpack.c.b16 %v1054, %v1053
    %vm1063 = vcmask 523264
    %v1065 = vsel %vm1063, %v1028, 0
    %v1068 = vsel %vm1063, %v1029, 0
    %1070 = vmatprep.subr.bf16.mxu0 0
    %1071 = vmatpush1.bf16.msra.mxu0 0
    %1072 = vmatprep.subr.bf16.mxu0 0
    %1073 = vmatpush1.bf16.msra.mxu0 0
    %1074 = vmatprep.subr.bf16.mxu0 0
    %1075 = vmatpush1.bf16.msra.mxu0 0
    %1076 = vmatprep.subr.bf16.mxu0 0
    %1077 = vmatpush1.bf16.msra.mxu0 0
    %1078 = vmatprep.subr.bf16.mxu0 0
    %1079 = vmatpush1.bf16.msra.mxu0 %v1058
    %1080 = vmatprep.subr.bf16.mxu0 0
    %1081 = vmatpush1.bf16.msra.mxu0 %v1057
    %1082 = vmatprep.subr.bf16.mxu0 0
    %1083 = vmatpush1.bf16.msra.mxu0 %v1056
    %1084 = vmatprep.subr.bf16.mxu0 0
    %1085 = vmatpush1.bf16.msra.mxu0 %v1055
    %1086 = vmatprep.subr.bf16.mxu0 0
    %1087 = vmatpush2.bf16.msra.mxu0 0
    %1088 = vmatprep.subr.bf16.mxu0 0
    %1089 = vmatpush2.bf16.msra.mxu0 0
    %1090 = vmatprep.subr.bf16.mxu0 0
    %1091 = vmatpush2.bf16.msra.mxu0 0
    %1092 = vmatprep.subr.bf16.mxu0 0
    %1093 = vmatpush2.bf16.msra.mxu0 0
    %1094 = vmatprep.subr.bf16.mxu0 0
    %1095 = vmatpush2.bf16.msra.mxu0 0
    %1096 = vmatprep.subr.bf16.mxu0 0
    %1097 = vmatpush2.bf16.msra.mxu0 0
    %1098 = vmatprep.subr.bf16.mxu0 0
    %1099 = vmatpush2.bf16.msra.mxu0 0
    %1100 = vmatprep.subr.bf16.mxu0 0
    %1101 = vmatpush2.bf16.msra.mxu0 0
    %1102 = vmatprep.mubr.bf16.mxu0 0
    %1103 = vmatmul.mubr.bf16.gmra.mxu0 %v1065
    %v1104 = vpop.f32.mrf.mxu0
    %v1105 = vadd.f32 0.0, %v1104
    %v1106 = vpop.f32.mrf.mxu0
    %v1107 = vpop.f32.mrf.mxu0
    %v1108 = vadd.f32 0.0, %v1107
    %v1109 = vpop.f32.mrf.mxu0
    %1110 = vmatprep.mubr.bf16.mxu0 0
    %1111 = vmatmul.mubr.bf16.gmra.mxu0 %v1068
    %v1112 = vpop.f32.mrf.mxu0
    %v1113 = vadd.f32 0.0, %v1112
    %v1114 = vpop.f32.mrf.mxu0
    %v1115 = vpop.f32.mrf.mxu0
    %v1116 = vadd.f32 0.0, %v1115
    %v1117 = vpop.f32.mrf.mxu0
    %1118 = vdwg.mxu0
    %v1127 = vunpack.c.l.b16 %v1004
    %v1128 = vunpack.c.l.b16 %v1005
    %v1129 = vunpack.c.l.b16 %v1006
    %v1130 = vunpack.c.l.b16 %v1007
    %v1131 = vunpack.c.l.b16 %v1008
    %v1132 = vunpack.c.l.b16 %v1009
    %v1133 = vunpack.c.l.b16 %v1010
    %v1134 = vunpack.c.l.b16 %v1011
    %v1135 = vpack.c.b16 %v1128, %v1127
    %v1136 = vpack.c.b16 %v1130, %v1129
    %v1137 = vpack.c.b16 %v1132, %v1131
    %v1138 = vpack.c.b16 %v1134, %v1133
    %v1144 = vsel %vm1063, %v1002, 0
    %v1147 = vsel %vm1063, %v1003, 0
    %1149 = vmatprep.subr.bf16.mxu0 0
    %1150 = vmatpush1.bf16.msra.mxu0 0
    %1151 = vmatprep.subr.bf16.mxu0 0
    %1152 = vmatpush1.bf16.msra.mxu0 0
    %1153 = vmatprep.subr.bf16.mxu0 0
    %1154 = vmatpush1.bf16.msra.mxu0 0
    %1155 = vmatprep.subr.bf16.mxu0 0
    %1156 = vmatpush1.bf16.msra.mxu0 0
    %1157 = vmatprep.subr.bf16.mxu0 0
    %1158 = vmatpush1.bf16.msra.mxu0 %v1138
    %1159 = vmatprep.subr.bf16.mxu0 0
    %1160 = vmatpush1.bf16.msra.mxu0 %v1137
    %1161 = vmatprep.subr.bf16.mxu0 0
    %1162 = vmatpush1.bf16.msra.mxu0 %v1136
    %1163 = vmatprep.subr.bf16.mxu0 0
    %1164 = vmatpush1.bf16.msra.mxu0 %v1135
    %1165 = vmatprep.subr.bf16.mxu0 0
    %1166 = vmatpush2.bf16.msra.mxu0 0
    %1167 = vmatprep.subr.bf16.mxu0 0
    %1168 = vmatpush2.bf16.msra.mxu0 0
    %1169 = vmatprep.subr.bf16.mxu0 0
    %1170 = vmatpush2.bf16.msra.mxu0 0
    %1171 = vmatprep.subr.bf16.mxu0 0
    %1172 = vmatpush2.bf16.msra.mxu0 0
    %1173 = vmatprep.subr.bf16.mxu0 0
    %1174 = vmatpush2.bf16.msra.mxu0 0
    %1175 = vmatprep.subr.bf16.mxu0 0
    %1176 = vmatpush2.bf16.msra.mxu0 0
    %1177 = vmatprep.subr.bf16.mxu0 0
    %1178 = vmatpush2.bf16.msra.mxu0 0
    %1179 = vmatprep.subr.bf16.mxu0 0
    %1180 = vmatpush2.bf16.msra.mxu0 0
    %1181 = vmatprep.mubr.bf16.mxu0 0
    %1182 = vmatmul.mubr.bf16.gmra.mxu0 %v1144
    %v1183 = vpop.f32.mrf.mxu0
    %v1184 = vadd.f32 %v1105, %v1183
    %v1185 = vpop.f32.mrf.mxu0
    %v1186 = vpop.f32.mrf.mxu0
    %v1187 = vadd.f32 %v1108, %v1186
    %v1188 = vpop.f32.mrf.mxu0
    %1189 = vmatprep.mubr.bf16.mxu0 0
    %1190 = vmatmul.mubr.bf16.gmra.mxu0 %v1147
    %v1191 = vpop.f32.mrf.mxu0
    %v1192 = vadd.f32 %v1113, %v1191
    %v1193 = vpop.f32.mrf.mxu0
    %v1194 = vpop.f32.mrf.mxu0
    %v1195 = vadd.f32 %v1116, %v1194
    %v1196 = vpop.f32.mrf.mxu0
    %1197 = vdwg.mxu0
    %v1198 = vrot.slane %v952, 7
    %v1199 = vsel %vm520, %v521, %v1198
    %v1200 = vrot.slane %v953, 7
    %v1201 = vsel %vm520, %v1198, %v1200
    %v1202 = vrot.slane %v954, 7
    %v1203 = vsel %vm520, %v1200, %v1202
    %v1204 = vrot.slane %v955, 7
    %v1205 = vsel %vm520, %v1202, %v1204
    %v1210 = vsel %vm516, %v1199, 0.0
    %v1211 = vsel %vm517, %v1201, 0.0
    %v1212 = vsel %vm518, %v1203, 0.0
    %v1213 = vsel %vm519, %v1205, 0.0
    %v1214 = vpack.c.bf16 %v1211, %v1210
    %v1215 = vpack.c.bf16 %v1213, %v1212
    %s1216 = scalar_lea.vmem %s7, 64
    %v1217 = vld [vmem:[%s1216] sm:$0xf]
    %v1218 = vld [vmem:[%s1216 + $0x4] sm:$0xf]
    %v1219 = vld [vmem:[%s1216 + $0x8] sm:$0xf]
    %v1220 = vld [vmem:[%s1216 + $0xc] sm:$0xf]
    %v1221 = vld [vmem:[%s1216 + $0x10] sm:$0xf]
    %v1222 = vld [vmem:[%s1216 + $0x14] sm:$0xf]
    %v1223 = vld [vmem:[%s1216 + $0x18] sm:$0xf]
    %v1224 = vld [vmem:[%s1216 + $0x1c] sm:$0xf]
    %v1233 = vunpack.c.l.b16 %v1217
    %v1234 = vunpack.c.l.b16 %v1218
    %v1235 = vunpack.c.l.b16 %v1219
    %v1236 = vunpack.c.l.b16 %v1220
    %v1237 = vunpack.c.l.b16 %v1221
    %v1238 = vunpack.c.l.b16 %v1222
    %v1239 = vunpack.c.l.b16 %v1223
    %v1240 = vunpack.c.l.b16 %v1224
    %v1241 = vpack.c.b16 %v1234, %v1233
    %v1242 = vpack.c.b16 %v1236, %v1235
    %v1243 = vpack.c.b16 %v1238, %v1237
    %v1244 = vpack.c.b16 %v1240, %v1239
    %v1250 = vsel %vm1063, %v1214, 0
    %v1253 = vsel %vm1063, %v1215, 0
    %1255 = vmatprep.subr.bf16.mxu0 0
    %1256 = vmatpush1.bf16.msra.mxu0 0
    %1257 = vmatprep.subr.bf16.mxu0 0
    %1258 = vmatpush1.bf16.msra.mxu0 0
    %1259 = vmatprep.subr.bf16.mxu0 0
    %1260 = vmatpush1.bf16.msra.mxu0 0
    %1261 = vmatprep.subr.bf16.mxu0 0
    %1262 = vmatpush1.bf16.msra.mxu0 0
    %1263 = vmatprep.subr.bf16.mxu0 0
    %1264 = vmatpush1.bf16.msra.mxu0 %v1244
    %1265 = vmatprep.subr.bf16.mxu0 0
    %1266 = vmatpush1.bf16.msra.mxu0 %v1243
    %1267 = vmatprep.subr.bf16.mxu0 0
    %1268 = vmatpush1.bf16.msra.mxu0 %v1242
    %1269 = vmatprep.subr.bf16.mxu0 0
    %1270 = vmatpush1.bf16.msra.mxu0 %v1241
    %1271 = vmatprep.subr.bf16.mxu0 0
    %1272 = vmatpush2.bf16.msra.mxu0 0
    %1273 = vmatprep.subr.bf16.mxu0 0
    %1274 = vmatpush2.bf16.msra.mxu0 0
    %1275 = vmatprep.subr.bf16.mxu0 0
    %1276 = vmatpush2.bf16.msra.mxu0 0
    %1277 = vmatprep.subr.bf16.mxu0 0
    %1278 = vmatpush2.bf16.msra.mxu0 0
    %1279 = vmatprep.subr.bf16.mxu0 0
    %1280 = vmatpush2.bf16.msra.mxu0 0
    %1281 = vmatprep.subr.bf16.mxu0 0
    %1282 = vmatpush2.bf16.msra.mxu0 0
    %1283 = vmatprep.subr.bf16.mxu0 0
    %1284 = vmatpush2.bf16.msra.mxu0 0
    %1285 = vmatprep.subr.bf16.mxu0 0
    %1286 = vmatpush2.bf16.msra.mxu0 0
    %1287 = vmatprep.mubr.bf16.mxu0 0
    %1288 = vmatmul.mubr.bf16.gmra.mxu0 %v1250
    %v1289 = vpop.f32.mrf.mxu0
    %v1290 = vadd.f32 0.0, %v1289
    %v1291 = vpop.f32.mrf.mxu0
    %v1292 = vpop.f32.mrf.mxu0
    %v1293 = vadd.f32 0.0, %v1292
    %v1294 = vpop.f32.mrf.mxu0
    %1295 = vmatprep.mubr.bf16.mxu0 0
    %1296 = vmatmul.mubr.bf16.gmra.mxu0 %v1253
    %v1297 = vpop.f32.mrf.mxu0
    %v1298 = vadd.f32 0.0, %v1297
    %v1299 = vpop.f32.mrf.mxu0
    %v1300 = vpop.f32.mrf.mxu0
    %v1301 = vadd.f32 0.0, %v1300
    %v1302 = vpop.f32.mrf.mxu0
    %1303 = vdwg.mxu0
    %v1304 = vadd.f32 %v1184, %v1290
    %v1305 = vadd.f32 %v1187, %v1293
    %v1306 = vadd.f32 %v1192, %v1298
    %v1307 = vadd.f32 %v1195, %v1301
    %v1308 = vpack.c.bf16 %v953, %v952
    %v1309 = vpack.c.bf16 %v955, %v954
    %s1310 = scalar_lea.vmem %s7, 96
    %v1311 = vld [vmem:[%s1310] sm:$0xf]
    %v1312 = vld [vmem:[%s1310 + $0x4] sm:$0xf]
    %v1313 = vld [vmem:[%s1310 + $0x8] sm:$0xf]
    %v1314 = vld [vmem:[%s1310 + $0xc] sm:$0xf]
    %v1315 = vld [vmem:[%s1310 + $0x10] sm:$0xf]
    %v1316 = vld [vmem:[%s1310 + $0x14] sm:$0xf]
    %v1317 = vld [vmem:[%s1310 + $0x18] sm:$0xf]
    %v1318 = vld [vmem:[%s1310 + $0x1c] sm:$0xf]
    %v1327 = vunpack.c.l.b16 %v1311
    %v1328 = vunpack.c.l.b16 %v1312
    %v1329 = vunpack.c.l.b16 %v1313
    %v1330 = vunpack.c.l.b16 %v1314
    %v1331 = vunpack.c.l.b16 %v1315
    %v1332 = vunpack.c.l.b16 %v1316
    %v1333 = vunpack.c.l.b16 %v1317
    %v1334 = vunpack.c.l.b16 %v1318
    %v1335 = vpack.c.b16 %v1328, %v1327
    %v1336 = vpack.c.b16 %v1330, %v1329
    %v1337 = vpack.c.b16 %v1332, %v1331
    %v1338 = vpack.c.b16 %v1334, %v1333
    %v1344 = vsel %vm1063, %v1308, 0
    %v1347 = vsel %vm1063, %v1309, 0
    %1349 = vmatprep.subr.bf16.mxu0 0
    %1350 = vmatpush1.bf16.msra.mxu0 0
    %1351 = vmatprep.subr.bf16.mxu0 0
    %1352 = vmatpush1.bf16.msra.mxu0 0
    %1353 = vmatprep.subr.bf16.mxu0 0
    %1354 = vmatpush1.bf16.msra.mxu0 0
    %1355 = vmatprep.subr.bf16.mxu0 0
    %1356 = vmatpush1.bf16.msra.mxu0 0
    %1357 = vmatprep.subr.bf16.mxu0 0
    %1358 = vmatpush1.bf16.msra.mxu0 %v1338
    %1359 = vmatprep.subr.bf16.mxu0 0
    %1360 = vmatpush1.bf16.msra.mxu0 %v1337
    %1361 = vmatprep.subr.bf16.mxu0 0
    %1362 = vmatpush1.bf16.msra.mxu0 %v1336
    %1363 = vmatprep.subr.bf16.mxu0 0
    %1364 = vmatpush1.bf16.msra.mxu0 %v1335
    %1365 = vmatprep.subr.bf16.mxu0 0
    %1366 = vmatpush2.bf16.msra.mxu0 0
    %1367 = vmatprep.subr.bf16.mxu0 0
    %1368 = vmatpush2.bf16.msra.mxu0 0
    %1369 = vmatprep.subr.bf16.mxu0 0
    %1370 = vmatpush2.bf16.msra.mxu0 0
    %1371 = vmatprep.subr.bf16.mxu0 0
    %1372 = vmatpush2.bf16.msra.mxu0 0
    %1373 = vmatprep.subr.bf16.mxu0 0
    %1374 = vmatpush2.bf16.msra.mxu0 0
    %1375 = vmatprep.subr.bf16.mxu0 0
    %1376 = vmatpush2.bf16.msra.mxu0 0
    %1377 = vmatprep.subr.bf16.mxu0 0
    %1378 = vmatpush2.bf16.msra.mxu0 0
    %1379 = vmatprep.subr.bf16.mxu0 0
    %1380 = vmatpush2.bf16.msra.mxu0 0
    %1381 = vmatprep.mubr.bf16.mxu0 0
    %1382 = vmatmul.mubr.bf16.gmra.mxu0 %v1344
    %v1383 = vpop.f32.mrf.mxu0
    %v1384 = vadd.f32 0.0, %v1383
    %v1385 = vpop.f32.mrf.mxu0
    %v1386 = vpop.f32.mrf.mxu0
    %v1387 = vadd.f32 0.0, %v1386
    %v1388 = vpop.f32.mrf.mxu0
    %1389 = vmatprep.mubr.bf16.mxu0 0
    %1390 = vmatmul.mubr.bf16.gmra.mxu0 %v1347
    %v1391 = vpop.f32.mrf.mxu0
    %v1392 = vadd.f32 0.0, %v1391
    %v1393 = vpop.f32.mrf.mxu0
    %v1394 = vpop.f32.mrf.mxu0
    %v1395 = vadd.f32 0.0, %v1394
    %v1396 = vpop.f32.mrf.mxu0
    %1397 = vdwg.mxu0
    %v1398 = vadd.f32 %v1304, %v1384
    %v1399 = vadd.f32 %v1305, %v1387
    %v1400 = vadd.f32 %v1306, %v1392
    %v1401 = vadd.f32 %v1307, %v1395
    %v1402 = vrot.slane %v952, 1
    %v1403 = vrot.slane %v953, 1
    %v1404 = vsel %vm750, %v1402, %v1403
    %v1405 = vrot.slane %v954, 1
    %v1406 = vsel %vm750, %v1403, %v1405
    %v1407 = vrot.slane %v955, 1
    %v1408 = vsel %vm750, %v1405, %v1407
    %v1409 = vsel %vm750, %v1407, %v758
    %v1414 = vsel %vm746, %v1404, 0.0
    %v1415 = vsel %vm747, %v1406, 0.0
    %v1416 = vsel %vm748, %v1408, 0.0
    %v1417 = vsel %vm749, %v1409, 0.0
    %v1418 = vpack.c.bf16 %v1415, %v1414
    %v1419 = vpack.c.bf16 %v1417, %v1416
    %s1420 = scalar_lea.vmem %s7, 128
    %v1421 = vld [vmem:[%s1420] sm:$0xf]
    %v1422 = vld [vmem:[%s1420 + $0x4] sm:$0xf]
    %v1423 = vld [vmem:[%s1420 + $0x8] sm:$0xf]
    %v1424 = vld [vmem:[%s1420 + $0xc] sm:$0xf]
    %v1425 = vld [vmem:[%s1420 + $0x10] sm:$0xf]
    %v1426 = vld [vmem:[%s1420 + $0x14] sm:$0xf]
    %v1427 = vld [vmem:[%s1420 + $0x18] sm:$0xf]
    %v1428 = vld [vmem:[%s1420 + $0x1c] sm:$0xf]
    %v1437 = vunpack.c.l.b16 %v1421
    %v1438 = vunpack.c.l.b16 %v1422
    %v1439 = vunpack.c.l.b16 %v1423
    %v1440 = vunpack.c.l.b16 %v1424
    %v1441 = vunpack.c.l.b16 %v1425
    %v1442 = vunpack.c.l.b16 %v1426
    %v1443 = vunpack.c.l.b16 %v1427
    %v1444 = vunpack.c.l.b16 %v1428
    %v1445 = vpack.c.b16 %v1438, %v1437
    %v1446 = vpack.c.b16 %v1440, %v1439
    %v1447 = vpack.c.b16 %v1442, %v1441
    %v1448 = vpack.c.b16 %v1444, %v1443
    %v1454 = vsel %vm1063, %v1418, 0
    %v1457 = vsel %vm1063, %v1419, 0
    %1459 = vmatprep.subr.bf16.mxu0 0
    %1460 = vmatpush1.bf16.msra.mxu0 0
    %1461 = vmatprep.subr.bf16.mxu0 0
    %1462 = vmatpush1.bf16.msra.mxu0 0
    %1463 = vmatprep.subr.bf16.mxu0 0
    %1464 = vmatpush1.bf16.msra.mxu0 0
    %1465 = vmatprep.subr.bf16.mxu0 0
    %1466 = vmatpush1.bf16.msra.mxu0 0
    %1467 = vmatprep.subr.bf16.mxu0 0
    %1468 = vmatpush1.bf16.msra.mxu0 %v1448
    %1469 = vmatprep.subr.bf16.mxu0 0
    %1470 = vmatpush1.bf16.msra.mxu0 %v1447
    %1471 = vmatprep.subr.bf16.mxu0 0
    %1472 = vmatpush1.bf16.msra.mxu0 %v1446
    %1473 = vmatprep.subr.bf16.mxu0 0
    %1474 = vmatpush1.bf16.msra.mxu0 %v1445
    %1475 = vmatprep.subr.bf16.mxu0 0
    %1476 = vmatpush2.bf16.msra.mxu0 0
    %1477 = vmatprep.subr.bf16.mxu0 0
    %1478 = vmatpush2.bf16.msra.mxu0 0
    %1479 = vmatprep.subr.bf16.mxu0 0
    %1480 = vmatpush2.bf16.msra.mxu0 0
    %1481 = vmatprep.subr.bf16.mxu0 0
    %1482 = vmatpush2.bf16.msra.mxu0 0
    %1483 = vmatprep.subr.bf16.mxu0 0
    %1484 = vmatpush2.bf16.msra.mxu0 0
    %1485 = vmatprep.subr.bf16.mxu0 0
    %1486 = vmatpush2.bf16.msra.mxu0 0
    %1487 = vmatprep.subr.bf16.mxu0 0
    %1488 = vmatpush2.bf16.msra.mxu0 0
    %1489 = vmatprep.subr.bf16.mxu0 0
    %1490 = vmatpush2.bf16.msra.mxu0 0
    %1491 = vmatprep.mubr.bf16.mxu0 0
    %1492 = vmatmul.mubr.bf16.gmra.mxu0 %v1454
    %v1493 = vpop.f32.mrf.mxu0
    %v1494 = vadd.f32 0.0, %v1493
    %v1495 = vpop.f32.mrf.mxu0
    %v1496 = vpop.f32.mrf.mxu0
    %v1497 = vadd.f32 0.0, %v1496
    %v1498 = vpop.f32.mrf.mxu0
    %1499 = vmatprep.mubr.bf16.mxu0 0
    %1500 = vmatmul.mubr.bf16.gmra.mxu0 %v1457
    %v1501 = vpop.f32.mrf.mxu0
    %v1502 = vadd.f32 0.0, %v1501
    %v1503 = vpop.f32.mrf.mxu0
    %v1504 = vpop.f32.mrf.mxu0
    %v1505 = vadd.f32 0.0, %v1504
    %v1506 = vpop.f32.mrf.mxu0
    %1507 = vdwg.mxu0
    %v1508 = vadd.f32 %v1398, %v1494
    %v1509 = vadd.f32 %v1399, %v1497
    %v1510 = vadd.f32 %v1400, %v1502
    %v1511 = vadd.f32 %v1401, %v1505
    %v1512 = vrot.slane %v952, 2
    %v1513 = vrot.slane %v953, 2
    %v1514 = vsel %vm858, %v1512, %v1513
    %v1515 = vrot.slane %v954, 2
    %v1516 = vsel %vm858, %v1513, %v1515
    %v1517 = vrot.slane %v955, 2
    %v1518 = vsel %vm858, %v1515, %v1517
    %v1519 = vsel %vm858, %v1517, %v866
    %v1524 = vsel %vm854, %v1514, 0.0
    %v1525 = vsel %vm855, %v1516, 0.0
    %v1526 = vsel %vm856, %v1518, 0.0
    %v1527 = vsel %vm857, %v1519, 0.0
    %v1528 = vpack.c.bf16 %v1525, %v1524
    %v1529 = vpack.c.bf16 %v1527, %v1526
    %s1530 = scalar_lea.vmem %s7, 160
    %v1531 = vld [vmem:[%s1530] sm:$0xf]
    %v1532 = vld [vmem:[%s1530 + $0x4] sm:$0xf]
    %v1533 = vld [vmem:[%s1530 + $0x8] sm:$0xf]
    %v1534 = vld [vmem:[%s1530 + $0xc] sm:$0xf]
    %v1535 = vld [vmem:[%s1530 + $0x10] sm:$0xf]
    %v1536 = vld [vmem:[%s1530 + $0x14] sm:$0xf]
    %v1537 = vld [vmem:[%s1530 + $0x18] sm:$0xf]
    %v1538 = vld [vmem:[%s1530 + $0x1c] sm:$0xf]
    %v1547 = vunpack.c.l.b16 %v1531
    %v1548 = vunpack.c.l.b16 %v1532
    %v1549 = vunpack.c.l.b16 %v1533
    %v1550 = vunpack.c.l.b16 %v1534
    %v1551 = vunpack.c.l.b16 %v1535
    %v1552 = vunpack.c.l.b16 %v1536
    %v1553 = vunpack.c.l.b16 %v1537
    %v1554 = vunpack.c.l.b16 %v1538
    %v1555 = vpack.c.b16 %v1548, %v1547
    %v1556 = vpack.c.b16 %v1550, %v1549
    %v1557 = vpack.c.b16 %v1552, %v1551
    %v1558 = vpack.c.b16 %v1554, %v1553
    %v1564 = vsel %vm1063, %v1528, 0
    %v1567 = vsel %vm1063, %v1529, 0
    %1569 = vmatprep.subr.bf16.mxu0 0
    %1570 = vmatpush1.bf16.msra.mxu0 0
    %1571 = vmatprep.subr.bf16.mxu0 0
    %1572 = vmatpush1.bf16.msra.mxu0 0
    %1573 = vmatprep.subr.bf16.mxu0 0
    %1574 = vmatpush1.bf16.msra.mxu0 0
    %1575 = vmatprep.subr.bf16.mxu0 0
    %1576 = vmatpush1.bf16.msra.mxu0 0
    %1577 = vmatprep.subr.bf16.mxu0 0
    %1578 = vmatpush1.bf16.msra.mxu0 %v1558
    %1579 = vmatprep.subr.bf16.mxu0 0
    %1580 = vmatpush1.bf16.msra.mxu0 %v1557
    %1581 = vmatprep.subr.bf16.mxu0 0
    %1582 = vmatpush1.bf16.msra.mxu0 %v1556
    %1583 = vmatprep.subr.bf16.mxu0 0
    %1584 = vmatpush1.bf16.msra.mxu0 %v1555
    %1585 = vmatprep.subr.bf16.mxu0 0
    %1586 = vmatpush2.bf16.msra.mxu0 0
    %1587 = vmatprep.subr.bf16.mxu0 0
    %1588 = vmatpush2.bf16.msra.mxu0 0
    %1589 = vmatprep.subr.bf16.mxu0 0
    %1590 = vmatpush2.bf16.msra.mxu0 0
    %1591 = vmatprep.subr.bf16.mxu0 0
    %1592 = vmatpush2.bf16.msra.mxu0 0
    %1593 = vmatprep.subr.bf16.mxu0 0
    %1594 = vmatpush2.bf16.msra.mxu0 0
    %1595 = vmatprep.subr.bf16.mxu0 0
    %1596 = vmatpush2.bf16.msra.mxu0 0
    %1597 = vmatprep.subr.bf16.mxu0 0
    %1598 = vmatpush2.bf16.msra.mxu0 0
    %1599 = vmatprep.subr.bf16.mxu0 0
    %1600 = vmatpush2.bf16.msra.mxu0 0
    %1601 = vmatprep.mubr.bf16.mxu0 0
    %1602 = vmatmul.mubr.bf16.gmra.mxu0 %v1564
    %v1603 = vpop.f32.mrf.mxu0
    %v1604 = vadd.f32 0.0, %v1603
    %v1605 = vpop.f32.mrf.mxu0
    %v1606 = vpop.f32.mrf.mxu0
    %v1607 = vadd.f32 0.0, %v1606
    %v1608 = vpop.f32.mrf.mxu0
    %1609 = vmatprep.mubr.bf16.mxu0 0
    %1610 = vmatmul.mubr.bf16.gmra.mxu0 %v1567
    %v1611 = vpop.f32.mrf.mxu0
    %v1612 = vadd.f32 0.0, %v1611
    %v1613 = vpop.f32.mrf.mxu0
    %v1614 = vpop.f32.mrf.mxu0
    %v1615 = vadd.f32 0.0, %v1614
    %v1616 = vpop.f32.mrf.mxu0
    %1617 = vdwg.mxu0
    %v1618 = vadd.f32 %v1508, %v1604
    %v1619 = vadd.f32 %v1509, %v1607
    %v1620 = vadd.f32 %v1510, %v1612
    %v1621 = vadd.f32 %v1511, %v1615
    %v1622 = vadd.s32 %v437, 3
    %v1623 = vadd.s32 %v438, 3
    %v1624 = vadd.s32 %v439, 3
    %v1625 = vadd.s32 %v440, 3
    %vm1626 = vcmp.ge.s32.totalorder %v1622, 0
    %vm1627 = vcmp.ge.s32.totalorder %v1623, 0
    %vm1628 = vcmp.ge.s32.totalorder %v1624, 0
    %vm1629 = vcmp.ge.s32.totalorder %v1625, 0
    %vm1630 = vcmp.lt.s32.totalorder %v1622, 16
    %vm1631 = vcmp.lt.s32.totalorder %v1623, 16
    %vm1632 = vcmp.lt.s32.totalorder %v1624, 16
    %vm1633 = vcmp.lt.s32.totalorder %v1625, 16
    %vm1634 = vmand %vm1626, %vm1630
    %vm1635 = vmand %vm1627, %vm1631
    %vm1636 = vmand %vm1628, %vm1632
    %vm1637 = vmand %vm1629, %vm1633
    %v1638 = vsel %vm1634, 1, 0
    %v1639 = vsel %vm1635, 1, 0
    %v1640 = vsel %vm1636, 1, 0
    %v1641 = vsel %vm1637, 1, 0
    %vm1642 = vcmp.eq.s32.totalorder %v1638, 1
    %vm1643 = vcmp.eq.s32.totalorder %v1639, 1
    %vm1644 = vcmp.eq.s32.totalorder %v1640, 1
    %vm1645 = vcmp.eq.s32.totalorder %v1641, 1
    %vm1646 = vcmask 1044480
    %v1647 = vrot.slane %v952, 3
    %v1648 = vrot.slane %v953, 3
    %v1649 = vsel %vm1646, %v1647, %v1648
    %v1650 = vrot.slane %v954, 3
    %v1651 = vsel %vm1646, %v1648, %v1650
    %v1652 = vrot.slane %v955, 3
    %v1653 = vsel %vm1646, %v1650, %v1652
    %v1654 = vrot.slane 0.0, 3
    %v1655 = vsel %vm1646, %v1652, %v1654
    %v1660 = vsel %vm1642, %v1649, 0.0
    %v1661 = vsel %vm1643, %v1651, 0.0
    %v1662 = vsel %vm1644, %v1653, 0.0
    %v1663 = vsel %vm1645, %v1655, 0.0
    %v1664 = vpack.c.bf16 %v1661, %v1660
    %v1665 = vpack.c.bf16 %v1663, %v1662
    %s1666 = scalar_lea.vmem %s7, 192
    %v1667 = vld [vmem:[%s1666] sm:$0xf]
    %v1668 = vld [vmem:[%s1666 + $0x4] sm:$0xf]
    %v1669 = vld [vmem:[%s1666 + $0x8] sm:$0xf]
    %v1670 = vld [vmem:[%s1666 + $0xc] sm:$0xf]
    %v1671 = vld [vmem:[%s1666 + $0x10] sm:$0xf]
    %v1672 = vld [vmem:[%s1666 + $0x14] sm:$0xf]
    %v1673 = vld [vmem:[%s1666 + $0x18] sm:$0xf]
    %v1674 = vld [vmem:[%s1666 + $0x1c] sm:$0xf]
    %v1683 = vunpack.c.l.b16 %v1667
    %v1684 = vunpack.c.l.b16 %v1668
    %v1685 = vunpack.c.l.b16 %v1669
    %v1686 = vunpack.c.l.b16 %v1670
    %v1687 = vunpack.c.l.b16 %v1671
    %v1688 = vunpack.c.l.b16 %v1672
    %v1689 = vunpack.c.l.b16 %v1673
    %v1690 = vunpack.c.l.b16 %v1674
    %v1691 = vpack.c.b16 %v1684, %v1683
    %v1692 = vpack.c.b16 %v1686, %v1685
    %v1693 = vpack.c.b16 %v1688, %v1687
    %v1694 = vpack.c.b16 %v1690, %v1689
    %v1700 = vsel %vm1063, %v1664, 0
    %v1703 = vsel %vm1063, %v1665, 0
    %1705 = vmatprep.subr.bf16.mxu0 0
    %1706 = vmatpush1.bf16.msra.mxu0 0
    %1707 = vmatprep.subr.bf16.mxu0 0
    %1708 = vmatpush1.bf16.msra.mxu0 0
    %1709 = vmatprep.subr.bf16.mxu0 0
    %1710 = vmatpush1.bf16.msra.mxu0 0
    %1711 = vmatprep.subr.bf16.mxu0 0
    %1712 = vmatpush1.bf16.msra.mxu0 0
    %1713 = vmatprep.subr.bf16.mxu0 0
    %1714 = vmatpush1.bf16.msra.mxu0 %v1694
    %1715 = vmatprep.subr.bf16.mxu0 0
    %1716 = vmatpush1.bf16.msra.mxu0 %v1693
    %1717 = vmatprep.subr.bf16.mxu0 0
    %1718 = vmatpush1.bf16.msra.mxu0 %v1692
    %1719 = vmatprep.subr.bf16.mxu0 0
    %1720 = vmatpush1.bf16.msra.mxu0 %v1691
    %1721 = vmatprep.subr.bf16.mxu0 0
    %1722 = vmatpush2.bf16.msra.mxu0 0
    %1723 = vmatprep.subr.bf16.mxu0 0
    %1724 = vmatpush2.bf16.msra.mxu0 0
    %1725 = vmatprep.subr.bf16.mxu0 0
    %1726 = vmatpush2.bf16.msra.mxu0 0
    %1727 = vmatprep.subr.bf16.mxu0 0
    %1728 = vmatpush2.bf16.msra.mxu0 0
    %1729 = vmatprep.subr.bf16.mxu0 0
    %1730 = vmatpush2.bf16.msra.mxu0 0
    %1731 = vmatprep.subr.bf16.mxu0 0
    %1732 = vmatpush2.bf16.msra.mxu0 0
    %1733 = vmatprep.subr.bf16.mxu0 0
    %1734 = vmatpush2.bf16.msra.mxu0 0
    %1735 = vmatprep.subr.bf16.mxu0 0
    %1736 = vmatpush2.bf16.msra.mxu0 0
    %1737 = vmatprep.mubr.bf16.mxu0 0
    %1738 = vmatmul.mubr.bf16.gmra.mxu0 %v1700
    %v1739 = vpop.f32.mrf.mxu0
    %v1740 = vadd.f32 0.0, %v1739
    %v1741 = vpop.f32.mrf.mxu0
    %v1742 = vpop.f32.mrf.mxu0
    %v1743 = vadd.f32 0.0, %v1742
    %v1744 = vpop.f32.mrf.mxu0
    %1745 = vmatprep.mubr.bf16.mxu0 0
    %1746 = vmatmul.mubr.bf16.gmra.mxu0 %v1703
    %v1747 = vpop.f32.mrf.mxu0
    %v1748 = vadd.f32 0.0, %v1747
    %v1749 = vpop.f32.mrf.mxu0
    %v1750 = vpop.f32.mrf.mxu0
    %v1751 = vadd.f32 0.0, %v1750
    %v1752 = vpop.f32.mrf.mxu0
    %1753 = vdwg.mxu0
    %v1754 = vadd.f32 %v1618, %v1740
    %v1755 = vadd.f32 %v1619, %v1743
    %v1756 = vadd.f32 %v1620, %v1748
    %v1757 = vadd.f32 %v1621, %v1751
    %v1759 = vlaneseq
    %v1760 = vshrl.u32 %v1759, 7
    %v1761 = vsub.s32 0, %v1760
    %v1762 = vrot.slane %v956, %v1761
    %v1764 = vadd.f32 %v1754, %v1762
    %v1765 = vadd.f32 %v1755, %v1762
    %v1766 = vadd.f32 %v1756, %v1762
    %v1767 = vadd.f32 %v1757, %v1762
    %v1768 = vmax.f32 %v1764, 0.0
    %v1769 = vmax.f32 %v1765, 0.0
    %v1770 = vmax.f32 %v1766, 0.0
    %v1771 = vmax.f32 %v1767, 0.0
    %v1772 = vld [vmem:[#allocation8] sm:$0x1]
    %v1773 = vadd.s32 %v437, 4294967292
    %v1774 = vadd.s32 %v438, 4294967292
    %v1775 = vadd.s32 %v439, 4294967292
    %v1776 = vadd.s32 %v440, 4294967292
    %vm1777 = vcmp.ge.s32.totalorder %v1773, 0
    %vm1778 = vcmp.ge.s32.totalorder %v1774, 0
    %vm1779 = vcmp.ge.s32.totalorder %v1775, 0
    %vm1780 = vcmp.ge.s32.totalorder %v1776, 0
    %vm1781 = vcmp.lt.s32.totalorder %v1773, 16
    %vm1782 = vcmp.lt.s32.totalorder %v1774, 16
    %vm1783 = vcmp.lt.s32.totalorder %v1775, 16
    %vm1784 = vcmp.lt.s32.totalorder %v1776, 16
    %vm1785 = vmand %vm1777, %vm1781
    %vm1786 = vmand %vm1778, %vm1782
    %vm1787 = vmand %vm1779, %vm1783
    %vm1788 = vmand %vm1780, %vm1784
    %v1789 = vsel %vm1785, 1, 0
    %v1790 = vsel %vm1786, 1, 0
    %v1791 = vsel %vm1787, 1, 0
    %v1792 = vsel %vm1788, 1, 0
    %vm1793 = vcmp.eq.s32.totalorder %v1789, 1
    %vm1794 = vcmp.eq.s32.totalorder %v1790, 1
    %vm1795 = vcmp.eq.s32.totalorder %v1791, 1
    %vm1796 = vcmp.eq.s32.totalorder %v1792, 1
    %vm1801 = vcmask 1043456
    %v1802 = vrot.slane 0.0, 4
    %v1803 = vrot.slane %v1768, 4
    %v1804 = vsel %vm1801, %v1802, %v1803
    %v1805 = vrot.slane %v1769, 4
    %v1806 = vsel %vm1801, %v1803, %v1805
    %v1807 = vrot.slane %v1770, 4
    %v1808 = vsel %vm1801, %v1805, %v1807
    %v1809 = vrot.slane %v1771, 4
    %v1810 = vsel %vm1801, %v1807, %v1809
    %v1815 = vsel %vm1793, %v1804, 0.0
    %v1816 = vsel %vm1794, %v1806, 0.0
    %v1817 = vsel %vm1795, %v1808, 0.0
    %v1818 = vsel %vm1796, %v1810, 0.0
    %v1819 = vpack.c.bf16 %v1816, %v1815
    %v1820 = vpack.c.bf16 %v1818, %v1817
    %v1821 = vld [vmem:[%s11] sm:$0xf]
    %v1822 = vld [vmem:[%s11 + $0x4] sm:$0xf]
    %v1823 = vld [vmem:[%s11 + $0x8] sm:$0xf]
    %v1824 = vld [vmem:[%s11 + $0xc] sm:$0xf]
    %v1825 = vld [vmem:[%s11 + $0x10] sm:$0xf]
    %v1826 = vld [vmem:[%s11 + $0x14] sm:$0xf]
    %v1827 = vld [vmem:[%s11 + $0x18] sm:$0xf]
    %v1828 = vld [vmem:[%s11 + $0x1c] sm:$0xf]
    %v1829 = vrot.slane %v1768, 6
    %v1830 = vsel %vm475, %v476, %v1829
    %v1831 = vrot.slane %v1769, 6
    %v1832 = vsel %vm475, %v1829, %v1831
    %v1833 = vrot.slane %v1770, 6
    %v1834 = vsel %vm475, %v1831, %v1833
    %v1835 = vrot.slane %v1771, 6
    %v1836 = vsel %vm475, %v1833, %v1835
    %v1841 = vsel %vm466, %v1830, 0.0
    %v1842 = vsel %vm467, %v1832, 0.0
    %v1843 = vsel %vm468, %v1834, 0.0
    %v1844 = vsel %vm469, %v1836, 0.0
    %v1845 = vpack.c.bf16 %v1842, %v1841
    %v1846 = vpack.c.bf16 %v1844, %v1843
    %s1847 = scalar_lea.vmem %s11, 32
    %v1848 = vld [vmem:[%s1847] sm:$0xf]
    %v1849 = vld [vmem:[%s1847 + $0x4] sm:$0xf]
    %v1850 = vld [vmem:[%s1847 + $0x8] sm:$0xf]
    %v1851 = vld [vmem:[%s1847 + $0xc] sm:$0xf]
    %v1852 = vld [vmem:[%s1847 + $0x10] sm:$0xf]
    %v1853 = vld [vmem:[%s1847 + $0x14] sm:$0xf]
    %v1854 = vld [vmem:[%s1847 + $0x18] sm:$0xf]
    %v1855 = vld [vmem:[%s1847 + $0x1c] sm:$0xf]
    %v1864 = vunpack.c.l.b16 %v1848
    %v1865 = vunpack.c.l.b16 %v1849
    %v1866 = vunpack.c.l.b16 %v1850
    %v1867 = vunpack.c.l.b16 %v1851
    %v1868 = vunpack.c.l.b16 %v1852
    %v1869 = vunpack.c.l.b16 %v1853
    %v1870 = vunpack.c.l.b16 %v1854
    %v1871 = vunpack.c.l.b16 %v1855
    %v1872 = vpack.c.b16 %v1865, %v1864
    %v1873 = vpack.c.b16 %v1867, %v1866
    %v1874 = vpack.c.b16 %v1869, %v1868
    %v1875 = vpack.c.b16 %v1871, %v1870
    %v1881 = vsel %vm1063, %v1845, 0
    %v1884 = vsel %vm1063, %v1846, 0
    %1886 = vmatprep.subr.bf16.mxu0 0
    %1887 = vmatpush1.bf16.msra.mxu0 0
    %1888 = vmatprep.subr.bf16.mxu0 0
    %1889 = vmatpush1.bf16.msra.mxu0 0
    %1890 = vmatprep.subr.bf16.mxu0 0
    %1891 = vmatpush1.bf16.msra.mxu0 0
    %1892 = vmatprep.subr.bf16.mxu0 0
    %1893 = vmatpush1.bf16.msra.mxu0 0
    %1894 = vmatprep.subr.bf16.mxu0 0
    %1895 = vmatpush1.bf16.msra.mxu0 %v1875
    %1896 = vmatprep.subr.bf16.mxu0 0
    %1897 = vmatpush1.bf16.msra.mxu0 %v1874
    %1898 = vmatprep.subr.bf16.mxu0 0
    %1899 = vmatpush1.bf16.msra.mxu0 %v1873
    %1900 = vmatprep.subr.bf16.mxu0 0
    %1901 = vmatpush1.bf16.msra.mxu0 %v1872
    %1902 = vmatprep.subr.bf16.mxu0 0
    %1903 = vmatpush2.bf16.msra.mxu0 0
    %1904 = vmatprep.subr.bf16.mxu0 0
    %1905 = vmatpush2.bf16.msra.mxu0 0
    %1906 = vmatprep.subr.bf16.mxu0 0
    %1907 = vmatpush2.bf16.msra.mxu0 0
    %1908 = vmatprep.subr.bf16.mxu0 0
    %1909 = vmatpush2.bf16.msra.mxu0 0
    %1910 = vmatprep.subr.bf16.mxu0 0
    %1911 = vmatpush2.bf16.msra.mxu0 0
    %1912 = vmatprep.subr.bf16.mxu0 0
    %1913 = vmatpush2.bf16.msra.mxu0 0
    %1914 = vmatprep.subr.bf16.mxu0 0
    %1915 = vmatpush2.bf16.msra.mxu0 0
    %1916 = vmatprep.subr.bf16.mxu0 0
    %1917 = vmatpush2.bf16.msra.mxu0 0
    %1918 = vmatprep.mubr.bf16.mxu0 0
    %1919 = vmatmul.mubr.bf16.gmra.mxu0 %v1881
    %v1920 = vpop.f32.mrf.mxu0
    %v1921 = vadd.f32 0.0, %v1920
    %v1922 = vpop.f32.mrf.mxu0
    %v1923 = vpop.f32.mrf.mxu0
    %v1924 = vadd.f32 0.0, %v1923
    %v1925 = vpop.f32.mrf.mxu0
    %1926 = vmatprep.mubr.bf16.mxu0 0
    %1927 = vmatmul.mubr.bf16.gmra.mxu0 %v1884
    %v1928 = vpop.f32.mrf.mxu0
    %v1929 = vadd.f32 0.0, %v1928
    %v1930 = vpop.f32.mrf.mxu0
    %v1931 = vpop.f32.mrf.mxu0
    %v1932 = vadd.f32 0.0, %v1931
    %v1933 = vpop.f32.mrf.mxu0
    %1934 = vdwg.mxu0
    %v1943 = vunpack.c.l.b16 %v1821
    %v1944 = vunpack.c.l.b16 %v1822
    %v1945 = vunpack.c.l.b16 %v1823
    %v1946 = vunpack.c.l.b16 %v1824
    %v1947 = vunpack.c.l.b16 %v1825
    %v1948 = vunpack.c.l.b16 %v1826
    %v1949 = vunpack.c.l.b16 %v1827
    %v1950 = vunpack.c.l.b16 %v1828
    %v1951 = vpack.c.b16 %v1944, %v1943
    %v1952 = vpack.c.b16 %v1946, %v1945
    %v1953 = vpack.c.b16 %v1948, %v1947
    %v1954 = vpack.c.b16 %v1950, %v1949
    %v1960 = vsel %vm1063, %v1819, 0
    %v1963 = vsel %vm1063, %v1820, 0
    %1965 = vmatprep.subr.bf16.mxu0 0
    %1966 = vmatpush1.bf16.msra.mxu0 0
    %1967 = vmatprep.subr.bf16.mxu0 0
    %1968 = vmatpush1.bf16.msra.mxu0 0
    %1969 = vmatprep.subr.bf16.mxu0 0
    %1970 = vmatpush1.bf16.msra.mxu0 0
    %1971 = vmatprep.subr.bf16.mxu0 0
    %1972 = vmatpush1.bf16.msra.mxu0 0
    %1973 = vmatprep.subr.bf16.mxu0 0
    %1974 = vmatpush1.bf16.msra.mxu0 %v1954
    %1975 = vmatprep.subr.bf16.mxu0 0
    %1976 = vmatpush1.bf16.msra.mxu0 %v1953
    %1977 = vmatprep.subr.bf16.mxu0 0
    %1978 = vmatpush1.bf16.msra.mxu0 %v1952
    %1979 = vmatprep.subr.bf16.mxu0 0
    %1980 = vmatpush1.bf16.msra.mxu0 %v1951
    %1981 = vmatprep.subr.bf16.mxu0 0
    %1982 = vmatpush2.bf16.msra.mxu0 0
    %1983 = vmatprep.subr.bf16.mxu0 0
    %1984 = vmatpush2.bf16.msra.mxu0 0
    %1985 = vmatprep.subr.bf16.mxu0 0
    %1986 = vmatpush2.bf16.msra.mxu0 0
    %1987 = vmatprep.subr.bf16.mxu0 0
    %1988 = vmatpush2.bf16.msra.mxu0 0
    %1989 = vmatprep.subr.bf16.mxu0 0
    %1990 = vmatpush2.bf16.msra.mxu0 0
    %1991 = vmatprep.subr.bf16.mxu0 0
    %1992 = vmatpush2.bf16.msra.mxu0 0
    %1993 = vmatprep.subr.bf16.mxu0 0
    %1994 = vmatpush2.bf16.msra.mxu0 0
    %1995 = vmatprep.subr.bf16.mxu0 0
    %1996 = vmatpush2.bf16.msra.mxu0 0
    %1997 = vmatprep.mubr.bf16.mxu0 0
    %1998 = vmatmul.mubr.bf16.gmra.mxu0 %v1960
    %v1999 = vpop.f32.mrf.mxu0
    %v2000 = vadd.f32 %v1921, %v1999
    %v2001 = vpop.f32.mrf.mxu0
    %v2002 = vpop.f32.mrf.mxu0
    %v2003 = vadd.f32 %v1924, %v2002
    %v2004 = vpop.f32.mrf.mxu0
    %2005 = vmatprep.mubr.bf16.mxu0 0
    %2006 = vmatmul.mubr.bf16.gmra.mxu0 %v1963
    %v2007 = vpop.f32.mrf.mxu0
    %v2008 = vadd.f32 %v1929, %v2007
    %v2009 = vpop.f32.mrf.mxu0
    %v2010 = vpop.f32.mrf.mxu0
    %v2011 = vadd.f32 %v1932, %v2010
    %v2012 = vpop.f32.mrf.mxu0
    %2013 = vdwg.mxu0
    %v2014 = vpack.c.bf16 %v1769, %v1768
    %v2015 = vpack.c.bf16 %v1771, %v1770
    %s2016 = scalar_lea.vmem %s11, 64
    %v2017 = vld [vmem:[%s2016] sm:$0xf]
    %v2018 = vld [vmem:[%s2016 + $0x4] sm:$0xf]
    %v2019 = vld [vmem:[%s2016 + $0x8] sm:$0xf]
    %v2020 = vld [vmem:[%s2016 + $0xc] sm:$0xf]
    %v2021 = vld [vmem:[%s2016 + $0x10] sm:$0xf]
    %v2022 = vld [vmem:[%s2016 + $0x14] sm:$0xf]
    %v2023 = vld [vmem:[%s2016 + $0x18] sm:$0xf]
    %v2024 = vld [vmem:[%s2016 + $0x1c] sm:$0xf]
    %v2033 = vunpack.c.l.b16 %v2017
    %v2034 = vunpack.c.l.b16 %v2018
    %v2035 = vunpack.c.l.b16 %v2019
    %v2036 = vunpack.c.l.b16 %v2020
    %v2037 = vunpack.c.l.b16 %v2021
    %v2038 = vunpack.c.l.b16 %v2022
    %v2039 = vunpack.c.l.b16 %v2023
    %v2040 = vunpack.c.l.b16 %v2024
    %v2041 = vpack.c.b16 %v2034, %v2033
    %v2042 = vpack.c.b16 %v2036, %v2035
    %v2043 = vpack.c.b16 %v2038, %v2037
    %v2044 = vpack.c.b16 %v2040, %v2039
    %v2050 = vsel %vm1063, %v2014, 0
    %v2053 = vsel %vm1063, %v2015, 0
    %2055 = vmatprep.subr.bf16.mxu0 0
    %2056 = vmatpush1.bf16.msra.mxu0 0
    %2057 = vmatprep.subr.bf16.mxu0 0
    %2058 = vmatpush1.bf16.msra.mxu0 0
    %2059 = vmatprep.subr.bf16.mxu0 0
    %2060 = vmatpush1.bf16.msra.mxu0 0
    %2061 = vmatprep.subr.bf16.mxu0 0
    %2062 = vmatpush1.bf16.msra.mxu0 0
    %2063 = vmatprep.subr.bf16.mxu0 0
    %2064 = vmatpush1.bf16.msra.mxu0 %v2044
    %2065 = vmatprep.subr.bf16.mxu0 0
    %2066 = vmatpush1.bf16.msra.mxu0 %v2043
    %2067 = vmatprep.subr.bf16.mxu0 0
    %2068 = vmatpush1.bf16.msra.mxu0 %v2042
    %2069 = vmatprep.subr.bf16.mxu0 0
    %2070 = vmatpush1.bf16.msra.mxu0 %v2041
    %2071 = vmatprep.subr.bf16.mxu0 0
    %2072 = vmatpush2.bf16.msra.mxu0 0
    %2073 = vmatprep.subr.bf16.mxu0 0
    %2074 = vmatpush2.bf16.msra.mxu0 0
    %2075 = vmatprep.subr.bf16.mxu0 0
    %2076 = vmatpush2.bf16.msra.mxu0 0
    %2077 = vmatprep.subr.bf16.mxu0 0
    %2078 = vmatpush2.bf16.msra.mxu0 0
    %2079 = vmatprep.subr.bf16.mxu0 0
    %2080 = vmatpush2.bf16.msra.mxu0 0
    %2081 = vmatprep.subr.bf16.mxu0 0
    %2082 = vmatpush2.bf16.msra.mxu0 0
    %2083 = vmatprep.subr.bf16.mxu0 0
    %2084 = vmatpush2.bf16.msra.mxu0 0
    %2085 = vmatprep.subr.bf16.mxu0 0
    %2086 = vmatpush2.bf16.msra.mxu0 0
    %2087 = vmatprep.mubr.bf16.mxu0 0
    %2088 = vmatmul.mubr.bf16.gmra.mxu0 %v2050
    %v2089 = vpop.f32.mrf.mxu0
    %v2090 = vadd.f32 0.0, %v2089
    %v2091 = vpop.f32.mrf.mxu0
    %v2092 = vpop.f32.mrf.mxu0
    %v2093 = vadd.f32 0.0, %v2092
    %v2094 = vpop.f32.mrf.mxu0
    %2095 = vmatprep.mubr.bf16.mxu0 0
    %2096 = vmatmul.mubr.bf16.gmra.mxu0 %v2053
    %v2097 = vpop.f32.mrf.mxu0
    %v2098 = vadd.f32 0.0, %v2097
    %v2099 = vpop.f32.mrf.mxu0
    %v2100 = vpop.f32.mrf.mxu0
    %v2101 = vadd.f32 0.0, %v2100
    %v2102 = vpop.f32.mrf.mxu0
    %2103 = vdwg.mxu0
    %v2104 = vadd.f32 %v2000, %v2090
    %v2105 = vadd.f32 %v2003, %v2093
    %v2106 = vadd.f32 %v2008, %v2098
    %v2107 = vadd.f32 %v2011, %v2101
    %v2108 = vrot.slane %v1768, 2
    %v2109 = vrot.slane %v1769, 2
    %v2110 = vsel %vm858, %v2108, %v2109
    %v2111 = vrot.slane %v1770, 2
    %v2112 = vsel %vm858, %v2109, %v2111
    %v2113 = vrot.slane %v1771, 2
    %v2114 = vsel %vm858, %v2111, %v2113
    %v2115 = vsel %vm858, %v2113, %v866
    %v2120 = vsel %vm854, %v2110, 0.0
    %v2121 = vsel %vm855, %v2112, 0.0
    %v2122 = vsel %vm856, %v2114, 0.0
    %v2123 = vsel %vm857, %v2115, 0.0
    %v2124 = vpack.c.bf16 %v2121, %v2120
    %v2125 = vpack.c.bf16 %v2123, %v2122
    %s2126 = scalar_lea.vmem %s11, 96
    %v2127 = vld [vmem:[%s2126] sm:$0xf]
    %v2128 = vld [vmem:[%s2126 + $0x4] sm:$0xf]
    %v2129 = vld [vmem:[%s2126 + $0x8] sm:$0xf]
    %v2130 = vld [vmem:[%s2126 + $0xc] sm:$0xf]
    %v2131 = vld [vmem:[%s2126 + $0x10] sm:$0xf]
    %v2132 = vld [vmem:[%s2126 + $0x14] sm:$0xf]
    %v2133 = vld [vmem:[%s2126 + $0x18] sm:$0xf]
    %v2134 = vld [vmem:[%s2126 + $0x1c] sm:$0xf]
    %v2143 = vunpack.c.l.b16 %v2127
    %v2144 = vunpack.c.l.b16 %v2128
    %v2145 = vunpack.c.l.b16 %v2129
    %v2146 = vunpack.c.l.b16 %v2130
    %v2147 = vunpack.c.l.b16 %v2131
    %v2148 = vunpack.c.l.b16 %v2132
    %v2149 = vunpack.c.l.b16 %v2133
    %v2150 = vunpack.c.l.b16 %v2134
    %v2151 = vpack.c.b16 %v2144, %v2143
    %v2152 = vpack.c.b16 %v2146, %v2145
    %v2153 = vpack.c.b16 %v2148, %v2147
    %v2154 = vpack.c.b16 %v2150, %v2149
    %v2160 = vsel %vm1063, %v2124, 0
    %v2163 = vsel %vm1063, %v2125, 0
    %2165 = vmatprep.subr.bf16.mxu0 0
    %2166 = vmatpush1.bf16.msra.mxu0 0
    %2167 = vmatprep.subr.bf16.mxu0 0
    %2168 = vmatpush1.bf16.msra.mxu0 0
    %2169 = vmatprep.subr.bf16.mxu0 0
    %2170 = vmatpush1.bf16.msra.mxu0 0
    %2171 = vmatprep.subr.bf16.mxu0 0
    %2172 = vmatpush1.bf16.msra.mxu0 0
    %2173 = vmatprep.subr.bf16.mxu0 0
    %2174 = vmatpush1.bf16.msra.mxu0 %v2154
    %2175 = vmatprep.subr.bf16.mxu0 0
    %2176 = vmatpush1.bf16.msra.mxu0 %v2153
    %2177 = vmatprep.subr.bf16.mxu0 0
    %2178 = vmatpush1.bf16.msra.mxu0 %v2152
    %2179 = vmatprep.subr.bf16.mxu0 0
    %2180 = vmatpush1.bf16.msra.mxu0 %v2151
    %2181 = vmatprep.subr.bf16.mxu0 0
    %2182 = vmatpush2.bf16.msra.mxu0 0
    %2183 = vmatprep.subr.bf16.mxu0 0
    %2184 = vmatpush2.bf16.msra.mxu0 0
    %2185 = vmatprep.subr.bf16.mxu0 0
    %2186 = vmatpush2.bf16.msra.mxu0 0
    %2187 = vmatprep.subr.bf16.mxu0 0
    %2188 = vmatpush2.bf16.msra.mxu0 0
    %2189 = vmatprep.subr.bf16.mxu0 0
    %2190 = vmatpush2.bf16.msra.mxu0 0
    %2191 = vmatprep.subr.bf16.mxu0 0
    %2192 = vmatpush2.bf16.msra.mxu0 0
    %2193 = vmatprep.subr.bf16.mxu0 0
    %2194 = vmatpush2.bf16.msra.mxu0 0
    %2195 = vmatprep.subr.bf16.mxu0 0
    %2196 = vmatpush2.bf16.msra.mxu0 0
    %2197 = vmatprep.mubr.bf16.mxu0 0
    %2198 = vmatmul.mubr.bf16.gmra.mxu0 %v2160
    %v2199 = vpop.f32.mrf.mxu0
    %v2200 = vadd.f32 0.0, %v2199
    %v2201 = vpop.f32.mrf.mxu0
    %v2202 = vpop.f32.mrf.mxu0
    %v2203 = vadd.f32 0.0, %v2202
    %v2204 = vpop.f32.mrf.mxu0
    %2205 = vmatprep.mubr.bf16.mxu0 0
    %2206 = vmatmul.mubr.bf16.gmra.mxu0 %v2163
    %v2207 = vpop.f32.mrf.mxu0
    %v2208 = vadd.f32 0.0, %v2207
    %v2209 = vpop.f32.mrf.mxu0
    %v2210 = vpop.f32.mrf.mxu0
    %v2211 = vadd.f32 0.0, %v2210
    %v2212 = vpop.f32.mrf.mxu0
    %2213 = vdwg.mxu0
    %v2214 = vadd.f32 %v2104, %v2200
    %v2215 = vadd.f32 %v2105, %v2203
    %v2216 = vadd.f32 %v2106, %v2208
    %v2217 = vadd.f32 %v2107, %v2211
    %v2218 = vadd.s32 %v437, 4
    %v2219 = vadd.s32 %v438, 4
    %v2220 = vadd.s32 %v439, 4
    %v2221 = vadd.s32 %v440, 4
    %vm2222 = vcmp.ge.s32.totalorder %v2218, 0
    %vm2223 = vcmp.ge.s32.totalorder %v2219, 0
    %vm2224 = vcmp.ge.s32.totalorder %v2220, 0
    %vm2225 = vcmp.ge.s32.totalorder %v2221, 0
    %vm2226 = vcmp.lt.s32.totalorder %v2218, 16
    %vm2227 = vcmp.lt.s32.totalorder %v2219, 16
    %vm2228 = vcmp.lt.s32.totalorder %v2220, 16
    %vm2229 = vcmp.lt.s32.totalorder %v2221, 16
    %vm2230 = vmand %vm2222, %vm2226
    %vm2231 = vmand %vm2223, %vm2227
    %vm2232 = vmand %vm2224, %vm2228
    %vm2233 = vmand %vm2225, %vm2229
    %v2234 = vsel %vm2230, 1, 0
    %v2235 = vsel %vm2231, 1, 0
    %v2236 = vsel %vm2232, 1, 0
    %v2237 = vsel %vm2233, 1, 0
    %vm2238 = vcmp.eq.s32.totalorder %v2234, 1
    %vm2239 = vcmp.eq.s32.totalorder %v2235, 1
    %vm2240 = vcmp.eq.s32.totalorder %v2236, 1
    %vm2241 = vcmp.eq.s32.totalorder %v2237, 1
    %v2242 = vsel %vm1801, %v1809, %v1802
    %v2244 = vsel %vm2238, %v1806, 0.0
    %v2245 = vsel %vm2239, %v1808, 0.0
    %v2246 = vsel %vm2240, %v1810, 0.0
    %v2247 = vsel %vm2241, %v2242, 0.0
    %v2248 = vpack.c.bf16 %v2245, %v2244
    %v2249 = vpack.c.bf16 %v2247, %v2246
    %s2250 = scalar_lea.vmem %s11, 128
    %v2251 = vld [vmem:[%s2250] sm:$0xf]
    %v2252 = vld [vmem:[%s2250 + $0x4] sm:$0xf]
    %v2253 = vld [vmem:[%s2250 + $0x8] sm:$0xf]
    %v2254 = vld [vmem:[%s2250 + $0xc] sm:$0xf]
    %v2255 = vld [vmem:[%s2250 + $0x10] sm:$0xf]
    %v2256 = vld [vmem:[%s2250 + $0x14] sm:$0xf]
    %v2257 = vld [vmem:[%s2250 + $0x18] sm:$0xf]
    %v2258 = vld [vmem:[%s2250 + $0x1c] sm:$0xf]
    %v2267 = vunpack.c.l.b16 %v2251
    %v2268 = vunpack.c.l.b16 %v2252
    %v2269 = vunpack.c.l.b16 %v2253
    %v2270 = vunpack.c.l.b16 %v2254
    %v2271 = vunpack.c.l.b16 %v2255
    %v2272 = vunpack.c.l.b16 %v2256
    %v2273 = vunpack.c.l.b16 %v2257
    %v2274 = vunpack.c.l.b16 %v2258
    %v2275 = vpack.c.b16 %v2268, %v2267
    %v2276 = vpack.c.b16 %v2270, %v2269
    %v2277 = vpack.c.b16 %v2272, %v2271
    %v2278 = vpack.c.b16 %v2274, %v2273
    %v2284 = vsel %vm1063, %v2248, 0
    %v2287 = vsel %vm1063, %v2249, 0
    %2289 = vmatprep.subr.bf16.mxu0 0
    %2290 = vmatpush1.bf16.msra.mxu0 0
    %2291 = vmatprep.subr.bf16.mxu0 0
    %2292 = vmatpush1.bf16.msra.mxu0 0
    %2293 = vmatprep.subr.bf16.mxu0 0
    %2294 = vmatpush1.bf16.msra.mxu0 0
    %2295 = vmatprep.subr.bf16.mxu0 0
    %2296 = vmatpush1.bf16.msra.mxu0 0
    %2297 = vmatprep.subr.bf16.mxu0 0
    %2298 = vmatpush1.bf16.msra.mxu0 %v2278
    %2299 = vmatprep.subr.bf16.mxu0 0
    %2300 = vmatpush1.bf16.msra.mxu0 %v2277
    %2301 = vmatprep.subr.bf16.mxu0 0
    %2302 = vmatpush1.bf16.msra.mxu0 %v2276
    %2303 = vmatprep.subr.bf16.mxu0 0
    %2304 = vmatpush1.bf16.msra.mxu0 %v2275
    %2305 = vmatprep.subr.bf16.mxu0 0
    %2306 = vmatpush2.bf16.msra.mxu0 0
    %2307 = vmatprep.subr.bf16.mxu0 0
    %2308 = vmatpush2.bf16.msra.mxu0 0
    %2309 = vmatprep.subr.bf16.mxu0 0
    %2310 = vmatpush2.bf16.msra.mxu0 0
    %2311 = vmatprep.subr.bf16.mxu0 0
    %2312 = vmatpush2.bf16.msra.mxu0 0
    %2313 = vmatprep.subr.bf16.mxu0 0
    %2314 = vmatpush2.bf16.msra.mxu0 0
    %2315 = vmatprep.subr.bf16.mxu0 0
    %2316 = vmatpush2.bf16.msra.mxu0 0
    %2317 = vmatprep.subr.bf16.mxu0 0
    %2318 = vmatpush2.bf16.msra.mxu0 0
    %2319 = vmatprep.subr.bf16.mxu0 0
    %2320 = vmatpush2.bf16.msra.mxu0 0
    %2321 = vmatprep.mubr.bf16.mxu0 0
    %2322 = vmatmul.mubr.bf16.gmra.mxu0 %v2284
    %v2323 = vpop.f32.mrf.mxu0
    %v2324 = vadd.f32 0.0, %v2323
    %v2325 = vpop.f32.mrf.mxu0
    %v2326 = vpop.f32.mrf.mxu0
    %v2327 = vadd.f32 0.0, %v2326
    %v2328 = vpop.f32.mrf.mxu0
    %2329 = vmatprep.mubr.bf16.mxu0 0
    %2330 = vmatmul.mubr.bf16.gmra.mxu0 %v2287
    %v2331 = vpop.f32.mrf.mxu0
    %v2332 = vadd.f32 0.0, %v2331
    %v2333 = vpop.f32.mrf.mxu0
    %v2334 = vpop.f32.mrf.mxu0
    %v2335 = vadd.f32 0.0, %v2334
    %v2336 = vpop.f32.mrf.mxu0
    %2337 = vdwg.mxu0
    %v2338 = vadd.f32 %v2214, %v2324
    %v2339 = vadd.f32 %v2215, %v2327
    %v2340 = vadd.f32 %v2216, %v2332
    %v2341 = vadd.f32 %v2217, %v2335
    %v2343 = vlaneseq
    %v2344 = vshrl.u32 %v2343, 7
    %v2345 = vsub.s32 0, %v2344
    %v2346 = vrot.slane %v1772, %v2345
    %v2348 = vadd.f32 %v2338, %v2346
    %v2349 = vadd.f32 %v2339, %v2346
    %v2350 = vadd.f32 %v2340, %v2346
    %v2351 = vadd.f32 %v2341, %v2346
    %v2352 = vmax.f32 %v2348, 0.0
    %v2353 = vmax.f32 %v2349, 0.0
    %v2354 = vmax.f32 %v2350, 0.0
    %v2355 = vmax.f32 %v2351, 0.0
    %v2356 = vld [vmem:[#allocation11] sm:$0x1]
    %v2357 = vadd.s32 %v438, 4294967288
    %v2358 = vadd.s32 %v439, 4294967288
    %v2359 = vadd.s32 %v440, 4294967288
    %vm2360 = vcmp.ge.s32.totalorder %v2357, 0
    %vm2361 = vcmp.ge.s32.totalorder %v2358, 0
    %vm2362 = vcmp.ge.s32.totalorder %v2359, 0
    %vm2363 = vcmp.lt.s32.totalorder %v2357, 16
    %vm2364 = vcmp.lt.s32.totalorder %v2358, 16
    %vm2365 = vcmp.lt.s32.totalorder %v2359, 16
    %vm2366 = vmand %vm2360, %vm2363
    %vm2367 = vmand %vm2361, %vm2364
    %vm2368 = vmand %vm2362, %vm2365
    %v2369 = vsel %vm2366, 1, 0
    %v2370 = vsel %vm2367, 1, 0
    %v2371 = vsel %vm2368, 1, 0
    %vm2372 = vcmp.eq.s32.totalorder %v2369, 1
    %vm2373 = vcmp.eq.s32.totalorder %v2370, 1
    %vm2374 = vcmp.eq.s32.totalorder %v2371, 1
    %v2375 = vsel %vm2372, %v2352, 0.0
    %v2376 = vsel %vm2373, %v2353, 0.0
    %v2377 = vsel %vm2374, %v2354, 0.0
    %v2378 = vpack.c.bf16 %v2375, 0.0
    %v2379 = vpack.c.bf16 %v2377, %v2376
    %v2380 = vld [vmem:[#allocation9] sm:$0xf]
    %v2381 = vld [vmem:[#allocation9 + $0x4] sm:$0xf]
    %v2382 = vld [vmem:[#allocation9 + $0x8] sm:$0xf]
    %v2383 = vld [vmem:[#allocation9 + $0xc] sm:$0xf]
    %v2384 = vld [vmem:[#allocation9 + $0x10] sm:$0xf]
    %v2385 = vld [vmem:[#allocation9 + $0x14] sm:$0xf]
    %v2386 = vld [vmem:[#allocation9 + $0x18] sm:$0xf]
    %v2387 = vld [vmem:[#allocation9 + $0x1c] sm:$0xf]
    %v2392 = vrot.slane %v2352, 4
    %v2393 = vsel %vm1801, %v1802, %v2392
    %v2394 = vrot.slane %v2353, 4
    %v2395 = vsel %vm1801, %v2392, %v2394
    %v2396 = vrot.slane %v2354, 4
    %v2397 = vsel %vm1801, %v2394, %v2396
    %v2398 = vrot.slane %v2355, 4
    %v2399 = vsel %vm1801, %v2396, %v2398
    %v2404 = vsel %vm1793, %v2393, 0.0
    %v2405 = vsel %vm1794, %v2395, 0.0
    %v2406 = vsel %vm1795, %v2397, 0.0
    %v2407 = vsel %vm1796, %v2399, 0.0
    %v2408 = vpack.c.bf16 %v2405, %v2404
    %v2409 = vpack.c.bf16 %v2407, %v2406
    %s2410 = scalar_lea.vmem [#allocation9], 32
    %v2411 = vld [vmem:[%s2410] sm:$0xf]
    %v2412 = vld [vmem:[%s2410 + $0x4] sm:$0xf]
    %v2413 = vld [vmem:[%s2410 + $0x8] sm:$0xf]
    %v2414 = vld [vmem:[%s2410 + $0xc] sm:$0xf]
    %v2415 = vld [vmem:[%s2410 + $0x10] sm:$0xf]
    %v2416 = vld [vmem:[%s2410 + $0x14] sm:$0xf]
    %v2417 = vld [vmem:[%s2410 + $0x18] sm:$0xf]
    %v2418 = vld [vmem:[%s2410 + $0x1c] sm:$0xf]
    %v2427 = vunpack.c.l.b16 %v2411
    %v2428 = vunpack.c.l.b16 %v2412
    %v2429 = vunpack.c.l.b16 %v2413
    %v2430 = vunpack.c.l.b16 %v2414
    %v2431 = vunpack.c.l.b16 %v2415
    %v2432 = vunpack.c.l.b16 %v2416
    %v2433 = vunpack.c.l.b16 %v2417
    %v2434 = vunpack.c.l.b16 %v2418
    %v2435 = vpack.c.b16 %v2428, %v2427
    %v2436 = vpack.c.b16 %v2430, %v2429
    %v2437 = vpack.c.b16 %v2432, %v2431
    %v2438 = vpack.c.b16 %v2434, %v2433
    %v2444 = vsel %vm1063, %v2408, 0
    %v2447 = vsel %vm1063, %v2409, 0
    %2449 = vmatprep.subr.bf16.mxu0 0
    %2450 = vmatpush1.bf16.msra.mxu0 0
    %2451 = vmatprep.subr.bf16.mxu0 0
    %2452 = vmatpush1.bf16.msra.mxu0 0
    %2453 = vmatprep.subr.bf16.mxu0 0
    %2454 = vmatpush1.bf16.msra.mxu0 0
    %2455 = vmatprep.subr.bf16.mxu0 0
    %2456 = vmatpush1.bf16.msra.mxu0 0
    %2457 = vmatprep.subr.bf16.mxu0 0
    %2458 = vmatpush1.bf16.msra.mxu0 %v2438
    %2459 = vmatprep.subr.bf16.mxu0 0
    %2460 = vmatpush1.bf16.msra.mxu0 %v2437
    %2461 = vmatprep.subr.bf16.mxu0 0
    %2462 = vmatpush1.bf16.msra.mxu0 %v2436
    %2463 = vmatprep.subr.bf16.mxu0 0
    %2464 = vmatpush1.bf16.msra.mxu0 %v2435
    %2465 = vmatprep.subr.bf16.mxu0 0
    %2466 = vmatpush2.bf16.msra.mxu0 0
    %2467 = vmatprep.subr.bf16.mxu0 0
    %2468 = vmatpush2.bf16.msra.mxu0 0
    %2469 = vmatprep.subr.bf16.mxu0 0
    %2470 = vmatpush2.bf16.msra.mxu0 0
    %2471 = vmatprep.subr.bf16.mxu0 0
    %2472 = vmatpush2.bf16.msra.mxu0 0
    %2473 = vmatprep.subr.bf16.mxu0 0
    %2474 = vmatpush2.bf16.msra.mxu0 0
    %2475 = vmatprep.subr.bf16.mxu0 0
    %2476 = vmatpush2.bf16.msra.mxu0 0
    %2477 = vmatprep.subr.bf16.mxu0 0
    %2478 = vmatpush2.bf16.msra.mxu0 0
    %2479 = vmatprep.subr.bf16.mxu0 0
    %2480 = vmatpush2.bf16.msra.mxu0 0
    %2481 = vmatprep.mubr.bf16.mxu0 0
    %2482 = vmatmul.mubr.bf16.gmra.mxu0 %v2444
    %v2483 = vpop.f32.mrf.mxu0
    %v2484 = vadd.f32 0.0, %v2483
    %v2485 = vpop.f32.mrf.mxu0
    %v2486 = vpop.f32.mrf.mxu0
    %v2487 = vadd.f32 0.0, %v2486
    %v2488 = vpop.f32.mrf.mxu0
    %2489 = vmatprep.mubr.bf16.mxu0 0
    %2490 = vmatmul.mubr.bf16.gmra.mxu0 %v2447
    %v2491 = vpop.f32.mrf.mxu0
    %v2492 = vadd.f32 0.0, %v2491
    %v2493 = vpop.f32.mrf.mxu0
    %v2494 = vpop.f32.mrf.mxu0
    %v2495 = vadd.f32 0.0, %v2494
    %v2496 = vpop.f32.mrf.mxu0
    %2497 = vdwg.mxu0
    %v2506 = vunpack.c.l.b16 %v2380
    %v2507 = vunpack.c.l.b16 %v2381
    %v2508 = vunpack.c.l.b16 %v2382
    %v2509 = vunpack.c.l.b16 %v2383
    %v2510 = vunpack.c.l.b16 %v2384
    %v2511 = vunpack.c.l.b16 %v2385
    %v2512 = vunpack.c.l.b16 %v2386
    %v2513 = vunpack.c.l.b16 %v2387
    %v2514 = vpack.c.b16 %v2507, %v2506
    %v2515 = vpack.c.b16 %v2509, %v2508
    %v2516 = vpack.c.b16 %v2511, %v2510
    %v2517 = vpack.c.b16 %v2513, %v2512
    %v2523 = vsel %vm1063, %v2378, 0
    %v2526 = vsel %vm1063, %v2379, 0
    %2528 = vmatprep.subr.bf16.mxu0 0
    %2529 = vmatpush1.bf16.msra.mxu0 0
    %2530 = vmatprep.subr.bf16.mxu0 0
    %2531 = vmatpush1.bf16.msra.mxu0 0
    %2532 = vmatprep.subr.bf16.mxu0 0
    %2533 = vmatpush1.bf16.msra.mxu0 0
    %2534 = vmatprep.subr.bf16.mxu0 0
    %2535 = vmatpush1.bf16.msra.mxu0 0
    %2536 = vmatprep.subr.bf16.mxu0 0
    %2537 = vmatpush1.bf16.msra.mxu0 %v2517
    %2538 = vmatprep.subr.bf16.mxu0 0
    %2539 = vmatpush1.bf16.msra.mxu0 %v2516
    %2540 = vmatprep.subr.bf16.mxu0 0
    %2541 = vmatpush1.bf16.msra.mxu0 %v2515
    %2542 = vmatprep.subr.bf16.mxu0 0
    %2543 = vmatpush1.bf16.msra.mxu0 %v2514
    %2544 = vmatprep.subr.bf16.mxu0 0
    %2545 = vmatpush2.bf16.msra.mxu0 0
    %2546 = vmatprep.subr.bf16.mxu0 0
    %2547 = vmatpush2.bf16.msra.mxu0 0
    %2548 = vmatprep.subr.bf16.mxu0 0
    %2549 = vmatpush2.bf16.msra.mxu0 0
    %2550 = vmatprep.subr.bf16.mxu0 0
    %2551 = vmatpush2.bf16.msra.mxu0 0
    %2552 = vmatprep.subr.bf16.mxu0 0
    %2553 = vmatpush2.bf16.msra.mxu0 0
    %2554 = vmatprep.subr.bf16.mxu0 0
    %2555 = vmatpush2.bf16.msra.mxu0 0
    %2556 = vmatprep.subr.bf16.mxu0 0
    %2557 = vmatpush2.bf16.msra.mxu0 0
    %2558 = vmatprep.subr.bf16.mxu0 0
    %2559 = vmatpush2.bf16.msra.mxu0 0
    %2560 = vmatprep.mubr.bf16.mxu0 0
    %2561 = vmatmul.mubr.bf16.gmra.mxu0 %v2523
    %v2562 = vpop.f32.mrf.mxu0
    %v2563 = vadd.f32 %v2484, %v2562
    %v2564 = vpop.f32.mrf.mxu0
    %v2565 = vpop.f32.mrf.mxu0
    %v2566 = vadd.f32 %v2487, %v2565
    %v2567 = vpop.f32.mrf.mxu0
    %2568 = vmatprep.mubr.bf16.mxu0 0
    %2569 = vmatmul.mubr.bf16.gmra.mxu0 %v2526
    %v2570 = vpop.f32.mrf.mxu0
    %v2571 = vadd.f32 %v2492, %v2570
    %v2572 = vpop.f32.mrf.mxu0
    %v2573 = vpop.f32.mrf.mxu0
    %v2574 = vadd.f32 %v2495, %v2573
    %v2575 = vpop.f32.mrf.mxu0
    %2576 = vdwg.mxu0
    %v2577 = vpack.c.bf16 %v2353, %v2352
    %v2578 = vpack.c.bf16 %v2355, %v2354
    %s2579 = scalar_lea.vmem [#allocation9], 64
    %v2580 = vld [vmem:[%s2579] sm:$0xf]
    %v2581 = vld [vmem:[%s2579 + $0x4] sm:$0xf]
    %v2582 = vld [vmem:[%s2579 + $0x8] sm:$0xf]
    %v2583 = vld [vmem:[%s2579 + $0xc] sm:$0xf]
    %v2584 = vld [vmem:[%s2579 + $0x10] sm:$0xf]
    %v2585 = vld [vmem:[%s2579 + $0x14] sm:$0xf]
    %v2586 = vld [vmem:[%s2579 + $0x18] sm:$0xf]
    %v2587 = vld [vmem:[%s2579 + $0x1c] sm:$0xf]
    %v2596 = vunpack.c.l.b16 %v2580
    %v2597 = vunpack.c.l.b16 %v2581
    %v2598 = vunpack.c.l.b16 %v2582
    %v2599 = vunpack.c.l.b16 %v2583
    %v2600 = vunpack.c.l.b16 %v2584
    %v2601 = vunpack.c.l.b16 %v2585
    %v2602 = vunpack.c.l.b16 %v2586
    %v2603 = vunpack.c.l.b16 %v2587
    %v2604 = vpack.c.b16 %v2597, %v2596
    %v2605 = vpack.c.b16 %v2599, %v2598
    %v2606 = vpack.c.b16 %v2601, %v2600
    %v2607 = vpack.c.b16 %v2603, %v2602
    %v2613 = vsel %vm1063, %v2577, 0
    %v2616 = vsel %vm1063, %v2578, 0
    %2618 = vmatprep.subr.bf16.mxu0 0
    %2619 = vmatpush1.bf16.msra.mxu0 0
    %2620 = vmatprep.subr.bf16.mxu0 0
    %2621 = vmatpush1.bf16.msra.mxu0 0
    %2622 = vmatprep.subr.bf16.mxu0 0
    %2623 = vmatpush1.bf16.msra.mxu0 0
    %2624 = vmatprep.subr.bf16.mxu0 0
    %2625 = vmatpush1.bf16.msra.mxu0 0
    %2626 = vmatprep.subr.bf16.mxu0 0
    %2627 = vmatpush1.bf16.msra.mxu0 %v2607
    %2628 = vmatprep.subr.bf16.mxu0 0
    %2629 = vmatpush1.bf16.msra.mxu0 %v2606
    %2630 = vmatprep.subr.bf16.mxu0 0
    %2631 = vmatpush1.bf16.msra.mxu0 %v2605
    %2632 = vmatprep.subr.bf16.mxu0 0
    %2633 = vmatpush1.bf16.msra.mxu0 %v2604
    %2634 = vmatprep.subr.bf16.mxu0 0
    %2635 = vmatpush2.bf16.msra.mxu0 0
    %2636 = vmatprep.subr.bf16.mxu0 0
    %2637 = vmatpush2.bf16.msra.mxu0 0
    %2638 = vmatprep.subr.bf16.mxu0 0
    %2639 = vmatpush2.bf16.msra.mxu0 0
    %2640 = vmatprep.subr.bf16.mxu0 0
    %2641 = vmatpush2.bf16.msra.mxu0 0
    %2642 = vmatprep.subr.bf16.mxu0 0
    %2643 = vmatpush2.bf16.msra.mxu0 0
    %2644 = vmatprep.subr.bf16.mxu0 0
    %2645 = vmatpush2.bf16.msra.mxu0 0
    %2646 = vmatprep.subr.bf16.mxu0 0
    %2647 = vmatpush2.bf16.msra.mxu0 0
    %2648 = vmatprep.subr.bf16.mxu0 0
    %2649 = vmatpush2.bf16.msra.mxu0 0
    %2650 = vmatprep.mubr.bf16.mxu0 0
    %2651 = vmatmul.mubr.bf16.gmra.mxu0 %v2613
    %v2652 = vpop.f32.mrf.mxu0
    %v2653 = vadd.f32 0.0, %v2652
    %v2654 = vpop.f32.mrf.mxu0
    %v2655 = vpop.f32.mrf.mxu0
    %v2656 = vadd.f32 0.0, %v2655
    %v2657 = vpop.f32.mrf.mxu0
    %2658 = vmatprep.mubr.bf16.mxu0 0
    %2659 = vmatmul.mubr.bf16.gmra.mxu0 %v2616
    %v2660 = vpop.f32.mrf.mxu0
    %v2661 = vadd.f32 0.0, %v2660
    %v2662 = vpop.f32.mrf.mxu0
    %v2663 = vpop.f32.mrf.mxu0
    %v2664 = vadd.f32 0.0, %v2663
    %v2665 = vpop.f32.mrf.mxu0
    %2666 = vdwg.mxu0
    %v2667 = vadd.f32 %v2563, %v2653
    %v2668 = vadd.f32 %v2566, %v2656
    %v2669 = vadd.f32 %v2571, %v2661
    %v2670 = vadd.f32 %v2574, %v2664
    %v2671 = vsel %vm1801, %v2398, %v1802
    %v2673 = vsel %vm2238, %v2395, 0.0
    %v2674 = vsel %vm2239, %v2397, 0.0
    %v2675 = vsel %vm2240, %v2399, 0.0
    %v2676 = vsel %vm2241, %v2671, 0.0
    %v2677 = vpack.c.bf16 %v2674, %v2673
    %v2678 = vpack.c.bf16 %v2676, %v2675
    %s2679 = scalar_lea.vmem [#allocation9], 96
    %v2680 = vld [vmem:[%s2679] sm:$0xf]
    %v2681 = vld [vmem:[%s2679 + $0x4] sm:$0xf]
    %v2682 = vld [vmem:[%s2679 + $0x8] sm:$0xf]
    %v2683 = vld [vmem:[%s2679 + $0xc] sm:$0xf]
    %v2684 = vld [vmem:[%s2679 + $0x10] sm:$0xf]
    %v2685 = vld [vmem:[%s2679 + $0x14] sm:$0xf]
    %v2686 = vld [vmem:[%s2679 + $0x18] sm:$0xf]
    %v2687 = vld [vmem:[%s2679 + $0x1c] sm:$0xf]
    %v2696 = vunpack.c.l.b16 %v2680
    %v2697 = vunpack.c.l.b16 %v2681
    %v2698 = vunpack.c.l.b16 %v2682
    %v2699 = vunpack.c.l.b16 %v2683
    %v2700 = vunpack.c.l.b16 %v2684
    %v2701 = vunpack.c.l.b16 %v2685
    %v2702 = vunpack.c.l.b16 %v2686
    %v2703 = vunpack.c.l.b16 %v2687
    %v2704 = vpack.c.b16 %v2697, %v2696
    %v2705 = vpack.c.b16 %v2699, %v2698
    %v2706 = vpack.c.b16 %v2701, %v2700
    %v2707 = vpack.c.b16 %v2703, %v2702
    %v2713 = vsel %vm1063, %v2677, 0
    %v2716 = vsel %vm1063, %v2678, 0
    %2718 = vmatprep.subr.bf16.mxu0 0
    %2719 = vmatpush1.bf16.msra.mxu0 0
    %2720 = vmatprep.subr.bf16.mxu0 0
    %2721 = vmatpush1.bf16.msra.mxu0 0
    %2722 = vmatprep.subr.bf16.mxu0 0
    %2723 = vmatpush1.bf16.msra.mxu0 0
    %2724 = vmatprep.subr.bf16.mxu0 0
    %2725 = vmatpush1.bf16.msra.mxu0 0
    %2726 = vmatprep.subr.bf16.mxu0 0
    %2727 = vmatpush1.bf16.msra.mxu0 %v2707
    %2728 = vmatprep.subr.bf16.mxu0 0
    %2729 = vmatpush1.bf16.msra.mxu0 %v2706
    %2730 = vmatprep.subr.bf16.mxu0 0
    %2731 = vmatpush1.bf16.msra.mxu0 %v2705
    %2732 = vmatprep.subr.bf16.mxu0 0
    %2733 = vmatpush1.bf16.msra.mxu0 %v2704
    %2734 = vmatprep.subr.bf16.mxu0 0
    %2735 = vmatpush2.bf16.msra.mxu0 0
    %2736 = vmatprep.subr.bf16.mxu0 0
    %2737 = vmatpush2.bf16.msra.mxu0 0
    %2738 = vmatprep.subr.bf16.mxu0 0
    %2739 = vmatpush2.bf16.msra.mxu0 0
    %2740 = vmatprep.subr.bf16.mxu0 0
    %2741 = vmatpush2.bf16.msra.mxu0 0
    %2742 = vmatprep.subr.bf16.mxu0 0
    %2743 = vmatpush2.bf16.msra.mxu0 0
    %2744 = vmatprep.subr.bf16.mxu0 0
    %2745 = vmatpush2.bf16.msra.mxu0 0
    %2746 = vmatprep.subr.bf16.mxu0 0
    %2747 = vmatpush2.bf16.msra.mxu0 0
    %2748 = vmatprep.subr.bf16.mxu0 0
    %2749 = vmatpush2.bf16.msra.mxu0 0
    %2750 = vmatprep.mubr.bf16.mxu0 0
    %2751 = vmatmul.mubr.bf16.gmra.mxu0 %v2713
    %v2752 = vpop.f32.mrf.mxu0
    %v2753 = vadd.f32 0.0, %v2752
    %v2754 = vpop.f32.mrf.mxu0
    %v2755 = vpop.f32.mrf.mxu0
    %v2756 = vadd.f32 0.0, %v2755
    %v2757 = vpop.f32.mrf.mxu0
    %2758 = vmatprep.mubr.bf16.mxu0 0
    %2759 = vmatmul.mubr.bf16.gmra.mxu0 %v2716
    %v2760 = vpop.f32.mrf.mxu0
    %v2761 = vadd.f32 0.0, %v2760
    %v2762 = vpop.f32.mrf.mxu0
    %v2763 = vpop.f32.mrf.mxu0
    %v2764 = vadd.f32 0.0, %v2763
    %v2765 = vpop.f32.mrf.mxu0
    %2766 = vdwg.mxu0
    %v2767 = vadd.f32 %v2667, %v2753
    %v2768 = vadd.f32 %v2668, %v2756
    %v2769 = vadd.f32 %v2669, %v2761
    %v2770 = vadd.f32 %v2670, %v2764
    %v2771 = vadd.s32 %v437, 8
    %v2772 = vadd.s32 %v438, 8
    %v2773 = vadd.s32 %v439, 8
    %vm2774 = vcmp.ge.s32.totalorder %v2771, 0
    %vm2775 = vcmp.ge.s32.totalorder %v2772, 0
    %vm2776 = vcmp.ge.s32.totalorder %v2773, 0
    %vm2777 = vcmp.lt.s32.totalorder %v2771, 16
    %vm2778 = vcmp.lt.s32.totalorder %v2772, 16
    %vm2779 = vcmp.lt.s32.totalorder %v2773, 16
    %vm2780 = vmand %vm2774, %vm2777
    %vm2781 = vmand %vm2775, %vm2778
    %vm2782 = vmand %vm2776, %vm2779
    %v2783 = vsel %vm2780, 1, 0
    %v2784 = vsel %vm2781, 1, 0
    %v2785 = vsel %vm2782, 1, 0
    %vm2786 = vcmp.eq.s32.totalorder %v2783, 1
    %vm2787 = vcmp.eq.s32.totalorder %v2784, 1
    %vm2788 = vcmp.eq.s32.totalorder %v2785, 1
    %v2789 = vsel %vm2786, %v2353, 0.0
    %v2790 = vsel %vm2787, %v2354, 0.0
    %v2791 = vsel %vm2788, %v2355, 0.0
    %v2792 = vpack.c.bf16 %v2790, %v2789
    %v2793 = vpack.c.bf16 0.0, %v2791
    %s2794 = scalar_lea.vmem [#allocation9], 128
    %v2795 = vld [vmem:[%s2794] sm:$0xf]
    %v2796 = vld [vmem:[%s2794 + $0x4] sm:$0xf]
    %v2797 = vld [vmem:[%s2794 + $0x8] sm:$0xf]
    %v2798 = vld [vmem:[%s2794 + $0xc] sm:$0xf]
    %v2799 = vld [vmem:[%s2794 + $0x10] sm:$0xf]
    %v2800 = vld [vmem:[%s2794 + $0x14] sm:$0xf]
    %v2801 = vld [vmem:[%s2794 + $0x18] sm:$0xf]
    %v2802 = vld [vmem:[%s2794 + $0x1c] sm:$0xf]
    %v2811 = vunpack.c.l.b16 %v2795
    %v2812 = vunpack.c.l.b16 %v2796
    %v2813 = vunpack.c.l.b16 %v2797
    %v2814 = vunpack.c.l.b16 %v2798
    %v2815 = vunpack.c.l.b16 %v2799
    %v2816 = vunpack.c.l.b16 %v2800
    %v2817 = vunpack.c.l.b16 %v2801
    %v2818 = vunpack.c.l.b16 %v2802
    %v2819 = vpack.c.b16 %v2812, %v2811
    %v2820 = vpack.c.b16 %v2814, %v2813
    %v2821 = vpack.c.b16 %v2816, %v2815
    %v2822 = vpack.c.b16 %v2818, %v2817
    %v2828 = vsel %vm1063, %v2792, 0
    %v2831 = vsel %vm1063, %v2793, 0
    %2833 = vmatprep.subr.bf16.mxu0 0
    %2834 = vmatpush1.bf16.msra.mxu0 0
    %2835 = vmatprep.subr.bf16.mxu0 0
    %2836 = vmatpush1.bf16.msra.mxu0 0
    %2837 = vmatprep.subr.bf16.mxu0 0
    %2838 = vmatpush1.bf16.msra.mxu0 0
    %2839 = vmatprep.subr.bf16.mxu0 0
    %2840 = vmatpush1.bf16.msra.mxu0 0
    %2841 = vmatprep.subr.bf16.mxu0 0
    %2842 = vmatpush1.bf16.msra.mxu0 %v2822
    %2843 = vmatprep.subr.bf16.mxu0 0
    %2844 = vmatpush1.bf16.msra.mxu0 %v2821
    %2845 = vmatprep.subr.bf16.mxu0 0
    %2846 = vmatpush1.bf16.msra.mxu0 %v2820
    %2847 = vmatprep.subr.bf16.mxu0 0
    %2848 = vmatpush1.bf16.msra.mxu0 %v2819
    %2849 = vmatprep.subr.bf16.mxu0 0
    %2850 = vmatpush2.bf16.msra.mxu0 0
    %2851 = vmatprep.subr.bf16.mxu0 0
    %2852 = vmatpush2.bf16.msra.mxu0 0
    %2853 = vmatprep.subr.bf16.mxu0 0
    %2854 = vmatpush2.bf16.msra.mxu0 0
    %2855 = vmatprep.subr.bf16.mxu0 0
    %2856 = vmatpush2.bf16.msra.mxu0 0
    %2857 = vmatprep.subr.bf16.mxu0 0
    %2858 = vmatpush2.bf16.msra.mxu0 0
    %2859 = vmatprep.subr.bf16.mxu0 0
    %2860 = vmatpush2.bf16.msra.mxu0 0
    %2861 = vmatprep.subr.bf16.mxu0 0
    %2862 = vmatpush2.bf16.msra.mxu0 0
    %2863 = vmatprep.subr.bf16.mxu0 0
    %2864 = vmatpush2.bf16.msra.mxu0 0
    %2865 = vmatprep.mubr.bf16.mxu0 0
    %2866 = vmatmul.mubr.bf16.gmra.mxu0 %v2828
    %v2867 = vpop.f32.mrf.mxu0
    %v2868 = vadd.f32 0.0, %v2867
    %v2869 = vpop.f32.mrf.mxu0
    %v2870 = vpop.f32.mrf.mxu0
    %v2871 = vadd.f32 0.0, %v2870
    %v2872 = vpop.f32.mrf.mxu0
    %2873 = vmatprep.mubr.bf16.mxu0 0
    %2874 = vmatmul.mubr.bf16.gmra.mxu0 %v2831
    %v2875 = vpop.f32.mrf.mxu0
    %v2876 = vadd.f32 0.0, %v2875
    %v2877 = vpop.f32.mrf.mxu0
    %v2878 = vpop.f32.mrf.mxu0
    %v2879 = vadd.f32 0.0, %v2878
    %v2880 = vpop.f32.mrf.mxu0
    %2881 = vdwg.mxu0
    %v2882 = vadd.f32 %v2767, %v2868
    %v2883 = vadd.f32 %v2768, %v2871
    %v2884 = vadd.f32 %v2769, %v2876
    %v2885 = vadd.f32 %v2770, %v2879
    %v2887 = vlaneseq
    %v2888 = vshrl.u32 %v2887, 7
    %v2889 = vsub.s32 0, %v2888
    %v2890 = vrot.slane %v2356, %v2889
    %v2892 = vadd.f32 %v2882, %v2890
    %v2893 = vadd.f32 %v2883, %v2890
    %v2894 = vadd.f32 %v2884, %v2890
    %v2895 = vadd.f32 %v2885, %v2890
    %v2896 = vmax.f32 %v2892, 0.0
    %v2897 = vmax.f32 %v2893, 0.0
    %v2898 = vmax.f32 %v2894, 0.0
    %v2899 = vmax.f32 %v2895, 0.0
    %v2900 = vld [vmem:[#allocation14] sm:$0x1]
    %v2901 = vsel %vm2372, %v2896, 0.0
    %v2902 = vsel %vm2373, %v2897, 0.0
    %v2903 = vsel %vm2374, %v2898, 0.0
    %v2904 = vpack.c.bf16 %v2901, 0.0
    %v2905 = vpack.c.bf16 %v2903, %v2902
    %s2906 = scalar_lea.vmem [#allocation12], 32
    %v2907 = vld [vmem:[%s2906] sm:$0xf]
    %v2908 = vld [vmem:[%s2906 + $0x4] sm:$0xf]
    %v2909 = vld [vmem:[%s2906 + $0x8] sm:$0xf]
    %v2910 = vld [vmem:[%s2906 + $0xc] sm:$0xf]
    %v2911 = vld [vmem:[%s2906 + $0x10] sm:$0xf]
    %v2912 = vld [vmem:[%s2906 + $0x14] sm:$0xf]
    %v2913 = vld [vmem:[%s2906 + $0x18] sm:$0xf]
    %v2914 = vld [vmem:[%s2906 + $0x1c] sm:$0xf]
    %v2915 = vpack.c.bf16 %v2897, %v2896
    %v2916 = vpack.c.bf16 %v2899, %v2898
    %s2917 = scalar_lea.vmem [#allocation12], 64
    %v2918 = vld [vmem:[%s2917] sm:$0xf]
    %v2919 = vld [vmem:[%s2917 + $0x4] sm:$0xf]
    %v2920 = vld [vmem:[%s2917 + $0x8] sm:$0xf]
    %v2921 = vld [vmem:[%s2917 + $0xc] sm:$0xf]
    %v2922 = vld [vmem:[%s2917 + $0x10] sm:$0xf]
    %v2923 = vld [vmem:[%s2917 + $0x14] sm:$0xf]
    %v2924 = vld [vmem:[%s2917 + $0x18] sm:$0xf]
    %v2925 = vld [vmem:[%s2917 + $0x1c] sm:$0xf]
    %v2934 = vunpack.c.l.b16 %v2918
    %v2935 = vunpack.c.l.b16 %v2919
    %v2936 = vunpack.c.l.b16 %v2920
    %v2937 = vunpack.c.l.b16 %v2921
    %v2938 = vunpack.c.l.b16 %v2922
    %v2939 = vunpack.c.l.b16 %v2923
    %v2940 = vunpack.c.l.b16 %v2924
    %v2941 = vunpack.c.l.b16 %v2925
    %v2942 = vpack.c.b16 %v2935, %v2934
    %v2943 = vpack.c.b16 %v2937, %v2936
    %v2944 = vpack.c.b16 %v2939, %v2938
    %v2945 = vpack.c.b16 %v2941, %v2940
    %v2951 = vsel %vm1063, %v2915, 0
    %v2954 = vsel %vm1063, %v2916, 0
    %2956 = vmatprep.subr.bf16.mxu0 0
    %2957 = vmatpush1.bf16.msra.mxu0 0
    %2958 = vmatprep.subr.bf16.mxu0 0
    %2959 = vmatpush1.bf16.msra.mxu0 0
    %2960 = vmatprep.subr.bf16.mxu0 0
    %2961 = vmatpush1.bf16.msra.mxu0 0
    %2962 = vmatprep.subr.bf16.mxu0 0
    %2963 = vmatpush1.bf16.msra.mxu0 0
    %2964 = vmatprep.subr.bf16.mxu0 0
    %2965 = vmatpush1.bf16.msra.mxu0 %v2945
    %2966 = vmatprep.subr.bf16.mxu0 0
    %2967 = vmatpush1.bf16.msra.mxu0 %v2944
    %2968 = vmatprep.subr.bf16.mxu0 0
    %2969 = vmatpush1.bf16.msra.mxu0 %v2943
    %2970 = vmatprep.subr.bf16.mxu0 0
    %2971 = vmatpush1.bf16.msra.mxu0 %v2942
    %2972 = vmatprep.subr.bf16.mxu0 0
    %2973 = vmatpush2.bf16.msra.mxu0 0
    %2974 = vmatprep.subr.bf16.mxu0 0
    %2975 = vmatpush2.bf16.msra.mxu0 0
    %2976 = vmatprep.subr.bf16.mxu0 0
    %2977 = vmatpush2.bf16.msra.mxu0 0
    %2978 = vmatprep.subr.bf16.mxu0 0
    %2979 = vmatpush2.bf16.msra.mxu0 0
    %2980 = vmatprep.subr.bf16.mxu0 0
    %2981 = vmatpush2.bf16.msra.mxu0 0
    %2982 = vmatprep.subr.bf16.mxu0 0
    %2983 = vmatpush2.bf16.msra.mxu0 0
    %2984 = vmatprep.subr.bf16.mxu0 0
    %2985 = vmatpush2.bf16.msra.mxu0 0
    %2986 = vmatprep.subr.bf16.mxu0 0
    %2987 = vmatpush2.bf16.msra.mxu0 0
    %2988 = vmatprep.mubr.bf16.mxu0 0
    %2989 = vmatmul.mubr.bf16.gmra.mxu0 %v2951
    %v2990 = vpop.f32.mrf.mxu0
    %v2991 = vadd.f32 0.0, %v2990
    %v2992 = vpop.f32.mrf.mxu0
    %v2993 = vpop.f32.mrf.mxu0
    %v2994 = vadd.f32 0.0, %v2993
    %v2995 = vpop.f32.mrf.mxu0
    %2996 = vmatprep.mubr.bf16.mxu0 0
    %2997 = vmatmul.mubr.bf16.gmra.mxu0 %v2954
    %v2998 = vpop.f32.mrf.mxu0
    %v2999 = vadd.f32 0.0, %v2998
    %v3000 = vpop.f32.mrf.mxu0
    %v3001 = vpop.f32.mrf.mxu0
    %v3002 = vadd.f32 0.0, %v3001
    %v3003 = vpop.f32.mrf.mxu0
    %3004 = vdwg.mxu0
    %v3013 = vunpack.c.l.b16 %v2907
    %v3014 = vunpack.c.l.b16 %v2908
    %v3015 = vunpack.c.l.b16 %v2909
    %v3016 = vunpack.c.l.b16 %v2910
    %v3017 = vunpack.c.l.b16 %v2911
    %v3018 = vunpack.c.l.b16 %v2912
    %v3019 = vunpack.c.l.b16 %v2913
    %v3020 = vunpack.c.l.b16 %v2914
    %v3021 = vpack.c.b16 %v3014, %v3013
    %v3022 = vpack.c.b16 %v3016, %v3015
    %v3023 = vpack.c.b16 %v3018, %v3017
    %v3024 = vpack.c.b16 %v3020, %v3019
    %v3030 = vsel %vm1063, %v2904, 0
    %v3033 = vsel %vm1063, %v2905, 0
    %3035 = vmatprep.subr.bf16.mxu0 0
    %3036 = vmatpush1.bf16.msra.mxu0 0
    %3037 = vmatprep.subr.bf16.mxu0 0
    %3038 = vmatpush1.bf16.msra.mxu0 0
    %3039 = vmatprep.subr.bf16.mxu0 0
    %3040 = vmatpush1.bf16.msra.mxu0 0
    %3041 = vmatprep.subr.bf16.mxu0 0
    %3042 = vmatpush1.bf16.msra.mxu0 0
    %3043 = vmatprep.subr.bf16.mxu0 0
    %3044 = vmatpush1.bf16.msra.mxu0 %v3024
    %3045 = vmatprep.subr.bf16.mxu0 0
    %3046 = vmatpush1.bf16.msra.mxu0 %v3023
    %3047 = vmatprep.subr.bf16.mxu0 0
    %3048 = vmatpush1.bf16.msra.mxu0 %v3022
    %3049 = vmatprep.subr.bf16.mxu0 0
    %3050 = vmatpush1.bf16.msra.mxu0 %v3021
    %3051 = vmatprep.subr.bf16.mxu0 0
    %3052 = vmatpush2.bf16.msra.mxu0 0
    %3053 = vmatprep.subr.bf16.mxu0 0
    %3054 = vmatpush2.bf16.msra.mxu0 0
    %3055 = vmatprep.subr.bf16.mxu0 0
    %3056 = vmatpush2.bf16.msra.mxu0 0
    %3057 = vmatprep.subr.bf16.mxu0 0
    %3058 = vmatpush2.bf16.msra.mxu0 0
    %3059 = vmatprep.subr.bf16.mxu0 0
    %3060 = vmatpush2.bf16.msra.mxu0 0
    %3061 = vmatprep.subr.bf16.mxu0 0
    %3062 = vmatpush2.bf16.msra.mxu0 0
    %3063 = vmatprep.subr.bf16.mxu0 0
    %3064 = vmatpush2.bf16.msra.mxu0 0
    %3065 = vmatprep.subr.bf16.mxu0 0
    %3066 = vmatpush2.bf16.msra.mxu0 0
    %3067 = vmatprep.mubr.bf16.mxu0 0
    %3068 = vmatmul.mubr.bf16.gmra.mxu0 %v3030
    %v3069 = vpop.f32.mrf.mxu0
    %v3070 = vadd.f32 %v2991, %v3069
    %v3071 = vpop.f32.mrf.mxu0
    %v3072 = vpop.f32.mrf.mxu0
    %v3073 = vadd.f32 %v2994, %v3072
    %v3074 = vpop.f32.mrf.mxu0
    %3075 = vmatprep.mubr.bf16.mxu0 0
    %3076 = vmatmul.mubr.bf16.gmra.mxu0 %v3033
    %v3077 = vpop.f32.mrf.mxu0
    %v3078 = vadd.f32 %v2999, %v3077
    %v3079 = vpop.f32.mrf.mxu0
    %v3080 = vpop.f32.mrf.mxu0
    %v3081 = vadd.f32 %v3002, %v3080
    %v3082 = vpop.f32.mrf.mxu0
    %3083 = vdwg.mxu0
    %v3084 = vsel %vm2786, %v2897, 0.0
    %v3085 = vsel %vm2787, %v2898, 0.0
    %v3086 = vsel %vm2788, %v2899, 0.0
    %v3087 = vpack.c.bf16 %v3085, %v3084
    %v3088 = vpack.c.bf16 0.0, %v3086
    %s3089 = scalar_lea.vmem [#allocation12], 96
    %v3090 = vld [vmem:[%s3089] sm:$0xf]
    %v3091 = vld [vmem:[%s3089 + $0x4] sm:$0xf]
    %v3092 = vld [vmem:[%s3089 + $0x8] sm:$0xf]
    %v3093 = vld [vmem:[%s3089 + $0xc] sm:$0xf]
    %v3094 = vld [vmem:[%s3089 + $0x10] sm:$0xf]
    %v3095 = vld [vmem:[%s3089 + $0x14] sm:$0xf]
    %v3096 = vld [vmem:[%s3089 + $0x18] sm:$0xf]
    %v3097 = vld [vmem:[%s3089 + $0x1c] sm:$0xf]
    %v3106 = vunpack.c.l.b16 %v3090
    %v3107 = vunpack.c.l.b16 %v3091
    %v3108 = vunpack.c.l.b16 %v3092
    %v3109 = vunpack.c.l.b16 %v3093
    %v3110 = vunpack.c.l.b16 %v3094
    %v3111 = vunpack.c.l.b16 %v3095
    %v3112 = vunpack.c.l.b16 %v3096
    %v3113 = vunpack.c.l.b16 %v3097
    %v3114 = vpack.c.b16 %v3107, %v3106
    %v3115 = vpack.c.b16 %v3109, %v3108
    %v3116 = vpack.c.b16 %v3111, %v3110
    %v3117 = vpack.c.b16 %v3113, %v3112
    %v3123 = vsel %vm1063, %v3087, 0
    %v3126 = vsel %vm1063, %v3088, 0
    %3128 = vmatprep.subr.bf16.mxu0 0
    %3129 = vmatpush1.bf16.msra.mxu0 0
    %3130 = vmatprep.subr.bf16.mxu0 0
    %3131 = vmatpush1.bf16.msra.mxu0 0
    %3132 = vmatprep.subr.bf16.mxu0 0
    %3133 = vmatpush1.bf16.msra.mxu0 0
    %3134 = vmatprep.subr.bf16.mxu0 0
    %3135 = vmatpush1.bf16.msra.mxu0 0
    %3136 = vmatprep.subr.bf16.mxu0 0
    %3137 = vmatpush1.bf16.msra.mxu0 %v3117
    %3138 = vmatprep.subr.bf16.mxu0 0
    %3139 = vmatpush1.bf16.msra.mxu0 %v3116
    %3140 = vmatprep.subr.bf16.mxu0 0
    %3141 = vmatpush1.bf16.msra.mxu0 %v3115
    %3142 = vmatprep.subr.bf16.mxu0 0
    %3143 = vmatpush1.bf16.msra.mxu0 %v3114
    %3144 = vmatprep.subr.bf16.mxu0 0
    %3145 = vmatpush2.bf16.msra.mxu0 0
    %3146 = vmatprep.subr.bf16.mxu0 0
    %3147 = vmatpush2.bf16.msra.mxu0 0
    %3148 = vmatprep.subr.bf16.mxu0 0
    %3149 = vmatpush2.bf16.msra.mxu0 0
    %3150 = vmatprep.subr.bf16.mxu0 0
    %3151 = vmatpush2.bf16.msra.mxu0 0
    %3152 = vmatprep.subr.bf16.mxu0 0
    %3153 = vmatpush2.bf16.msra.mxu0 0
    %3154 = vmatprep.subr.bf16.mxu0 0
    %3155 = vmatpush2.bf16.msra.mxu0 0
    %3156 = vmatprep.subr.bf16.mxu0 0
    %3157 = vmatpush2.bf16.msra.mxu0 0
    %3158 = vmatprep.subr.bf16.mxu0 0
    %3159 = vmatpush2.bf16.msra.mxu0 0
    %3160 = vmatprep.mubr.bf16.mxu0 0
    %3161 = vmatmul.mubr.bf16.gmra.mxu0 %v3123
    %v3162 = vpop.f32.mrf.mxu0
    %v3163 = vadd.f32 0.0, %v3162
    %v3164 = vpop.f32.mrf.mxu0
    %v3165 = vpop.f32.mrf.mxu0
    %v3166 = vadd.f32 0.0, %v3165
    %v3167 = vpop.f32.mrf.mxu0
    %3168 = vmatprep.mubr.bf16.mxu0 0
    %3169 = vmatmul.mubr.bf16.gmra.mxu0 %v3126
    %v3170 = vpop.f32.mrf.mxu0
    %v3171 = vadd.f32 0.0, %v3170
    %v3172 = vpop.f32.mrf.mxu0
    %v3173 = vpop.f32.mrf.mxu0
    %v3174 = vadd.f32 0.0, %v3173
    %v3175 = vpop.f32.mrf.mxu0
    %3176 = vdwg.mxu0
    %v3177 = vadd.f32 %v3070, %v3163
    %v3178 = vadd.f32 %v3073, %v3166
    %v3179 = vadd.f32 %v3078, %v3171
    %v3180 = vadd.f32 %v3081, %v3174
    %v3182 = vlaneseq
    %v3183 = vshrl.u32 %v3182, 7
    %v3184 = vsub.s32 0, %v3183
    %v3185 = vrot.slane %v2900, %v3184
    %v3187 = vadd.f32 %v3177, %v3185
    %v3188 = vadd.f32 %v3178, %v3185
    %v3189 = vadd.f32 %v3179, %v3185
    %v3190 = vadd.f32 %v3180, %v3185
    %v3191 = vmax.f32 %v3187, 0.0
    %v3192 = vmax.f32 %v3188, 0.0
    %v3193 = vmax.f32 %v3189, 0.0
    %v3194 = vmax.f32 %v3190, 0.0
    %v3195 = vld [vmem:[#allocation17] sm:$0x1]
    %v3196 = vpack.c.bf16 %v3192, %v3191
    %v3197 = vpack.c.bf16 %v3194, %v3193
    %s3198 = scalar_lea.vmem [#allocation15], 64
    %v3199 = vld [vmem:[%s3198] sm:$0xf]
    %v3200 = vld [vmem:[%s3198 + $0x4] sm:$0xf]
    %v3201 = vld [vmem:[%s3198 + $0x8] sm:$0xf]
    %v3202 = vld [vmem:[%s3198 + $0xc] sm:$0xf]
    %v3203 = vld [vmem:[%s3198 + $0x10] sm:$0xf]
    %v3204 = vld [vmem:[%s3198 + $0x14] sm:$0xf]
    %v3205 = vld [vmem:[%s3198 + $0x18] sm:$0xf]
    %v3206 = vld [vmem:[%s3198 + $0x1c] sm:$0xf]
    %v3208 = vlaneseq
    %v3209 = vshrl.u32 %v3208, 7
    %v3210 = vsub.s32 0, %v3209
    %v3211 = vrot.slane %v3195, %v3210
    %v3221 = vunpack.c.l.b16 %v3199
    %v3222 = vunpack.c.l.b16 %v3200
    %v3223 = vunpack.c.l.b16 %v3201
    %v3224 = vunpack.c.l.b16 %v3202
    %v3225 = vunpack.c.l.b16 %v3203
    %v3226 = vunpack.c.l.b16 %v3204
    %v3227 = vunpack.c.l.b16 %v3205
    %v3228 = vunpack.c.l.b16 %v3206
    %v3229 = vpack.c.b16 %v3222, %v3221
    %v3230 = vpack.c.b16 %v3224, %v3223
    %v3231 = vpack.c.b16 %v3226, %v3225
    %v3232 = vpack.c.b16 %v3228, %v3227
    %v3238 = vsel %vm1063, %v3196, 0
    %v3241 = vsel %vm1063, %v3197, 0
    %3243 = vmatprep.subr.bf16.mxu0 0
    %3244 = vmatpush1.bf16.msra.mxu0 0
    %3245 = vmatprep.subr.bf16.mxu0 0
    %3246 = vmatpush1.bf16.msra.mxu0 0
    %3247 = vmatprep.subr.bf16.mxu0 0
    %3248 = vmatpush1.bf16.msra.mxu0 0
    %3249 = vmatprep.subr.bf16.mxu0 0
    %3250 = vmatpush1.bf16.msra.mxu0 0
    %3251 = vmatprep.subr.bf16.mxu0 0
    %3252 = vmatpush1.bf16.msra.mxu0 %v3232
    %3253 = vmatprep.subr.bf16.mxu0 0
    %3254 = vmatpush1.bf16.msra.mxu0 %v3231
    %3255 = vmatprep.subr.bf16.mxu0 0
    %3256 = vmatpush1.bf16.msra.mxu0 %v3230
    %3257 = vmatprep.subr.bf16.mxu0 0
    %3258 = vmatpush1.bf16.msra.mxu0 %v3229
    %3259 = vmatprep.subr.bf16.mxu0 0
    %3260 = vmatpush2.bf16.msra.mxu0 0
    %3261 = vmatprep.subr.bf16.mxu0 0
    %3262 = vmatpush2.bf16.msra.mxu0 0
    %3263 = vmatprep.subr.bf16.mxu0 0
    %3264 = vmatpush2.bf16.msra.mxu0 0
    %3265 = vmatprep.subr.bf16.mxu0 0
    %3266 = vmatpush2.bf16.msra.mxu0 0
    %3267 = vmatprep.subr.bf16.mxu0 0
    %3268 = vmatpush2.bf16.msra.mxu0 0
    %3269 = vmatprep.subr.bf16.mxu0 0
    %3270 = vmatpush2.bf16.msra.mxu0 0
    %3271 = vmatprep.subr.bf16.mxu0 0
    %3272 = vmatpush2.bf16.msra.mxu0 0
    %3273 = vmatprep.subr.bf16.mxu0 0
    %3274 = vmatpush2.bf16.msra.mxu0 0
    %3275 = vmatprep.mubr.bf16.mxu0 0
    %3276 = vmatmul.mubr.bf16.gmra.mxu0 %v3238
    %v3277 = vpop.f32.mrf.mxu0
    %v3278 = vadd.f32 %v3211, %v3277
    %v3279 = vpop.f32.mrf.mxu0
    %v3280 = vpop.f32.mrf.mxu0
    %v3281 = vadd.f32 %v3211, %v3280
    %v3282 = vpop.f32.mrf.mxu0
    %3283 = vmatprep.mubr.bf16.mxu0 0
    %3284 = vmatmul.mubr.bf16.gmra.mxu0 %v3241
    %v3285 = vpop.f32.mrf.mxu0
    %v3286 = vadd.f32 %v3211, %v3285
    %v3287 = vpop.f32.mrf.mxu0
    %v3288 = vpop.f32.mrf.mxu0
    %v3289 = vadd.f32 %v3211, %v3288
    %v3290 = vpop.f32.mrf.mxu0
    %3291 = vdwg.mxu0
    %v3292 = vmax.f32 %v3278, 0.0
    %v3293 = vmax.f32 %v3281, 0.0
    %v3294 = vmax.f32 %v3286, 0.0
    %v3295 = vmax.f32 %v3289, 0.0
    %v3296 = vld [vmem:[#allocation18] sm:$0x1]
    %v3297 = vpack.c.bf16 %v3293, %v3292
    %v3298 = vpack.c.bf16 %v3295, %v3294
    %v3299 = vld [vmem:[%s27] sm:$0xf]
    %v3300 = vld [vmem:[%s27 + $0x4] sm:$0xf]
    %v3301 = vld [vmem:[%s27 + $0x8] sm:$0xf]
    %v3302 = vld [vmem:[%s27 + $0xc] sm:$0xf]
    %v3303 = vld [vmem:[%s27 + $0x10] sm:$0xf]
    %v3304 = vld [vmem:[%s27 + $0x14] sm:$0xf]
    %v3305 = vld [vmem:[%s27 + $0x18] sm:$0xf]
    %v3306 = vld [vmem:[%s27 + $0x1c] sm:$0xf]
    %v3308 = vlaneseq
    %v3309 = vshrl.u32 %v3308, 7
    %v3310 = vsub.s32 0, %v3309
    %v3311 = vrot.slane %v3296, %v3310
    %v3321 = vunpack.c.l.b16 %v3299
    %v3322 = vunpack.c.l.b16 %v3300
    %v3323 = vunpack.c.l.b16 %v3301
    %v3324 = vunpack.c.l.b16 %v3302
    %v3325 = vunpack.c.l.b16 %v3303
    %v3326 = vunpack.c.l.b16 %v3304
    %v3327 = vunpack.c.l.b16 %v3305
    %v3328 = vunpack.c.l.b16 %v3306
    %v3329 = vpack.c.b16 %v3322, %v3321
    %v3330 = vpack.c.b16 %v3324, %v3323
    %v3331 = vpack.c.b16 %v3326, %v3325
    %v3332 = vpack.c.b16 %v3328, %v3327
    %v3338 = vsel %vm1063, %v3297, 0
    %v3341 = vsel %vm1063, %v3298, 0
    %3343 = vmatprep.subr.bf16.mxu0 0
    %3344 = vmatpush1.bf16.msra.mxu0 0
    %3345 = vmatprep.subr.bf16.mxu0 0
    %3346 = vmatpush1.bf16.msra.mxu0 0
    %3347 = vmatprep.subr.bf16.mxu0 0
    %3348 = vmatpush1.bf16.msra.mxu0 0
    %3349 = vmatprep.subr.bf16.mxu0 0
    %3350 = vmatpush1.bf16.msra.mxu0 0
    %3351 = vmatprep.subr.bf16.mxu0 0
    %3352 = vmatpush1.bf16.msra.mxu0 %v3332
    %3353 = vmatprep.subr.bf16.mxu0 0
    %3354 = vmatpush1.bf16.msra.mxu0 %v3331
    %3355 = vmatprep.subr.bf16.mxu0 0
    %3356 = vmatpush1.bf16.msra.mxu0 %v3330
    %3357 = vmatprep.subr.bf16.mxu0 0
    %3358 = vmatpush1.bf16.msra.mxu0 %v3329
    %3359 = vmatprep.subr.bf16.mxu0 0
    %3360 = vmatpush2.bf16.msra.mxu0 0
    %3361 = vmatprep.subr.bf16.mxu0 0
    %3362 = vmatpush2.bf16.msra.mxu0 0
    %3363 = vmatprep.subr.bf16.mxu0 0
    %3364 = vmatpush2.bf16.msra.mxu0 0
    %3365 = vmatprep.subr.bf16.mxu0 0
    %3366 = vmatpush2.bf16.msra.mxu0 0
    %3367 = vmatprep.subr.bf16.mxu0 0
    %3368 = vmatpush2.bf16.msra.mxu0 0
    %3369 = vmatprep.subr.bf16.mxu0 0
    %3370 = vmatpush2.bf16.msra.mxu0 0
    %3371 = vmatprep.subr.bf16.mxu0 0
    %3372 = vmatpush2.bf16.msra.mxu0 0
    %3373 = vmatprep.subr.bf16.mxu0 0
    %3374 = vmatpush2.bf16.msra.mxu0 0
    %3375 = vmatprep.mubr.bf16.mxu0 0
    %3376 = vmatmul.mubr.bf16.gmra.mxu0 %v3338
    %v3377 = vpop.f32.mrf.mxu0
    %v3378 = vadd.f32 %v3311, %v3377
    %v3379 = vpop.f32.mrf.mxu0
    %v3380 = vpop.f32.mrf.mxu0
    %v3381 = vadd.f32 %v3311, %v3380
    %v3382 = vpop.f32.mrf.mxu0
    %3383 = vmatprep.mubr.bf16.mxu0 0
    %3384 = vmatmul.mubr.bf16.gmra.mxu0 %v3341
    %v3385 = vpop.f32.mrf.mxu0
    %v3386 = vadd.f32 %v3311, %v3385
    %v3387 = vpop.f32.mrf.mxu0
    %v3388 = vpop.f32.mrf.mxu0
    %v3389 = vadd.f32 %v3311, %v3388
    %v3390 = vpop.f32.mrf.mxu0
    %3391 = vdwg.mxu0
    %v3392 = vmax.f32 %v3378, 0.0
    %v3393 = vmax.f32 %v3381, 0.0
    %v3394 = vmax.f32 %v3386, 0.0
    %v3395 = vmax.f32 %v3389, 0.0
    %v3396 = vld [vmem:[#allocation20] sm:$0xff]
    %v3397 = vld [vmem:[#allocation20 + $0x8] sm:$0xff]
    %v3398 = vld [vmem:[#allocation23] sm:$0x1]
    %v3400 = vlaneseq
    %v3401 = vshrl.u32 %v3400, 7
    %v3402 = vsub.s32 0, %v3401
    %v3403 = vrot.slane %v3398, %v3402
    %vm3405 = vcmask 130048
    %v3407 = vsel %vm3405, %v3392, 0
    %v3410 = vsel %vm3405, %v3393, 0
    %v3413 = vsel %vm3405, %v3394, 0
    %v3416 = vsel %vm3405, %v3395, 0
    %3418 = vmatprep.subr.mxu0 0.0
    %3419 = vmatpush1.msra.mxu0 0.0
    %3420 = vmatprep.subr.mxu0 0.0
    %3421 = vmatpush1.msra.mxu0 0.0
    %3422 = vmatprep.subr.mxu0 0.0
    %3423 = vmatpush1.msra.mxu0 0.0
    %3424 = vmatprep.subr.mxu0 0.0
    %3425 = vmatpush1.msra.mxu0 0.0
    %3426 = vmatprep.subr.mxu0 0.0
    %3427 = vmatpush1.msra.mxu0 0.0
    %3428 = vmatprep.subr.mxu0 0.0
    %3429 = vmatpush1.msra.mxu0 0.0
    %3430 = vmatprep.subr.mxu0 0.0
    %3431 = vmatpush1.msra.mxu0 0.0
    %3432 = vmatprep.subr.mxu0 0.0
    %3433 = vmatpush1.msra.mxu0 0.0
    %3434 = vmatprep.subr.mxu0 0.0
    %3435 = vmatpush1.msra.mxu0 0.0
    %3436 = vmatprep.subr.mxu0 0.0
    %3437 = vmatpush1.msra.mxu0 0.0
    %3438 = vmatprep.subr.mxu0 0.0
    %3439 = vmatpush1.msra.mxu0 0.0
    %3440 = vmatprep.subr.mxu0 0.0
    %3441 = vmatpush1.msra.mxu0 0.0
    %3442 = vmatprep.subr.mxu0 0.0
    %3443 = vmatpush1.msra.mxu0 0.0
    %3444 = vmatprep.subr.mxu0 0.0
    %3445 = vmatpush1.msra.mxu0 0.0
    %3446 = vmatprep.subr.mxu0 0.0
    %3447 = vmatpush1.msra.mxu0 %v3397
    %3448 = vmatprep.subr.mxu0 0.0
    %3449 = vmatpush1.msra.mxu0 %v3396
    %3450 = vmatprep.subr.mxu0 0.0
    %3451 = vmatpush2.msra.mxu0 0.0
    %3452 = vmatprep.subr.mxu0 0.0
    %3453 = vmatpush2.msra.mxu0 0.0
    %3454 = vmatprep.subr.mxu0 0.0
    %3455 = vmatpush2.msra.mxu0 0.0
    %3456 = vmatprep.subr.mxu0 0.0
    %3457 = vmatpush2.msra.mxu0 0.0
    %3458 = vmatprep.subr.mxu0 0.0
    %3459 = vmatpush2.msra.mxu0 0.0
    %3460 = vmatprep.subr.mxu0 0.0
    %3461 = vmatpush2.msra.mxu0 0.0
    %3462 = vmatprep.subr.mxu0 0.0
    %3463 = vmatpush2.msra.mxu0 0.0
    %3464 = vmatprep.subr.mxu0 0.0
    %3465 = vmatpush2.msra.mxu0 0.0
    %3466 = vmatprep.subr.mxu0 0.0
    %3467 = vmatpush2.msra.mxu0 0.0
    %3468 = vmatprep.subr.mxu0 0.0
    %3469 = vmatpush2.msra.mxu0 0.0
    %3470 = vmatprep.subr.mxu0 0.0
    %3471 = vmatpush2.msra.mxu0 0.0
    %3472 = vmatprep.subr.mxu0 0.0
    %3473 = vmatpush2.msra.mxu0 0.0
    %3474 = vmatprep.subr.mxu0 0.0
    %3475 = vmatpush2.msra.mxu0 0.0
    %3476 = vmatprep.subr.mxu0 0.0
    %3477 = vmatpush2.msra.mxu0 0.0
    %3478 = vmatprep.subr.mxu0 0.0
    %3479 = vmatpush2.msra.mxu0 0.0
    %3480 = vmatprep.subr.mxu0 0.0
    %3481 = vmatpush2.msra.mxu0 0.0
    %3482 = vmatprep.mubr.f32.mxu0 0.0
    %3483 = vmatmul.mubr.f32.gmra.mxu0 %v3407
    %v3484 = vpop.f32.mrf.mxu0
    %v3485 = vadd.f32 %v3403, %v3484
    %v3486 = vpop.f32.mrf.mxu0
    %3487 = vmatprep.mubr.f32.mxu0 0.0
    %3488 = vmatmul.mubr.f32.gmra.mxu0 %v3410
    %v3489 = vpop.f32.mrf.mxu0
    %v3490 = vadd.f32 %v3403, %v3489
    %v3491 = vpop.f32.mrf.mxu0
    %3492 = vmatprep.mubr.f32.mxu0 0.0
    %3493 = vmatmul.mubr.f32.gmra.mxu0 %v3413
    %v3494 = vpop.f32.mrf.mxu0
    %v3495 = vadd.f32 %v3403, %v3494
    %v3496 = vpop.f32.mrf.mxu0
    %3497 = vmatprep.mubr.f32.mxu0 0.0
    %3498 = vmatmul.mubr.f32.gmra.mxu0 %v3416
    %v3499 = vpop.f32.mrf.mxu0
    %v3500 = vadd.f32 %v3403, %v3499
    %v3501 = vpop.f32.mrf.mxu0
    %3502 = vdwg.mxu0
    %v3503 = vld [vmem:[#allocation21] sm:$0xff]
    %v3504 = vld [vmem:[#allocation21 + $0x8] sm:$0xff]
    %3505 = vmatprep.subr.mxu0 0.0
    %3506 = vmatpush1.msra.mxu0 0.0
    %3507 = vmatprep.subr.mxu0 0.0
    %3508 = vmatpush1.msra.mxu0 0.0
    %3509 = vmatprep.subr.mxu0 0.0
    %3510 = vmatpush1.msra.mxu0 0.0
    %3511 = vmatprep.subr.mxu0 0.0
    %3512 = vmatpush1.msra.mxu0 0.0
    %3513 = vmatprep.subr.mxu0 0.0
    %3514 = vmatpush1.msra.mxu0 0.0
    %3515 = vmatprep.subr.mxu0 0.0
    %3516 = vmatpush1.msra.mxu0 0.0
    %3517 = vmatprep.subr.mxu0 0.0
    %3518 = vmatpush1.msra.mxu0 0.0
    %3519 = vmatprep.subr.mxu0 0.0
    %3520 = vmatpush1.msra.mxu0 0.0
    %3521 = vmatprep.subr.mxu0 0.0
    %3522 = vmatpush1.msra.mxu0 0.0
    %3523 = vmatprep.subr.mxu0 0.0
    %3524 = vmatpush1.msra.mxu0 0.0
    %3525 = vmatprep.subr.mxu0 0.0
    %3526 = vmatpush1.msra.mxu0 0.0
    %3527 = vmatprep.subr.mxu0 0.0
    %3528 = vmatpush1.msra.mxu0 0.0
    %3529 = vmatprep.subr.mxu0 0.0
    %3530 = vmatpush1.msra.mxu0 0.0
    %3531 = vmatprep.subr.mxu0 0.0
    %3532 = vmatpush1.msra.mxu0 0.0
    %3533 = vmatprep.subr.mxu0 0.0
    %3534 = vmatpush1.msra.mxu0 %v3504
    %3535 = vmatprep.subr.mxu0 0.0
    %3536 = vmatpush1.msra.mxu0 %v3503
    %3537 = vmatprep.subr.mxu0 0.0
    %3538 = vmatpush2.msra.mxu0 0.0
    %3539 = vmatprep.subr.mxu0 0.0
    %3540 = vmatpush2.msra.mxu0 0.0
    %3541 = vmatprep.subr.mxu0 0.0
    %3542 = vmatpush2.msra.mxu0 0.0
    %3543 = vmatprep.subr.mxu0 0.0
    %3544 = vmatpush2.msra.mxu0 0.0
    %3545 = vmatprep.subr.mxu0 0.0
    %3546 = vmatpush2.msra.mxu0 0.0
    %3547 = vmatprep.subr.mxu0 0.0
    %3548 = vmatpush2.msra.mxu0 0.0
    %3549 = vmatprep.subr.mxu0 0.0
    %3550 = vmatpush2.msra.mxu0 0.0
    %3551 = vmatprep.subr.mxu0 0.0
    %3552 = vmatpush2.msra.mxu0 0.0
    %3553 = vmatprep.subr.mxu0 0.0
    %3554 = vmatpush2.msra.mxu0 0.0
    %3555 = vmatprep.subr.mxu0 0.0
    %3556 = vmatpush2.msra.mxu0 0.0
    %3557 = vmatprep.subr.mxu0 0.0
    %3558 = vmatpush2.msra.mxu0 0.0
    %3559 = vmatprep.subr.mxu0 0.0
    %3560 = vmatpush2.msra.mxu0 0.0
    %3561 = vmatprep.subr.mxu0 0.0
    %3562 = vmatpush2.msra.mxu0 0.0
    %3563 = vmatprep.subr.mxu0 0.0
    %3564 = vmatpush2.msra.mxu0 0.0
    %3565 = vmatprep.subr.mxu0 0.0
    %3566 = vmatpush2.msra.mxu0 0.0
    %3567 = vmatprep.subr.mxu0 0.0
    %3568 = vmatpush2.msra.mxu0 0.0
    %3569 = vmatprep.mubr.f32.mxu0 0.0
    %3570 = vmatmul.mubr.f32.gmra.mxu0 %v3407
    %v3571 = vpop.f32.mrf.mxu0
    %v3572 = vadd.f32 0.0, %v3571
    %v3573 = vpop.f32.mrf.mxu0
    %3574 = vmatprep.mubr.f32.mxu0 0.0
    %3575 = vmatmul.mubr.f32.gmra.mxu0 %v3410
    %v3576 = vpop.f32.mrf.mxu0
    %v3577 = vadd.f32 0.0, %v3576
    %v3578 = vpop.f32.mrf.mxu0
    %3579 = vmatprep.mubr.f32.mxu0 0.0
    %3580 = vmatmul.mubr.f32.gmra.mxu0 %v3413
    %v3581 = vpop.f32.mrf.mxu0
    %v3582 = vadd.f32 0.0, %v3581
    %v3583 = vpop.f32.mrf.mxu0
    %3584 = vmatprep.mubr.f32.mxu0 0.0
    %3585 = vmatmul.mubr.f32.gmra.mxu0 %v3416
    %v3586 = vpop.f32.mrf.mxu0
    %v3587 = vadd.f32 0.0, %v3586
    %v3588 = vpop.f32.mrf.mxu0
    %3589 = vdwg.mxu0
    %v3590 = vld [vmem:[%s37] sm:$0xff]
    %v3591 = vld [vmem:[%s37 + $0x8] sm:$0xff]
    %v3592 = vld [vmem:[%s37 + $0x10] sm:$0xff]
    %v3593 = vld [vmem:[%s37 + $0x18] sm:$0xff]
    %v3596 = vrot.slane %v3577, 7
    %v3597 = vrot.slane %v3587, 7
    %v3600 = vadd.f32 %v3485, %v3596
    %v3601 = vadd.f32 %v3495, %v3597
    %vm3602 = vcmask 261120
    %v3603 = vsel %vm3602, 0.0, 0
    %3605 = vmatprep.subr.mxu0 0.0
    %3606 = vmatpush1.msra.mxu0 0.0
    %3607 = vmatprep.subr.mxu0 0.0
    %3608 = vmatpush1.msra.mxu0 0.0
    %3609 = vmatprep.subr.mxu0 0.0
    %3610 = vmatpush1.msra.mxu0 0.0
    %3611 = vmatprep.subr.mxu0 0.0
    %3612 = vmatpush1.msra.mxu0 0.0
    %3613 = vmatprep.subr.mxu0 0.0
    %3614 = vmatpush1.msra.mxu0 0.0
    %3615 = vmatprep.subr.mxu0 0.0
    %3616 = vmatpush1.msra.mxu0 0.0
    %3617 = vmatprep.subr.mxu0 0.0
    %3618 = vmatpush1.msra.mxu0 0.0
    %3619 = vmatprep.subr.mxu0 0.0
    %3620 = vmatpush1.msra.mxu0 0.0
    %3621 = vmatprep.subr.mxu0 0.0
    %3622 = vmatpush1.msra.mxu0 0.0
    %3623 = vmatprep.subr.mxu0 0.0
    %3624 = vmatpush1.msra.mxu0 0.0
    %3625 = vmatprep.subr.mxu0 0.0
    %3626 = vmatpush1.msra.mxu0 0.0
    %3627 = vmatprep.subr.mxu0 0.0
    %3628 = vmatpush1.msra.mxu0 0.0
    %3629 = vmatprep.subr.mxu0 0.0
    %3630 = vmatpush1.msra.mxu0 %v3593
    %3631 = vmatprep.subr.mxu0 0.0
    %3632 = vmatpush1.msra.mxu0 %v3592
    %3633 = vmatprep.subr.mxu0 0.0
    %3634 = vmatpush1.msra.mxu0 %v3591
    %3635 = vmatprep.subr.mxu0 0.0
    %3636 = vmatpush1.msra.mxu0 %v3590
    %3637 = vmatprep.subr.mxu0 0.0
    %3638 = vmatpush2.msra.mxu0 0.0
    %3639 = vmatprep.subr.mxu0 0.0
    %3640 = vmatpush2.msra.mxu0 0.0
    %3641 = vmatprep.subr.mxu0 0.0
    %3642 = vmatpush2.msra.mxu0 0.0
    %3643 = vmatprep.subr.mxu0 0.0
    %3644 = vmatpush2.msra.mxu0 0.0
    %3645 = vmatprep.subr.mxu0 0.0
    %3646 = vmatpush2.msra.mxu0 0.0
    %3647 = vmatprep.subr.mxu0 0.0
    %3648 = vmatpush2.msra.mxu0 0.0
    %3649 = vmatprep.subr.mxu0 0.0
    %3650 = vmatpush2.msra.mxu0 0.0
    %3651 = vmatprep.subr.mxu0 0.0
    %3652 = vmatpush2.msra.mxu0 0.0
    %3653 = vmatprep.subr.mxu0 0.0
    %3654 = vmatpush2.msra.mxu0 0.0
    %3655 = vmatprep.subr.mxu0 0.0
    %3656 = vmatpush2.msra.mxu0 0.0
    %3657 = vmatprep.subr.mxu0 0.0
    %3658 = vmatpush2.msra.mxu0 0.0
    %3659 = vmatprep.subr.mxu0 0.0
    %3660 = vmatpush2.msra.mxu0 0.0
    %3661 = vmatprep.subr.mxu0 0.0
    %3662 = vmatpush2.msra.mxu0 0.0
    %3663 = vmatprep.subr.mxu0 0.0
    %3664 = vmatpush2.msra.mxu0 0.0
    %3665 = vmatprep.subr.mxu0 0.0
    %3666 = vmatpush2.msra.mxu0 0.0
    %3667 = vmatprep.subr.mxu0 0.0
    %3668 = vmatpush2.msra.mxu0 0.0
    %3669 = vmatprep.mubr.f32.mxu0 0.0
    %3670 = vmatmul.mubr.f32.gmra.mxu0 %v3603
    %v3671 = vpop.f32.mrf.mxu0
    %v3672 = vadd.f32 0.0, %v3671
    %v3673 = vpop.f32.mrf.mxu0
    %3674 = vdwg.mxu0
    %v3676 = vrot.slane %v3672, 1
    %v3679 = vadd.f32 %v3600, %v3672
    %v3680 = vadd.f32 %v3601, %v3676
    %v3681 = vxor.u32 %v3679, 2147483648
    %v3682 = vxor.u32 %v3680, 2147483648
    %v3683 = vmul.f32 %v3681, 1.442695
    %v3684 = vpow.pop %v3683
    %v3685 = vmul.f32 %v3682, 1.442695
    %v3686 = vpow.pop %v3685
    %v3687 = vadd.f32 %v3684, 1.0
    %v3688 = vadd.f32 %v3686, 1.0
    %v3689 = vrcp.pop %v3687
    %v3690 = vmul.f32 1.0, %v3689
    %v3691 = vrcp.pop %v3688
    %v3692 = vmul.f32 1.0, %v3691
    %v3693 = vtanh.pop %v3679
    %v3694 = vtanh.pop %v3680
    %v3695 = vmul.f32 %v3690, 0.0
    %v3696 = vmul.f32 %v3692, 0.0
    %3699 = vrot.lane.b32.xlu0 %v3693, 64
    %v3700 = vpop.permute.xlu0 %3699
    %3701 = vrot.lane.b32.xlu0 %v3694, 64
    %v3702 = vpop.permute.xlu0 %3701
    %v3705 = vmul.f32 %v3690, %v3700
    %v3706 = vmul.f32 %v3692, %v3702
    %3709 = vrot.lane.b32.xlu0 %v3705, 32
    %v3710 = vpop.permute.xlu0 %3709
    %3711 = vrot.lane.b32.xlu0 %v3706, 32
    %v3712 = vpop.permute.xlu0 %3711
    %v3715 = vadd.f32 %v3695, %v3710
    %v3716 = vadd.f32 %v3696, %v3712
    %v3717 = vtanh.pop %v3715
    %v3718 = vtanh.pop %v3716
    %3721 = vrot.lane.b32.xlu0 %v3717, 64
    %v3722 = vpop.permute.xlu0 %3721
    %3723 = vrot.lane.b32.xlu0 %v3718, 64
    %v3724 = vpop.permute.xlu0 %3723
    %v3727 = vmul.f32 %v3690, %v3722
    %v3728 = vmul.f32 %v3692, %v3724
    %v3729 = vmax.f32 %v3727, 0.0
    %v3730 = vmax.f32 %v3728, 0.0
    %v3734 = vunpack.c.l.s4 1983009808
    %v3735 = vunpack.c.0.s8 %v3734
    %v3736 = vlaneseq
    %v3737 = vshrl.u32 %v3736, 7
    %v3738 = vsub.s32 %v3735, %v3737
    %v3739 = vrot.slane %v3729, %v3738
    %v3741 = vunpack.c.l.s4 1983009808
    %v3742 = vunpack.c.0.s8 %v3741
    %v3743 = vlaneseq
    %v3744 = vshrl.u32 %v3743, 7
    %v3745 = vsub.s32 %v3742, %v3744
    %v3746 = vrot.slane %v3730, %v3745
    %vm3747 = vcmask 1044484
    %v3748 = vsel %vm3747, %v3739, %v3739
    %vm3749 = vcmask 1046534
    %v3750 = vsel %vm3749, %v3739, %v3748
    %v3751 = vrot.slane %v3746, 7
    %vm3752 = vcmask 1041409
    %v3753 = vsel %vm3752, %v3751, %v3750
    %vm3754 = vcmask 1043459
    %v3755 = vsel %vm3754, %v3751, %v3753
    %vm3756 = vcmask 1045509
    %v3757 = vsel %vm3756, %v3751, %v3755
    %vm3758 = vcmask 1047559
    %v3759 = vsel %vm3758, %v3751, %v3757
    %3760 = vrot.lane.b32.xlu0 %v3759, 32
    %v3761 = vpop.permute.xlu0 %3760
    %vm3763 = vcmask 123904
    %3764 = vst.msk [vmem:[#allocation2] sm:$0x3] %vm3763, %v3761
    %vm3766 = vcmask 1042304
    %3767 = vst.msk [vmem:[#allocation2 + $0x6] sm:$0x3] %vm3766, %v3759
    %v3768 = vrot.slane %v3577, 5
    %v3769 = vrot.slane %v3587, 5
    %v3772 = vadd.f32 %v3485, %v3768
    %v3773 = vadd.f32 %v3495, %v3769
    %v3776 = vrot.slane %v3728, 7
    %v3777 = vsel %vm3752, %v3776, %v3727
    %3778 = vrot.lane.b32.xlu0 %v3777, 32
    %v3779 = vpop.permute.xlu0 %3778
    %v3780 = vsel %vm3602, %v3779, 0
    %3782 = vmatprep.subr.mxu0 0.0
    %3783 = vmatpush1.msra.mxu0 0.0
    %3784 = vmatprep.subr.mxu0 0.0
    %3785 = vmatpush1.msra.mxu0 0.0
    %3786 = vmatprep.subr.mxu0 0.0
    %3787 = vmatpush1.msra.mxu0 0.0
    %3788 = vmatprep.subr.mxu0 0.0
    %3789 = vmatpush1.msra.mxu0 0.0
    %3790 = vmatprep.subr.mxu0 0.0
    %3791 = vmatpush1.msra.mxu0 0.0
    %3792 = vmatprep.subr.mxu0 0.0
    %3793 = vmatpush1.msra.mxu0 0.0
    %3794 = vmatprep.subr.mxu0 0.0
    %3795 = vmatpush1.msra.mxu0 0.0
    %3796 = vmatprep.subr.mxu0 0.0
    %3797 = vmatpush1.msra.mxu0 0.0
    %3798 = vmatprep.subr.mxu0 0.0
    %3799 = vmatpush1.msra.mxu0 0.0
    %3800 = vmatprep.subr.mxu0 0.0
    %3801 = vmatpush1.msra.mxu0 0.0
    %3802 = vmatprep.subr.mxu0 0.0
    %3803 = vmatpush1.msra.mxu0 0.0
    %3804 = vmatprep.subr.mxu0 0.0
    %3805 = vmatpush1.msra.mxu0 0.0
    %3806 = vmatprep.subr.mxu0 0.0
    %3807 = vmatpush1.msra.mxu0 %v3593
    %3808 = vmatprep.subr.mxu0 0.0
    %3809 = vmatpush1.msra.mxu0 %v3592
    %3810 = vmatprep.subr.mxu0 0.0
    %3811 = vmatpush1.msra.mxu0 %v3591
    %3812 = vmatprep.subr.mxu0 0.0
    %3813 = vmatpush1.msra.mxu0 %v3590
    %3814 = vmatprep.subr.mxu0 0.0
    %3815 = vmatpush2.msra.mxu0 0.0
    %3816 = vmatprep.subr.mxu0 0.0
    %3817 = vmatpush2.msra.mxu0 0.0
    %3818 = vmatprep.subr.mxu0 0.0
    %3819 = vmatpush2.msra.mxu0 0.0
    %3820 = vmatprep.subr.mxu0 0.0
    %3821 = vmatpush2.msra.mxu0 0.0
    %3822 = vmatprep.subr.mxu0 0.0
    %3823 = vmatpush2.msra.mxu0 0.0
    %3824 = vmatprep.subr.mxu0 0.0
    %3825 = vmatpush2.msra.mxu0 0.0
    %3826 = vmatprep.subr.mxu0 0.0
    %3827 = vmatpush2.msra.mxu0 0.0
    %3828 = vmatprep.subr.mxu0 0.0
    %3829 = vmatpush2.msra.mxu0 0.0
    %3830 = vmatprep.subr.mxu0 0.0
    %3831 = vmatpush2.msra.mxu0 0.0
    %3832 = vmatprep.subr.mxu0 0.0
    %3833 = vmatpush2.msra.mxu0 0.0
    %3834 = vmatprep.subr.mxu0 0.0
    %3835 = vmatpush2.msra.mxu0 0.0
    %3836 = vmatprep.subr.mxu0 0.0
    %3837 = vmatpush2.msra.mxu0 0.0
    %3838 = vmatprep.subr.mxu0 0.0
    %3839 = vmatpush2.msra.mxu0 0.0
    %3840 = vmatprep.subr.mxu0 0.0
    %3841 = vmatpush2.msra.mxu0 0.0
    %3842 = vmatprep.subr.mxu0 0.0
    %3843 = vmatpush2.msra.mxu0 0.0
    %3844 = vmatprep.subr.mxu0 0.0
    %3845 = vmatpush2.msra.mxu0 0.0
    %3846 = vmatprep.mubr.f32.mxu0 0.0
    %3847 = vmatmul.mubr.f32.gmra.mxu0 %v3780
    %v3848 = vpop.f32.mrf.mxu0
    %v3849 = vadd.f32 0.0, %v3848
    %v3850 = vpop.f32.mrf.mxu0
    %3851 = vdwg.mxu0
    %v3853 = vrot.slane %v3849, 7
    %v3856 = vadd.f32 %v3772, %v3853
    %v3857 = vadd.f32 %v3773, %v3849
    %v3858 = vxor.u32 %v3856, 2147483648
    %v3859 = vxor.u32 %v3857, 2147483648
    %v3860 = vmul.f32 %v3858, 1.442695
    %v3861 = vpow.pop %v3860
    %v3862 = vmul.f32 %v3859, 1.442695
    %v3863 = vpow.pop %v3862
    %v3864 = vadd.f32 %v3861, 1.0
    %v3865 = vadd.f32 %v3863, 1.0
    %v3866 = vrcp.pop %v3864
    %v3867 = vmul.f32 1.0, %v3866
    %v3868 = vrcp.pop %v3865
    %v3869 = vmul.f32 1.0, %v3868
    %v3870 = vtanh.pop %v3856
    %v3871 = vtanh.pop %v3857
    %v3874 = vrot.slane %v3715, 7
    %v3875 = vrot.slane %v3716, 7
    %v3878 = vmul.f32 %v3867, %v3874
    %v3879 = vmul.f32 %v3869, %v3875
    %3882 = vrot.lane.b32.xlu0 %v3870, 64
    %v3883 = vpop.permute.xlu0 %3882
    %3884 = vrot.lane.b32.xlu0 %v3871, 64
    %v3885 = vpop.permute.xlu0 %3884
    %v3888 = vmul.f32 %v3867, %v3883
    %v3889 = vmul.f32 %v3869, %v3885
    %3892 = vrot.lane.b32.xlu0 %v3888, 32
    %v3893 = vpop.permute.xlu0 %3892
    %3894 = vrot.lane.b32.xlu0 %v3889, 32
    %v3895 = vpop.permute.xlu0 %3894
    %v3898 = vadd.f32 %v3878, %v3893
    %v3899 = vadd.f32 %v3879, %v3895
    %v3900 = vtanh.pop %v3898
    %v3901 = vtanh.pop %v3899
    %3904 = vrot.lane.b32.xlu0 %v3900, 64
    %v3905 = vpop.permute.xlu0 %3904
    %3906 = vrot.lane.b32.xlu0 %v3901, 64
    %v3907 = vpop.permute.xlu0 %3906
    %v3910 = vmul.f32 %v3867, %v3905
    %v3911 = vmul.f32 %v3869, %v3907
    %v3912 = vmax.f32 %v3910, 0.0
    %v3913 = vmax.f32 %v3911, 0.0
    %v3917 = vunpack.c.l.s4 1983009808
    %v3918 = vunpack.c.0.s8 %v3917
    %v3919 = vlaneseq
    %v3920 = vshrl.u32 %v3919, 7
    %v3921 = vsub.s32 %v3918, %v3920
    %v3922 = vrot.slane %v3912, %v3921
    %v3924 = vunpack.c.l.s4 1983009808
    %v3925 = vunpack.c.0.s8 %v3924
    %v3926 = vlaneseq
    %v3927 = vshrl.u32 %v3926, 7
    %v3928 = vsub.s32 %v3925, %v3927
    %v3929 = vrot.slane %v3913, %v3928
    %v3930 = vrot.slane %v3922, 1
    %v3931 = vsel %vm3747, %v3930, %v3930
    %v3932 = vsel %vm3749, %v3930, %v3931
    %v3933 = vsel %vm3752, %v3929, %v3932
    %v3934 = vsel %vm3754, %v3929, %v3933
    %v3935 = vsel %vm3756, %v3929, %v3934
    %v3936 = vsel %vm3758, %v3929, %v3935
    %3937 = vrot.lane.b32.xlu0 %v3936, 64
    %v3938 = vpop.permute.xlu0 %3937
    %vm3940 = vcmask 386304
    %3941 = vst.msk [vmem:[#allocation2] sm:$0x3] %vm3940, %v3938
    %3942 = vrot.lane.b32.xlu0 %v3936, 96
    %v3943 = vpop.permute.xlu0 %3942
    %vm3945 = vcmask 779904
    %3946 = vst.msk [vmem:[#allocation2 + $0x6] sm:$0x3] %vm3945, %v3943
    %v3947 = vrot.slane %v3577, 3
    %v3948 = vrot.slane %v3587, 3
    %v3951 = vadd.f32 %v3485, %v3947
    %v3952 = vadd.f32 %v3495, %v3948
    %v3955 = vrot.slane %v3910, 1
    %v3956 = vsel %vm3752, %v3911, %v3955
    %3957 = vrot.lane.b32.xlu0 %v3956, 32
    %v3958 = vpop.permute.xlu0 %3957
    %v3959 = vsel %vm3602, %v3958, 0
    %3961 = vmatprep.subr.mxu0 0.0
    %3962 = vmatpush1.msra.mxu0 0.0
    %3963 = vmatprep.subr.mxu0 0.0
    %3964 = vmatpush1.msra.mxu0 0.0
    %3965 = vmatprep.subr.mxu0 0.0
    %3966 = vmatpush1.msra.mxu0 0.0
    %3967 = vmatprep.subr.mxu0 0.0
    %3968 = vmatpush1.msra.mxu0 0.0
    %3969 = vmatprep.subr.mxu0 0.0
    %3970 = vmatpush1.msra.mxu0 0.0
    %3971 = vmatprep.subr.mxu0 0.0
    %3972 = vmatpush1.msra.mxu0 0.0
    %3973 = vmatprep.subr.mxu0 0.0
    %3974 = vmatpush1.msra.mxu0 0.0
    %3975 = vmatprep.subr.mxu0 0.0
    %3976 = vmatpush1.msra.mxu0 0.0
    %3977 = vmatprep.subr.mxu0 0.0
    %3978 = vmatpush1.msra.mxu0 0.0
    %3979 = vmatprep.subr.mxu0 0.0
    %3980 = vmatpush1.msra.mxu0 0.0
    %3981 = vmatprep.subr.mxu0 0.0
    %3982 = vmatpush1.msra.mxu0 0.0
    %3983 = vmatprep.subr.mxu0 0.0
    %3984 = vmatpush1.msra.mxu0 0.0
    %3985 = vmatprep.subr.mxu0 0.0
    %3986 = vmatpush1.msra.mxu0 %v3593
    %3987 = vmatprep.subr.mxu0 0.0
    %3988 = vmatpush1.msra.mxu0 %v3592
    %3989 = vmatprep.subr.mxu0 0.0
    %3990 = vmatpush1.msra.mxu0 %v3591
    %3991 = vmatprep.subr.mxu0 0.0
    %3992 = vmatpush1.msra.mxu0 %v3590
    %3993 = vmatprep.subr.mxu0 0.0
    %3994 = vmatpush2.msra.mxu0 0.0
    %3995 = vmatprep.subr.mxu0 0.0
    %3996 = vmatpush2.msra.mxu0 0.0
    %3997 = vmatprep.subr.mxu0 0.0
    %3998 = vmatpush2.msra.mxu0 0.0
    %3999 = vmatprep.subr.mxu0 0.0
    %4000 = vmatpush2.msra.mxu0 0.0
    %4001 = vmatprep.subr.mxu0 0.0
    %4002 = vmatpush2.msra.mxu0 0.0
    %4003 = vmatprep.subr.mxu0 0.0
    %4004 = vmatpush2.msra.mxu0 0.0
    %4005 = vmatprep.subr.mxu0 0.0
    %4006 = vmatpush2.msra.mxu0 0.0
    %4007 = vmatprep.subr.mxu0 0.0
    %4008 = vmatpush2.msra.mxu0 0.0
    %4009 = vmatprep.subr.mxu0 0.0
    %4010 = vmatpush2.msra.mxu0 0.0
    %4011 = vmatprep.subr.mxu0 0.0
    %4012 = vmatpush2.msra.mxu0 0.0
    %4013 = vmatprep.subr.mxu0 0.0
    %4014 = vmatpush2.msra.mxu0 0.0
    %4015 = vmatprep.subr.mxu0 0.0
    %4016 = vmatpush2.msra.mxu0 0.0
    %4017 = vmatprep.subr.mxu0 0.0
    %4018 = vmatpush2.msra.mxu0 0.0
    %4019 = vmatprep.subr.mxu0 0.0
    %4020 = vmatpush2.msra.mxu0 0.0
    %4021 = vmatprep.subr.mxu0 0.0
    %4022 = vmatpush2.msra.mxu0 0.0
    %4023 = vmatprep.subr.mxu0 0.0
    %4024 = vmatpush2.msra.mxu0 0.0
    %4025 = vmatprep.mubr.f32.mxu0 0.0
    %4026 = vmatmul.mubr.f32.gmra.mxu0 %v3959
    %v4027 = vpop.f32.mrf.mxu0
    %v4028 = vadd.f32 0.0, %v4027
    %v4029 = vpop.f32.mrf.mxu0
    %4030 = vdwg.mxu0
    %v4032 = vrot.slane %v4028, 6
    %v4033 = vrot.slane %v4028, 7
    %v4036 = vadd.f32 %v3951, %v4032
    %v4037 = vadd.f32 %v3952, %v4033
    %v4038 = vxor.u32 %v4036, 2147483648
    %v4039 = vxor.u32 %v4037, 2147483648
    %v4040 = vmul.f32 %v4038, 1.442695
    %v4041 = vpow.pop %v4040
    %v4042 = vmul.f32 %v4039, 1.442695
    %v4043 = vpow.pop %v4042
    %v4044 = vadd.f32 %v4041, 1.0
    %v4045 = vadd.f32 %v4043, 1.0
    %v4046 = vrcp.pop %v4044
    %v4047 = vmul.f32 1.0, %v4046
    %v4048 = vrcp.pop %v4045
    %v4049 = vmul.f32 1.0, %v4048
    %v4050 = vtanh.pop %v4036
    %v4051 = vtanh.pop %v4037
    %v4054 = vrot.slane %v3898, 7
    %v4055 = vrot.slane %v3899, 7
    %v4058 = vmul.f32 %v4047, %v4054
    %v4059 = vmul.f32 %v4049, %v4055
    %4062 = vrot.lane.b32.xlu0 %v4050, 64
    %v4063 = vpop.permute.xlu0 %4062
    %4064 = vrot.lane.b32.xlu0 %v4051, 64
    %v4065 = vpop.permute.xlu0 %4064
    %v4068 = vmul.f32 %v4047, %v4063
    %v4069 = vmul.f32 %v4049, %v4065
    %4072 = vrot.lane.b32.xlu0 %v4068, 32
    %v4073 = vpop.permute.xlu0 %4072
    %4074 = vrot.lane.b32.xlu0 %v4069, 32
    %v4075 = vpop.permute.xlu0 %4074
    %v4078 = vadd.f32 %v4058, %v4073
    %v4079 = vadd.f32 %v4059, %v4075
    %v4080 = vtanh.pop %v4078
    %v4081 = vtanh.pop %v4079
    %4084 = vrot.lane.b32.xlu0 %v4080, 64
    %v4085 = vpop.permute.xlu0 %4084
    %4086 = vrot.lane.b32.xlu0 %v4081, 64
    %v4087 = vpop.permute.xlu0 %4086
    %v4090 = vmul.f32 %v4047, %v4085
    %v4091 = vmul.f32 %v4049, %v4087
    %v4092 = vmax.f32 %v4090, 0.0
    %v4093 = vmax.f32 %v4091, 0.0
    %v4097 = vunpack.c.l.s4 1983009808
    %v4098 = vunpack.c.0.s8 %v4097
    %v4099 = vlaneseq
    %v4100 = vshrl.u32 %v4099, 7
    %v4101 = vsub.s32 %v4098, %v4100
    %v4102 = vrot.slane %v4092, %v4101
    %v4103 = vcombine.high %v4102, %v4102
    %v4105 = vunpack.c.l.s4 1983009808
    %v4106 = vunpack.c.0.s8 %v4105
    %v4107 = vlaneseq
    %v4108 = vshrl.u32 %v4107, 7
    %v4109 = vsub.s32 %v4106, %v4108
    %v4110 = vrot.slane %v4093, %v4109
    %v4111 = vcombine.high %v4110, %v4110
    %v4112 = vsel %vm3747, %v4103, %v4103
    %v4113 = vsel %vm3749, %v4103, %v4112
    %v4114 = vrot.slane %v4111, 7
    %v4115 = vsel %vm3752, %v4114, %v4113
    %v4116 = vsel %vm3754, %v4114, %v4115
    %v4117 = vsel %vm3756, %v4114, %v4116
    %v4118 = vsel %vm3758, %v4114, %v4117
    %4119 = vrot.lane.b32.xlu0 %v4118, 96
    %v4120 = vpop.permute.xlu0 %4119
    %vm4122 = vcmask 648704
    %4123 = vst.msk [vmem:[#allocation2] sm:$0x3] %vm4122, %v4120
    %4124 = vrot.lane.b32.xlu0 %v4118, 64
    %v4125 = vpop.permute.xlu0 %4124
    %vm4127 = vcmask 517504
    %4128 = vst.msk [vmem:[#allocation2 + $0x6] sm:$0x3] %vm4127, %v4125
    %v4129 = vrot.slane %v3577, 1
    %v4130 = vrot.slane %v3587, 1
    %v4133 = vadd.f32 %v3485, %v4129
    %v4134 = vadd.f32 %v3495, %v4130
    %v4137 = vrot.slane %v4090, 2
    %v4138 = vrot.slane %v4091, 1
    %v4139 = vsel %vm3752, %v4138, %v4137
    %4140 = vrot.lane.b32.xlu0 %v4139, 32
    %v4141 = vpop.permute.xlu0 %4140
    %v4142 = vsel %vm3602, %v4141, 0
    %4144 = vmatprep.subr.mxu0 0.0
    %4145 = vmatpush1.msra.mxu0 0.0
    %4146 = vmatprep.subr.mxu0 0.0
    %4147 = vmatpush1.msra.mxu0 0.0
    %4148 = vmatprep.subr.mxu0 0.0
    %4149 = vmatpush1.msra.mxu0 0.0
    %4150 = vmatprep.subr.mxu0 0.0
    %4151 = vmatpush1.msra.mxu0 0.0
    %4152 = vmatprep.subr.mxu0 0.0
    %4153 = vmatpush1.msra.mxu0 0.0
    %4154 = vmatprep.subr.mxu0 0.0
    %4155 = vmatpush1.msra.mxu0 0.0
    %4156 = vmatprep.subr.mxu0 0.0
    %4157 = vmatpush1.msra.mxu0 0.0
    %4158 = vmatprep.subr.mxu0 0.0
    %4159 = vmatpush1.msra.mxu0 0.0
    %4160 = vmatprep.subr.mxu0 0.0
    %4161 = vmatpush1.msra.mxu0 0.0
    %4162 = vmatprep.subr.mxu0 0.0
    %4163 = vmatpush1.msra.mxu0 0.0
    %4164 = vmatprep.subr.mxu0 0.0
    %4165 = vmatpush1.msra.mxu0 0.0
    %4166 = vmatprep.subr.mxu0 0.0
    %4167 = vmatpush1.msra.mxu0 0.0
    %4168 = vmatprep.subr.mxu0 0.0
    %4169 = vmatpush1.msra.mxu0 %v3593
    %4170 = vmatprep.subr.mxu0 0.0
    %4171 = vmatpush1.msra.mxu0 %v3592
    %4172 = vmatprep.subr.mxu0 0.0
    %4173 = vmatpush1.msra.mxu0 %v3591
    %4174 = vmatprep.subr.mxu0 0.0
    %4175 = vmatpush1.msra.mxu0 %v3590
    %4176 = vmatprep.subr.mxu0 0.0
    %4177 = vmatpush2.msra.mxu0 0.0
    %4178 = vmatprep.subr.mxu0 0.0
    %4179 = vmatpush2.msra.mxu0 0.0
    %4180 = vmatprep.subr.mxu0 0.0
    %4181 = vmatpush2.msra.mxu0 0.0
    %4182 = vmatprep.subr.mxu0 0.0
    %4183 = vmatpush2.msra.mxu0 0.0
    %4184 = vmatprep.subr.mxu0 0.0
    %4185 = vmatpush2.msra.mxu0 0.0
    %4186 = vmatprep.subr.mxu0 0.0
    %4187 = vmatpush2.msra.mxu0 0.0
    %4188 = vmatprep.subr.mxu0 0.0
    %4189 = vmatpush2.msra.mxu0 0.0
    %4190 = vmatprep.subr.mxu0 0.0
    %4191 = vmatpush2.msra.mxu0 0.0
    %4192 = vmatprep.subr.mxu0 0.0
    %4193 = vmatpush2.msra.mxu0 0.0
    %4194 = vmatprep.subr.mxu0 0.0
    %4195 = vmatpush2.msra.mxu0 0.0
    %4196 = vmatprep.subr.mxu0 0.0
    %4197 = vmatpush2.msra.mxu0 0.0
    %4198 = vmatprep.subr.mxu0 0.0
    %4199 = vmatpush2.msra.mxu0 0.0
    %4200 = vmatprep.subr.mxu0 0.0
    %4201 = vmatpush2.msra.mxu0 0.0
    %4202 = vmatprep.subr.mxu0 0.0
    %4203 = vmatpush2.msra.mxu0 0.0
    %4204 = vmatprep.subr.mxu0 0.0
    %4205 = vmatpush2.msra.mxu0 0.0
    %4206 = vmatprep.subr.mxu0 0.0
    %4207 = vmatpush2.msra.mxu0 0.0
    %4208 = vmatprep.mubr.f32.mxu0 0.0
    %4209 = vmatmul.mubr.f32.gmra.mxu0 %v4142
    %v4210 = vpop.f32.mrf.mxu0
    %v4211 = vadd.f32 0.0, %v4210
    %v4212 = vpop.f32.mrf.mxu0
    %4213 = vdwg.mxu0
    %v4215 = vrot.slane %v4211, 5
    %v4216 = vrot.slane %v4211, 6
    %v4219 = vadd.f32 %v4133, %v4215
    %v4220 = vadd.f32 %v4134, %v4216
    %v4221 = vxor.u32 %v4219, 2147483648
    %v4222 = vxor.u32 %v4220, 2147483648
    %v4223 = vmul.f32 %v4221, 1.442695
    %v4224 = vpow.pop %v4223
    %v4225 = vmul.f32 %v4222, 1.442695
    %v4226 = vpow.pop %v4225
    %v4227 = vadd.f32 %v4224, 1.0
    %v4228 = vadd.f32 %v4226, 1.0
    %v4229 = vrcp.pop %v4227
    %v4230 = vmul.f32 1.0, %v4229
    %v4231 = vrcp.pop %v4228
    %v4232 = vmul.f32 1.0, %v4231
    %v4233 = vtanh.pop %v4219
    %v4234 = vtanh.pop %v4220
    %v4237 = vrot.slane %v4078, 7
    %v4238 = vrot.slane %v4079, 7
    %v4241 = vmul.f32 %v4230, %v4237
    %v4242 = vmul.f32 %v4232, %v4238
    %4245 = vrot.lane.b32.xlu0 %v4233, 64
    %v4246 = vpop.permute.xlu0 %4245
    %4247 = vrot.lane.b32.xlu0 %v4234, 64
    %v4248 = vpop.permute.xlu0 %4247
    %v4251 = vmul.f32 %v4230, %v4246
    %v4252 = vmul.f32 %v4232, %v4248
    %4255 = vrot.lane.b32.xlu0 %v4251, 32
    %v4256 = vpop.permute.xlu0 %4255
    %4257 = vrot.lane.b32.xlu0 %v4252, 32
    %v4258 = vpop.permute.xlu0 %4257
    %v4261 = vadd.f32 %v4241, %v4256
    %v4262 = vadd.f32 %v4242, %v4258
    %v4263 = vtanh.pop %v4261
    %v4264 = vtanh.pop %v4262
    %4267 = vrot.lane.b32.xlu0 %v4263, 64
    %v4268 = vpop.permute.xlu0 %4267
    %4269 = vrot.lane.b32.xlu0 %v4264, 64
    %v4270 = vpop.permute.xlu0 %4269
    %v4273 = vmul.f32 %v4230, %v4268
    %v4274 = vmul.f32 %v4232, %v4270
    %v4275 = vmax.f32 %v4273, 0.0
    %v4276 = vmax.f32 %v4274, 0.0
    %v4280 = vunpack.c.l.s4 1983009808
    %v4281 = vunpack.c.0.s8 %v4280
    %v4282 = vlaneseq
    %v4283 = vshrl.u32 %v4282, 7
    %v4284 = vsub.s32 %v4281, %v4283
    %v4285 = vrot.slane %v4275, %v4284
    %v4286 = vcombine.high %v4285, %v4285
    %v4288 = vunpack.c.l.s4 1983009808
    %v4289 = vunpack.c.0.s8 %v4288
    %v4290 = vlaneseq
    %v4291 = vshrl.u32 %v4290, 7
    %v4292 = vsub.s32 %v4289, %v4291
    %v4293 = vrot.slane %v4276, %v4292
    %v4294 = vcombine.high %v4293, %v4293
    %v4295 = vrot.slane %v4286, 1
    %v4296 = vsel %vm3747, %v4295, %v4295
    %v4297 = vsel %vm3749, %v4295, %v4296
    %v4298 = vsel %vm3752, %v4294, %v4297
    %v4299 = vsel %vm3754, %v4294, %v4298
    %v4300 = vsel %vm3756, %v4294, %v4299
    %v4301 = vsel %vm3758, %v4294, %v4300
    %vm4303 = vcmask 911104
    %4304 = vst.msk [vmem:[#allocation2] sm:$0x3] %vm4303, %v4301
    %4305 = vrot.lane.b32.xlu0 %v4301, 32
    %v4306 = vpop.permute.xlu0 %4305
    %vm4308 = vcmask 255104
    %4309 = vst.msk [vmem:[#allocation2 + $0x6] sm:$0x3] %vm4308, %v4306
    %v4312 = vrot.slane %v4273, 3
    %v4313 = vrot.slane %v4274, 2
    %v4314 = vsel %vm3752, %v4313, %v4312
    %4315 = vrot.lane.b32.xlu0 %v4314, 32
    %v4316 = vpop.permute.xlu0 %4315
    %v4317 = vsel %vm3602, %v4316, 0
    %4319 = vmatprep.subr.mxu0 0.0
    %4320 = vmatpush1.msra.mxu0 0.0
    %4321 = vmatprep.subr.mxu0 0.0
    %4322 = vmatpush1.msra.mxu0 0.0
    %4323 = vmatprep.subr.mxu0 0.0
    %4324 = vmatpush1.msra.mxu0 0.0
    %4325 = vmatprep.subr.mxu0 0.0
    %4326 = vmatpush1.msra.mxu0 0.0
    %4327 = vmatprep.subr.mxu0 0.0
    %4328 = vmatpush1.msra.mxu0 0.0
    %4329 = vmatprep.subr.mxu0 0.0
    %4330 = vmatpush1.msra.mxu0 0.0
    %4331 = vmatprep.subr.mxu0 0.0
    %4332 = vmatpush1.msra.mxu0 0.0
    %4333 = vmatprep.subr.mxu0 0.0
    %4334 = vmatpush1.msra.mxu0 0.0
    %4335 = vmatprep.subr.mxu0 0.0
    %4336 = vmatpush1.msra.mxu0 0.0
    %4337 = vmatprep.subr.mxu0 0.0
    %4338 = vmatpush1.msra.mxu0 0.0
    %4339 = vmatprep.subr.mxu0 0.0
    %4340 = vmatpush1.msra.mxu0 0.0
    %4341 = vmatprep.subr.mxu0 0.0
    %4342 = vmatpush1.msra.mxu0 0.0
    %4343 = vmatprep.subr.mxu0 0.0
    %4344 = vmatpush1.msra.mxu0 %v3593
    %4345 = vmatprep.subr.mxu0 0.0
    %4346 = vmatpush1.msra.mxu0 %v3592
    %4347 = vmatprep.subr.mxu0 0.0
    %4348 = vmatpush1.msra.mxu0 %v3591
    %4349 = vmatprep.subr.mxu0 0.0
    %4350 = vmatpush1.msra.mxu0 %v3590
    %4351 = vmatprep.subr.mxu0 0.0
    %4352 = vmatpush2.msra.mxu0 0.0
    %4353 = vmatprep.subr.mxu0 0.0
    %4354 = vmatpush2.msra.mxu0 0.0
    %4355 = vmatprep.subr.mxu0 0.0
    %4356 = vmatpush2.msra.mxu0 0.0
    %4357 = vmatprep.subr.mxu0 0.0
    %4358 = vmatpush2.msra.mxu0 0.0
    %4359 = vmatprep.subr.mxu0 0.0
    %4360 = vmatpush2.msra.mxu0 0.0
    %4361 = vmatprep.subr.mxu0 0.0
    %4362 = vmatpush2.msra.mxu0 0.0
    %4363 = vmatprep.subr.mxu0 0.0
    %4364 = vmatpush2.msra.mxu0 0.0
    %4365 = vmatprep.subr.mxu0 0.0
    %4366 = vmatpush2.msra.mxu0 0.0
    %4367 = vmatprep.subr.mxu0 0.0
    %4368 = vmatpush2.msra.mxu0 0.0
    %4369 = vmatprep.subr.mxu0 0.0
    %4370 = vmatpush2.msra.mxu0 0.0
    %4371 = vmatprep.subr.mxu0 0.0
    %4372 = vmatpush2.msra.mxu0 0.0
    %4373 = vmatprep.subr.mxu0 0.0
    %4374 = vmatpush2.msra.mxu0 0.0
    %4375 = vmatprep.subr.mxu0 0.0
    %4376 = vmatpush2.msra.mxu0 0.0
    %4377 = vmatprep.subr.mxu0 0.0
    %4378 = vmatpush2.msra.mxu0 0.0
    %4379 = vmatprep.subr.mxu0 0.0
    %4380 = vmatpush2.msra.mxu0 0.0
    %4381 = vmatprep.subr.mxu0 0.0
    %4382 = vmatpush2.msra.mxu0 0.0
    %4383 = vmatprep.mubr.f32.mxu0 0.0
    %4384 = vmatmul.mubr.f32.gmra.mxu0 %v4317
    %v4385 = vpop.f32.mrf.mxu0
    %v4386 = vadd.f32 0.0, %v4385
    %v4387 = vpop.f32.mrf.mxu0
    %4388 = vdwg.mxu0
    %v4390 = vrot.slane %v4386, 4
    %v4391 = vrot.slane %v4386, 5
    %v4394 = vadd.f32 %v3600, %v4390
    %v4395 = vadd.f32 %v3601, %v4391
    %v4396 = vxor.u32 %v4394, 2147483648
    %v4397 = vxor.u32 %v4395, 2147483648
    %v4398 = vmul.f32 %v4396, 1.442695
    %v4399 = vpow.pop %v4398
    %v4400 = vmul.f32 %v4397, 1.442695
    %v4401 = vpow.pop %v4400
    %v4402 = vadd.f32 %v4399, 1.0
    %v4403 = vadd.f32 %v4401, 1.0
    %v4404 = vrcp.pop %v4402
    %v4405 = vmul.f32 1.0, %v4404
    %v4406 = vrcp.pop %v4403
    %v4407 = vmul.f32 1.0, %v4406
    %v4408 = vtanh.pop %v4394
    %v4409 = vtanh.pop %v4395
    %v4412 = vrot.slane %v4261, 7
    %v4413 = vrot.slane %v4262, 7
    %v4416 = vmul.f32 %v4405, %v4412
    %v4417 = vmul.f32 %v4407, %v4413
    %4420 = vrot.lane.b32.xlu0 %v4408, 64
    %v4421 = vpop.permute.xlu0 %4420
    %4422 = vrot.lane.b32.xlu0 %v4409, 64
    %v4423 = vpop.permute.xlu0 %4422
    %v4426 = vmul.f32 %v4405, %v4421
    %v4427 = vmul.f32 %v4407, %v4423
    %4430 = vrot.lane.b32.xlu0 %v4426, 32
    %v4431 = vpop.permute.xlu0 %4430
    %4432 = vrot.lane.b32.xlu0 %v4427, 32
    %v4433 = vpop.permute.xlu0 %4432
    %v4436 = vadd.f32 %v4416, %v4431
    %v4437 = vadd.f32 %v4417, %v4433
    %v4438 = vtanh.pop %v4436
    %v4439 = vtanh.pop %v4437
    %4442 = vrot.lane.b32.xlu0 %v4438, 64
    %v4443 = vpop.permute.xlu0 %4442
    %4444 = vrot.lane.b32.xlu0 %v4439, 64
    %v4445 = vpop.permute.xlu0 %4444
    %v4448 = vmul.f32 %v4405, %v4443
    %v4449 = vmul.f32 %v4407, %v4445
    %v4450 = vmax.f32 %v4448, 0.0
    %v4451 = vmax.f32 %v4449, 0.0
    %v4454 = vcombine.high %v4450, %v4450
    %v4456 = vunpack.c.l.s4 1983009808
    %v4457 = vunpack.c.0.s8 %v4456
    %v4458 = vlaneseq
    %v4459 = vshrl.u32 %v4458, 7
    %v4460 = vsub.s32 %v4457, %v4459
    %v4461 = vrot.slane %v4454, %v4460
    %v4462 = vcombine.high %v4451, %v4451
    %v4464 = vunpack.c.l.s4 1983009808
    %v4465 = vunpack.c.0.s8 %v4464
    %v4466 = vlaneseq
    %v4467 = vshrl.u32 %v4466, 7
    %v4468 = vsub.s32 %v4465, %v4467
    %v4469 = vrot.slane %v4462, %v4468
    %v4470 = vsel %vm3747, %v4461, %v4461
    %v4471 = vsel %vm3749, %v4461, %v4470
    %v4472 = vrot.slane %v4469, 7
    %v4473 = vsel %vm3752, %v4472, %v4471
    %v4474 = vsel %vm3754, %v4472, %v4473
    %v4475 = vsel %vm3756, %v4472, %v4474
    %v4476 = vsel %vm3758, %v4472, %v4475
    %4477 = vrot.lane.b32.xlu0 %v4476, 32
    %v4478 = vpop.permute.xlu0 %4477
    %4480 = vst.msk [vmem:[#allocation2 + $0x2] sm:$0x3] %vm3763, %v4478
    %4482 = vst.msk [vmem:[#allocation2 + $0x4] sm:$0x3] %vm3766, %v4476
    %v4485 = vrot.slane %v4448, 4
    %v4486 = vrot.slane %v4449, 3
    %v4487 = vsel %vm3752, %v4486, %v4485
    %4488 = vrot.lane.b32.xlu0 %v4487, 32
    %v4489 = vpop.permute.xlu0 %4488
    %v4490 = vsel %vm3602, %v4489, 0
    %4492 = vmatprep.subr.mxu0 0.0
    %4493 = vmatpush1.msra.mxu0 0.0
    %4494 = vmatprep.subr.mxu0 0.0
    %4495 = vmatpush1.msra.mxu0 0.0
    %4496 = vmatprep.subr.mxu0 0.0
    %4497 = vmatpush1.msra.mxu0 0.0
    %4498 = vmatprep.subr.mxu0 0.0
    %4499 = vmatpush1.msra.mxu0 0.0
    %4500 = vmatprep.subr.mxu0 0.0
    %4501 = vmatpush1.msra.mxu0 0.0
    %4502 = vmatprep.subr.mxu0 0.0
    %4503 = vmatpush1.msra.mxu0 0.0
    %4504 = vmatprep.subr.mxu0 0.0
    %4505 = vmatpush1.msra.mxu0 0.0
    %4506 = vmatprep.subr.mxu0 0.0
    %4507 = vmatpush1.msra.mxu0 0.0
    %4508 = vmatprep.subr.mxu0 0.0
    %4509 = vmatpush1.msra.mxu0 0.0
    %4510 = vmatprep.subr.mxu0 0.0
    %4511 = vmatpush1.msra.mxu0 0.0
    %4512 = vmatprep.subr.mxu0 0.0
    %4513 = vmatpush1.msra.mxu0 0.0
    %4514 = vmatprep.subr.mxu0 0.0
    %4515 = vmatpush1.msra.mxu0 0.0
    %4516 = vmatprep.subr.mxu0 0.0
    %4517 = vmatpush1.msra.mxu0 %v3593
    %4518 = vmatprep.subr.mxu0 0.0
    %4519 = vmatpush1.msra.mxu0 %v3592
    %4520 = vmatprep.subr.mxu0 0.0
    %4521 = vmatpush1.msra.mxu0 %v3591
    %4522 = vmatprep.subr.mxu0 0.0
    %4523 = vmatpush1.msra.mxu0 %v3590
    %4524 = vmatprep.subr.mxu0 0.0
    %4525 = vmatpush2.msra.mxu0 0.0
    %4526 = vmatprep.subr.mxu0 0.0
    %4527 = vmatpush2.msra.mxu0 0.0
    %4528 = vmatprep.subr.mxu0 0.0
    %4529 = vmatpush2.msra.mxu0 0.0
    %4530 = vmatprep.subr.mxu0 0.0
    %4531 = vmatpush2.msra.mxu0 0.0
    %4532 = vmatprep.subr.mxu0 0.0
    %4533 = vmatpush2.msra.mxu0 0.0
    %4534 = vmatprep.subr.mxu0 0.0
    %4535 = vmatpush2.msra.mxu0 0.0
    %4536 = vmatprep.subr.mxu0 0.0
    %4537 = vmatpush2.msra.mxu0 0.0
    %4538 = vmatprep.subr.mxu0 0.0
    %4539 = vmatpush2.msra.mxu0 0.0
    %4540 = vmatprep.subr.mxu0 0.0
    %4541 = vmatpush2.msra.mxu0 0.0
    %4542 = vmatprep.subr.mxu0 0.0
    %4543 = vmatpush2.msra.mxu0 0.0
    %4544 = vmatprep.subr.mxu0 0.0
    %4545 = vmatpush2.msra.mxu0 0.0
    %4546 = vmatprep.subr.mxu0 0.0
    %4547 = vmatpush2.msra.mxu0 0.0
    %4548 = vmatprep.subr.mxu0 0.0
    %4549 = vmatpush2.msra.mxu0 0.0
    %4550 = vmatprep.subr.mxu0 0.0
    %4551 = vmatpush2.msra.mxu0 0.0
    %4552 = vmatprep.subr.mxu0 0.0
    %4553 = vmatpush2.msra.mxu0 0.0
    %4554 = vmatprep.subr.mxu0 0.0
    %4555 = vmatpush2.msra.mxu0 0.0
    %4556 = vmatprep.mubr.f32.mxu0 0.0
    %4557 = vmatmul.mubr.f32.gmra.mxu0 %v4490
    %v4558 = vpop.f32.mrf.mxu0
    %v4559 = vadd.f32 0.0, %v4558
    %v4560 = vpop.f32.mrf.mxu0
    %4561 = vdwg.mxu0
    %v4563 = vrot.slane %v4559, 3
    %v4564 = vrot.slane %v4559, 4
    %v4567 = vadd.f32 %v3772, %v4563
    %v4568 = vadd.f32 %v3773, %v4564
    %v4569 = vxor.u32 %v4567, 2147483648
    %v4570 = vxor.u32 %v4568, 2147483648
    %v4571 = vmul.f32 %v4569, 1.442695
    %v4572 = vpow.pop %v4571
    %v4573 = vmul.f32 %v4570, 1.442695
    %v4574 = vpow.pop %v4573
    %v4575 = vadd.f32 %v4572, 1.0
    %v4576 = vadd.f32 %v4574, 1.0
    %v4577 = vrcp.pop %v4575
    %v4578 = vmul.f32 1.0, %v4577
    %v4579 = vrcp.pop %v4576
    %v4580 = vmul.f32 1.0, %v4579
    %v4581 = vtanh.pop %v4567
    %v4582 = vtanh.pop %v4568
    %v4585 = vrot.slane %v4436, 7
    %v4586 = vrot.slane %v4437, 7
    %v4589 = vmul.f32 %v4578, %v4585
    %v4590 = vmul.f32 %v4580, %v4586
    %4593 = vrot.lane.b32.xlu0 %v4581, 64
    %v4594 = vpop.permute.xlu0 %4593
    %4595 = vrot.lane.b32.xlu0 %v4582, 64
    %v4596 = vpop.permute.xlu0 %4595
    %v4599 = vmul.f32 %v4578, %v4594
    %v4600 = vmul.f32 %v4580, %v4596
    %4603 = vrot.lane.b32.xlu0 %v4599, 32
    %v4604 = vpop.permute.xlu0 %4603
    %4605 = vrot.lane.b32.xlu0 %v4600, 32
    %v4606 = vpop.permute.xlu0 %4605
    %v4609 = vadd.f32 %v4589, %v4604
    %v4610 = vadd.f32 %v4590, %v4606
    %v4611 = vtanh.pop %v4609
    %v4612 = vtanh.pop %v4610
    %4615 = vrot.lane.b32.xlu0 %v4611, 64
    %v4616 = vpop.permute.xlu0 %4615
    %4617 = vrot.lane.b32.xlu0 %v4612, 64
    %v4618 = vpop.permute.xlu0 %4617
    %v4621 = vmul.f32 %v4578, %v4616
    %v4622 = vmul.f32 %v4580, %v4618
    %v4623 = vmax.f32 %v4621, 0.0
    %v4624 = vmax.f32 %v4622, 0.0
    %v4627 = vcombine.high %v4623, %v4623
    %v4629 = vunpack.c.l.s4 1983009808
    %v4630 = vunpack.c.0.s8 %v4629
    %v4631 = vlaneseq
    %v4632 = vshrl.u32 %v4631, 7
    %v4633 = vsub.s32 %v4630, %v4632
    %v4634 = vrot.slane %v4627, %v4633
    %v4635 = vcombine.high %v4624, %v4624
    %v4637 = vunpack.c.l.s4 1983009808
    %v4638 = vunpack.c.0.s8 %v4637
    %v4639 = vlaneseq
    %v4640 = vshrl.u32 %v4639, 7
    %v4641 = vsub.s32 %v4638, %v4640
    %v4642 = vrot.slane %v4635, %v4641
    %v4643 = vrot.slane %v4634, 1
    %v4644 = vsel %vm3747, %v4643, %v4643
    %v4645 = vsel %vm3749, %v4643, %v4644
    %v4646 = vsel %vm3752, %v4642, %v4645
    %v4647 = vsel %vm3754, %v4642, %v4646
    %v4648 = vsel %vm3756, %v4642, %v4647
    %v4649 = vsel %vm3758, %v4642, %v4648
    %4650 = vrot.lane.b32.xlu0 %v4649, 64
    %v4651 = vpop.permute.xlu0 %4650
    %4653 = vst.msk [vmem:[#allocation2 + $0x2] sm:$0x3] %vm3940, %v4651
    %4654 = vrot.lane.b32.xlu0 %v4649, 96
    %v4655 = vpop.permute.xlu0 %4654
    %4657 = vst.msk [vmem:[#allocation2 + $0x4] sm:$0x3] %vm3945, %v4655
    %v4660 = vrot.slane %v4621, 5
    %v4661 = vrot.slane %v4622, 4
    %v4662 = vsel %vm3752, %v4661, %v4660
    %4663 = vrot.lane.b32.xlu0 %v4662, 32
    %v4664 = vpop.permute.xlu0 %4663
    %v4665 = vsel %vm3602, %v4664, 0
    %4667 = vmatprep.subr.mxu0 0.0
    %4668 = vmatpush1.msra.mxu0 0.0
    %4669 = vmatprep.subr.mxu0 0.0
    %4670 = vmatpush1.msra.mxu0 0.0
    %4671 = vmatprep.subr.mxu0 0.0
    %4672 = vmatpush1.msra.mxu0 0.0
    %4673 = vmatprep.subr.mxu0 0.0
    %4674 = vmatpush1.msra.mxu0 0.0
    %4675 = vmatprep.subr.mxu0 0.0
    %4676 = vmatpush1.msra.mxu0 0.0
    %4677 = vmatprep.subr.mxu0 0.0
    %4678 = vmatpush1.msra.mxu0 0.0
    %4679 = vmatprep.subr.mxu0 0.0
    %4680 = vmatpush1.msra.mxu0 0.0
    %4681 = vmatprep.subr.mxu0 0.0
    %4682 = vmatpush1.msra.mxu0 0.0
    %4683 = vmatprep.subr.mxu0 0.0
    %4684 = vmatpush1.msra.mxu0 0.0
    %4685 = vmatprep.subr.mxu0 0.0
    %4686 = vmatpush1.msra.mxu0 0.0
    %4687 = vmatprep.subr.mxu0 0.0
    %4688 = vmatpush1.msra.mxu0 0.0
    %4689 = vmatprep.subr.mxu0 0.0
    %4690 = vmatpush1.msra.mxu0 0.0
    %4691 = vmatprep.subr.mxu0 0.0
    %4692 = vmatpush1.msra.mxu0 %v3593
    %4693 = vmatprep.subr.mxu0 0.0
    %4694 = vmatpush1.msra.mxu0 %v3592
    %4695 = vmatprep.subr.mxu0 0.0
    %4696 = vmatpush1.msra.mxu0 %v3591
    %4697 = vmatprep.subr.mxu0 0.0
    %4698 = vmatpush1.msra.mxu0 %v3590
    %4699 = vmatprep.subr.mxu0 0.0
    %4700 = vmatpush2.msra.mxu0 0.0
    %4701 = vmatprep.subr.mxu0 0.0
    %4702 = vmatpush2.msra.mxu0 0.0
    %4703 = vmatprep.subr.mxu0 0.0
    %4704 = vmatpush2.msra.mxu0 0.0
    %4705 = vmatprep.subr.mxu0 0.0
    %4706 = vmatpush2.msra.mxu0 0.0
    %4707 = vmatprep.subr.mxu0 0.0
    %4708 = vmatpush2.msra.mxu0 0.0
    %4709 = vmatprep.subr.mxu0 0.0
    %4710 = vmatpush2.msra.mxu0 0.0
    %4711 = vmatprep.subr.mxu0 0.0
    %4712 = vmatpush2.msra.mxu0 0.0
    %4713 = vmatprep.subr.mxu0 0.0
    %4714 = vmatpush2.msra.mxu0 0.0
    %4715 = vmatprep.subr.mxu0 0.0
    %4716 = vmatpush2.msra.mxu0 0.0
    %4717 = vmatprep.subr.mxu0 0.0
    %4718 = vmatpush2.msra.mxu0 0.0
    %4719 = vmatprep.subr.mxu0 0.0
    %4720 = vmatpush2.msra.mxu0 0.0
    %4721 = vmatprep.subr.mxu0 0.0
    %4722 = vmatpush2.msra.mxu0 0.0
    %4723 = vmatprep.subr.mxu0 0.0
    %4724 = vmatpush2.msra.mxu0 0.0
    %4725 = vmatprep.subr.mxu0 0.0
    %4726 = vmatpush2.msra.mxu0 0.0
    %4727 = vmatprep.subr.mxu0 0.0
    %4728 = vmatpush2.msra.mxu0 0.0
    %4729 = vmatprep.subr.mxu0 0.0
    %4730 = vmatpush2.msra.mxu0 0.0
    %4731 = vmatprep.mubr.f32.mxu0 0.0
    %4732 = vmatmul.mubr.f32.gmra.mxu0 %v4665
    %v4733 = vpop.f32.mrf.mxu0
    %v4734 = vadd.f32 0.0, %v4733
    %v4735 = vpop.f32.mrf.mxu0
    %4736 = vdwg.mxu0
    %v4738 = vrot.slane %v4734, 2
    %v4739 = vrot.slane %v4734, 3
    %v4742 = vadd.f32 %v3951, %v4738
    %v4743 = vadd.f32 %v3952, %v4739
    %v4744 = vxor.u32 %v4742, 2147483648
    %v4745 = vxor.u32 %v4743, 2147483648
    %v4746 = vmul.f32 %v4744, 1.442695
    %v4747 = vpow.pop %v4746
    %v4748 = vmul.f32 %v4745, 1.442695
    %v4749 = vpow.pop %v4748
    %v4750 = vadd.f32 %v4747, 1.0
    %v4751 = vadd.f32 %v4749, 1.0
    %v4752 = vrcp.pop %v4750
    %v4753 = vmul.f32 1.0, %v4752
    %v4754 = vrcp.pop %v4751
    %v4755 = vmul.f32 1.0, %v4754
    %v4756 = vtanh.pop %v4742
    %v4757 = vtanh.pop %v4743
    %v4760 = vrot.slane %v4609, 7
    %v4761 = vrot.slane %v4610, 7
    %v4764 = vmul.f32 %v4753, %v4760
    %v4765 = vmul.f32 %v4755, %v4761
    %4768 = vrot.lane.b32.xlu0 %v4756, 64
    %v4769 = vpop.permute.xlu0 %4768
    %4770 = vrot.lane.b32.xlu0 %v4757, 64
    %v4771 = vpop.permute.xlu0 %4770
    %v4774 = vmul.f32 %v4753, %v4769
    %v4775 = vmul.f32 %v4755, %v4771
    %4778 = vrot.lane.b32.xlu0 %v4774, 32
    %v4779 = vpop.permute.xlu0 %4778
    %4780 = vrot.lane.b32.xlu0 %v4775, 32
    %v4781 = vpop.permute.xlu0 %4780
    %v4784 = vadd.f32 %v4764, %v4779
    %v4785 = vadd.f32 %v4765, %v4781
    %v4786 = vtanh.pop %v4784
    %v4787 = vtanh.pop %v4785
    %4790 = vrot.lane.b32.xlu0 %v4786, 64
    %v4791 = vpop.permute.xlu0 %4790
    %4792 = vrot.lane.b32.xlu0 %v4787, 64
    %v4793 = vpop.permute.xlu0 %4792
    %v4796 = vmul.f32 %v4753, %v4791
    %v4797 = vmul.f32 %v4755, %v4793
    %v4798 = vmax.f32 %v4796, 0.0
    %v4799 = vmax.f32 %v4797, 0.0
    %v4802 = vcombine.high %v4798, %v4798
    %v4804 = vunpack.c.l.s4 1983009808
    %v4805 = vunpack.c.0.s8 %v4804
    %v4806 = vlaneseq
    %v4807 = vshrl.u32 %v4806, 7
    %v4808 = vsub.s32 %v4805, %v4807
    %v4809 = vrot.slane %v4802, %v4808
    %v4810 = vcombine.high %v4809, %v4809
    %v4811 = vcombine.high %v4799, %v4799
    %v4813 = vunpack.c.l.s4 1983009808
    %v4814 = vunpack.c.0.s8 %v4813
    %v4815 = vlaneseq
    %v4816 = vshrl.u32 %v4815, 7
    %v4817 = vsub.s32 %v4814, %v4816
    %v4818 = vrot.slane %v4811, %v4817
    %v4819 = vcombine.high %v4818, %v4818
    %v4820 = vsel %vm3747, %v4810, %v4810
    %v4821 = vsel %vm3749, %v4810, %v4820
    %v4822 = vrot.slane %v4819, 7
    %v4823 = vsel %vm3752, %v4822, %v4821
    %v4824 = vsel %vm3754, %v4822, %v4823
    %v4825 = vsel %vm3756, %v4822, %v4824
    %v4826 = vsel %vm3758, %v4822, %v4825
    %4827 = vrot.lane.b32.xlu0 %v4826, 96
    %v4828 = vpop.permute.xlu0 %4827
    %4830 = vst.msk [vmem:[#allocation2 + $0x2] sm:$0x3] %vm4122, %v4828
    %4831 = vrot.lane.b32.xlu0 %v4826, 64
    %v4832 = vpop.permute.xlu0 %4831
    %4834 = vst.msk [vmem:[#allocation2 + $0x4] sm:$0x3] %vm4127, %v4832
    %v4837 = vrot.slane %v4796, 6
    %v4838 = vrot.slane %v4797, 5
    %v4839 = vsel %vm3752, %v4838, %v4837
    %4840 = vrot.lane.b32.xlu0 %v4839, 32
    %v4841 = vpop.permute.xlu0 %4840
    %v4842 = vsel %vm3602, %v4841, 0
    %4844 = vmatprep.subr.mxu0 0.0
    %4845 = vmatpush1.msra.mxu0 0.0
    %4846 = vmatprep.subr.mxu0 0.0
    %4847 = vmatpush1.msra.mxu0 0.0
    %4848 = vmatprep.subr.mxu0 0.0
    %4849 = vmatpush1.msra.mxu0 0.0
    %4850 = vmatprep.subr.mxu0 0.0
    %4851 = vmatpush1.msra.mxu0 0.0
    %4852 = vmatprep.subr.mxu0 0.0
    %4853 = vmatpush1.msra.mxu0 0.0
    %4854 = vmatprep.subr.mxu0 0.0
    %4855 = vmatpush1.msra.mxu0 0.0
    %4856 = vmatprep.subr.mxu0 0.0
    %4857 = vmatpush1.msra.mxu0 0.0
    %4858 = vmatprep.subr.mxu0 0.0
    %4859 = vmatpush1.msra.mxu0 0.0
    %4860 = vmatprep.subr.mxu0 0.0
    %4861 = vmatpush1.msra.mxu0 0.0
    %4862 = vmatprep.subr.mxu0 0.0
    %4863 = vmatpush1.msra.mxu0 0.0
    %4864 = vmatprep.subr.mxu0 0.0
    %4865 = vmatpush1.msra.mxu0 0.0
    %4866 = vmatprep.subr.mxu0 0.0
    %4867 = vmatpush1.msra.mxu0 0.0
    %4868 = vmatprep.subr.mxu0 0.0
    %4869 = vmatpush1.msra.mxu0 %v3593
    %4870 = vmatprep.subr.mxu0 0.0
    %4871 = vmatpush1.msra.mxu0 %v3592
    %4872 = vmatprep.subr.mxu0 0.0
    %4873 = vmatpush1.msra.mxu0 %v3591
    %4874 = vmatprep.subr.mxu0 0.0
    %4875 = vmatpush1.msra.mxu0 %v3590
    %4876 = vmatprep.subr.mxu0 0.0
    %4877 = vmatpush2.msra.mxu0 0.0
    %4878 = vmatprep.subr.mxu0 0.0
    %4879 = vmatpush2.msra.mxu0 0.0
    %4880 = vmatprep.subr.mxu0 0.0
    %4881 = vmatpush2.msra.mxu0 0.0
    %4882 = vmatprep.subr.mxu0 0.0
    %4883 = vmatpush2.msra.mxu0 0.0
    %4884 = vmatprep.subr.mxu0 0.0
    %4885 = vmatpush2.msra.mxu0 0.0
    %4886 = vmatprep.subr.mxu0 0.0
    %4887 = vmatpush2.msra.mxu0 0.0
    %4888 = vmatprep.subr.mxu0 0.0
    %4889 = vmatpush2.msra.mxu0 0.0
    %4890 = vmatprep.subr.mxu0 0.0
    %4891 = vmatpush2.msra.mxu0 0.0
    %4892 = vmatprep.subr.mxu0 0.0
    %4893 = vmatpush2.msra.mxu0 0.0
    %4894 = vmatprep.subr.mxu0 0.0
    %4895 = vmatpush2.msra.mxu0 0.0
    %4896 = vmatprep.subr.mxu0 0.0
    %4897 = vmatpush2.msra.mxu0 0.0
    %4898 = vmatprep.subr.mxu0 0.0
    %4899 = vmatpush2.msra.mxu0 0.0
    %4900 = vmatprep.subr.mxu0 0.0
    %4901 = vmatpush2.msra.mxu0 0.0
    %4902 = vmatprep.subr.mxu0 0.0
    %4903 = vmatpush2.msra.mxu0 0.0
    %4904 = vmatprep.subr.mxu0 0.0
    %4905 = vmatpush2.msra.mxu0 0.0
    %4906 = vmatprep.subr.mxu0 0.0
    %4907 = vmatpush2.msra.mxu0 0.0
    %4908 = vmatprep.mubr.f32.mxu0 0.0
    %4909 = vmatmul.mubr.f32.gmra.mxu0 %v4842
    %v4910 = vpop.f32.mrf.mxu0
    %v4911 = vadd.f32 0.0, %v4910
    %v4912 = vpop.f32.mrf.mxu0
    %4913 = vdwg.mxu0
    %v4915 = vrot.slane %v4911, 1
    %v4916 = vrot.slane %v4911, 2
    %v4919 = vadd.f32 %v4133, %v4915
    %v4920 = vadd.f32 %v4134, %v4916
    %v4921 = vxor.u32 %v4919, 2147483648
    %v4922 = vxor.u32 %v4920, 2147483648
    %v4923 = vmul.f32 %v4921, 1.442695
    %v4924 = vpow.pop %v4923
    %v4925 = vmul.f32 %v4922, 1.442695
    %v4926 = vpow.pop %v4925
    %v4927 = vadd.f32 %v4924, 1.0
    %v4928 = vadd.f32 %v4926, 1.0
    %v4929 = vrcp.pop %v4927
    %v4930 = vmul.f32 1.0, %v4929
    %v4931 = vrcp.pop %v4928
    %v4932 = vmul.f32 1.0, %v4931
    %v4933 = vtanh.pop %v4919
    %v4934 = vtanh.pop %v4920
    %v4937 = vrot.slane %v4784, 7
    %v4938 = vrot.slane %v4785, 7
    %v4941 = vmul.f32 %v4930, %v4937
    %v4942 = vmul.f32 %v4932, %v4938
    %4945 = vrot.lane.b32.xlu0 %v4933, 64
    %v4946 = vpop.permute.xlu0 %4945
    %4947 = vrot.lane.b32.xlu0 %v4934, 64
    %v4948 = vpop.permute.xlu0 %4947
    %v4951 = vmul.f32 %v4930, %v4946
    %v4952 = vmul.f32 %v4932, %v4948
    %4955 = vrot.lane.b32.xlu0 %v4951, 32
    %v4956 = vpop.permute.xlu0 %4955
    %4957 = vrot.lane.b32.xlu0 %v4952, 32
    %v4958 = vpop.permute.xlu0 %4957
    %v4961 = vadd.f32 %v4941, %v4956
    %v4962 = vadd.f32 %v4942, %v4958
    %v4963 = vtanh.pop %v4961
    %v4964 = vtanh.pop %v4962
    %4967 = vrot.lane.b32.xlu0 %v4963, 64
    %v4968 = vpop.permute.xlu0 %4967
    %4969 = vrot.lane.b32.xlu0 %v4964, 64
    %v4970 = vpop.permute.xlu0 %4969
    %v4973 = vmul.f32 %v4930, %v4968
    %v4974 = vmul.f32 %v4932, %v4970
    %v4975 = vmax.f32 %v4973, 0.0
    %v4976 = vmax.f32 %v4974, 0.0
    %v4979 = vcombine.high %v4975, %v4975
    %v4981 = vunpack.c.l.s4 1983009808
    %v4982 = vunpack.c.0.s8 %v4981
    %v4983 = vlaneseq
    %v4984 = vshrl.u32 %v4983, 7
    %v4985 = vsub.s32 %v4982, %v4984
    %v4986 = vrot.slane %v4979, %v4985
    %v4987 = vcombine.high %v4986, %v4986
    %v4988 = vcombine.high %v4976, %v4976
    %v4990 = vunpack.c.l.s4 1983009808
    %v4991 = vunpack.c.0.s8 %v4990
    %v4992 = vlaneseq
    %v4993 = vshrl.u32 %v4992, 7
    %v4994 = vsub.s32 %v4991, %v4993
    %v4995 = vrot.slane %v4988, %v4994
    %v4996 = vcombine.high %v4995, %v4995
    %v4997 = vrot.slane %v4987, 1
    %v4998 = vsel %vm3747, %v4997, %v4997
    %v4999 = vsel %vm3749, %v4997, %v4998
    %v5000 = vsel %vm3752, %v4996, %v4999
    %v5001 = vsel %vm3754, %v4996, %v5000
    %v5002 = vsel %vm3756, %v4996, %v5001
    %v5003 = vsel %vm3758, %v4996, %v5002
    %5005 = vst.msk [vmem:[#allocation2 + $0x2] sm:$0x3] %vm4303, %v5003
    %5006 = vrot.lane.b32.xlu0 %v5003, 32
    %v5007 = vpop.permute.xlu0 %5006
    %5009 = vst.msk [vmem:[#allocation2 + $0x4] sm:$0x3] %vm4308, %v5007
    %v5012 = vrot.slane %v3572, 7
    %v5013 = vrot.slane %v3582, 7
    %v5016 = vadd.f32 %v3490, %v5012
    %v5017 = vadd.f32 %v3500, %v5013
    %v5020 = vrot.slane %v4973, 7
    %v5021 = vrot.slane %v4974, 6
    %v5022 = vsel %vm3752, %v5021, %v5020
    %5023 = vrot.lane.b32.xlu0 %v5022, 32
    %v5024 = vpop.permute.xlu0 %5023
    %v5025 = vsel %vm3602, %v5024, 0
    %5027 = vmatprep.subr.mxu0 0.0
    %5028 = vmatpush1.msra.mxu0 0.0
    %5029 = vmatprep.subr.mxu0 0.0
    %5030 = vmatpush1.msra.mxu0 0.0
    %5031 = vmatprep.subr.mxu0 0.0
    %5032 = vmatpush1.msra.mxu0 0.0
    %5033 = vmatprep.subr.mxu0 0.0
    %5034 = vmatpush1.msra.mxu0 0.0
    %5035 = vmatprep.subr.mxu0 0.0
    %5036 = vmatpush1.msra.mxu0 0.0
    %5037 = vmatprep.subr.mxu0 0.0
    %5038 = vmatpush1.msra.mxu0 0.0
    %5039 = vmatprep.subr.mxu0 0.0
    %5040 = vmatpush1.msra.mxu0 0.0
    %5041 = vmatprep.subr.mxu0 0.0
    %5042 = vmatpush1.msra.mxu0 0.0
    %5043 = vmatprep.subr.mxu0 0.0
    %5044 = vmatpush1.msra.mxu0 0.0
    %5045 = vmatprep.subr.mxu0 0.0
    %5046 = vmatpush1.msra.mxu0 0.0
    %5047 = vmatprep.subr.mxu0 0.0
    %5048 = vmatpush1.msra.mxu0 0.0
    %5049 = vmatprep.subr.mxu0 0.0
    %5050 = vmatpush1.msra.mxu0 0.0
    %5051 = vmatprep.subr.mxu0 0.0
    %5052 = vmatpush1.msra.mxu0 %v3593
    %5053 = vmatprep.subr.mxu0 0.0
    %5054 = vmatpush1.msra.mxu0 %v3592
    %5055 = vmatprep.subr.mxu0 0.0
    %5056 = vmatpush1.msra.mxu0 %v3591
    %5057 = vmatprep.subr.mxu0 0.0
    %5058 = vmatpush1.msra.mxu0 %v3590
    %5059 = vmatprep.subr.mxu0 0.0
    %5060 = vmatpush2.msra.mxu0 0.0
    %5061 = vmatprep.subr.mxu0 0.0
    %5062 = vmatpush2.msra.mxu0 0.0
    %5063 = vmatprep.subr.mxu0 0.0
    %5064 = vmatpush2.msra.mxu0 0.0
    %5065 = vmatprep.subr.mxu0 0.0
    %5066 = vmatpush2.msra.mxu0 0.0
    %5067 = vmatprep.subr.mxu0 0.0
    %5068 = vmatpush2.msra.mxu0 0.0
    %5069 = vmatprep.subr.mxu0 0.0
    %5070 = vmatpush2.msra.mxu0 0.0
    %5071 = vmatprep.subr.mxu0 0.0
    %5072 = vmatpush2.msra.mxu0 0.0
    %5073 = vmatprep.subr.mxu0 0.0
    %5074 = vmatpush2.msra.mxu0 0.0
    %5075 = vmatprep.subr.mxu0 0.0
    %5076 = vmatpush2.msra.mxu0 0.0
    %5077 = vmatprep.subr.mxu0 0.0
    %5078 = vmatpush2.msra.mxu0 0.0
    %5079 = vmatprep.subr.mxu0 0.0
    %5080 = vmatpush2.msra.mxu0 0.0
    %5081 = vmatprep.subr.mxu0 0.0
    %5082 = vmatpush2.msra.mxu0 0.0
    %5083 = vmatprep.subr.mxu0 0.0
    %5084 = vmatpush2.msra.mxu0 0.0
    %5085 = vmatprep.subr.mxu0 0.0
    %5086 = vmatpush2.msra.mxu0 0.0
    %5087 = vmatprep.subr.mxu0 0.0
    %5088 = vmatpush2.msra.mxu0 0.0
    %5089 = vmatprep.subr.mxu0 0.0
    %5090 = vmatpush2.msra.mxu0 0.0
    %5091 = vmatprep.mubr.f32.mxu0 0.0
    %5092 = vmatmul.mubr.f32.gmra.mxu0 %v5025
    %v5093 = vpop.f32.mrf.mxu0
    %v5094 = vadd.f32 0.0, %v5093
    %v5095 = vpop.f32.mrf.mxu0
    %5096 = vdwg.mxu0
    %v5098 = vrot.slane %v5094, 1
    %v5101 = vadd.f32 %v5016, %v5094
    %v5102 = vadd.f32 %v5017, %v5098
    %v5103 = vxor.u32 %v5101, 2147483648
    %v5104 = vxor.u32 %v5102, 2147483648
    %v5105 = vmul.f32 %v5103, 1.442695
    %v5106 = vpow.pop %v5105
    %v5107 = vmul.f32 %v5104, 1.442695
    %v5108 = vpow.pop %v5107
    %v5109 = vadd.f32 %v5106, 1.0
    %v5110 = vadd.f32 %v5108, 1.0
    %v5111 = vrcp.pop %v5109
    %v5112 = vmul.f32 1.0, %v5111
    %v5113 = vrcp.pop %v5110
    %v5114 = vmul.f32 1.0, %v5113
    %v5115 = vtanh.pop %v5101
    %v5116 = vtanh.pop %v5102
    %v5119 = vrot.slane %v4961, 7
    %v5120 = vrot.slane %v4962, 7
    %v5123 = vmul.f32 %v5112, %v5119
    %v5124 = vmul.f32 %v5114, %v5120
    %5127 = vrot.lane.b32.xlu0 %v5115, 64
    %v5128 = vpop.permute.xlu0 %5127
    %5129 = vrot.lane.b32.xlu0 %v5116, 64
    %v5130 = vpop.permute.xlu0 %5129
    %v5133 = vmul.f32 %v5112, %v5128
    %v5134 = vmul.f32 %v5114, %v5130
    %5137 = vrot.lane.b32.xlu0 %v5133, 32
    %v5138 = vpop.permute.xlu0 %5137
    %5139 = vrot.lane.b32.xlu0 %v5134, 32
    %v5140 = vpop.permute.xlu0 %5139
    %v5143 = vadd.f32 %v5123, %v5138
    %v5144 = vadd.f32 %v5124, %v5140
    %v5145 = vtanh.pop %v5143
    %v5146 = vtanh.pop %v5144
    %5149 = vrot.lane.b32.xlu0 %v5145, 64
    %v5150 = vpop.permute.xlu0 %5149
    %5151 = vrot.lane.b32.xlu0 %v5146, 64
    %v5152 = vpop.permute.xlu0 %5151
    %v5155 = vmul.f32 %v5112, %v5150
    %v5156 = vmul.f32 %v5114, %v5152
    %v5157 = vmax.f32 %v5155, 0.0
    %v5158 = vmax.f32 %v5156, 0.0
    %v5162 = vunpack.c.l.s4 1983009808
    %v5163 = vunpack.c.0.s8 %v5162
    %v5164 = vlaneseq
    %v5165 = vshrl.u32 %v5164, 7
    %v5166 = vsub.s32 %v5163, %v5165
    %v5167 = vrot.slane %v5157, %v5166
    %v5169 = vunpack.c.l.s4 1983009808
    %v5170 = vunpack.c.0.s8 %v5169
    %v5171 = vlaneseq
    %v5172 = vshrl.u32 %v5171, 7
    %v5173 = vsub.s32 %v5170, %v5172
    %v5174 = vrot.slane %v5158, %v5173
    %v5175 = vsel %vm3747, %v5167, %v5167
    %v5176 = vsel %vm3749, %v5167, %v5175
    %v5177 = vrot.slane %v5174, 7
    %v5178 = vsel %vm3752, %v5177, %v5176
    %v5179 = vsel %vm3754, %v5177, %v5178
    %v5180 = vsel %vm3756, %v5177, %v5179
    %v5181 = vsel %vm3758, %v5177, %v5180
    %5182 = vrot.lane.b32.xlu0 %v5181, 32
    %v5183 = vpop.permute.xlu0 %5182
    %5185 = vst.msk [vmem:[#allocation2 + $0x4] sm:$0x3] %vm3763, %v5183
    %5187 = vst.msk [vmem:[#allocation2 + $0x2] sm:$0x3] %vm3766, %v5181
    %v5188 = vrot.slane %v3572, 5
    %v5189 = vrot.slane %v3582, 5
    %v5192 = vadd.f32 %v3490, %v5188
    %v5193 = vadd.f32 %v3500, %v5189
    %v5196 = vrot.slane %v5156, 7
    %v5197 = vsel %vm3752, %v5196, %v5155
    %5198 = vrot.lane.b32.xlu0 %v5197, 32
    %v5199 = vpop.permute.xlu0 %5198
    %v5200 = vsel %vm3602, %v5199, 0
    %5202 = vmatprep.subr.mxu0 0.0
    %5203 = vmatpush1.msra.mxu0 0.0
    %5204 = vmatprep.subr.mxu0 0.0
    %5205 = vmatpush1.msra.mxu0 0.0
    %5206 = vmatprep.subr.mxu0 0.0
    %5207 = vmatpush1.msra.mxu0 0.0
    %5208 = vmatprep.subr.mxu0 0.0
    %5209 = vmatpush1.msra.mxu0 0.0
    %5210 = vmatprep.subr.mxu0 0.0
    %5211 = vmatpush1.msra.mxu0 0.0
    %5212 = vmatprep.subr.mxu0 0.0
    %5213 = vmatpush1.msra.mxu0 0.0
    %5214 = vmatprep.subr.mxu0 0.0
    %5215 = vmatpush1.msra.mxu0 0.0
    %5216 = vmatprep.subr.mxu0 0.0
    %5217 = vmatpush1.msra.mxu0 0.0
    %5218 = vmatprep.subr.mxu0 0.0
    %5219 = vmatpush1.msra.mxu0 0.0
    %5220 = vmatprep.subr.mxu0 0.0
    %5221 = vmatpush1.msra.mxu0 0.0
    %5222 = vmatprep.subr.mxu0 0.0
    %5223 = vmatpush1.msra.mxu0 0.0
    %5224 = vmatprep.subr.mxu0 0.0
    %5225 = vmatpush1.msra.mxu0 0.0
    %5226 = vmatprep.subr.mxu0 0.0
    %5227 = vmatpush1.msra.mxu0 %v3593
    %5228 = vmatprep.subr.mxu0 0.0
    %5229 = vmatpush1.msra.mxu0 %v3592
    %5230 = vmatprep.subr.mxu0 0.0
    %5231 = vmatpush1.msra.mxu0 %v3591
    %5232 = vmatprep.subr.mxu0 0.0
    %5233 = vmatpush1.msra.mxu0 %v3590
    %5234 = vmatprep.subr.mxu0 0.0
    %5235 = vmatpush2.msra.mxu0 0.0
    %5236 = vmatprep.subr.mxu0 0.0
    %5237 = vmatpush2.msra.mxu0 0.0
    %5238 = vmatprep.subr.mxu0 0.0
    %5239 = vmatpush2.msra.mxu0 0.0
    %5240 = vmatprep.subr.mxu0 0.0
    %5241 = vmatpush2.msra.mxu0 0.0
    %5242 = vmatprep.subr.mxu0 0.0
    %5243 = vmatpush2.msra.mxu0 0.0
    %5244 = vmatprep.subr.mxu0 0.0
    %5245 = vmatpush2.msra.mxu0 0.0
    %5246 = vmatprep.subr.mxu0 0.0
    %5247 = vmatpush2.msra.mxu0 0.0
    %5248 = vmatprep.subr.mxu0 0.0
    %5249 = vmatpush2.msra.mxu0 0.0
    %5250 = vmatprep.subr.mxu0 0.0
    %5251 = vmatpush2.msra.mxu0 0.0
    %5252 = vmatprep.subr.mxu0 0.0
    %5253 = vmatpush2.msra.mxu0 0.0
    %5254 = vmatprep.subr.mxu0 0.0
    %5255 = vmatpush2.msra.mxu0 0.0
    %5256 = vmatprep.subr.mxu0 0.0
    %5257 = vmatpush2.msra.mxu0 0.0
    %5258 = vmatprep.subr.mxu0 0.0
    %5259 = vmatpush2.msra.mxu0 0.0
    %5260 = vmatprep.subr.mxu0 0.0
    %5261 = vmatpush2.msra.mxu0 0.0
    %5262 = vmatprep.subr.mxu0 0.0
    %5263 = vmatpush2.msra.mxu0 0.0
    %5264 = vmatprep.subr.mxu0 0.0
    %5265 = vmatpush2.msra.mxu0 0.0
    %5266 = vmatprep.mubr.f32.mxu0 0.0
    %5267 = vmatmul.mubr.f32.gmra.mxu0 %v5200
    %v5268 = vpop.f32.mrf.mxu0
    %v5269 = vadd.f32 0.0, %v5268
    %v5270 = vpop.f32.mrf.mxu0
    %5271 = vdwg.mxu0
    %v5273 = vrot.slane %v5269, 7
    %v5276 = vadd.f32 %v5192, %v5273
    %v5277 = vadd.f32 %v5193, %v5269
    %v5278 = vxor.u32 %v5276, 2147483648
    %v5279 = vxor.u32 %v5277, 2147483648
    %v5280 = vmul.f32 %v5278, 1.442695
    %v5281 = vpow.pop %v5280
    %v5282 = vmul.f32 %v5279, 1.442695
    %v5283 = vpow.pop %v5282
    %v5284 = vadd.f32 %v5281, 1.0
    %v5285 = vadd.f32 %v5283, 1.0
    %v5286 = vrcp.pop %v5284
    %v5287 = vmul.f32 1.0, %v5286
    %v5288 = vrcp.pop %v5285
    %v5289 = vmul.f32 1.0, %v5288
    %v5290 = vtanh.pop %v5276
    %v5291 = vtanh.pop %v5277
    %v5294 = vrot.slane %v5143, 7
    %v5295 = vrot.slane %v5144, 7
    %v5298 = vmul.f32 %v5287, %v5294
    %v5299 = vmul.f32 %v5289, %v5295
    %5302 = vrot.lane.b32.xlu0 %v5290, 64
    %v5303 = vpop.permute.xlu0 %5302
    %5304 = vrot.lane.b32.xlu0 %v5291, 64
    %v5305 = vpop.permute.xlu0 %5304
    %v5308 = vmul.f32 %v5287, %v5303
    %v5309 = vmul.f32 %v5289, %v5305
    %5312 = vrot.lane.b32.xlu0 %v5308, 32
    %v5313 = vpop.permute.xlu0 %5312
    %5314 = vrot.lane.b32.xlu0 %v5309, 32
    %v5315 = vpop.permute.xlu0 %5314
    %v5318 = vadd.f32 %v5298, %v5313
    %v5319 = vadd.f32 %v5299, %v5315
    %v5320 = vtanh.pop %v5318
    %v5321 = vtanh.pop %v5319
    %5324 = vrot.lane.b32.xlu0 %v5320, 64
    %v5325 = vpop.permute.xlu0 %5324
    %5326 = vrot.lane.b32.xlu0 %v5321, 64
    %v5327 = vpop.permute.xlu0 %5326
    %v5330 = vmul.f32 %v5287, %v5325
    %v5331 = vmul.f32 %v5289, %v5327
    %v5332 = vmax.f32 %v5330, 0.0
    %v5333 = vmax.f32 %v5331, 0.0
    %v5337 = vunpack.c.l.s4 1983009808
    %v5338 = vunpack.c.0.s8 %v5337
    %v5339 = vlaneseq
    %v5340 = vshrl.u32 %v5339, 7
    %v5341 = vsub.s32 %v5338, %v5340
    %v5342 = vrot.slane %v5332, %v5341
    %v5344 = vunpack.c.l.s4 1983009808
    %v5345 = vunpack.c.0.s8 %v5344
    %v5346 = vlaneseq
    %v5347 = vshrl.u32 %v5346, 7
    %v5348 = vsub.s32 %v5345, %v5347
    %v5349 = vrot.slane %v5333, %v5348
    %v5350 = vrot.slane %v5342, 1
    %v5351 = vsel %vm3747, %v5350, %v5350
    %v5352 = vsel %vm3749, %v5350, %v5351
    %v5353 = vsel %vm3752, %v5349, %v5352
    %v5354 = vsel %vm3754, %v5349, %v5353
    %v5355 = vsel %vm3756, %v5349, %v5354
    %v5356 = vsel %vm3758, %v5349, %v5355
    %5357 = vrot.lane.b32.xlu0 %v5356, 64
    %v5358 = vpop.permute.xlu0 %5357
    %5360 = vst.msk [vmem:[#allocation2 + $0x4] sm:$0x3] %vm3940, %v5358
    %5361 = vrot.lane.b32.xlu0 %v5356, 96
    %v5362 = vpop.permute.xlu0 %5361
    %5364 = vst.msk [vmem:[#allocation2 + $0x2] sm:$0x3] %vm3945, %v5362
    %v5365 = vrot.slane %v3572, 3
    %v5366 = vrot.slane %v3582, 3
    %v5369 = vadd.f32 %v3490, %v5365
    %v5370 = vadd.f32 %v3500, %v5366
    %v5373 = vrot.slane %v5330, 1
    %v5374 = vsel %vm3752, %v5331, %v5373
    %5375 = vrot.lane.b32.xlu0 %v5374, 32
    %v5376 = vpop.permute.xlu0 %5375
    %v5377 = vsel %vm3602, %v5376, 0
    %5379 = vmatprep.subr.mxu0 0.0
    %5380 = vmatpush1.msra.mxu0 0.0
    %5381 = vmatprep.subr.mxu0 0.0
    %5382 = vmatpush1.msra.mxu0 0.0
    %5383 = vmatprep.subr.mxu0 0.0
    %5384 = vmatpush1.msra.mxu0 0.0
    %5385 = vmatprep.subr.mxu0 0.0
    %5386 = vmatpush1.msra.mxu0 0.0
    %5387 = vmatprep.subr.mxu0 0.0
    %5388 = vmatpush1.msra.mxu0 0.0
    %5389 = vmatprep.subr.mxu0 0.0
    %5390 = vmatpush1.msra.mxu0 0.0
    %5391 = vmatprep.subr.mxu0 0.0
    %5392 = vmatpush1.msra.mxu0 0.0
    %5393 = vmatprep.subr.mxu0 0.0
    %5394 = vmatpush1.msra.mxu0 0.0
    %5395 = vmatprep.subr.mxu0 0.0
    %5396 = vmatpush1.msra.mxu0 0.0
    %5397 = vmatprep.subr.mxu0 0.0
    %5398 = vmatpush1.msra.mxu0 0.0
    %5399 = vmatprep.subr.mxu0 0.0
    %5400 = vmatpush1.msra.mxu0 0.0
    %5401 = vmatprep.subr.mxu0 0.0
    %5402 = vmatpush1.msra.mxu0 0.0
    %5403 = vmatprep.subr.mxu0 0.0
    %5404 = vmatpush1.msra.mxu0 %v3593
    %5405 = vmatprep.subr.mxu0 0.0
    %5406 = vmatpush1.msra.mxu0 %v3592
    %5407 = vmatprep.subr.mxu0 0.0
    %5408 = vmatpush1.msra.mxu0 %v3591
    %5409 = vmatprep.subr.mxu0 0.0
    %5410 = vmatpush1.msra.mxu0 %v3590
    %5411 = vmatprep.subr.mxu0 0.0
    %5412 = vmatpush2.msra.mxu0 0.0
    %5413 = vmatprep.subr.mxu0 0.0
    %5414 = vmatpush2.msra.mxu0 0.0
    %5415 = vmatprep.subr.mxu0 0.0
    %5416 = vmatpush2.msra.mxu0 0.0
    %5417 = vmatprep.subr.mxu0 0.0
    %5418 = vmatpush2.msra.mxu0 0.0
    %5419 = vmatprep.subr.mxu0 0.0
    %5420 = vmatpush2.msra.mxu0 0.0
    %5421 = vmatprep.subr.mxu0 0.0
    %5422 = vmatpush2.msra.mxu0 0.0
    %5423 = vmatprep.subr.mxu0 0.0
    %5424 = vmatpush2.msra.mxu0 0.0
    %5425 = vmatprep.subr.mxu0 0.0
    %5426 = vmatpush2.msra.mxu0 0.0
    %5427 = vmatprep.subr.mxu0 0.0
    %5428 = vmatpush2.msra.mxu0 0.0
    %5429 = vmatprep.subr.mxu0 0.0
    %5430 = vmatpush2.msra.mxu0 0.0
    %5431 = vmatprep.subr.mxu0 0.0
    %5432 = vmatpush2.msra.mxu0 0.0
    %5433 = vmatprep.subr.mxu0 0.0
    %5434 = vmatpush2.msra.mxu0 0.0
    %5435 = vmatprep.subr.mxu0 0.0
    %5436 = vmatpush2.msra.mxu0 0.0
    %5437 = vmatprep.subr.mxu0 0.0
    %5438 = vmatpush2.msra.mxu0 0.0
    %5439 = vmatprep.subr.mxu0 0.0
    %5440 = vmatpush2.msra.mxu0 0.0
    %5441 = vmatprep.subr.mxu0 0.0
    %5442 = vmatpush2.msra.mxu0 0.0
    %5443 = vmatprep.mubr.f32.mxu0 0.0
    %5444 = vmatmul.mubr.f32.gmra.mxu0 %v5377
    %v5445 = vpop.f32.mrf.mxu0
    %v5446 = vadd.f32 0.0, %v5445
    %v5447 = vpop.f32.mrf.mxu0
    %5448 = vdwg.mxu0
    %v5450 = vrot.slane %v5446, 6
    %v5451 = vrot.slane %v5446, 7
    %v5454 = vadd.f32 %v5369, %v5450
    %v5455 = vadd.f32 %v5370, %v5451
    %v5456 = vxor.u32 %v5454, 2147483648
    %v5457 = vxor.u32 %v5455, 2147483648
    %v5458 = vmul.f32 %v5456, 1.442695
    %v5459 = vpow.pop %v5458
    %v5460 = vmul.f32 %v5457, 1.442695
    %v5461 = vpow.pop %v5460
    %v5462 = vadd.f32 %v5459, 1.0
    %v5463 = vadd.f32 %v5461, 1.0
    %v5464 = vrcp.pop %v5462
    %v5465 = vmul.f32 1.0, %v5464
    %v5466 = vrcp.pop %v5463
    %v5467 = vmul.f32 1.0, %v5466
    %v5468 = vtanh.pop %v5454
    %v5469 = vtanh.pop %v5455
    %v5472 = vrot.slane %v5318, 7
    %v5473 = vrot.slane %v5319, 7
    %v5476 = vmul.f32 %v5465, %v5472
    %v5477 = vmul.f32 %v5467, %v5473
    %5480 = vrot.lane.b32.xlu0 %v5468, 64
    %v5481 = vpop.permute.xlu0 %5480
    %5482 = vrot.lane.b32.xlu0 %v5469, 64
    %v5483 = vpop.permute.xlu0 %5482
    %v5486 = vmul.f32 %v5465, %v5481
    %v5487 = vmul.f32 %v5467, %v5483
    %5490 = vrot.lane.b32.xlu0 %v5486, 32
    %v5491 = vpop.permute.xlu0 %5490
    %5492 = vrot.lane.b32.xlu0 %v5487, 32
    %v5493 = vpop.permute.xlu0 %5492
    %v5496 = vadd.f32 %v5476, %v5491
    %v5497 = vadd.f32 %v5477, %v5493
    %v5498 = vtanh.pop %v5496
    %v5499 = vtanh.pop %v5497
    %5502 = vrot.lane.b32.xlu0 %v5498, 64
    %v5503 = vpop.permute.xlu0 %5502
    %5504 = vrot.lane.b32.xlu0 %v5499, 64
    %v5505 = vpop.permute.xlu0 %5504
    %v5508 = vmul.f32 %v5465, %v5503
    %v5509 = vmul.f32 %v5467, %v5505
    %v5510 = vmax.f32 %v5508, 0.0
    %v5511 = vmax.f32 %v5509, 0.0
    %v5515 = vunpack.c.l.s4 1983009808
    %v5516 = vunpack.c.0.s8 %v5515
    %v5517 = vlaneseq
    %v5518 = vshrl.u32 %v5517, 7
    %v5519 = vsub.s32 %v5516, %v5518
    %v5520 = vrot.slane %v5510, %v5519
    %v5521 = vcombine.high %v5520, %v5520
    %v5523 = vunpack.c.l.s4 1983009808
    %v5524 = vunpack.c.0.s8 %v5523
    %v5525 = vlaneseq
    %v5526 = vshrl.u32 %v5525, 7
    %v5527 = vsub.s32 %v5524, %v5526
    %v5528 = vrot.slane %v5511, %v5527
    %v5529 = vcombine.high %v5528, %v5528
    %v5530 = vsel %vm3747, %v5521, %v5521
    %v5531 = vsel %vm3749, %v5521, %v5530
    %v5532 = vrot.slane %v5529, 7
    %v5533 = vsel %vm3752, %v5532, %v5531
    %v5534 = vsel %vm3754, %v5532, %v5533
    %v5535 = vsel %vm3756, %v5532, %v5534
    %v5536 = vsel %vm3758, %v5532, %v5535
    %5537 = vrot.lane.b32.xlu0 %v5536, 96
    %v5538 = vpop.permute.xlu0 %5537
    %5540 = vst.msk [vmem:[#allocation2 + $0x4] sm:$0x3] %vm4122, %v5538
    %5541 = vrot.lane.b32.xlu0 %v5536, 64
    %v5542 = vpop.permute.xlu0 %5541
    %5544 = vst.msk [vmem:[#allocation2 + $0x2] sm:$0x3] %vm4127, %v5542
    %v5545 = vrot.slane %v3572, 1
    %v5546 = vrot.slane %v3582, 1
    %v5549 = vadd.f32 %v3490, %v5545
    %v5550 = vadd.f32 %v3500, %v5546
    %v5553 = vrot.slane %v5508, 2
    %v5554 = vrot.slane %v5509, 1
    %v5555 = vsel %vm3752, %v5554, %v5553
    %5556 = vrot.lane.b32.xlu0 %v5555, 32
    %v5557 = vpop.permute.xlu0 %5556
    %v5558 = vsel %vm3602, %v5557, 0
    %5560 = vmatprep.subr.mxu0 0.0
    %5561 = vmatpush1.msra.mxu0 0.0
    %5562 = vmatprep.subr.mxu0 0.0
    %5563 = vmatpush1.msra.mxu0 0.0
    %5564 = vmatprep.subr.mxu0 0.0
    %5565 = vmatpush1.msra.mxu0 0.0
    %5566 = vmatprep.subr.mxu0 0.0
    %5567 = vmatpush1.msra.mxu0 0.0
    %5568 = vmatprep.subr.mxu0 0.0
    %5569 = vmatpush1.msra.mxu0 0.0
    %5570 = vmatprep.subr.mxu0 0.0
    %5571 = vmatpush1.msra.mxu0 0.0
    %5572 = vmatprep.subr.mxu0 0.0
    %5573 = vmatpush1.msra.mxu0 0.0
    %5574 = vmatprep.subr.mxu0 0.0
    %5575 = vmatpush1.msra.mxu0 0.0
    %5576 = vmatprep.subr.mxu0 0.0
    %5577 = vmatpush1.msra.mxu0 0.0
    %5578 = vmatprep.subr.mxu0 0.0
    %5579 = vmatpush1.msra.mxu0 0.0
    %5580 = vmatprep.subr.mxu0 0.0
    %5581 = vmatpush1.msra.mxu0 0.0
    %5582 = vmatprep.subr.mxu0 0.0
    %5583 = vmatpush1.msra.mxu0 0.0
    %5584 = vmatprep.subr.mxu0 0.0
    %5585 = vmatpush1.msra.mxu0 %v3593
    %5586 = vmatprep.subr.mxu0 0.0
    %5587 = vmatpush1.msra.mxu0 %v3592
    %5588 = vmatprep.subr.mxu0 0.0
    %5589 = vmatpush1.msra.mxu0 %v3591
    %5590 = vmatprep.subr.mxu0 0.0
    %5591 = vmatpush1.msra.mxu0 %v3590
    %5592 = vmatprep.subr.mxu0 0.0
    %5593 = vmatpush2.msra.mxu0 0.0
    %5594 = vmatprep.subr.mxu0 0.0
    %5595 = vmatpush2.msra.mxu0 0.0
    %5596 = vmatprep.subr.mxu0 0.0
    %5597 = vmatpush2.msra.mxu0 0.0
    %5598 = vmatprep.subr.mxu0 0.0
    %5599 = vmatpush2.msra.mxu0 0.0
    %5600 = vmatprep.subr.mxu0 0.0
    %5601 = vmatpush2.msra.mxu0 0.0
    %5602 = vmatprep.subr.mxu0 0.0
    %5603 = vmatpush2.msra.mxu0 0.0
    %5604 = vmatprep.subr.mxu0 0.0
    %5605 = vmatpush2.msra.mxu0 0.0
    %5606 = vmatprep.subr.mxu0 0.0
    %5607 = vmatpush2.msra.mxu0 0.0
    %5608 = vmatprep.subr.mxu0 0.0
    %5609 = vmatpush2.msra.mxu0 0.0
    %5610 = vmatprep.subr.mxu0 0.0
    %5611 = vmatpush2.msra.mxu0 0.0
    %5612 = vmatprep.subr.mxu0 0.0
    %5613 = vmatpush2.msra.mxu0 0.0
    %5614 = vmatprep.subr.mxu0 0.0
    %5615 = vmatpush2.msra.mxu0 0.0
    %5616 = vmatprep.subr.mxu0 0.0
    %5617 = vmatpush2.msra.mxu0 0.0
    %5618 = vmatprep.subr.mxu0 0.0
    %5619 = vmatpush2.msra.mxu0 0.0
    %5620 = vmatprep.subr.mxu0 0.0
    %5621 = vmatpush2.msra.mxu0 0.0
    %5622 = vmatprep.subr.mxu0 0.0
    %5623 = vmatpush2.msra.mxu0 0.0
    %5624 = vmatprep.mubr.f32.mxu0 0.0
    %5625 = vmatmul.mubr.f32.gmra.mxu0 %v5558
    %v5626 = vpop.f32.mrf.mxu0
    %v5627 = vadd.f32 0.0, %v5626
    %v5628 = vpop.f32.mrf.mxu0
    %5629 = vdwg.mxu0
    %v5631 = vrot.slane %v5627, 5
    %v5632 = vrot.slane %v5627, 6
    %v5635 = vadd.f32 %v5549, %v5631
    %v5636 = vadd.f32 %v5550, %v5632
    %v5637 = vxor.u32 %v5635, 2147483648
    %v5638 = vxor.u32 %v5636, 2147483648
    %v5639 = vmul.f32 %v5637, 1.442695
    %v5640 = vpow.pop %v5639
    %v5641 = vmul.f32 %v5638, 1.442695
    %v5642 = vpow.pop %v5641
    %v5643 = vadd.f32 %v5640, 1.0
    %v5644 = vadd.f32 %v5642, 1.0
    %v5645 = vrcp.pop %v5643
    %v5646 = vmul.f32 1.0, %v5645
    %v5647 = vrcp.pop %v5644
    %v5648 = vmul.f32 1.0, %v5647
    %v5649 = vtanh.pop %v5635
    %v5650 = vtanh.pop %v5636
    %v5653 = vrot.slane %v5496, 7
    %v5654 = vrot.slane %v5497, 7
    %v5657 = vmul.f32 %v5646, %v5653
    %v5658 = vmul.f32 %v5648, %v5654
    %5661 = vrot.lane.b32.xlu0 %v5649, 64
    %v5662 = vpop.permute.xlu0 %5661
    %5663 = vrot.lane.b32.xlu0 %v5650, 64
    %v5664 = vpop.permute.xlu0 %5663
    %v5667 = vmul.f32 %v5646, %v5662
    %v5668 = vmul.f32 %v5648, %v5664
    %5671 = vrot.lane.b32.xlu0 %v5667, 32
    %v5672 = vpop.permute.xlu0 %5671
    %5673 = vrot.lane.b32.xlu0 %v5668, 32
    %v5674 = vpop.permute.xlu0 %5673
    %v5677 = vadd.f32 %v5657, %v5672
    %v5678 = vadd.f32 %v5658, %v5674
    %v5679 = vtanh.pop %v5677
    %v5680 = vtanh.pop %v5678
    %5683 = vrot.lane.b32.xlu0 %v5679, 64
    %v5684 = vpop.permute.xlu0 %5683
    %5685 = vrot.lane.b32.xlu0 %v5680, 64
    %v5686 = vpop.permute.xlu0 %5685
    %v5689 = vmul.f32 %v5646, %v5684
    %v5690 = vmul.f32 %v5648, %v5686
    %v5691 = vmax.f32 %v5689, 0.0
    %v5692 = vmax.f32 %v5690, 0.0
    %v5696 = vunpack.c.l.s4 1983009808
    %v5697 = vunpack.c.0.s8 %v5696
    %v5698 = vlaneseq
    %v5699 = vshrl.u32 %v5698, 7
    %v5700 = vsub.s32 %v5697, %v5699
    %v5701 = vrot.slane %v5691, %v5700
    %v5702 = vcombine.high %v5701, %v5701
    %v5704 = vunpack.c.l.s4 1983009808
    %v5705 = vunpack.c.0.s8 %v5704
    %v5706 = vlaneseq
    %v5707 = vshrl.u32 %v5706, 7
    %v5708 = vsub.s32 %v5705, %v5707
    %v5709 = vrot.slane %v5692, %v5708
    %v5710 = vcombine.high %v5709, %v5709
    %v5711 = vrot.slane %v5702, 1
    %v5712 = vsel %vm3747, %v5711, %v5711
    %v5713 = vsel %vm3749, %v5711, %v5712
    %v5714 = vsel %vm3752, %v5710, %v5713
    %v5715 = vsel %vm3754, %v5710, %v5714
    %v5716 = vsel %vm3756, %v5710, %v5715
    %v5717 = vsel %vm3758, %v5710, %v5716
    %5719 = vst.msk [vmem:[#allocation2 + $0x4] sm:$0x3] %vm4303, %v5717
    %5720 = vrot.lane.b32.xlu0 %v5717, 32
    %v5721 = vpop.permute.xlu0 %5720
    %5723 = vst.msk [vmem:[#allocation2 + $0x2] sm:$0x3] %vm4308, %v5721
    %v5726 = vrot.slane %v5689, 3
    %v5727 = vrot.slane %v5690, 2
    %v5728 = vsel %vm3752, %v5727, %v5726
    %5729 = vrot.lane.b32.xlu0 %v5728, 32
    %v5730 = vpop.permute.xlu0 %5729
    %v5731 = vsel %vm3602, %v5730, 0
    %5733 = vmatprep.subr.mxu0 0.0
    %5734 = vmatpush1.msra.mxu0 0.0
    %5735 = vmatprep.subr.mxu0 0.0
    %5736 = vmatpush1.msra.mxu0 0.0
    %5737 = vmatprep.subr.mxu0 0.0
    %5738 = vmatpush1.msra.mxu0 0.0
    %5739 = vmatprep.subr.mxu0 0.0
    %5740 = vmatpush1.msra.mxu0 0.0
    %5741 = vmatprep.subr.mxu0 0.0
    %5742 = vmatpush1.msra.mxu0 0.0
    %5743 = vmatprep.subr.mxu0 0.0
    %5744 = vmatpush1.msra.mxu0 0.0
    %5745 = vmatprep.subr.mxu0 0.0
    %5746 = vmatpush1.msra.mxu0 0.0
    %5747 = vmatprep.subr.mxu0 0.0
    %5748 = vmatpush1.msra.mxu0 0.0
    %5749 = vmatprep.subr.mxu0 0.0
    %5750 = vmatpush1.msra.mxu0 0.0
    %5751 = vmatprep.subr.mxu0 0.0
    %5752 = vmatpush1.msra.mxu0 0.0
    %5753 = vmatprep.subr.mxu0 0.0
    %5754 = vmatpush1.msra.mxu0 0.0
    %5755 = vmatprep.subr.mxu0 0.0
    %5756 = vmatpush1.msra.mxu0 0.0
    %5757 = vmatprep.subr.mxu0 0.0
    %5758 = vmatpush1.msra.mxu0 %v3593
    %5759 = vmatprep.subr.mxu0 0.0
    %5760 = vmatpush1.msra.mxu0 %v3592
    %5761 = vmatprep.subr.mxu0 0.0
    %5762 = vmatpush1.msra.mxu0 %v3591
    %5763 = vmatprep.subr.mxu0 0.0
    %5764 = vmatpush1.msra.mxu0 %v3590
    %5765 = vmatprep.subr.mxu0 0.0
    %5766 = vmatpush2.msra.mxu0 0.0
    %5767 = vmatprep.subr.mxu0 0.0
    %5768 = vmatpush2.msra.mxu0 0.0
    %5769 = vmatprep.subr.mxu0 0.0
    %5770 = vmatpush2.msra.mxu0 0.0
    %5771 = vmatprep.subr.mxu0 0.0
    %5772 = vmatpush2.msra.mxu0 0.0
    %5773 = vmatprep.subr.mxu0 0.0
    %5774 = vmatpush2.msra.mxu0 0.0
    %5775 = vmatprep.subr.mxu0 0.0
    %5776 = vmatpush2.msra.mxu0 0.0
    %5777 = vmatprep.subr.mxu0 0.0
    %5778 = vmatpush2.msra.mxu0 0.0
    %5779 = vmatprep.subr.mxu0 0.0
    %5780 = vmatpush2.msra.mxu0 0.0
    %5781 = vmatprep.subr.mxu0 0.0
    %5782 = vmatpush2.msra.mxu0 0.0
    %5783 = vmatprep.subr.mxu0 0.0
    %5784 = vmatpush2.msra.mxu0 0.0
    %5785 = vmatprep.subr.mxu0 0.0
    %5786 = vmatpush2.msra.mxu0 0.0
    %5787 = vmatprep.subr.mxu0 0.0
    %5788 = vmatpush2.msra.mxu0 0.0
    %5789 = vmatprep.subr.mxu0 0.0
    %5790 = vmatpush2.msra.mxu0 0.0
    %5791 = vmatprep.subr.mxu0 0.0
    %5792 = vmatpush2.msra.mxu0 0.0
    %5793 = vmatprep.subr.mxu0 0.0
    %5794 = vmatpush2.msra.mxu0 0.0
    %5795 = vmatprep.subr.mxu0 0.0
    %5796 = vmatpush2.msra.mxu0 0.0
    %5797 = vmatprep.mubr.f32.mxu0 0.0
    %5798 = vmatmul.mubr.f32.gmra.mxu0 %v5731
    %v5799 = vpop.f32.mrf.mxu0
    %v5800 = vadd.f32 0.0, %v5799
    %v5801 = vpop.f32.mrf.mxu0
    %5802 = vdwg.mxu0
    %v5804 = vrot.slane %v5800, 4
    %v5805 = vrot.slane %v5800, 5
    %v5808 = vadd.f32 %v5016, %v5804
    %v5809 = vadd.f32 %v5017, %v5805
    %v5810 = vxor.u32 %v5808, 2147483648
    %v5811 = vxor.u32 %v5809, 2147483648
    %v5812 = vmul.f32 %v5810, 1.442695
    %v5813 = vpow.pop %v5812
    %v5814 = vmul.f32 %v5811, 1.442695
    %v5815 = vpow.pop %v5814
    %v5816 = vadd.f32 %v5813, 1.0
    %v5817 = vadd.f32 %v5815, 1.0
    %v5818 = vrcp.pop %v5816
    %v5819 = vmul.f32 1.0, %v5818
    %v5820 = vrcp.pop %v5817
    %v5821 = vmul.f32 1.0, %v5820
    %v5822 = vtanh.pop %v5808
    %v5823 = vtanh.pop %v5809
    %v5826 = vrot.slane %v5677, 7
    %v5827 = vrot.slane %v5678, 7
    %v5830 = vmul.f32 %v5819, %v5826
    %v5831 = vmul.f32 %v5821, %v5827
    %5834 = vrot.lane.b32.xlu0 %v5822, 64
    %v5835 = vpop.permute.xlu0 %5834
    %5836 = vrot.lane.b32.xlu0 %v5823, 64
    %v5837 = vpop.permute.xlu0 %5836
    %v5840 = vmul.f32 %v5819, %v5835
    %v5841 = vmul.f32 %v5821, %v5837
    %5844 = vrot.lane.b32.xlu0 %v5840, 32
    %v5845 = vpop.permute.xlu0 %5844
    %5846 = vrot.lane.b32.xlu0 %v5841, 32
    %v5847 = vpop.permute.xlu0 %5846
    %v5850 = vadd.f32 %v5830, %v5845
    %v5851 = vadd.f32 %v5831, %v5847
    %v5852 = vtanh.pop %v5850
    %v5853 = vtanh.pop %v5851
    %5856 = vrot.lane.b32.xlu0 %v5852, 64
    %v5857 = vpop.permute.xlu0 %5856
    %5858 = vrot.lane.b32.xlu0 %v5853, 64
    %v5859 = vpop.permute.xlu0 %5858
    %v5862 = vmul.f32 %v5819, %v5857
    %v5863 = vmul.f32 %v5821, %v5859
    %v5864 = vmax.f32 %v5862, 0.0
    %v5865 = vmax.f32 %v5863, 0.0
    %v5868 = vcombine.high %v5864, %v5864
    %v5870 = vunpack.c.l.s4 1983009808
    %v5871 = vunpack.c.0.s8 %v5870
    %v5872 = vlaneseq
    %v5873 = vshrl.u32 %v5872, 7
    %v5874 = vsub.s32 %v5871, %v5873
    %v5875 = vrot.slane %v5868, %v5874
    %v5876 = vcombine.high %v5865, %v5865
    %v5878 = vunpack.c.l.s4 1983009808
    %v5879 = vunpack.c.0.s8 %v5878
    %v5880 = vlaneseq
    %v5881 = vshrl.u32 %v5880, 7
    %v5882 = vsub.s32 %v5879, %v5881
    %v5883 = vrot.slane %v5876, %v5882
    %v5884 = vsel %vm3747, %v5875, %v5875
    %v5885 = vsel %vm3749, %v5875, %v5884
    %v5886 = vrot.slane %v5883, 7
    %v5887 = vsel %vm3752, %v5886, %v5885
    %v5888 = vsel %vm3754, %v5886, %v5887
    %v5889 = vsel %vm3756, %v5886, %v5888
    %v5890 = vsel %vm3758, %v5886, %v5889
    %5891 = vrot.lane.b32.xlu0 %v5890, 32
    %v5892 = vpop.permute.xlu0 %5891
    %5894 = vst.msk [vmem:[#allocation2 + $0x6] sm:$0x3] %vm3763, %v5892
    %5896 = vst.msk [vmem:[#allocation2] sm:$0x3] %vm3766, %v5890
    %v5899 = vrot.slane %v5862, 4
    %v5900 = vrot.slane %v5863, 3
    %v5901 = vsel %vm3752, %v5900, %v5899
    %5902 = vrot.lane.b32.xlu0 %v5901, 32
    %v5903 = vpop.permute.xlu0 %5902
    %v5904 = vsel %vm3602, %v5903, 0
    %5906 = vmatprep.subr.mxu0 0.0
    %5907 = vmatpush1.msra.mxu0 0.0
    %5908 = vmatprep.subr.mxu0 0.0
    %5909 = vmatpush1.msra.mxu0 0.0
    %5910 = vmatprep.subr.mxu0 0.0
    %5911 = vmatpush1.msra.mxu0 0.0
    %5912 = vmatprep.subr.mxu0 0.0
    %5913 = vmatpush1.msra.mxu0 0.0
    %5914 = vmatprep.subr.mxu0 0.0
    %5915 = vmatpush1.msra.mxu0 0.0
    %5916 = vmatprep.subr.mxu0 0.0
    %5917 = vmatpush1.msra.mxu0 0.0
    %5918 = vmatprep.subr.mxu0 0.0
    %5919 = vmatpush1.msra.mxu0 0.0
    %5920 = vmatprep.subr.mxu0 0.0
    %5921 = vmatpush1.msra.mxu0 0.0
    %5922 = vmatprep.subr.mxu0 0.0
    %5923 = vmatpush1.msra.mxu0 0.0
    %5924 = vmatprep.subr.mxu0 0.0
    %5925 = vmatpush1.msra.mxu0 0.0
    %5926 = vmatprep.subr.mxu0 0.0
    %5927 = vmatpush1.msra.mxu0 0.0
    %5928 = vmatprep.subr.mxu0 0.0
    %5929 = vmatpush1.msra.mxu0 0.0
    %5930 = vmatprep.subr.mxu0 0.0
    %5931 = vmatpush1.msra.mxu0 %v3593
    %5932 = vmatprep.subr.mxu0 0.0
    %5933 = vmatpush1.msra.mxu0 %v3592
    %5934 = vmatprep.subr.mxu0 0.0
    %5935 = vmatpush1.msra.mxu0 %v3591
    %5936 = vmatprep.subr.mxu0 0.0
    %5937 = vmatpush1.msra.mxu0 %v3590
    %5938 = vmatprep.subr.mxu0 0.0
    %5939 = vmatpush2.msra.mxu0 0.0
    %5940 = vmatprep.subr.mxu0 0.0
    %5941 = vmatpush2.msra.mxu0 0.0
    %5942 = vmatprep.subr.mxu0 0.0
    %5943 = vmatpush2.msra.mxu0 0.0
    %5944 = vmatprep.subr.mxu0 0.0
    %5945 = vmatpush2.msra.mxu0 0.0
    %5946 = vmatprep.subr.mxu0 0.0
    %5947 = vmatpush2.msra.mxu0 0.0
    %5948 = vmatprep.subr.mxu0 0.0
    %5949 = vmatpush2.msra.mxu0 0.0
    %5950 = vmatprep.subr.mxu0 0.0
    %5951 = vmatpush2.msra.mxu0 0.0
    %5952 = vmatprep.subr.mxu0 0.0
    %5953 = vmatpush2.msra.mxu0 0.0
    %5954 = vmatprep.subr.mxu0 0.0
    %5955 = vmatpush2.msra.mxu0 0.0
    %5956 = vmatprep.subr.mxu0 0.0
    %5957 = vmatpush2.msra.mxu0 0.0
    %5958 = vmatprep.subr.mxu0 0.0
    %5959 = vmatpush2.msra.mxu0 0.0
    %5960 = vmatprep.subr.mxu0 0.0
    %5961 = vmatpush2.msra.mxu0 0.0
    %5962 = vmatprep.subr.mxu0 0.0
    %5963 = vmatpush2.msra.mxu0 0.0
    %5964 = vmatprep.subr.mxu0 0.0
    %5965 = vmatpush2.msra.mxu0 0.0
    %5966 = vmatprep.subr.mxu0 0.0
    %5967 = vmatpush2.msra.mxu0 0.0
    %5968 = vmatprep.subr.mxu0 0.0
    %5969 = vmatpush2.msra.mxu0 0.0
    %5970 = vmatprep.mubr.f32.mxu0 0.0
    %5971 = vmatmul.mubr.f32.gmra.mxu0 %v5904
    %v5972 = vpop.f32.mrf.mxu0
    %v5973 = vadd.f32 0.0, %v5972
    %v5974 = vpop.f32.mrf.mxu0
    %5975 = vdwg.mxu0
    %v5977 = vrot.slane %v5973, 3
    %v5978 = vrot.slane %v5973, 4
    %v5981 = vadd.f32 %v5192, %v5977
    %v5982 = vadd.f32 %v5193, %v5978
    %v5983 = vxor.u32 %v5981, 2147483648
    %v5984 = vxor.u32 %v5982, 2147483648
    %v5985 = vmul.f32 %v5983, 1.442695
    %v5986 = vpow.pop %v5985
    %v5987 = vmul.f32 %v5984, 1.442695
    %v5988 = vpow.pop %v5987
    %v5989 = vadd.f32 %v5986, 1.0
    %v5990 = vadd.f32 %v5988, 1.0
    %v5991 = vrcp.pop %v5989
    %v5992 = vmul.f32 1.0, %v5991
    %v5993 = vrcp.pop %v5990
    %v5994 = vmul.f32 1.0, %v5993
    %v5995 = vtanh.pop %v5981
    %v5996 = vtanh.pop %v5982
    %v5999 = vrot.slane %v5850, 7
    %v6000 = vrot.slane %v5851, 7
    %v6003 = vmul.f32 %v5992, %v5999
    %v6004 = vmul.f32 %v5994, %v6000
    %6007 = vrot.lane.b32.xlu0 %v5995, 64
    %v6008 = vpop.permute.xlu0 %6007
    %6009 = vrot.lane.b32.xlu0 %v5996, 64
    %v6010 = vpop.permute.xlu0 %6009
    %v6013 = vmul.f32 %v5992, %v6008
    %v6014 = vmul.f32 %v5994, %v6010
    %6017 = vrot.lane.b32.xlu0 %v6013, 32
    %v6018 = vpop.permute.xlu0 %6017
    %6019 = vrot.lane.b32.xlu0 %v6014, 32
    %v6020 = vpop.permute.xlu0 %6019
    %v6023 = vadd.f32 %v6003, %v6018
    %v6024 = vadd.f32 %v6004, %v6020
    %v6025 = vtanh.pop %v6023
    %v6026 = vtanh.pop %v6024
    %6029 = vrot.lane.b32.xlu0 %v6025, 64
    %v6030 = vpop.permute.xlu0 %6029
    %6031 = vrot.lane.b32.xlu0 %v6026, 64
    %v6032 = vpop.permute.xlu0 %6031
    %v6035 = vmul.f32 %v5992, %v6030
    %v6036 = vmul.f32 %v5994, %v6032
    %v6037 = vmax.f32 %v6035, 0.0
    %v6038 = vmax.f32 %v6036, 0.0
    %v6041 = vcombine.high %v6037, %v6037
    %v6043 = vunpack.c.l.s4 1983009808
    %v6044 = vunpack.c.0.s8 %v6043
    %v6045 = vlaneseq
    %v6046 = vshrl.u32 %v6045, 7
    %v6047 = vsub.s32 %v6044, %v6046
    %v6048 = vrot.slane %v6041, %v6047
    %v6049 = vcombine.high %v6038, %v6038
    %v6051 = vunpack.c.l.s4 1983009808
    %v6052 = vunpack.c.0.s8 %v6051
    %v6053 = vlaneseq
    %v6054 = vshrl.u32 %v6053, 7
    %v6055 = vsub.s32 %v6052, %v6054
    %v6056 = vrot.slane %v6049, %v6055
    %v6057 = vrot.slane %v6048, 1
    %v6058 = vsel %vm3747, %v6057, %v6057
    %v6059 = vsel %vm3749, %v6057, %v6058
    %v6060 = vsel %vm3752, %v6056, %v6059
    %v6061 = vsel %vm3754, %v6056, %v6060
    %v6062 = vsel %vm3756, %v6056, %v6061
    %v6063 = vsel %vm3758, %v6056, %v6062
    %6064 = vrot.lane.b32.xlu0 %v6063, 64
    %v6065 = vpop.permute.xlu0 %6064
    %6067 = vst.msk [vmem:[#allocation2 + $0x6] sm:$0x3] %vm3940, %v6065
    %6068 = vrot.lane.b32.xlu0 %v6063, 96
    %v6069 = vpop.permute.xlu0 %6068
    %6071 = vst.msk [vmem:[#allocation2] sm:$0x3] %vm3945, %v6069
    %v6074 = vrot.slane %v6035, 5
    %v6075 = vrot.slane %v6036, 4
    %v6076 = vsel %vm3752, %v6075, %v6074
    %6077 = vrot.lane.b32.xlu0 %v6076, 32
    %v6078 = vpop.permute.xlu0 %6077
    %v6079 = vsel %vm3602, %v6078, 0
    %6081 = vmatprep.subr.mxu0 0.0
    %6082 = vmatpush1.msra.mxu0 0.0
    %6083 = vmatprep.subr.mxu0 0.0
    %6084 = vmatpush1.msra.mxu0 0.0
    %6085 = vmatprep.subr.mxu0 0.0
    %6086 = vmatpush1.msra.mxu0 0.0
    %6087 = vmatprep.subr.mxu0 0.0
    %6088 = vmatpush1.msra.mxu0 0.0
    %6089 = vmatprep.subr.mxu0 0.0
    %6090 = vmatpush1.msra.mxu0 0.0
    %6091 = vmatprep.subr.mxu0 0.0
    %6092 = vmatpush1.msra.mxu0 0.0
    %6093 = vmatprep.subr.mxu0 0.0
    %6094 = vmatpush1.msra.mxu0 0.0
    %6095 = vmatprep.subr.mxu0 0.0
    %6096 = vmatpush1.msra.mxu0 0.0
    %6097 = vmatprep.subr.mxu0 0.0
    %6098 = vmatpush1.msra.mxu0 0.0
    %6099 = vmatprep.subr.mxu0 0.0
    %6100 = vmatpush1.msra.mxu0 0.0
    %6101 = vmatprep.subr.mxu0 0.0
    %6102 = vmatpush1.msra.mxu0 0.0
    %6103 = vmatprep.subr.mxu0 0.0
    %6104 = vmatpush1.msra.mxu0 0.0
    %6105 = vmatprep.subr.mxu0 0.0
    %6106 = vmatpush1.msra.mxu0 %v3593
    %6107 = vmatprep.subr.mxu0 0.0
    %6108 = vmatpush1.msra.mxu0 %v3592
    %6109 = vmatprep.subr.mxu0 0.0
    %6110 = vmatpush1.msra.mxu0 %v3591
    %6111 = vmatprep.subr.mxu0 0.0
    %6112 = vmatpush1.msra.mxu0 %v3590
    %6113 = vmatprep.subr.mxu0 0.0
    %6114 = vmatpush2.msra.mxu0 0.0
    %6115 = vmatprep.subr.mxu0 0.0
    %6116 = vmatpush2.msra.mxu0 0.0
    %6117 = vmatprep.subr.mxu0 0.0
    %6118 = vmatpush2.msra.mxu0 0.0
    %6119 = vmatprep.subr.mxu0 0.0
    %6120 = vmatpush2.msra.mxu0 0.0
    %6121 = vmatprep.subr.mxu0 0.0
    %6122 = vmatpush2.msra.mxu0 0.0
    %6123 = vmatprep.subr.mxu0 0.0
    %6124 = vmatpush2.msra.mxu0 0.0
    %6125 = vmatprep.subr.mxu0 0.0
    %6126 = vmatpush2.msra.mxu0 0.0
    %6127 = vmatprep.subr.mxu0 0.0
    %6128 = vmatpush2.msra.mxu0 0.0
    %6129 = vmatprep.subr.mxu0 0.0
    %6130 = vmatpush2.msra.mxu0 0.0
    %6131 = vmatprep.subr.mxu0 0.0
    %6132 = vmatpush2.msra.mxu0 0.0
    %6133 = vmatprep.subr.mxu0 0.0
    %6134 = vmatpush2.msra.mxu0 0.0
    %6135 = vmatprep.subr.mxu0 0.0
    %6136 = vmatpush2.msra.mxu0 0.0
    %6137 = vmatprep.subr.mxu0 0.0
    %6138 = vmatpush2.msra.mxu0 0.0
    %6139 = vmatprep.subr.mxu0 0.0
    %6140 = vmatpush2.msra.mxu0 0.0
    %6141 = vmatprep.subr.mxu0 0.0
    %6142 = vmatpush2.msra.mxu0 0.0
    %6143 = vmatprep.subr.mxu0 0.0
    %6144 = vmatpush2.msra.mxu0 0.0
    %6145 = vmatprep.mubr.f32.mxu0 0.0
    %6146 = vmatmul.mubr.f32.gmra.mxu0 %v6079
    %v6147 = vpop.f32.mrf.mxu0
    %v6148 = vadd.f32 0.0, %v6147
    %v6149 = vpop.f32.mrf.mxu0
    %6150 = vdwg.mxu0
    %v6152 = vrot.slane %v6148, 2
    %v6153 = vrot.slane %v6148, 3
    %v6156 = vadd.f32 %v5369, %v6152
    %v6157 = vadd.f32 %v5370, %v6153
    %v6158 = vxor.u32 %v6156, 2147483648
    %v6159 = vxor.u32 %v6157, 2147483648
    %v6160 = vmul.f32 %v6158, 1.442695
    %v6161 = vpow.pop %v6160
    %v6162 = vmul.f32 %v6159, 1.442695
    %v6163 = vpow.pop %v6162
    %v6164 = vadd.f32 %v6161, 1.0
    %v6165 = vadd.f32 %v6163, 1.0
    %v6166 = vrcp.pop %v6164
    %v6167 = vmul.f32 1.0, %v6166
    %v6168 = vrcp.pop %v6165
    %v6169 = vmul.f32 1.0, %v6168
    %v6170 = vtanh.pop %v6156
    %v6171 = vtanh.pop %v6157
    %v6174 = vrot.slane %v6023, 7
    %v6175 = vrot.slane %v6024, 7
    %v6178 = vmul.f32 %v6167, %v6174
    %v6179 = vmul.f32 %v6169, %v6175
    %6182 = vrot.lane.b32.xlu0 %v6170, 64
    %v6183 = vpop.permute.xlu0 %6182
    %6184 = vrot.lane.b32.xlu0 %v6171, 64
    %v6185 = vpop.permute.xlu0 %6184
    %v6188 = vmul.f32 %v6167, %v6183
    %v6189 = vmul.f32 %v6169, %v6185
    %6192 = vrot.lane.b32.xlu0 %v6188, 32
    %v6193 = vpop.permute.xlu0 %6192
    %6194 = vrot.lane.b32.xlu0 %v6189, 32
    %v6195 = vpop.permute.xlu0 %6194
    %v6198 = vadd.f32 %v6178, %v6193
    %v6199 = vadd.f32 %v6179, %v6195
    %v6200 = vtanh.pop %v6198
    %v6201 = vtanh.pop %v6199
    %6204 = vrot.lane.b32.xlu0 %v6200, 64
    %v6205 = vpop.permute.xlu0 %6204
    %6206 = vrot.lane.b32.xlu0 %v6201, 64
    %v6207 = vpop.permute.xlu0 %6206
    %v6210 = vmul.f32 %v6167, %v6205
    %v6211 = vmul.f32 %v6169, %v6207
    %v6212 = vmax.f32 %v6210, 0.0
    %v6213 = vmax.f32 %v6211, 0.0
    %v6216 = vcombine.high %v6212, %v6212
    %v6218 = vunpack.c.l.s4 1983009808
    %v6219 = vunpack.c.0.s8 %v6218
    %v6220 = vlaneseq
    %v6221 = vshrl.u32 %v6220, 7
    %v6222 = vsub.s32 %v6219, %v6221
    %v6223 = vrot.slane %v6216, %v6222
    %v6224 = vcombine.high %v6223, %v6223
    %v6225 = vcombine.high %v6213, %v6213
    %v6227 = vunpack.c.l.s4 1983009808
    %v6228 = vunpack.c.0.s8 %v6227
    %v6229 = vlaneseq
    %v6230 = vshrl.u32 %v6229, 7
    %v6231 = vsub.s32 %v6228, %v6230
    %v6232 = vrot.slane %v6225, %v6231
    %v6233 = vcombine.high %v6232, %v6232
    %v6234 = vsel %vm3747, %v6224, %v6224
    %v6235 = vsel %vm3749, %v6224, %v6234
    %v6236 = vrot.slane %v6233, 7
    %v6237 = vsel %vm3752, %v6236, %v6235
    %v6238 = vsel %vm3754, %v6236, %v6237
    %v6239 = vsel %vm3756, %v6236, %v6238
    %v6240 = vsel %vm3758, %v6236, %v6239
    %6241 = vrot.lane.b32.xlu0 %v6240, 96
    %v6242 = vpop.permute.xlu0 %6241
    %6244 = vst.msk [vmem:[#allocation2 + $0x6] sm:$0x3] %vm4122, %v6242
    %6245 = vrot.lane.b32.xlu0 %v6240, 64
    %v6246 = vpop.permute.xlu0 %6245
    %6248 = vst.msk [vmem:[#allocation2] sm:$0x3] %vm4127, %v6246
    %v6251 = vrot.slane %v6210, 6
    %v6252 = vrot.slane %v6211, 5
    %v6253 = vsel %vm3752, %v6252, %v6251
    %6254 = vrot.lane.b32.xlu0 %v6253, 32
    %v6255 = vpop.permute.xlu0 %6254
    %v6256 = vsel %vm3602, %v6255, 0
    %6258 = vmatprep.subr.mxu0 0.0
    %6259 = vmatpush1.msra.mxu0 0.0
    %6260 = vmatprep.subr.mxu0 0.0
    %6261 = vmatpush1.msra.mxu0 0.0
    %6262 = vmatprep.subr.mxu0 0.0
    %6263 = vmatpush1.msra.mxu0 0.0
    %6264 = vmatprep.subr.mxu0 0.0
    %6265 = vmatpush1.msra.mxu0 0.0
    %6266 = vmatprep.subr.mxu0 0.0
    %6267 = vmatpush1.msra.mxu0 0.0
    %6268 = vmatprep.subr.mxu0 0.0
    %6269 = vmatpush1.msra.mxu0 0.0
    %6270 = vmatprep.subr.mxu0 0.0
    %6271 = vmatpush1.msra.mxu0 0.0
    %6272 = vmatprep.subr.mxu0 0.0
    %6273 = vmatpush1.msra.mxu0 0.0
    %6274 = vmatprep.subr.mxu0 0.0
    %6275 = vmatpush1.msra.mxu0 0.0
    %6276 = vmatprep.subr.mxu0 0.0
    %6277 = vmatpush1.msra.mxu0 0.0
    %6278 = vmatprep.subr.mxu0 0.0
    %6279 = vmatpush1.msra.mxu0 0.0
    %6280 = vmatprep.subr.mxu0 0.0
    %6281 = vmatpush1.msra.mxu0 0.0
    %6282 = vmatprep.subr.mxu0 0.0
    %6283 = vmatpush1.msra.mxu0 %v3593
    %6284 = vmatprep.subr.mxu0 0.0
    %6285 = vmatpush1.msra.mxu0 %v3592
    %6286 = vmatprep.subr.mxu0 0.0
    %6287 = vmatpush1.msra.mxu0 %v3591
    %6288 = vmatprep.subr.mxu0 0.0
    %6289 = vmatpush1.msra.mxu0 %v3590
    %6290 = vmatprep.subr.mxu0 0.0
    %6291 = vmatpush2.msra.mxu0 0.0
    %6292 = vmatprep.subr.mxu0 0.0
    %6293 = vmatpush2.msra.mxu0 0.0
    %6294 = vmatprep.subr.mxu0 0.0
    %6295 = vmatpush2.msra.mxu0 0.0
    %6296 = vmatprep.subr.mxu0 0.0
    %6297 = vmatpush2.msra.mxu0 0.0
    %6298 = vmatprep.subr.mxu0 0.0
    %6299 = vmatpush2.msra.mxu0 0.0
    %6300 = vmatprep.subr.mxu0 0.0
    %6301 = vmatpush2.msra.mxu0 0.0
    %6302 = vmatprep.subr.mxu0 0.0
    %6303 = vmatpush2.msra.mxu0 0.0
    %6304 = vmatprep.subr.mxu0 0.0
    %6305 = vmatpush2.msra.mxu0 0.0
    %6306 = vmatprep.subr.mxu0 0.0
    %6307 = vmatpush2.msra.mxu0 0.0
    %6308 = vmatprep.subr.mxu0 0.0
    %6309 = vmatpush2.msra.mxu0 0.0
    %6310 = vmatprep.subr.mxu0 0.0
    %6311 = vmatpush2.msra.mxu0 0.0
    %6312 = vmatprep.subr.mxu0 0.0
    %6313 = vmatpush2.msra.mxu0 0.0
    %6314 = vmatprep.subr.mxu0 0.0
    %6315 = vmatpush2.msra.mxu0 0.0
    %6316 = vmatprep.subr.mxu0 0.0
    %6317 = vmatpush2.msra.mxu0 0.0
    %6318 = vmatprep.subr.mxu0 0.0
    %6319 = vmatpush2.msra.mxu0 0.0
    %6320 = vmatprep.subr.mxu0 0.0
    %6321 = vmatpush2.msra.mxu0 0.0
    %6322 = vmatprep.mubr.f32.mxu0 0.0
    %6323 = vmatmul.mubr.f32.gmra.mxu0 %v6256
    %v6324 = vpop.f32.mrf.mxu0
    %v6325 = vadd.f32 0.0, %v6324
    %v6326 = vpop.f32.mrf.mxu0
    %6327 = vdwg.mxu0
    %v6329 = vrot.slane %v6325, 1
    %v6330 = vrot.slane %v6325, 2
    %v6333 = vadd.f32 %v5549, %v6329
    %v6334 = vadd.f32 %v5550, %v6330
    %v6335 = vxor.u32 %v6333, 2147483648
    %v6336 = vxor.u32 %v6334, 2147483648
    %v6337 = vmul.f32 %v6335, 1.442695
    %v6338 = vpow.pop %v6337
    %v6339 = vmul.f32 %v6336, 1.442695
    %v6340 = vpow.pop %v6339
    %v6341 = vadd.f32 %v6338, 1.0
    %v6342 = vadd.f32 %v6340, 1.0
    %v6343 = vrcp.pop %v6341
    %v6344 = vmul.f32 1.0, %v6343
    %v6345 = vrcp.pop %v6342
    %v6346 = vmul.f32 1.0, %v6345
    %v6347 = vtanh.pop %v6333
    %v6348 = vtanh.pop %v6334
    %v6351 = vrot.slane %v6198, 7
    %v6352 = vrot.slane %v6199, 7
    %v6355 = vmul.f32 %v6344, %v6351
    %v6356 = vmul.f32 %v6346, %v6352
    %6359 = vrot.lane.b32.xlu0 %v6347, 64
    %v6360 = vpop.permute.xlu0 %6359
    %6361 = vrot.lane.b32.xlu0 %v6348, 64
    %v6362 = vpop.permute.xlu0 %6361
    %v6365 = vmul.f32 %v6344, %v6360
    %v6366 = vmul.f32 %v6346, %v6362
    %6369 = vrot.lane.b32.xlu0 %v6365, 32
    %v6370 = vpop.permute.xlu0 %6369
    %6371 = vrot.lane.b32.xlu0 %v6366, 32
    %v6372 = vpop.permute.xlu0 %6371
    %v6375 = vadd.f32 %v6355, %v6370
    %v6376 = vadd.f32 %v6356, %v6372
    %v6377 = vtanh.pop %v6375
    %v6378 = vtanh.pop %v6376
    %6381 = vrot.lane.b32.xlu0 %v6377, 64
    %v6382 = vpop.permute.xlu0 %6381
    %6383 = vrot.lane.b32.xlu0 %v6378, 64
    %v6384 = vpop.permute.xlu0 %6383
    %v6387 = vmul.f32 %v6344, %v6382
    %v6388 = vmul.f32 %v6346, %v6384
    %v6389 = vmax.f32 %v6387, 0.0
    %v6390 = vmax.f32 %v6388, 0.0
    %v6393 = vcombine.high %v6389, %v6389
    %v6395 = vunpack.c.l.s4 1983009808
    %v6396 = vunpack.c.0.s8 %v6395
    %v6397 = vlaneseq
    %v6398 = vshrl.u32 %v6397, 7
    %v6399 = vsub.s32 %v6396, %v6398
    %v6400 = vrot.slane %v6393, %v6399
    %v6401 = vcombine.high %v6400, %v6400
    %v6402 = vcombine.high %v6390, %v6390
    %v6404 = vunpack.c.l.s4 1983009808
    %v6405 = vunpack.c.0.s8 %v6404
    %v6406 = vlaneseq
    %v6407 = vshrl.u32 %v6406, 7
    %v6408 = vsub.s32 %v6405, %v6407
    %v6409 = vrot.slane %v6402, %v6408
    %v6410 = vcombine.high %v6409, %v6409
    %v6411 = vrot.slane %v6401, 1
    %v6412 = vsel %vm3747, %v6411, %v6411
    %v6413 = vsel %vm3749, %v6411, %v6412
    %v6414 = vsel %vm3752, %v6410, %v6413
    %v6415 = vsel %vm3754, %v6410, %v6414
    %v6416 = vsel %vm3756, %v6410, %v6415
    %v6417 = vsel %vm3758, %v6410, %v6416
    %6419 = vst.msk [vmem:[#allocation2 + $0x6] sm:$0x3] %vm4303, %v6417
    %6420 = vrot.lane.b32.xlu0 %v6417, 32
    %v6421 = vpop.permute.xlu0 %6420
    %6423 = vst.msk [vmem:[#allocation2] sm:$0x3] %vm4308, %v6421
    %v6424 = vld [vmem:[#allocation2] sm:$0xff]
    %v6425 = vld [vmem:[%s39] sm:$0xf]
    %v6426 = vld [vmem:[%s39 + $0x4] sm:$0xf]
    %v6427 = vld [vmem:[%s39 + $0x8] sm:$0xf]
    %v6428 = vld [vmem:[%s39 + $0xc] sm:$0xf]
    %v6429 = vld [vmem:[%s39 + $0x10] sm:$0xf]
    %v6430 = vld [vmem:[%s39 + $0x14] sm:$0xf]
    %v6431 = vld [vmem:[%s39 + $0x18] sm:$0xf]
    %v6432 = vld [vmem:[%s39 + $0x1c] sm:$0xf]
    %v6433 = vld [vmem:[%s39 + $0x20] sm:$0xf]
    %v6434 = vld [vmem:[%s39 + $0x24] sm:$0xf]
    %v6435 = vld [vmem:[%s39 + $0x28] sm:$0xf]
    %v6436 = vld [vmem:[%s39 + $0x2c] sm:$0xf]
    %v6437 = vld [vmem:[%s39 + $0x30] sm:$0xf]
    %v6438 = vld [vmem:[%s39 + $0x34] sm:$0xf]
    %v6439 = vld [vmem:[%s39 + $0x38] sm:$0xf]
    %v6440 = vld [vmem:[%s39 + $0x3c] sm:$0xf]
    %v6441 = vld [vmem:[%s39 + $0x40] sm:$0xf]
    %v6442 = vld [vmem:[%s39 + $0x44] sm:$0xf]
    %v6443 = vld [vmem:[%s39 + $0x48] sm:$0xf]
    %v6444 = vld [vmem:[%s39 + $0x4c] sm:$0xf]
    %v6445 = vld [vmem:[%s39 + $0x50] sm:$0xf]
    %v6446 = vld [vmem:[%s39 + $0x54] sm:$0xf]
    %v6447 = vld [vmem:[%s39 + $0x58] sm:$0xf]
    %v6448 = vld [vmem:[%s39 + $0x5c] sm:$0xf]
    %v6449 = vld [vmem:[%s39 + $0x60] sm:$0xf]
    %v6450 = vld [vmem:[%s39 + $0x64] sm:$0xf]
    %v6451 = vld [vmem:[%s39 + $0x68] sm:$0xf]
    %v6452 = vld [vmem:[%s39 + $0x6c] sm:$0xf]
    %v6453 = vld [vmem:[%s39 + $0x70] sm:$0xf]
    %v6454 = vld [vmem:[%s39 + $0x74] sm:$0xf]
    %v6455 = vld [vmem:[%s39 + $0x78] sm:$0xf]
    %v6456 = vld [vmem:[%s39 + $0x7c] sm:$0xf]
    %v6457 = vld [vmem:[%s39 + $0x80] sm:$0xf]
    %v6458 = vld [vmem:[%s39 + $0x84] sm:$0xf]
    %v6459 = vld [vmem:[%s39 + $0x88] sm:$0xf]
    %v6460 = vld [vmem:[%s39 + $0x8c] sm:$0xf]
    %v6461 = vld [vmem:[%s39 + $0x90] sm:$0xf]
    %v6462 = vld [vmem:[%s39 + $0x94] sm:$0xf]
    %v6463 = vld [vmem:[%s39 + $0x98] sm:$0xf]
    %v6464 = vld [vmem:[%s39 + $0x9c] sm:$0xf]
    %v6465 = vld [vmem:[%s39 + $0xa0] sm:$0xf]
    %v6466 = vld [vmem:[%s39 + $0xa4] sm:$0xf]
    %v6467 = vld [vmem:[%s39 + $0xa8] sm:$0xf]
    %v6468 = vld [vmem:[%s39 + $0xac] sm:$0xf]
    %v6469 = vld [vmem:[%s39 + $0xb0] sm:$0xf]
    %v6470 = vld [vmem:[%s39 + $0xb4] sm:$0xf]
    %v6471 = vld [vmem:[%s39 + $0xb8] sm:$0xf]
    %v6472 = vld [vmem:[%s39 + $0xbc] sm:$0xf]
    %v6473 = vld [vmem:[%s39 + $0xc0] sm:$0xf]
    %v6474 = vld [vmem:[%s39 + $0xc4] sm:$0xf]
    %v6475 = vld [vmem:[%s39 + $0xc8] sm:$0xf]
    %v6476 = vld [vmem:[%s39 + $0xcc] sm:$0xf]
    %v6477 = vld [vmem:[%s39 + $0xd0] sm:$0xf]
    %v6478 = vld [vmem:[%s39 + $0xd4] sm:$0xf]
    %v6479 = vld [vmem:[%s39 + $0xd8] sm:$0xf]
    %v6480 = vld [vmem:[%s39 + $0xdc] sm:$0xf]
    %v6481 = vld [vmem:[%s39 + $0xe0] sm:$0xf]
    %v6482 = vld [vmem:[%s39 + $0xe4] sm:$0xf]
    %v6483 = vld [vmem:[%s39 + $0xe8] sm:$0xf]
    %v6484 = vld [vmem:[%s39 + $0xec] sm:$0xf]
    %v6485 = vld [vmem:[%s39 + $0xf0] sm:$0xf]
    %v6486 = vld [vmem:[%s39 + $0xf4] sm:$0xf]
    %v6487 = vld [vmem:[%s39 + $0xf8] sm:$0xf]
    %v6488 = vld [vmem:[%s39 + $0xfc] sm:$0xf]
    %v6489 = vld [vmem:[#allocation24] sm:$0x1]
    %v6491 = vcombine.high %v6424, %v6424
    %v6493 = vunpack.c.l.s4 1983009808
    %v6494 = vunpack.c.0.s8 %v6493
    %v6495 = vlaneseq
    %v6496 = vshrl.u32 %v6495, 7
    %v6497 = vsub.s32 %v6494, %v6496
    %v6498 = vrot.slane %v6424, %v6497
    %v6500 = vunpack.c.l.s4 1983009808
    %v6501 = vunpack.c.0.s8 %v6500
    %v6502 = vlaneseq
    %v6503 = vshrl.u32 %v6502, 7
    %v6504 = vsub.s32 %v6501, %v6503
    %v6505 = vrot.slane %v6491, %v6504
    %v6506 = vcombine.high %v6498, %v6498
    %v6507 = vcombine.high %v6505, %v6505
    %v6512 = vpack.c.bf16 %v6498, %v6498
    %v6513 = vpack.c.bf16 %v6506, %v6506
    %v6514 = vpack.c.bf16 %v6505, %v6505
    %v6515 = vpack.c.bf16 %v6507, %v6507
    %v6517 = vlaneseq
    %v6518 = vshrl.u32 %v6517, 7
    %v6519 = vsub.s32 0, %v6518
    %v6520 = vrot.slane %v6489, %v6519
    %v6586 = vunpack.c.l.b16 %v6425
    %v6587 = vunpack.c.l.b16 %v6426
    %v6588 = vunpack.c.l.b16 %v6427
    %v6589 = vunpack.c.l.b16 %v6428
    %v6590 = vunpack.c.l.b16 %v6429
    %v6591 = vunpack.c.l.b16 %v6430
    %v6592 = vunpack.c.l.b16 %v6431
    %v6593 = vunpack.c.l.b16 %v6432
    %v6594 = vunpack.c.l.b16 %v6433
    %v6595 = vunpack.c.l.b16 %v6434
    %v6596 = vunpack.c.l.b16 %v6435
    %v6597 = vunpack.c.l.b16 %v6436
    %v6598 = vunpack.c.l.b16 %v6437
    %v6599 = vunpack.c.l.b16 %v6438
    %v6600 = vunpack.c.l.b16 %v6439
    %v6601 = vunpack.c.l.b16 %v6440
    %v6602 = vunpack.c.l.b16 %v6441
    %v6603 = vunpack.c.l.b16 %v6442
    %v6604 = vunpack.c.l.b16 %v6443
    %v6605 = vunpack.c.l.b16 %v6444
    %v6606 = vunpack.c.l.b16 %v6445
    %v6607 = vunpack.c.l.b16 %v6446
    %v6608 = vunpack.c.l.b16 %v6447
    %v6609 = vunpack.c.l.b16 %v6448
    %v6610 = vunpack.c.l.b16 %v6449
    %v6611 = vunpack.c.l.b16 %v6450
    %v6612 = vunpack.c.l.b16 %v6451
    %v6613 = vunpack.c.l.b16 %v6452
    %v6614 = vunpack.c.l.b16 %v6453
    %v6615 = vunpack.c.l.b16 %v6454
    %v6616 = vunpack.c.l.b16 %v6455
    %v6617 = vunpack.c.l.b16 %v6456
    %v6618 = vunpack.c.l.b16 %v6457
    %v6619 = vunpack.c.l.b16 %v6458
    %v6620 = vunpack.c.l.b16 %v6459
    %v6621 = vunpack.c.l.b16 %v6460
    %v6622 = vunpack.c.l.b16 %v6461
    %v6623 = vunpack.c.l.b16 %v6462
    %v6624 = vunpack.c.l.b16 %v6463
    %v6625 = vunpack.c.l.b16 %v6464
    %v6626 = vunpack.c.l.b16 %v6465
    %v6627 = vunpack.c.l.b16 %v6466
    %v6628 = vunpack.c.l.b16 %v6467
    %v6629 = vunpack.c.l.b16 %v6468
    %v6630 = vunpack.c.l.b16 %v6469
    %v6631 = vunpack.c.l.b16 %v6470
    %v6632 = vunpack.c.l.b16 %v6471
    %v6633 = vunpack.c.l.b16 %v6472
    %v6634 = vunpack.c.l.b16 %v6473
    %v6635 = vunpack.c.l.b16 %v6474
    %v6636 = vunpack.c.l.b16 %v6475
    %v6637 = vunpack.c.l.b16 %v6476
    %v6638 = vunpack.c.l.b16 %v6477
    %v6639 = vunpack.c.l.b16 %v6478
    %v6640 = vunpack.c.l.b16 %v6479
    %v6641 = vunpack.c.l.b16 %v6480
    %v6642 = vunpack.c.l.b16 %v6481
    %v6643 = vunpack.c.l.b16 %v6482
    %v6644 = vunpack.c.l.b16 %v6483
    %v6645 = vunpack.c.l.b16 %v6484
    %v6646 = vunpack.c.l.b16 %v6485
    %v6647 = vunpack.c.l.b16 %v6486
    %v6648 = vunpack.c.l.b16 %v6487
    %v6649 = vunpack.c.l.b16 %v6488
    %v6650 = vpack.c.b16 %v6587, %v6586
    %v6651 = vpack.c.b16 %v6589, %v6588
    %v6652 = vpack.c.b16 %v6591, %v6590
    %v6653 = vpack.c.b16 %v6593, %v6592
    %v6654 = vpack.c.b16 %v6595, %v6594
    %v6655 = vpack.c.b16 %v6597, %v6596
    %v6656 = vpack.c.b16 %v6599, %v6598
    %v6657 = vpack.c.b16 %v6601, %v6600
    %v6658 = vpack.c.b16 %v6603, %v6602
    %v6659 = vpack.c.b16 %v6605, %v6604
    %v6660 = vpack.c.b16 %v6607, %v6606
    %v6661 = vpack.c.b16 %v6609, %v6608
    %v6662 = vpack.c.b16 %v6611, %v6610
    %v6663 = vpack.c.b16 %v6613, %v6612
    %v6664 = vpack.c.b16 %v6615, %v6614
    %v6665 = vpack.c.b16 %v6617, %v6616
    %v6666 = vpack.c.b16 %v6619, %v6618
    %v6667 = vpack.c.b16 %v6621, %v6620
    %v6668 = vpack.c.b16 %v6623, %v6622
    %v6669 = vpack.c.b16 %v6625, %v6624
    %v6670 = vpack.c.b16 %v6627, %v6626
    %v6671 = vpack.c.b16 %v6629, %v6628
    %v6672 = vpack.c.b16 %v6631, %v6630
    %v6673 = vpack.c.b16 %v6633, %v6632
    %v6674 = vpack.c.b16 %v6635, %v6634
    %v6675 = vpack.c.b16 %v6637, %v6636
    %v6676 = vpack.c.b16 %v6639, %v6638
    %v6677 = vpack.c.b16 %v6641, %v6640
    %v6678 = vpack.c.b16 %v6643, %v6642
    %v6679 = vpack.c.b16 %v6645, %v6644
    %v6680 = vpack.c.b16 %v6647, %v6646
    %v6681 = vpack.c.b16 %v6649, %v6648
    %6714 = vmatprep.subr.bf16.mxu0 0
    %6715 = vmatpush1.bf16.msra.mxu0 %v6657
    %6716 = vmatprep.subr.bf16.mxu0 0
    %6717 = vmatpush1.bf16.msra.mxu0 %v6656
    %6718 = vmatprep.subr.bf16.mxu0 0
    %6719 = vmatpush1.bf16.msra.mxu0 %v6655
    %6720 = vmatprep.subr.bf16.mxu0 0
    %6721 = vmatpush1.bf16.msra.mxu0 %v6654
    %6722 = vmatprep.subr.bf16.mxu0 0
    %6723 = vmatpush1.bf16.msra.mxu0 %v6653
    %6724 = vmatprep.subr.bf16.mxu0 0
    %6725 = vmatpush1.bf16.msra.mxu0 %v6652
    %6726 = vmatprep.subr.bf16.mxu0 0
    %6727 = vmatpush1.bf16.msra.mxu0 %v6651
    %6728 = vmatprep.subr.bf16.mxu0 0
    %6729 = vmatpush1.bf16.msra.mxu0 %v6650
    %6730 = vmatprep.subr.bf16.mxu0 0
    %6731 = vmatpush2.bf16.msra.mxu0 %v6665
    %6732 = vmatprep.subr.bf16.mxu0 0
    %6733 = vmatpush2.bf16.msra.mxu0 %v6664
    %6734 = vmatprep.subr.bf16.mxu0 0
    %6735 = vmatpush2.bf16.msra.mxu0 %v6663
    %6736 = vmatprep.subr.bf16.mxu0 0
    %6737 = vmatpush2.bf16.msra.mxu0 %v6662
    %6738 = vmatprep.subr.bf16.mxu0 0
    %6739 = vmatpush2.bf16.msra.mxu0 %v6661
    %6740 = vmatprep.subr.bf16.mxu0 0
    %6741 = vmatpush2.bf16.msra.mxu0 %v6660
    %6742 = vmatprep.subr.bf16.mxu0 0
    %6743 = vmatpush2.bf16.msra.mxu0 %v6659
    %6744 = vmatprep.subr.bf16.mxu0 0
    %6745 = vmatpush2.bf16.msra.mxu0 %v6658
    %6746 = vmatprep.mubr.bf16.mxu0 %v6513
    %6747 = vmatmul.mubr.bf16.gmra.mxu0 %v6512
    %v6748 = vpop.f32.mrf.mxu0
    %v6749 = vadd.f32 %v6520, %v6748
    %v6750 = vpop.f32.mrf.mxu0
    %v6751 = vpop.f32.mrf.mxu0
    %v6752 = vpop.f32.mrf.mxu0
    %6753 = vdwg.mxu0
    %6754 = vmatprep.subr.bf16.mxu0 0
    %6755 = vmatpush1.bf16.msra.mxu0 %v6673
    %6756 = vmatprep.subr.bf16.mxu0 0
    %6757 = vmatpush1.bf16.msra.mxu0 %v6672
    %6758 = vmatprep.subr.bf16.mxu0 0
    %6759 = vmatpush1.bf16.msra.mxu0 %v6671
    %6760 = vmatprep.subr.bf16.mxu0 0
    %6761 = vmatpush1.bf16.msra.mxu0 %v6670
    %6762 = vmatprep.subr.bf16.mxu0 0
    %6763 = vmatpush1.bf16.msra.mxu0 %v6669
    %6764 = vmatprep.subr.bf16.mxu0 0
    %6765 = vmatpush1.bf16.msra.mxu0 %v6668
    %6766 = vmatprep.subr.bf16.mxu0 0
    %6767 = vmatpush1.bf16.msra.mxu0 %v6667
    %6768 = vmatprep.subr.bf16.mxu0 0
    %6769 = vmatpush1.bf16.msra.mxu0 %v6666
    %6770 = vmatprep.subr.bf16.mxu0 0
    %6771 = vmatpush2.bf16.msra.mxu0 %v6681
    %6772 = vmatprep.subr.bf16.mxu0 0
    %6773 = vmatpush2.bf16.msra.mxu0 %v6680
    %6774 = vmatprep.subr.bf16.mxu0 0
    %6775 = vmatpush2.bf16.msra.mxu0 %v6679
    %6776 = vmatprep.subr.bf16.mxu0 0
    %6777 = vmatpush2.bf16.msra.mxu0 %v6678
    %6778 = vmatprep.subr.bf16.mxu0 0
    %6779 = vmatpush2.bf16.msra.mxu0 %v6677
    %6780 = vmatprep.subr.bf16.mxu0 0
    %6781 = vmatpush2.bf16.msra.mxu0 %v6676
    %6782 = vmatprep.subr.bf16.mxu0 0
    %6783 = vmatpush2.bf16.msra.mxu0 %v6675
    %6784 = vmatprep.subr.bf16.mxu0 0
    %6785 = vmatpush2.bf16.msra.mxu0 %v6674
    %6786 = vmatprep.mubr.bf16.mxu0 %v6515
    %6787 = vmatmul.mubr.bf16.gmra.mxu0 %v6514
    %v6788 = vpop.f32.mrf.mxu0
    %v6789 = vadd.f32 %v6749, %v6788
    %v6790 = vpop.f32.mrf.mxu0
    %v6791 = vpop.f32.mrf.mxu0
    %v6792 = vpop.f32.mrf.mxu0
    %6793 = vdwg.mxu0
    %v6794 = vmax.f32 %v6789, 0.0
    %v6795 = vld [vmem:[#allocation26] sm:$0xf]
    %v6796 = vld [vmem:[#allocation26 + $0x4] sm:$0xf]
    %v6797 = vld [vmem:[#allocation26 + $0x8] sm:$0xf]
    %v6798 = vld [vmem:[#allocation26 + $0xc] sm:$0xf]
    %v6799 = vld [vmem:[#allocation26 + $0x10] sm:$0xf]
    %v6800 = vld [vmem:[#allocation26 + $0x14] sm:$0xf]
    %v6801 = vld [vmem:[#allocation26 + $0x18] sm:$0xf]
    %v6802 = vld [vmem:[#allocation26 + $0x1c] sm:$0xf]
    %v6803 = vld [vmem:[#allocation27] sm:$0x1]
    %v6804 = vpack.c.bf16 %v6794, %v6794
    %v6806 = vlaneseq
    %v6807 = vshrl.u32 %v6806, 7
    %v6808 = vsub.s32 0, %v6807
    %v6809 = vrot.slane %v6803, %v6808
    %v6819 = vunpack.c.l.b16 %v6795
    %v6820 = vunpack.c.l.b16 %v6796
    %v6821 = vunpack.c.l.b16 %v6797
    %v6822 = vunpack.c.l.b16 %v6798
    %v6823 = vunpack.c.l.b16 %v6799
    %v6824 = vunpack.c.l.b16 %v6800
    %v6825 = vunpack.c.l.b16 %v6801
    %v6826 = vunpack.c.l.b16 %v6802
    %v6827 = vpack.c.b16 %v6820, %v6819
    %v6828 = vpack.c.b16 %v6822, %v6821
    %v6829 = vpack.c.b16 %v6824, %v6823
    %v6830 = vpack.c.b16 %v6826, %v6825
    %v6836 = vsel %vm1063, %v6804, 0
    %6838 = vmatprep.subr.bf16.mxu0 0
    %6839 = vmatpush1.bf16.msra.mxu0 0
    %6840 = vmatprep.subr.bf16.mxu0 0
    %6841 = vmatpush1.bf16.msra.mxu0 0
    %6842 = vmatprep.subr.bf16.mxu0 0
    %6843 = vmatpush1.bf16.msra.mxu0 0
    %6844 = vmatprep.subr.bf16.mxu0 0
    %6845 = vmatpush1.bf16.msra.mxu0 0
    %6846 = vmatprep.subr.bf16.mxu0 0
    %6847 = vmatpush1.bf16.msra.mxu0 %v6830
    %6848 = vmatprep.subr.bf16.mxu0 0
    %6849 = vmatpush1.bf16.msra.mxu0 %v6829
    %6850 = vmatprep.subr.bf16.mxu0 0
    %6851 = vmatpush1.bf16.msra.mxu0 %v6828
    %6852 = vmatprep.subr.bf16.mxu0 0
    %6853 = vmatpush1.bf16.msra.mxu0 %v6827
    %6854 = vmatprep.subr.bf16.mxu0 0
    %6855 = vmatpush2.bf16.msra.mxu0 0
    %6856 = vmatprep.subr.bf16.mxu0 0
    %6857 = vmatpush2.bf16.msra.mxu0 0
    %6858 = vmatprep.subr.bf16.mxu0 0
    %6859 = vmatpush2.bf16.msra.mxu0 0
    %6860 = vmatprep.subr.bf16.mxu0 0
    %6861 = vmatpush2.bf16.msra.mxu0 0
    %6862 = vmatprep.subr.bf16.mxu0 0
    %6863 = vmatpush2.bf16.msra.mxu0 0
    %6864 = vmatprep.subr.bf16.mxu0 0
    %6865 = vmatpush2.bf16.msra.mxu0 0
    %6866 = vmatprep.subr.bf16.mxu0 0
    %6867 = vmatpush2.bf16.msra.mxu0 0
    %6868 = vmatprep.subr.bf16.mxu0 0
    %6869 = vmatpush2.bf16.msra.mxu0 0
    %6870 = vmatprep.mubr.bf16.mxu0 0
    %6871 = vmatmul.mubr.bf16.gmra.mxu0 %v6836
    %v6872 = vpop.f32.mrf.mxu0
    %v6873 = vadd.f32 %v6809, %v6872
    %v6874 = vpop.f32.mrf.mxu0
    %v6875 = vpop.f32.mrf.mxu0
    %v6876 = vpop.f32.mrf.mxu0
    %6877 = vdwg.mxu0
    %v6878 = vmax.f32 %v6873, 0.0
    %v6879 = vld [vmem:[#allocation29] sm:$0xf]
    %v6880 = vld [vmem:[#allocation29 + $0x4] sm:$0xf]
    %v6881 = vld [vmem:[#allocation29 + $0x8] sm:$0xf]
    %v6882 = vld [vmem:[#allocation29 + $0xc] sm:$0xf]
    %v6883 = vld [vmem:[#allocation29 + $0x10] sm:$0xf]
    %v6884 = vld [vmem:[#allocation29 + $0x14] sm:$0xf]
    %v6885 = vld [vmem:[#allocation29 + $0x18] sm:$0xf]
    %v6886 = vld [vmem:[#allocation29 + $0x1c] sm:$0xf]
    %v6887 = vld [vmem:[#allocation30] sm:$0x1]
    %v6888 = vpack.c.bf16 %v6878, %v6878
    %v6890 = vlaneseq
    %v6891 = vshrl.u32 %v6890, 7
    %v6892 = vsub.s32 0, %v6891
    %v6893 = vrot.slane %v6887, %v6892
    %v6903 = vunpack.c.l.b16 %v6879
    %v6904 = vunpack.c.l.b16 %v6880
    %v6905 = vunpack.c.l.b16 %v6881
    %v6906 = vunpack.c.l.b16 %v6882
    %v6907 = vunpack.c.l.b16 %v6883
    %v6908 = vunpack.c.l.b16 %v6884
    %v6909 = vunpack.c.l.b16 %v6885
    %v6910 = vunpack.c.l.b16 %v6886
    %v6911 = vpack.c.b16 %v6904, %v6903
    %v6912 = vpack.c.b16 %v6906, %v6905
    %v6913 = vpack.c.b16 %v6908, %v6907
    %v6914 = vpack.c.b16 %v6910, %v6909
    %v6920 = vsel %vm1063, %v6888, 0
    %6922 = vmatprep.subr.bf16.mxu0 0
    %6923 = vmatpush1.bf16.msra.mxu0 0
    %6924 = vmatprep.subr.bf16.mxu0 0
    %6925 = vmatpush1.bf16.msra.mxu0 0
    %6926 = vmatprep.subr.bf16.mxu0 0
    %6927 = vmatpush1.bf16.msra.mxu0 0
    %6928 = vmatprep.subr.bf16.mxu0 0
    %6929 = vmatpush1.bf16.msra.mxu0 0
    %6930 = vmatprep.subr.bf16.mxu0 0
    %6931 = vmatpush1.bf16.msra.mxu0 %v6914
    %6932 = vmatprep.subr.bf16.mxu0 0
    %6933 = vmatpush1.bf16.msra.mxu0 %v6913
    %6934 = vmatprep.subr.bf16.mxu0 0
    %6935 = vmatpush1.bf16.msra.mxu0 %v6912
    %6936 = vmatprep.subr.bf16.mxu0 0
    %6937 = vmatpush1.bf16.msra.mxu0 %v6911
    %6938 = vmatprep.subr.bf16.mxu0 0
    %6939 = vmatpush2.bf16.msra.mxu0 0
    %6940 = vmatprep.subr.bf16.mxu0 0
    %6941 = vmatpush2.bf16.msra.mxu0 0
    %6942 = vmatprep.subr.bf16.mxu0 0
    %6943 = vmatpush2.bf16.msra.mxu0 0
    %6944 = vmatprep.subr.bf16.mxu0 0
    %6945 = vmatpush2.bf16.msra.mxu0 0
    %6946 = vmatprep.subr.bf16.mxu0 0
    %6947 = vmatpush2.bf16.msra.mxu0 0
    %6948 = vmatprep.subr.bf16.mxu0 0
    %6949 = vmatpush2.bf16.msra.mxu0 0
    %6950 = vmatprep.subr.bf16.mxu0 0
    %6951 = vmatpush2.bf16.msra.mxu0 0
    %6952 = vmatprep.subr.bf16.mxu0 0
    %6953 = vmatpush2.bf16.msra.mxu0 0
    %6954 = vmatprep.mubr.bf16.mxu0 0
    %6955 = vmatmul.mubr.bf16.gmra.mxu0 %v6920
    %v6956 = vpop.f32.mrf.mxu0
    %v6957 = vadd.f32 %v6893, %v6956
    %v6958 = vpop.f32.mrf.mxu0
    %v6959 = vpop.f32.mrf.mxu0
    %v6960 = vpop.f32.mrf.mxu0
    %6961 = vdwg.mxu0
    %v6962 = vmax.f32 %v6957, 0.0
    %v6963 = vld [vmem:[#allocation32] sm:$0xf]
    %v6964 = vld [vmem:[#allocation32 + $0x4] sm:$0xf]
    %v6965 = vld [vmem:[#allocation32 + $0x8] sm:$0xf]
    %v6966 = vld [vmem:[#allocation32 + $0xc] sm:$0xf]
    %v6967 = vld [vmem:[#allocation32 + $0x10] sm:$0xf]
    %v6968 = vld [vmem:[#allocation32 + $0x14] sm:$0xf]
    %v6969 = vld [vmem:[#allocation32 + $0x18] sm:$0xf]
    %v6970 = vld [vmem:[#allocation32 + $0x1c] sm:$0xf]
    %v6971 = vld [vmem:[#allocation33] sm:$0x1]
    %v6972 = vpack.c.bf16 %v6962, %v6962
    %v6974 = vlaneseq
    %v6975 = vshrl.u32 %v6974, 7
    %v6976 = vsub.s32 0, %v6975
    %v6977 = vrot.slane %v6971, %v6976
    %v6987 = vunpack.c.l.b16 %v6963
    %v6988 = vunpack.c.l.b16 %v6964
    %v6989 = vunpack.c.l.b16 %v6965
    %v6990 = vunpack.c.l.b16 %v6966
    %v6991 = vunpack.c.l.b16 %v6967
    %v6992 = vunpack.c.l.b16 %v6968
    %v6993 = vunpack.c.l.b16 %v6969
    %v6994 = vunpack.c.l.b16 %v6970
    %v6995 = vpack.c.b16 %v6988, %v6987
    %v6996 = vpack.c.b16 %v6990, %v6989
    %v6997 = vpack.c.b16 %v6992, %v6991
    %v6998 = vpack.c.b16 %v6994, %v6993
    %v7004 = vsel %vm1063, %v6972, 0
    %7006 = vmatprep.subr.bf16.mxu0 0
    %7007 = vmatpush1.bf16.msra.mxu0 0
    %7008 = vmatprep.subr.bf16.mxu0 0
    %7009 = vmatpush1.bf16.msra.mxu0 0
    %7010 = vmatprep.subr.bf16.mxu0 0
    %7011 = vmatpush1.bf16.msra.mxu0 0
    %7012 = vmatprep.subr.bf16.mxu0 0
    %7013 = vmatpush1.bf16.msra.mxu0 0
    %7014 = vmatprep.subr.bf16.mxu0 0
    %7015 = vmatpush1.bf16.msra.mxu0 %v6998
    %7016 = vmatprep.subr.bf16.mxu0 0
    %7017 = vmatpush1.bf16.msra.mxu0 %v6997
    %7018 = vmatprep.subr.bf16.mxu0 0
    %7019 = vmatpush1.bf16.msra.mxu0 %v6996
    %7020 = vmatprep.subr.bf16.mxu0 0
    %7021 = vmatpush1.bf16.msra.mxu0 %v6995
    %7022 = vmatprep.subr.bf16.mxu0 0
    %7023 = vmatpush2.bf16.msra.mxu0 0
    %7024 = vmatprep.subr.bf16.mxu0 0
    %7025 = vmatpush2.bf16.msra.mxu0 0
    %7026 = vmatprep.subr.bf16.mxu0 0
    %7027 = vmatpush2.bf16.msra.mxu0 0
    %7028 = vmatprep.subr.bf16.mxu0 0
    %7029 = vmatpush2.bf16.msra.mxu0 0
    %7030 = vmatprep.subr.bf16.mxu0 0
    %7031 = vmatpush2.bf16.msra.mxu0 0
    %7032 = vmatprep.subr.bf16.mxu0 0
    %7033 = vmatpush2.bf16.msra.mxu0 0
    %7034 = vmatprep.subr.bf16.mxu0 0
    %7035 = vmatpush2.bf16.msra.mxu0 0
    %7036 = vmatprep.subr.bf16.mxu0 0
    %7037 = vmatpush2.bf16.msra.mxu0 0
    %7038 = vmatprep.mubr.bf16.mxu0 0
    %7039 = vmatmul.mubr.bf16.gmra.mxu0 %v7004
    %v7040 = vpop.f32.mrf.mxu0
    %v7041 = vadd.f32 %v6977, %v7040
    %v7042 = vpop.f32.mrf.mxu0
    %v7043 = vpop.f32.mrf.mxu0
    %v7044 = vpop.f32.mrf.mxu0
    %7045 = vdwg.mxu0
    %v7046 = vmax.f32 %v7041, 0.0
    %vm7047 = vcmask 517120
    %7048 = vst.msk [vmem:[#allocation37] sm:$0x3] %vm7047, %v7046
    %v7049 = vpack.c.bf16 %v7046, %v7046
    %v7050 = vld [vmem:[%s55] sm:$0xf]
    %v7051 = vld [vmem:[%s55 + $0x4] sm:$0xf]
    %v7052 = vld [vmem:[%s55 + $0x8] sm:$0xf]
    %v7053 = vld [vmem:[%s55 + $0xc] sm:$0xf]
    %v7054 = vld [vmem:[%s55 + $0x10] sm:$0xf]
    %v7055 = vld [vmem:[%s55 + $0x14] sm:$0xf]
    %v7056 = vld [vmem:[%s55 + $0x18] sm:$0xf]
    %v7057 = vld [vmem:[%s55 + $0x1c] sm:$0xf]
    %v7058 = vld [vmem:[#allocation35] sm:$0x1]
    %v7060 = vlaneseq
    %v7061 = vshrl.u32 %v7060, 7
    %v7062 = vsub.s32 0, %v7061
    %v7063 = vrot.slane %v7058, %v7062
    %v7073 = vunpack.c.l.b16 %v7050
    %v7074 = vunpack.c.l.b16 %v7051
    %v7075 = vunpack.c.l.b16 %v7052
    %v7076 = vunpack.c.l.b16 %v7053
    %v7077 = vunpack.c.l.b16 %v7054
    %v7078 = vunpack.c.l.b16 %v7055
    %v7079 = vunpack.c.l.b16 %v7056
    %v7080 = vunpack.c.l.b16 %v7057
    %v7081 = vpack.c.b16 %v7074, %v7073
    %v7082 = vpack.c.b16 %v7076, %v7075
    %v7083 = vpack.c.b16 %v7078, %v7077
    %v7084 = vpack.c.b16 %v7080, %v7079
    %v7090 = vsel %vm1063, %v7049, 0
    %7092 = vmatprep.subr.bf16.mxu0 0
    %7093 = vmatpush1.bf16.msra.mxu0 0
    %7094 = vmatprep.subr.bf16.mxu0 0
    %7095 = vmatpush1.bf16.msra.mxu0 0
    %7096 = vmatprep.subr.bf16.mxu0 0
    %7097 = vmatpush1.bf16.msra.mxu0 0
    %7098 = vmatprep.subr.bf16.mxu0 0
    %7099 = vmatpush1.bf16.msra.mxu0 0
    %7100 = vmatprep.subr.bf16.mxu0 0
    %7101 = vmatpush1.bf16.msra.mxu0 %v7084
    %7102 = vmatprep.subr.bf16.mxu0 0
    %7103 = vmatpush1.bf16.msra.mxu0 %v7083
    %7104 = vmatprep.subr.bf16.mxu0 0
    %7105 = vmatpush1.bf16.msra.mxu0 %v7082
    %7106 = vmatprep.subr.bf16.mxu0 0
    %7107 = vmatpush1.bf16.msra.mxu0 %v7081
    %7108 = vmatprep.subr.bf16.mxu0 0
    %7109 = vmatpush2.bf16.msra.mxu0 0
    %7110 = vmatprep.subr.bf16.mxu0 0
    %7111 = vmatpush2.bf16.msra.mxu0 0
    %7112 = vmatprep.subr.bf16.mxu0 0
    %7113 = vmatpush2.bf16.msra.mxu0 0
    %7114 = vmatprep.subr.bf16.mxu0 0
    %7115 = vmatpush2.bf16.msra.mxu0 0
    %7116 = vmatprep.subr.bf16.mxu0 0
    %7117 = vmatpush2.bf16.msra.mxu0 0
    %7118 = vmatprep.subr.bf16.mxu0 0
    %7119 = vmatpush2.bf16.msra.mxu0 0
    %7120 = vmatprep.subr.bf16.mxu0 0
    %7121 = vmatpush2.bf16.msra.mxu0 0
    %7122 = vmatprep.subr.bf16.mxu0 0
    %7123 = vmatpush2.bf16.msra.mxu0 0
    %7124 = vmatprep.mubr.bf16.mxu0 0
    %7125 = vmatmul.mubr.bf16.gmra.mxu0 %v7090
    %v7126 = vpop.f32.mrf.mxu0
    %v7127 = vadd.f32 %v7063, %v7126
    %v7128 = vpop.f32.mrf.mxu0
    %v7129 = vpop.f32.mrf.mxu0
    %v7130 = vpop.f32.mrf.mxu0
    %7131 = vdwg.mxu0
    %vm7132 = vcmask 33792
    %7133 = vst.msk [vmem:[#allocation36] sm:$0x3] %vm7132, %v7127
    // Predicated region
    $region202: #{feature_extractor.1} parent=1 // pred_check
      _
    $region203: #{feature_extractor.1} parent=1 // pred_check_branch
      %7135 = sbr.rel (0) target = $region205
    $region204: #{feature_extractor.1} parent=1 // pred_region
      %s7137 = ssub.s32 32, 32
      %7138 = vsyncadd [#allocation5], %s7137
      %s7140 = sshll.u32 [#allocation36], 4
      %s7141 = int_to_ptr.vmem [resolvable:$true] %s7140
      %7143 = dma.vmem_to_hbm [thread:$0]  %s7141, 32, %s59, [#allocation5]
    $region205: #{feature_extractor.1} parent=1 // pred_fallthru
      _
    // Predicated region
    $region206: #{feature_extractor.1} parent=1 // pred_check
      _
    $region207: #{feature_extractor.1} parent=1 // pred_check_branch
      %7145 = sbr.rel (0) target = $region209
    $region208: #{feature_extractor.1} parent=1 // pred_region
      %s7147 = ssub.s32 32, 32
      %7148 = vsyncadd [#allocation38], %s7147
      %s7150 = sshll.u32 [#allocation37], 4
      %s7151 = int_to_ptr.vmem [resolvable:$true] %s7150
      %7153 = dma.vmem_to_hbm [thread:$0]  %s7151, 32, %s61, [#allocation38]
    $region209: #{feature_extractor.1} parent=1 // pred_fallthru
      _
    // Predicated region
    $region210: #{feature_extractor.1} parent=1 // pred_check
      _
    $region211: #{feature_extractor.1} parent=1 // pred_check_branch
      %7155 = sbr.rel (0) target = $region213
    $region212: #{feature_extractor.1} parent=1 // pred_region
      %7156 = dma.done [#allocation5], 32
    $region213: #{feature_extractor.1} parent=1 // pred_fallthru
      _
    // Predicated region
    $region214: #{feature_extractor.1} parent=1 // pred_check
      _
    $region215: #{feature_extractor.1} parent=1 // pred_check_branch
      %7158 = sbr.rel (0) target = $region217
    $region216: #{feature_extractor.1} parent=1 // pred_region
      %7159 = dma.done [#allocation38], 32
    $region217: #{feature_extractor.1} parent=1 // pred_fallthru
      _
    %7160 = vsyncpa [#allocation4], 1
    %7161 = vsyncpa [#allocation7], 1
    %7162 = vsyncpa [#allocation10], 1
    %7163 = vsyncpa [#allocation13], 1
    %7164 = vsyncpa [#allocation16], 1
    %7165 = vsyncpa [#allocation19], 1
    %7166 = vsyncpa [#allocation22], 1
    %7167 = vsyncpa [#allocation25], 1
    %7168 = vsyncpa [#allocation28], 1
    %7169 = vsyncpa [#allocation31], 1
    %7170 = vsyncpa [#allocation34], 1
    %7171 = vsyncpa [#allocation5], 1
    %7172 = vsyncpa [#allocation38], 1

</llo_original>
